<compile_context>
chip_gen: v5e
topology: v5e:2x2
jax: 0.10.0
libtpu: 0.0.40
codegen_flags: <defaults>
</compile_context>

<pallas_src>
import math
import functools

import jax
import jax.numpy as jnp
from jax import lax
from jax.experimental import pallas as pl
from jax.experimental.pallas import tpu as pltpu  # noqa: F401  (TPU backend)

# ---------------- configuration ----------------------------------------------
EMBED_DIM   = 128            # lane-aligned (torch default was 96)
NUM_HEADS   = 4
HEAD_DIM    = EMBED_DIM // NUM_HEADS
MLP_RATIO   = 4.0
MLP_HIDDEN  = int(EMBED_DIM * MLP_RATIO)
DEPTH       = 2              # torch default 12; kept small for the demo
NUM_CLASSES = 10
OUT_PAD     = 128            # lane-dense classifier output (sliced to 10)
PATCH       = 4
IMG         = 16             # small image (torch default assumed 224)
IN_CH       = 3
GRID_HW     = IMG // PATCH
N_TOKENS    = GRID_HW * GRID_HW
PATCH_VEC   = IN_CH * PATCH * PATCH        # 48
PVEC_PAD    = 64                           # zero-padded patch vector (was 128)
SCALE       = HEAD_DIM ** (-0.5)
LN_EPS      = 1e-5


# ---------------- helpers traced inside the kernel ---------------------------
def _layernorm(x, gamma, beta):
    # One-pass form: E[x^2] and E[x] are independent XLU reductions.
    mu = jnp.mean(x, axis=-1, keepdims=True)
    ms = jnp.mean(x * x, axis=-1, keepdims=True)
    var = jnp.maximum(ms - mu * mu, 0.0)
    return (x - mu) * lax.rsqrt(var + LN_EPS) * gamma + beta


def _gelu_exact(x):
    # nn.GELU() default is the exact erf formulation.
    return 0.5 * x * (1.0 + lax.erf(x * (1.0 / math.sqrt(2.0))))


def _bf16(x):
    # Cast at the MXU boundary only; accumulation stays f32.
    return x.astype(jnp.bfloat16)


# ---------------- fused forward kernel ----------------------------------------
def fused_forward_kernel(
    patches_ref, pw_ref, pb_ref, pos_ref,
    ln1g_ref, ln1b_ref, wqkv_ref, bqkv_ref, wproj_ref, bproj_ref,
    ln2g_ref, ln2b_ref, wm1_ref, bm1_ref, wm2_ref, bm2_ref,
    fcw_ref, fcb_ref,
    out_ref,
    *, batch,
):
    BN = batch * N_TOKENS
    BH = batch * NUM_HEADS

    # ---- patch embedding: (B*N, 64) @ (64, C); patches already bf16 ----
    x = jnp.dot(patches_ref[...], pw_ref[...],
                preferred_element_type=jnp.float32) + pb_ref[...]      # (BN, C)

    # ---- additive positional encoding (pre-broadcast to (BN, C)) ----
    x = x + pos_ref[...]

    # ---- transformer blocks (unrolled, DEPTH is small & static) ----
    for d in range(DEPTH):
        # attention branch: x + proj(MHSA(LN1(x)))
        h = _layernorm(x, ln1g_ref[d], ln1b_ref[d])                    # (BN, C)
        qkv = jnp.dot(_bf16(h), wqkv_ref[d],
                      preferred_element_type=jnp.float32) + bqkv_ref[d]
        q = qkv[:, 0 * EMBED_DIM:1 * EMBED_DIM]
        k = qkv[:, 1 * EMBED_DIM:2 * EMBED_DIM]
        v = qkv[:, 2 * EMBED_DIM:3 * EMBED_DIM]

        # (BN, C) -> (B*H, N, D): merge batch and heads into one batch axis so
        # attention is 2 batched einsums instead of 8 tiny per-head matmuls.
        def to_heads(t):
            t4 = t.reshape(batch, N_TOKENS, NUM_HEADS, HEAD_DIM)
            t4 = jnp.transpose(t4, (0, 2, 1, 3))
            return _bf16(t4.reshape(BH, N_TOKENS, HEAD_DIM))

        qh = to_heads(q)
        kh = to_heads(k)
        vh = to_heads(v)

        # SCALE is folded into the Q columns of w_qkv/b_qkv at init.
        s = jnp.einsum('bnd,bmd->bnm', qh, kh,
                       preferred_element_type=jnp.float32)             # (BH,N,N)
        s = s - jnp.max(s, axis=-1, keepdims=True)
        p = jnp.exp(s)
        p = p * pl.reciprocal(jnp.sum(p, axis=-1, keepdims=True),
                              approx=True)
        o = jnp.einsum('bnm,bmd->bnd', _bf16(p), vh,
                       preferred_element_type=jnp.float32)             # (BH,N,D)

        # (B*H, N, D) -> (BN, C)
        o4 = o.reshape(batch, NUM_HEADS, N_TOKENS, HEAD_DIM)
        att = jnp.transpose(o4, (0, 2, 1, 3)).reshape(BN, EMBED_DIM)

        att = jnp.dot(_bf16(att), wproj_ref[d],
                      preferred_element_type=jnp.float32) + bproj_ref[d]
        x = x + att

        # MLP branch: x + W2 @ GELU(W1 @ LN2(x))
        h2 = _layernorm(x, ln2g_ref[d], ln2b_ref[d])
        m = jnp.dot(_bf16(h2), wm1_ref[d],
                    preferred_element_type=jnp.float32) + bm1_ref[d]
        m = _gelu_exact(m)
        m = jnp.dot(_bf16(m), wm2_ref[d],
                    preferred_element_type=jnp.float32) + bm2_ref[d]
        x = x + m

    # ---- mean pool over tokens + classifier (lane-dense padded output) ----
    pooled = jnp.mean(x.reshape(batch, N_TOKENS, EMBED_DIM), axis=1)   # (B, C)
    out_ref[...] = jnp.dot(_bf16(pooled), fcw_ref[...],
                           preferred_element_type=jnp.float32) + fcb_ref[...]


# ---------------- wrapper ------------------------------------------------------
def model_forward(params, x):
    # x: (B, 3, H, W) NCHW like PyTorch.
    B = x.shape[0]

    # Patchify (Conv2d(3, C, k=4, s=4) equivalent), zero-pad 48 -> 64 lanes,
    # cast to bf16 in the wrapper (halves the input DMA, drops an in-kernel cast).
    xp = x.reshape(B, IN_CH, GRID_HW, PATCH, GRID_HW, PATCH)
    xp = xp.transpose(0, 2, 4, 1, 3, 5).reshape(B * N_TOKENS, PATCH_VEC)
    xp = jnp.pad(xp, ((0, 0), (0, PVEC_PAD - PATCH_VEC))).astype(jnp.bfloat16)

    # Positional table pre-broadcast to (B*N, C) so the kernel just adds it.
    pos_full = jnp.tile(params["pos"], (B, 1))

    kernel = functools.partial(fused_forward_kernel, batch=B)
    logits_pad = pl.pallas_call(
        kernel,
        out_shape=jax.ShapeDtypeStruct((B, OUT_PAD), jnp.float32),
    )(
        xp, params["patch_w"], params["patch_b"], pos_full,
        params["ln1_g"], params["ln1_b"],
        params["w_qkv"], params["b_qkv"],
        params["w_proj"], params["b_proj"],
        params["ln2_g"], params["ln2_b"],
        params["w_mlp1"], params["b_mlp1"],
        params["w_mlp2"], params["b_mlp2"],
        params["fc_w"], params["fc_b"],
    )
    return logits_pad[:, :NUM_CLASSES]


# ---------------- parameter init (deterministic) ------------------------------
def init_params(key):
    keys = jax.random.split(key, 8)

    def normal_f32(k, shape, std=0.02):
        return std * jax.random.normal(k, shape, dtype=jnp.float32)

    def zeros_f32(shape):
        return jnp.zeros(shape, jnp.float32)

    # QKV weight with the attention scale folded into the Q columns.
    w_qkv_f32 = normal_f32(keys[3], (DEPTH, EMBED_DIM, 3 * EMBED_DIM))
    w_qkv_f32 = w_qkv_f32.at[:, :, :EMBED_DIM].multiply(SCALE)
    # (b_qkv is zeros; if it were nonzero its Q slice would be scaled too.)
    b_qkv_f32 = zeros_f32((DEPTH, 1, 3 * EMBED_DIM))

    # Classifier weight padded to 128 output lanes; padded columns zeroed so
    # the padded logits are deterministic zeros.
    fc_w_f32 = normal_f32(keys[2], (EMBED_DIM, OUT_PAD))
    col = jnp.arange(OUT_PAD)
    fc_w_f32 = jnp.where(col[None, :] < NUM_CLASSES, fc_w_f32, 0.0)

    params = {
        "patch_w": normal_f32(keys[0], (PVEC_PAD, EMBED_DIM)).astype(jnp.bfloat16),
        "patch_b": zeros_f32((1, EMBED_DIM)),
        # TODO(synk): LaplacianPositionalEncoding definition not provided;
        # deterministic additive positional table used instead.
        "pos": normal_f32(keys[1], (N_TOKENS, EMBED_DIM)),
        "fc_w": fc_w_f32.astype(jnp.bfloat16),
        "fc_b": zeros_f32((1, OUT_PAD)),
        # Per-block params stacked along a leading depth axis.
        "ln1_g": jnp.ones((DEPTH, 1, EMBED_DIM), jnp.float32),
        "ln1_b": zeros_f32((DEPTH, 1, EMBED_DIM)),
        "w_qkv": w_qkv_f32.astype(jnp.bfloat16),
        "b_qkv": b_qkv_f32,
        "w_proj": normal_f32(keys[4], (DEPTH, EMBED_DIM, EMBED_DIM)).astype(jnp.bfloat16),
        "b_proj": zeros_f32((DEPTH, 1, EMBED_DIM)),
        "ln2_g": jnp.ones((DEPTH, 1, EMBED_DIM), jnp.float32),
        "ln2_b": zeros_f32((DEPTH, 1, EMBED_DIM)),
        "w_mlp1": normal_f32(keys[5], (DEPTH, EMBED_DIM, MLP_HIDDEN)).astype(jnp.bfloat16),
        "b_mlp1": zeros_f32((DEPTH, 1, MLP_HIDDEN)),
        "w_mlp2": normal_f32(keys[6], (DEPTH, MLP_HIDDEN, EMBED_DIM)).astype(jnp.bfloat16),
        "b_mlp2": zeros_f32((DEPTH, 1, EMBED_DIM)),
    }
    return params


# ---------------- main ----------------------------------------------------------
if __name__ == "__main__":
    key = jax.random.PRNGKey(0)
    pkey, xkey = jax.random.split(key)
    params = init_params(pkey)
    x = jax.random.normal(xkey, (2, IN_CH, IMG, IMG), dtype=jnp.float32)

    fwd = jax.jit(model_forward)
    out = fwd(params, x)
    out = jax.block_until_ready(out)
    assert out.shape == (2, NUM_CLASSES)
    assert bool(jnp.all(jnp.isfinite(out)))
    print("KERNEL_OK")
</pallas_src>

<mosaic_0001>
module attributes {stable_mosaic.version = 11 : i64} {
  func.func @fused_forward_kernel(%arg0: memref<32x64xbf16, #tpu.memory_space<vmem>>, %arg1: memref<64x128xbf16, #tpu.memory_space<vmem>>, %arg2: memref<1x128xf32, #tpu.memory_space<vmem>>, %arg3: memref<32x128xf32, #tpu.memory_space<vmem>>, %arg4: memref<2x1x128xf32, #tpu.memory_space<vmem>>, %arg5: memref<2x1x128xf32, #tpu.memory_space<vmem>>, %arg6: memref<2x128x384xbf16, #tpu.memory_space<vmem>>, %arg7: memref<2x1x384xf32, #tpu.memory_space<vmem>>, %arg8: memref<2x128x128xbf16, #tpu.memory_space<vmem>>, %arg9: memref<2x1x128xf32, #tpu.memory_space<vmem>>, %arg10: memref<2x1x128xf32, #tpu.memory_space<vmem>>, %arg11: memref<2x1x128xf32, #tpu.memory_space<vmem>>, %arg12: memref<2x128x512xbf16, #tpu.memory_space<vmem>>, %arg13: memref<2x1x512xf32, #tpu.memory_space<vmem>>, %arg14: memref<2x512x128xbf16, #tpu.memory_space<vmem>>, %arg15: memref<2x1x128xf32, #tpu.memory_space<vmem>>, %arg16: memref<128x128xbf16, #tpu.memory_space<vmem>>, %arg17: memref<1x128xf32, #tpu.memory_space<vmem>>, %arg18: memref<2x128xf32, #tpu.memory_space<vmem>>) attributes {dimension_semantics = [], scalar_prefetch = 0 : i64, scratch_operands = 0 : i64, tpu.core_type = #tpu.core_type<tc>} {
    %c0 = arith.constant 0 : index
    %c0_0 = arith.constant 0 : index
    %0 = vector.load %arg0[%c0, %c0_0] : memref<32x64xbf16, #tpu.memory_space<vmem>>, vector<32x64xbf16>
    %c0_1 = arith.constant 0 : index
    %c0_2 = arith.constant 0 : index
    %1 = vector.load %arg1[%c0_1, %c0_2] : memref<64x128xbf16, #tpu.memory_space<vmem>>, vector<64x128xbf16>
    %cst = arith.constant dense<0.000000e+00> : vector<32x128xf32>
    %2 = tpu.matmul %0, %1, %cst {dimension_numbers = #tpu.dot_dimension_numbers<[1], [0], [0], [1], [0, 0, 1, 1], [], []>} : vector<32x64xbf16>, vector<64x128xbf16>, vector<32x128xf32> -> vector<32x128xf32>
    %c0_3 = arith.constant 0 : index
    %c0_4 = arith.constant 0 : index
    %3 = vector.load %arg2[%c0_3, %c0_4] : memref<1x128xf32, #tpu.memory_space<vmem>>, vector<1x128xf32>
    %4 = vector.broadcast %3 : vector<1x128xf32> to vector<32x128xf32>
    %5 = arith.addf %2, %4 : vector<32x128xf32>
    %c0_5 = arith.constant 0 : index
    %c0_6 = arith.constant 0 : index
    %6 = vector.load %arg3[%c0_5, %c0_6] : memref<32x128xf32, #tpu.memory_space<vmem>>, vector<32x128xf32>
    %7 = arith.addf %5, %6 : vector<32x128xf32>
    %c0_7 = arith.constant 0 : index
    %c0_8 = arith.constant 0 : index
    %c0_9 = arith.constant 0 : index
    %8 = vector.load %arg4[%c0_7, %c0_8, %c0_9] : memref<2x1x128xf32, #tpu.memory_space<vmem>>, vector<1x1x128xf32>
    %9 = vector.shape_cast %8 : vector<1x1x128xf32> to vector<1x128xf32>
    %c0_10 = arith.constant 0 : index
    %c0_11 = arith.constant 0 : index
    %c0_12 = arith.constant 0 : index
    %10 = vector.load %arg5[%c0_10, %c0_11, %c0_12] : memref<2x1x128xf32, #tpu.memory_space<vmem>>, vector<1x1x128xf32>
    %11 = vector.shape_cast %10 : vector<1x1x128xf32> to vector<1x128xf32>
    %cst_13 = arith.constant dense<0.000000e+00> : vector<32xf32>
    %12 = vector.multi_reduction <add>, %7, %cst_13 [1] : vector<32x128xf32> to vector<32xf32>
    %13 = vector.shape_cast %12 : vector<32xf32> to vector<32x1xf32>
    %cst_14 = arith.constant 1.280000e+02 : f32
    %14 = vector.broadcast %cst_14 : f32 to vector<32x1xf32>
    %15 = arith.divf %13, %14 : vector<32x1xf32>
    %16 = arith.mulf %7, %7 : vector<32x128xf32>
    %cst_15 = arith.constant dense<0.000000e+00> : vector<32xf32>
    %17 = vector.multi_reduction <add>, %16, %cst_15 [1] : vector<32x128xf32> to vector<32xf32>
    %18 = vector.shape_cast %17 : vector<32xf32> to vector<32x1xf32>
    %cst_16 = arith.constant 1.280000e+02 : f32
    %19 = vector.broadcast %cst_16 : f32 to vector<32x1xf32>
    %20 = arith.divf %18, %19 : vector<32x1xf32>
    %21 = arith.mulf %15, %15 : vector<32x1xf32>
    %22 = arith.subf %20, %21 : vector<32x1xf32>
    %cst_17 = arith.constant 0.000000e+00 : f32
    %23 = vector.broadcast %cst_17 : f32 to vector<32x1xf32>
    %24 = arith.maximumf %22, %23 : vector<32x1xf32>
    %25 = vector.broadcast %15 : vector<32x1xf32> to vector<32x128xf32>
    %26 = arith.subf %7, %25 : vector<32x128xf32>
    %cst_18 = arith.constant 9.99999974E-6 : f32
    %27 = vector.broadcast %cst_18 : f32 to vector<32x1xf32>
    %28 = arith.addf %24, %27 : vector<32x1xf32>
    %29 = math.rsqrt %28 : vector<32x1xf32>
    %30 = vector.broadcast %29 : vector<32x1xf32> to vector<32x128xf32>
    %31 = arith.mulf %26, %30 : vector<32x128xf32>
    %32 = vector.broadcast %9 : vector<1x128xf32> to vector<32x128xf32>
    %33 = arith.mulf %31, %32 : vector<32x128xf32>
    %34 = vector.broadcast %11 : vector<1x128xf32> to vector<32x128xf32>
    %35 = arith.addf %33, %34 : vector<32x128xf32>
    %36 = arith.truncf %35 : vector<32x128xf32> to vector<32x128xbf16>
    %c0_19 = arith.constant 0 : index
    %c0_20 = arith.constant 0 : index
    %c0_21 = arith.constant 0 : index
    %37 = vector.load %arg6[%c0_19, %c0_20, %c0_21] : memref<2x128x384xbf16, #tpu.memory_space<vmem>>, vector<1x128x384xbf16>
    %38 = vector.shape_cast %37 : vector<1x128x384xbf16> to vector<128x384xbf16>
    %cst_22 = arith.constant dense<0.000000e+00> : vector<32x384xf32>
    %39 = tpu.matmul %36, %38, %cst_22 {dimension_numbers = #tpu.dot_dimension_numbers<[1], [0], [0], [1], [0, 0, 1, 1], [], []>} : vector<32x128xbf16>, vector<128x384xbf16>, vector<32x384xf32> -> vector<32x384xf32>
    %c0_23 = arith.constant 0 : index
    %c0_24 = arith.constant 0 : index
    %c0_25 = arith.constant 0 : index
    %40 = vector.load %arg7[%c0_23, %c0_24, %c0_25] : memref<2x1x384xf32, #tpu.memory_space<vmem>>, vector<1x1x384xf32>
    %41 = vector.shape_cast %40 : vector<1x1x384xf32> to vector<1x384xf32>
    %42 = vector.broadcast %41 : vector<1x384xf32> to vector<32x384xf32>
    %43 = arith.addf %39, %42 : vector<32x384xf32>
    %44 = vector.extract_strided_slice %43 {offsets = [0, 0], sizes = [32, 128], strides = [1, 1]} : vector<32x384xf32> to vector<32x128xf32>
    %45 = vector.extract_strided_slice %43 {offsets = [0, 128], sizes = [32, 128], strides = [1, 1]} : vector<32x384xf32> to vector<32x128xf32>
    %46 = vector.extract_strided_slice %43 {offsets = [0, 256], sizes = [32, 128], strides = [1, 1]} : vector<32x384xf32> to vector<32x128xf32>
    %47 = vector.shape_cast %44 : vector<32x128xf32> to vector<2x16x4x32xf32>
    %48 = tpu.transpose %47, [0, 2, 1, 3] : vector<2x16x4x32xf32> -> vector<2x4x16x32xf32>
    %49 = vector.shape_cast %48 : vector<2x4x16x32xf32> to vector<8x16x32xf32>
    %50 = arith.truncf %49 : vector<8x16x32xf32> to vector<8x16x32xbf16>
    %51 = vector.shape_cast %45 : vector<32x128xf32> to vector<2x16x4x32xf32>
    %52 = tpu.transpose %51, [0, 2, 1, 3] : vector<2x16x4x32xf32> -> vector<2x4x16x32xf32>
    %53 = vector.shape_cast %52 : vector<2x4x16x32xf32> to vector<8x16x32xf32>
    %54 = arith.truncf %53 : vector<8x16x32xf32> to vector<8x16x32xbf16>
    %55 = vector.shape_cast %46 : vector<32x128xf32> to vector<2x16x4x32xf32>
    %56 = tpu.transpose %55, [0, 2, 1, 3] : vector<2x16x4x32xf32> -> vector<2x4x16x32xf32>
    %57 = vector.shape_cast %56 : vector<2x4x16x32xf32> to vector<8x16x32xf32>
    %58 = arith.truncf %57 : vector<8x16x32xf32> to vector<8x16x32xbf16>
    "tpu.trace_start"() <{level = 10 : i32, message = "bnd,bmd->bnm"}> : () -> ()
    %cst_26 = arith.constant dense<0.000000e+00> : vector<8x16x16xf32>
    %59 = tpu.matmul %50, %54, %cst_26 {dimension_numbers = #tpu.dot_dimension_numbers<[2], [2], [1], [1], [0, 0, 0, 1, 1, 1], [0], [0]>} : vector<8x16x32xbf16>, vector<8x16x32xbf16>, vector<8x16x16xf32> -> vector<8x16x16xf32>
    "tpu.trace_stop"() : () -> ()
    %cst_27 = arith.constant dense<0xFF800000> : vector<8x16xf32>
    %60 = vector.multi_reduction <maximumf>, %59, %cst_27 [2] : vector<8x16x16xf32> to vector<8x16xf32>
    %61 = vector.shape_cast %60 : vector<8x16xf32> to vector<8x16x1xf32>
    %62 = vector.broadcast %61 : vector<8x16x1xf32> to vector<8x16x16xf32>
    %63 = arith.subf %59, %62 : vector<8x16x16xf32>
    %64 = math.exp %63 : vector<8x16x16xf32>
    %cst_28 = arith.constant dense<0.000000e+00> : vector<8x16xf32>
    %65 = vector.multi_reduction <add>, %64, %cst_28 [2] : vector<8x16x16xf32> to vector<8x16xf32>
    %66 = vector.shape_cast %65 : vector<8x16xf32> to vector<8x16x1xf32>
    %67 = tpu.reciprocal %66 {approx = true} : vector<8x16x1xf32> -> vector<8x16x1xf32>
    %68 = vector.broadcast %67 : vector<8x16x1xf32> to vector<8x16x16xf32>
    %69 = arith.mulf %64, %68 : vector<8x16x16xf32>
    %70 = arith.truncf %69 : vector<8x16x16xf32> to vector<8x16x16xbf16>
    "tpu.trace_start"() <{level = 10 : i32, message = "bnm,bmd->bnd"}> : () -> ()
    %cst_29 = arith.constant dense<0.000000e+00> : vector<8x16x32xf32>
    %71 = tpu.matmul %70, %58, %cst_29 {dimension_numbers = #tpu.dot_dimension_numbers<[2], [1], [1], [2], [0, 0, 0, 1, 1, 2], [0], [0]>} : vector<8x16x16xbf16>, vector<8x16x32xbf16>, vector<8x16x32xf32> -> vector<8x16x32xf32>
    "tpu.trace_stop"() : () -> ()
    %72 = vector.shape_cast %71 : vector<8x16x32xf32> to vector<2x4x16x32xf32>
    %73 = tpu.transpose %72, [0, 2, 1, 3] : vector<2x4x16x32xf32> -> vector<2x16x4x32xf32>
    %74 = vector.shape_cast %73 : vector<2x16x4x32xf32> to vector<32x128xf32>
    %75 = arith.truncf %74 : vector<32x128xf32> to vector<32x128xbf16>
    %c0_30 = arith.constant 0 : index
    %c0_31 = arith.constant 0 : index
    %c0_32 = arith.constant 0 : index
    %76 = vector.load %arg8[%c0_30, %c0_31, %c0_32] : memref<2x128x128xbf16, #tpu.memory_space<vmem>>, vector<1x128x128xbf16>
    %77 = vector.shape_cast %76 : vector<1x128x128xbf16> to vector<128x128xbf16>
    %cst_33 = arith.constant dense<0.000000e+00> : vector<32x128xf32>
    %78 = tpu.matmul %75, %77, %cst_33 {dimension_numbers = #tpu.dot_dimension_numbers<[1], [0], [0], [1], [0, 0, 1, 1], [], []>} : vector<32x128xbf16>, vector<128x128xbf16>, vector<32x128xf32> -> vector<32x128xf32>
    %c0_34 = arith.constant 0 : index
    %c0_35 = arith.constant 0 : index
    %c0_36 = arith.constant 0 : index
    %79 = vector.load %arg9[%c0_34, %c0_35, %c0_36] : memref<2x1x128xf32, #tpu.memory_space<vmem>>, vector<1x1x128xf32>
    %80 = vector.shape_cast %79 : vector<1x1x128xf32> to vector<1x128xf32>
    %81 = vector.broadcast %80 : vector<1x128xf32> to vector<32x128xf32>
    %82 = arith.addf %78, %81 : vector<32x128xf32>
    %83 = arith.addf %7, %82 : vector<32x128xf32>
    %c0_37 = arith.constant 0 : index
    %c0_38 = arith.constant 0 : index
    %c0_39 = arith.constant 0 : index
    %84 = vector.load %arg10[%c0_37, %c0_38, %c0_39] : memref<2x1x128xf32, #tpu.memory_space<vmem>>, vector<1x1x128xf32>
    %85 = vector.shape_cast %84 : vector<1x1x128xf32> to vector<1x128xf32>
    %c0_40 = arith.constant 0 : index
    %c0_41 = arith.constant 0 : index
    %c0_42 = arith.constant 0 : index
    %86 = vector.load %arg11[%c0_40, %c0_41, %c0_42] : memref<2x1x128xf32, #tpu.memory_space<vmem>>, vector<1x1x128xf32>
    %87 = vector.shape_cast %86 : vector<1x1x128xf32> to vector<1x128xf32>
    %cst_43 = arith.constant dense<0.000000e+00> : vector<32xf32>
    %88 = vector.multi_reduction <add>, %83, %cst_43 [1] : vector<32x128xf32> to vector<32xf32>
    %89 = vector.shape_cast %88 : vector<32xf32> to vector<32x1xf32>
    %cst_44 = arith.constant 1.280000e+02 : f32
    %90 = vector.broadcast %cst_44 : f32 to vector<32x1xf32>
    %91 = arith.divf %89, %90 : vector<32x1xf32>
    %92 = arith.mulf %83, %83 : vector<32x128xf32>
    %cst_45 = arith.constant dense<0.000000e+00> : vector<32xf32>
    %93 = vector.multi_reduction <add>, %92, %cst_45 [1] : vector<32x128xf32> to vector<32xf32>
    %94 = vector.shape_cast %93 : vector<32xf32> to vector<32x1xf32>
    %cst_46 = arith.constant 1.280000e+02 : f32
    %95 = vector.broadcast %cst_46 : f32 to vector<32x1xf32>
    %96 = arith.divf %94, %95 : vector<32x1xf32>
    %97 = arith.mulf %91, %91 : vector<32x1xf32>
    %98 = arith.subf %96, %97 : vector<32x1xf32>
    %cst_47 = arith.constant 0.000000e+00 : f32
    %99 = vector.broadcast %cst_47 : f32 to vector<32x1xf32>
    %100 = arith.maximumf %98, %99 : vector<32x1xf32>
    %101 = vector.broadcast %91 : vector<32x1xf32> to vector<32x128xf32>
    %102 = arith.subf %83, %101 : vector<32x128xf32>
    %cst_48 = arith.constant 9.99999974E-6 : f32
    %103 = vector.broadcast %cst_48 : f32 to vector<32x1xf32>
    %104 = arith.addf %100, %103 : vector<32x1xf32>
    %105 = math.rsqrt %104 : vector<32x1xf32>
    %106 = vector.broadcast %105 : vector<32x1xf32> to vector<32x128xf32>
    %107 = arith.mulf %102, %106 : vector<32x128xf32>
    %108 = vector.broadcast %85 : vector<1x128xf32> to vector<32x128xf32>
    %109 = arith.mulf %107, %108 : vector<32x128xf32>
    %110 = vector.broadcast %87 : vector<1x128xf32> to vector<32x128xf32>
    %111 = arith.addf %109, %110 : vector<32x128xf32>
    %112 = arith.truncf %111 : vector<32x128xf32> to vector<32x128xbf16>
    %c0_49 = arith.constant 0 : index
    %c0_50 = arith.constant 0 : index
    %c0_51 = arith.constant 0 : index
    %113 = vector.load %arg12[%c0_49, %c0_50, %c0_51] : memref<2x128x512xbf16, #tpu.memory_space<vmem>>, vector<1x128x512xbf16>
    %114 = vector.shape_cast %113 : vector<1x128x512xbf16> to vector<128x512xbf16>
    %cst_52 = arith.constant dense<0.000000e+00> : vector<32x512xf32>
    %115 = tpu.matmul %112, %114, %cst_52 {dimension_numbers = #tpu.dot_dimension_numbers<[1], [0], [0], [1], [0, 0, 1, 1], [], []>} : vector<32x128xbf16>, vector<128x512xbf16>, vector<32x512xf32> -> vector<32x512xf32>
    %c0_53 = arith.constant 0 : index
    %c0_54 = arith.constant 0 : index
    %c0_55 = arith.constant 0 : index
    %116 = vector.load %arg13[%c0_53, %c0_54, %c0_55] : memref<2x1x512xf32, #tpu.memory_space<vmem>>, vector<1x1x512xf32>
    %117 = vector.shape_cast %116 : vector<1x1x512xf32> to vector<1x512xf32>
    %118 = vector.broadcast %117 : vector<1x512xf32> to vector<32x512xf32>
    %119 = arith.addf %115, %118 : vector<32x512xf32>
    %cst_56 = arith.constant 5.000000e-01 : f32
    %120 = vector.broadcast %cst_56 : f32 to vector<32x512xf32>
    %121 = arith.mulf %120, %119 : vector<32x512xf32>
    %cst_57 = arith.constant 0.707106769 : f32
    %122 = vector.broadcast %cst_57 : f32 to vector<32x512xf32>
    %123 = arith.mulf %119, %122 : vector<32x512xf32>
    %124 = math.erf %123 : vector<32x512xf32>
    %cst_58 = arith.constant 1.000000e+00 : f32
    %125 = vector.broadcast %cst_58 : f32 to vector<32x512xf32>
    %126 = arith.addf %125, %124 : vector<32x512xf32>
    %127 = arith.mulf %121, %126 : vector<32x512xf32>
    %128 = arith.truncf %127 : vector<32x512xf32> to vector<32x512xbf16>
    %c0_59 = arith.constant 0 : index
    %c0_60 = arith.constant 0 : index
    %c0_61 = arith.constant 0 : index
    %129 = vector.load %arg14[%c0_59, %c0_60, %c0_61] : memref<2x512x128xbf16, #tpu.memory_space<vmem>>, vector<1x512x128xbf16>
    %130 = vector.shape_cast %129 : vector<1x512x128xbf16> to vector<512x128xbf16>
    %cst_62 = arith.constant dense<0.000000e+00> : vector<32x128xf32>
    %131 = tpu.matmul %128, %130, %cst_62 {dimension_numbers = #tpu.dot_dimension_numbers<[1], [0], [0], [1], [0, 0, 1, 1], [], []>} : vector<32x512xbf16>, vector<512x128xbf16>, vector<32x128xf32> -> vector<32x128xf32>
    %c0_63 = arith.constant 0 : index
    %c0_64 = arith.constant 0 : index
    %c0_65 = arith.constant 0 : index
    %132 = vector.load %arg15[%c0_63, %c0_64, %c0_65] : memref<2x1x128xf32, #tpu.memory_space<vmem>>, vector<1x1x128xf32>
    %133 = vector.shape_cast %132 : vector<1x1x128xf32> to vector<1x128xf32>
    %134 = vector.broadcast %133 : vector<1x128xf32> to vector<32x128xf32>
    %135 = arith.addf %131, %134 : vector<32x128xf32>
    %136 = arith.addf %83, %135 : vector<32x128xf32>
    %c1 = arith.constant 1 : index
    %c0_66 = arith.constant 0 : index
    %c0_67 = arith.constant 0 : index
    %137 = vector.load %arg4[%c1, %c0_66, %c0_67] : memref<2x1x128xf32, #tpu.memory_space<vmem>>, vector<1x1x128xf32>
    %138 = vector.shape_cast %137 : vector<1x1x128xf32> to vector<1x128xf32>
    %c1_68 = arith.constant 1 : index
    %c0_69 = arith.constant 0 : index
    %c0_70 = arith.constant 0 : index
    %139 = vector.load %arg5[%c1_68, %c0_69, %c0_70] : memref<2x1x128xf32, #tpu.memory_space<vmem>>, vector<1x1x128xf32>
    %140 = vector.shape_cast %139 : vector<1x1x128xf32> to vector<1x128xf32>
    %cst_71 = arith.constant dense<0.000000e+00> : vector<32xf32>
    %141 = vector.multi_reduction <add>, %136, %cst_71 [1] : vector<32x128xf32> to vector<32xf32>
    %142 = vector.shape_cast %141 : vector<32xf32> to vector<32x1xf32>
    %cst_72 = arith.constant 1.280000e+02 : f32
    %143 = vector.broadcast %cst_72 : f32 to vector<32x1xf32>
    %144 = arith.divf %142, %143 : vector<32x1xf32>
    %145 = arith.mulf %136, %136 : vector<32x128xf32>
    %cst_73 = arith.constant dense<0.000000e+00> : vector<32xf32>
    %146 = vector.multi_reduction <add>, %145, %cst_73 [1] : vector<32x128xf32> to vector<32xf32>
    %147 = vector.shape_cast %146 : vector<32xf32> to vector<32x1xf32>
    %cst_74 = arith.constant 1.280000e+02 : f32
    %148 = vector.broadcast %cst_74 : f32 to vector<32x1xf32>
    %149 = arith.divf %147, %148 : vector<32x1xf32>
    %150 = arith.mulf %144, %144 : vector<32x1xf32>
    %151 = arith.subf %149, %150 : vector<32x1xf32>
    %cst_75 = arith.constant 0.000000e+00 : f32
    %152 = vector.broadcast %cst_75 : f32 to vector<32x1xf32>
    %153 = arith.maximumf %151, %152 : vector<32x1xf32>
    %154 = vector.broadcast %144 : vector<32x1xf32> to vector<32x128xf32>
    %155 = arith.subf %136, %154 : vector<32x128xf32>
    %cst_76 = arith.constant 9.99999974E-6 : f32
    %156 = vector.broadcast %cst_76 : f32 to vector<32x1xf32>
    %157 = arith.addf %153, %156 : vector<32x1xf32>
    %158 = math.rsqrt %157 : vector<32x1xf32>
    %159 = vector.broadcast %158 : vector<32x1xf32> to vector<32x128xf32>
    %160 = arith.mulf %155, %159 : vector<32x128xf32>
    %161 = vector.broadcast %138 : vector<1x128xf32> to vector<32x128xf32>
    %162 = arith.mulf %160, %161 : vector<32x128xf32>
    %163 = vector.broadcast %140 : vector<1x128xf32> to vector<32x128xf32>
    %164 = arith.addf %162, %163 : vector<32x128xf32>
    %165 = arith.truncf %164 : vector<32x128xf32> to vector<32x128xbf16>
    %c1_77 = arith.constant 1 : index
    %c0_78 = arith.constant 0 : index
    %c0_79 = arith.constant 0 : index
    %166 = vector.load %arg6[%c1_77, %c0_78, %c0_79] : memref<2x128x384xbf16, #tpu.memory_space<vmem>>, vector<1x128x384xbf16>
    %167 = vector.shape_cast %166 : vector<1x128x384xbf16> to vector<128x384xbf16>
    %cst_80 = arith.constant dense<0.000000e+00> : vector<32x384xf32>
    %168 = tpu.matmul %165, %167, %cst_80 {dimension_numbers = #tpu.dot_dimension_numbers<[1], [0], [0], [1], [0, 0, 1, 1], [], []>} : vector<32x128xbf16>, vector<128x384xbf16>, vector<32x384xf32> -> vector<32x384xf32>
    %c1_81 = arith.constant 1 : index
    %c0_82 = arith.constant 0 : index
    %c0_83 = arith.constant 0 : index
    %169 = vector.load %arg7[%c1_81, %c0_82, %c0_83] : memref<2x1x384xf32, #tpu.memory_space<vmem>>, vector<1x1x384xf32>
    %170 = vector.shape_cast %169 : vector<1x1x384xf32> to vector<1x384xf32>
    %171 = vector.broadcast %170 : vector<1x384xf32> to vector<32x384xf32>
    %172 = arith.addf %168, %171 : vector<32x384xf32>
    %173 = vector.extract_strided_slice %172 {offsets = [0, 0], sizes = [32, 128], strides = [1, 1]} : vector<32x384xf32> to vector<32x128xf32>
    %174 = vector.extract_strided_slice %172 {offsets = [0, 128], sizes = [32, 128], strides = [1, 1]} : vector<32x384xf32> to vector<32x128xf32>
    %175 = vector.extract_strided_slice %172 {offsets = [0, 256], sizes = [32, 128], strides = [1, 1]} : vector<32x384xf32> to vector<32x128xf32>
    %176 = vector.shape_cast %173 : vector<32x128xf32> to vector<2x16x4x32xf32>
    %177 = tpu.transpose %176, [0, 2, 1, 3] : vector<2x16x4x32xf32> -> vector<2x4x16x32xf32>
    %178 = vector.shape_cast %177 : vector<2x4x16x32xf32> to vector<8x16x32xf32>
    %179 = arith.truncf %178 : vector<8x16x32xf32> to vector<8x16x32xbf16>
    %180 = vector.shape_cast %174 : vector<32x128xf32> to vector<2x16x4x32xf32>
    %181 = tpu.transpose %180, [0, 2, 1, 3] : vector<2x16x4x32xf32> -> vector<2x4x16x32xf32>
    %182 = vector.shape_cast %181 : vector<2x4x16x32xf32> to vector<8x16x32xf32>
    %183 = arith.truncf %182 : vector<8x16x32xf32> to vector<8x16x32xbf16>
    %184 = vector.shape_cast %175 : vector<32x128xf32> to vector<2x16x4x32xf32>
    %185 = tpu.transpose %184, [0, 2, 1, 3] : vector<2x16x4x32xf32> -> vector<2x4x16x32xf32>
    %186 = vector.shape_cast %185 : vector<2x4x16x32xf32> to vector<8x16x32xf32>
    %187 = arith.truncf %186 : vector<8x16x32xf32> to vector<8x16x32xbf16>
    "tpu.trace_start"() <{level = 10 : i32, message = "bnd,bmd->bnm"}> : () -> ()
    %cst_84 = arith.constant dense<0.000000e+00> : vector<8x16x16xf32>
    %188 = tpu.matmul %179, %183, %cst_84 {dimension_numbers = #tpu.dot_dimension_numbers<[2], [2], [1], [1], [0, 0, 0, 1, 1, 1], [0], [0]>} : vector<8x16x32xbf16>, vector<8x16x32xbf16>, vector<8x16x16xf32> -> vector<8x16x16xf32>
    "tpu.trace_stop"() : () -> ()
    %cst_85 = arith.constant dense<0xFF800000> : vector<8x16xf32>
    %189 = vector.multi_reduction <maximumf>, %188, %cst_85 [2] : vector<8x16x16xf32> to vector<8x16xf32>
    %190 = vector.shape_cast %189 : vector<8x16xf32> to vector<8x16x1xf32>
    %191 = vector.broadcast %190 : vector<8x16x1xf32> to vector<8x16x16xf32>
    %192 = arith.subf %188, %191 : vector<8x16x16xf32>
    %193 = math.exp %192 : vector<8x16x16xf32>
    %cst_86 = arith.constant dense<0.000000e+00> : vector<8x16xf32>
    %194 = vector.multi_reduction <add>, %193, %cst_86 [2] : vector<8x16x16xf32> to vector<8x16xf32>
    %195 = vector.shape_cast %194 : vector<8x16xf32> to vector<8x16x1xf32>
    %196 = tpu.reciprocal %195 {approx = true} : vector<8x16x1xf32> -> vector<8x16x1xf32>
    %197 = vector.broadcast %196 : vector<8x16x1xf32> to vector<8x16x16xf32>
    %198 = arith.mulf %193, %197 : vector<8x16x16xf32>
    %199 = arith.truncf %198 : vector<8x16x16xf32> to vector<8x16x16xbf16>
    "tpu.trace_start"() <{level = 10 : i32, message = "bnm,bmd->bnd"}> : () -> ()
    %cst_87 = arith.constant dense<0.000000e+00> : vector<8x16x32xf32>
    %200 = tpu.matmul %199, %187, %cst_87 {dimension_numbers = #tpu.dot_dimension_numbers<[2], [1], [1], [2], [0, 0, 0, 1, 1, 2], [0], [0]>} : vector<8x16x16xbf16>, vector<8x16x32xbf16>, vector<8x16x32xf32> -> vector<8x16x32xf32>
    "tpu.trace_stop"() : () -> ()
    %201 = vector.shape_cast %200 : vector<8x16x32xf32> to vector<2x4x16x32xf32>
    %202 = tpu.transpose %201, [0, 2, 1, 3] : vector<2x4x16x32xf32> -> vector<2x16x4x32xf32>
    %203 = vector.shape_cast %202 : vector<2x16x4x32xf32> to vector<32x128xf32>
    %204 = arith.truncf %203 : vector<32x128xf32> to vector<32x128xbf16>
    %c1_88 = arith.constant 1 : index
    %c0_89 = arith.constant 0 : index
    %c0_90 = arith.constant 0 : index
    %205 = vector.load %arg8[%c1_88, %c0_89, %c0_90] : memref<2x128x128xbf16, #tpu.memory_space<vmem>>, vector<1x128x128xbf16>
    %206 = vector.shape_cast %205 : vector<1x128x128xbf16> to vector<128x128xbf16>
    %cst_91 = arith.constant dense<0.000000e+00> : vector<32x128xf32>
    %207 = tpu.matmul %204, %206, %cst_91 {dimension_numbers = #tpu.dot_dimension_numbers<[1], [0], [0], [1], [0, 0, 1, 1], [], []>} : vector<32x128xbf16>, vector<128x128xbf16>, vector<32x128xf32> -> vector<32x128xf32>
    %c1_92 = arith.constant 1 : index
    %c0_93 = arith.constant 0 : index
    %c0_94 = arith.constant 0 : index
    %208 = vector.load %arg9[%c1_92, %c0_93, %c0_94] : memref<2x1x128xf32, #tpu.memory_space<vmem>>, vector<1x1x128xf32>
    %209 = vector.shape_cast %208 : vector<1x1x128xf32> to vector<1x128xf32>
    %210 = vector.broadcast %209 : vector<1x128xf32> to vector<32x128xf32>
    %211 = arith.addf %207, %210 : vector<32x128xf32>
    %212 = arith.addf %136, %211 : vector<32x128xf32>
    %c1_95 = arith.constant 1 : index
    %c0_96 = arith.constant 0 : index
    %c0_97 = arith.constant 0 : index
    %213 = vector.load %arg10[%c1_95, %c0_96, %c0_97] : memref<2x1x128xf32, #tpu.memory_space<vmem>>, vector<1x1x128xf32>
    %214 = vector.shape_cast %213 : vector<1x1x128xf32> to vector<1x128xf32>
    %c1_98 = arith.constant 1 : index
    %c0_99 = arith.constant 0 : index
    %c0_100 = arith.constant 0 : index
    %215 = vector.load %arg11[%c1_98, %c0_99, %c0_100] : memref<2x1x128xf32, #tpu.memory_space<vmem>>, vector<1x1x128xf32>
    %216 = vector.shape_cast %215 : vector<1x1x128xf32> to vector<1x128xf32>
    %cst_101 = arith.constant dense<0.000000e+00> : vector<32xf32>
    %217 = vector.multi_reduction <add>, %212, %cst_101 [1] : vector<32x128xf32> to vector<32xf32>
    %218 = vector.shape_cast %217 : vector<32xf32> to vector<32x1xf32>
    %cst_102 = arith.constant 1.280000e+02 : f32
    %219 = vector.broadcast %cst_102 : f32 to vector<32x1xf32>
    %220 = arith.divf %218, %219 : vector<32x1xf32>
    %221 = arith.mulf %212, %212 : vector<32x128xf32>
    %cst_103 = arith.constant dense<0.000000e+00> : vector<32xf32>
    %222 = vector.multi_reduction <add>, %221, %cst_103 [1] : vector<32x128xf32> to vector<32xf32>
    %223 = vector.shape_cast %222 : vector<32xf32> to vector<32x1xf32>
    %cst_104 = arith.constant 1.280000e+02 : f32
    %224 = vector.broadcast %cst_104 : f32 to vector<32x1xf32>
    %225 = arith.divf %223, %224 : vector<32x1xf32>
    %226 = arith.mulf %220, %220 : vector<32x1xf32>
    %227 = arith.subf %225, %226 : vector<32x1xf32>
    %cst_105 = arith.constant 0.000000e+00 : f32
    %228 = vector.broadcast %cst_105 : f32 to vector<32x1xf32>
    %229 = arith.maximumf %227, %228 : vector<32x1xf32>
    %230 = vector.broadcast %220 : vector<32x1xf32> to vector<32x128xf32>
    %231 = arith.subf %212, %230 : vector<32x128xf32>
    %cst_106 = arith.constant 9.99999974E-6 : f32
    %232 = vector.broadcast %cst_106 : f32 to vector<32x1xf32>
    %233 = arith.addf %229, %232 : vector<32x1xf32>
    %234 = math.rsqrt %233 : vector<32x1xf32>
    %235 = vector.broadcast %234 : vector<32x1xf32> to vector<32x128xf32>
    %236 = arith.mulf %231, %235 : vector<32x128xf32>
    %237 = vector.broadcast %214 : vector<1x128xf32> to vector<32x128xf32>
    %238 = arith.mulf %236, %237 : vector<32x128xf32>
    %239 = vector.broadcast %216 : vector<1x128xf32> to vector<32x128xf32>
    %240 = arith.addf %238, %239 : vector<32x128xf32>
    %241 = arith.truncf %240 : vector<32x128xf32> to vector<32x128xbf16>
    %c1_107 = arith.constant 1 : index
    %c0_108 = arith.constant 0 : index
    %c0_109 = arith.constant 0 : index
    %242 = vector.load %arg12[%c1_107, %c0_108, %c0_109] : memref<2x128x512xbf16, #tpu.memory_space<vmem>>, vector<1x128x512xbf16>
    %243 = vector.shape_cast %242 : vector<1x128x512xbf16> to vector<128x512xbf16>
    %cst_110 = arith.constant dense<0.000000e+00> : vector<32x512xf32>
    %244 = tpu.matmul %241, %243, %cst_110 {dimension_numbers = #tpu.dot_dimension_numbers<[1], [0], [0], [1], [0, 0, 1, 1], [], []>} : vector<32x128xbf16>, vector<128x512xbf16>, vector<32x512xf32> -> vector<32x512xf32>
    %c1_111 = arith.constant 1 : index
    %c0_112 = arith.constant 0 : index
    %c0_113 = arith.constant 0 : index
    %245 = vector.load %arg13[%c1_111, %c0_112, %c0_113] : memref<2x1x512xf32, #tpu.memory_space<vmem>>, vector<1x1x512xf32>
    %246 = vector.shape_cast %245 : vector<1x1x512xf32> to vector<1x512xf32>
    %247 = vector.broadcast %246 : vector<1x512xf32> to vector<32x512xf32>
    %248 = arith.addf %244, %247 : vector<32x512xf32>
    %cst_114 = arith.constant 5.000000e-01 : f32
    %249 = vector.broadcast %cst_114 : f32 to vector<32x512xf32>
    %250 = arith.mulf %249, %248 : vector<32x512xf32>
    %cst_115 = arith.constant 0.707106769 : f32
    %251 = vector.broadcast %cst_115 : f32 to vector<32x512xf32>
    %252 = arith.mulf %248, %251 : vector<32x512xf32>
    %253 = math.erf %252 : vector<32x512xf32>
    %cst_116 = arith.constant 1.000000e+00 : f32
    %254 = vector.broadcast %cst_116 : f32 to vector<32x512xf32>
    %255 = arith.addf %254, %253 : vector<32x512xf32>
    %256 = arith.mulf %250, %255 : vector<32x512xf32>
    %257 = arith.truncf %256 : vector<32x512xf32> to vector<32x512xbf16>
    %c1_117 = arith.constant 1 : index
    %c0_118 = arith.constant 0 : index
    %c0_119 = arith.constant 0 : index
    %258 = vector.load %arg14[%c1_117, %c0_118, %c0_119] : memref<2x512x128xbf16, #tpu.memory_space<vmem>>, vector<1x512x128xbf16>
    %259 = vector.shape_cast %258 : vector<1x512x128xbf16> to vector<512x128xbf16>
    %cst_120 = arith.constant dense<0.000000e+00> : vector<32x128xf32>
    %260 = tpu.matmul %257, %259, %cst_120 {dimension_numbers = #tpu.dot_dimension_numbers<[1], [0], [0], [1], [0, 0, 1, 1], [], []>} : vector<32x512xbf16>, vector<512x128xbf16>, vector<32x128xf32> -> vector<32x128xf32>
    %c1_121 = arith.constant 1 : index
    %c0_122 = arith.constant 0 : index
    %c0_123 = arith.constant 0 : index
    %261 = vector.load %arg15[%c1_121, %c0_122, %c0_123] : memref<2x1x128xf32, #tpu.memory_space<vmem>>, vector<1x1x128xf32>
    %262 = vector.shape_cast %261 : vector<1x1x128xf32> to vector<1x128xf32>
    %263 = vector.broadcast %262 : vector<1x128xf32> to vector<32x128xf32>
    %264 = arith.addf %260, %263 : vector<32x128xf32>
    %265 = arith.addf %212, %264 : vector<32x128xf32>
    %266 = vector.shape_cast %265 : vector<32x128xf32> to vector<2x16x128xf32>
    %cst_124 = arith.constant dense<0.000000e+00> : vector<2x128xf32>
    %267 = vector.multi_reduction <add>, %266, %cst_124 [1] : vector<2x16x128xf32> to vector<2x128xf32>
    %cst_125 = arith.constant 1.600000e+01 : f32
    %268 = vector.broadcast %cst_125 : f32 to vector<2x128xf32>
    %269 = arith.divf %267, %268 : vector<2x128xf32>
    %270 = arith.truncf %269 : vector<2x128xf32> to vector<2x128xbf16>
    %c0_126 = arith.constant 0 : index
    %c0_127 = arith.constant 0 : index
    %271 = vector.load %arg16[%c0_126, %c0_127] : memref<128x128xbf16, #tpu.memory_space<vmem>>, vector<128x128xbf16>
    %cst_128 = arith.constant dense<0.000000e+00> : vector<2x128xf32>
    %272 = tpu.matmul %270, %271, %cst_128 {dimension_numbers = #tpu.dot_dimension_numbers<[1], [0], [0], [1], [0, 0, 1, 1], [], []>} : vector<2x128xbf16>, vector<128x128xbf16>, vector<2x128xf32> -> vector<2x128xf32>
    %c0_129 = arith.constant 0 : index
    %c0_130 = arith.constant 0 : index
    %273 = vector.load %arg17[%c0_129, %c0_130] : memref<1x128xf32, #tpu.memory_space<vmem>>, vector<1x128xf32>
    %274 = vector.broadcast %273 : vector<1x128xf32> to vector<2x128xf32>
    %275 = arith.addf %272, %274 : vector<2x128xf32>
    %c0_131 = arith.constant 0 : index
    %c0_132 = arith.constant 0 : index
    %276 = vector.load %arg18[%c0_131, %c0_132] : memref<2x128xf32, #tpu.memory_space<vmem>>, vector<2x128xf32>
    tpu.vector_store %arg18[%c0_131, %c0_132], %275 {strides = array<i32>} : memref<2x128xf32, #tpu.memory_space<vmem>>, vector<2x128xf32>,
    return
  }
}

</mosaic_0001>

<llo_original>
// kernel: model_forward.1
$region0: #{model_forward.1}
  #allocation0 [shape = 'u32[]', space=smem, size = 0x4, offset = 0x4, fixed_abs, tag = 'smem constant byte address 0x4 - core index']
  #allocation1 [shape = 'u32[72,128]{1,0:T(1,128)}', space=vmem, size = 0x9000, scoped, tag = 'internal scratch']
  %s0 = inlined_call_operand.vmem [shape: bf16[32,64], index: 0, kind: input, shape index: {}]
  %s1 = inlined_call_operand.vmem [shape: bf16[64,128], index: 1, kind: input, shape index: {}]
  %s2 = inlined_call_operand.vmem [shape: f32[1,128], index: 2, kind: input, shape index: {}]
  %s3 = inlined_call_operand.vmem [shape: f32[32,128], index: 3, kind: input, shape index: {}]
  %s4 = inlined_call_operand.vmem [shape: f32[2,1,128], index: 4, kind: input, shape index: {}]
  %s5 = inlined_call_operand.vmem [shape: f32[2,1,128], index: 5, kind: input, shape index: {}]
  %s6 = inlined_call_operand.vmem [shape: bf16[2,128,384], index: 6, kind: input, shape index: {}]
  %s7 = inlined_call_operand.vmem [shape: f32[2,1,384], index: 7, kind: input, shape index: {}]
  %s8 = inlined_call_operand.hbm [shape: bf16[2,128,128], index: 8, kind: input, shape index: {}]
  %s9 = inlined_call_operand.vmem [shape: f32[2,1,128], index: 9, kind: input, shape index: {}]
  %s10 = inlined_call_operand.vmem [shape: f32[2,1,128], index: 10, kind: input, shape index: {}]
  %s11 = inlined_call_operand.vmem [shape: f32[2,1,128], index: 11, kind: input, shape index: {}]
  %s12 = inlined_call_operand.vmem [shape: bf16[2,128,512], index: 12, kind: input, shape index: {}]
  %s13 = inlined_call_operand.vmem [shape: f32[2,1,512], index: 13, kind: input, shape index: {}]
  %s14 = inlined_call_operand.hbm [shape: bf16[2,512,128], index: 14, kind: input, shape index: {}]
  %s15 = inlined_call_operand.vmem [shape: f32[2,1,128], index: 15, kind: input, shape index: {}]
  %s16 = inlined_call_operand.vmem [shape: bf16[128,128], index: 16, kind: input, shape index: {}]
  %s17 = inlined_call_operand.vmem [shape: f32[1,128], index: 17, kind: input, shape index: {}]
  %s18 = inlined_call_operand.hbm [shape: f32[2,128], index: 18, kind: output, shape index: {}]
  %s19 = sld [smem:[#allocation0]]
  $region90: #{model_forward.1} parent=0
    _
  %s21 = ssub.s32 1, %s19
  %s22 = scalar_select 0, %s21, %s19
  $region1: #{model_forward.1} parent=0
    #allocation2 [shape = 'u8[65536]{0}', space=vmem, size = 0x10000, scoped, tag = 'input window, operand 8, single buffered']
    #allocation3 [shape = 's32[1]{0}', space=sflag, size = 0x4, scoped, tag = 'scoped memory for model_forward.1']
    #allocation4 [shape = 's32[1]{0}', space=sflag, size = 0x4, scoped, tag = 'scoped memory for model_forward.1']
    #allocation5 [shape = 'u8[262144]{0}', space=vmem, size = 0x40000, scoped, tag = 'input window, operand 14, single buffered']
    #allocation6 [shape = 's32[1]{0}', space=sflag, size = 0x4, scoped, tag = 'scoped memory for model_forward.1']
    #allocation7 [shape = 'u8[1024]{0}', space=vmem, size = 0x400, scoped, tag = 'output window, operand 0, single buffered']
    %23 = vsyncpa [#allocation3], 0
    %24 = vsyncpa [#allocation6], 0
    %25 = vsyncpa [#allocation4], 0
    // Predicated region
    $region2: #{model_forward.1} parent=1 // pred_check
      _
    $region3: #{model_forward.1} parent=1 // pred_check_branch
      %27 = sbr.rel (0) target = $region5
    $region4: #{model_forward.1} parent=1 // pred_region
      _
    $region5: #{model_forward.1} parent=1 // pred_fallthru
      _
    // Predicated region
    $region6: #{model_forward.1} parent=1 // pred_check
      _
    $region7: #{model_forward.1} parent=1 // pred_check_branch
      %29 = sbr.rel (0) target = $region9
    $region8: #{model_forward.1} parent=1 // pred_region
      _
    $region9: #{model_forward.1} parent=1 // pred_fallthru
      _
    // Predicated region
    $region10: #{model_forward.1} parent=1 // pred_check
      _
    $region11: #{model_forward.1} parent=1 // pred_check_branch
      %31 = sbr.rel (0) target = $region13
    $region12: #{model_forward.1} parent=1 // pred_region
      _
    $region13: #{model_forward.1} parent=1 // pred_fallthru
      _
    // Predicated region
    $region14: #{model_forward.1} parent=1 // pred_check
      _
    $region15: #{model_forward.1} parent=1 // pred_check_branch
      %33 = sbr.rel (0) target = $region17
    $region16: #{model_forward.1} parent=1 // pred_region
      _
    $region17: #{model_forward.1} parent=1 // pred_fallthru
      _
    // Predicated region
    $region18: #{model_forward.1} parent=1 // pred_check
      _
    $region19: #{model_forward.1} parent=1 // pred_check_branch
      %35 = sbr.rel (0) target = $region21
    $region20: #{model_forward.1} parent=1 // pred_region
      _
    $region21: #{model_forward.1} parent=1 // pred_fallthru
      _
    // Predicated region
    $region22: #{model_forward.1} parent=1 // pred_check
      _
    $region23: #{model_forward.1} parent=1 // pred_check_branch
      %37 = sbr.rel (0) target = $region25
    $region24: #{model_forward.1} parent=1 // pred_region
      _
    $region25: #{model_forward.1} parent=1 // pred_fallthru
      _
    // Predicated region
    $region26: #{model_forward.1} parent=1 // pred_check
      _
    $region27: #{model_forward.1} parent=1 // pred_check_branch
      %39 = sbr.rel (0) target = $region29
    $region28: #{model_forward.1} parent=1 // pred_region
      _
    $region29: #{model_forward.1} parent=1 // pred_fallthru
      _
    // Predicated region
    $region30: #{model_forward.1} parent=1 // pred_check
      _
    $region31: #{model_forward.1} parent=1 // pred_check_branch
      %41 = sbr.rel (0) target = $region33
    $region32: #{model_forward.1} parent=1 // pred_region
      _
    $region33: #{model_forward.1} parent=1 // pred_fallthru
      _
    // Predicated region
    $region34: #{model_forward.1} parent=1 // pred_check
      _
    $region35: #{model_forward.1} parent=1 // pred_check_branch
      %43 = sbr.rel (0) target = $region37
    $region36: #{model_forward.1} parent=1 // pred_region
      %45 = vsyncadd [#allocation3], 0
      %s46 = sshll.u32 %s8, 4
      %s47 = int_to_ptr.hbm [resolvable:$true] %s46
      %s48 = sshll.u32 [#allocation2], 4
      %s49 = int_to_ptr.vmem [resolvable:$true] %s48
      %54 = dma.hbm_to_vmem [thread:$0]  %s47, 2048, %s49, [#allocation3], 64, 64, 4
    $region37: #{model_forward.1} parent=1 // pred_fallthru
      _
    // Predicated region
    $region38: #{model_forward.1} parent=1 // pred_check
      _
    $region39: #{model_forward.1} parent=1 // pred_check_branch
      %56 = sbr.rel (0) target = $region41
    $region40: #{model_forward.1} parent=1 // pred_region
      _
    $region41: #{model_forward.1} parent=1 // pred_fallthru
      _
    // Predicated region
    $region42: #{model_forward.1} parent=1 // pred_check
      _
    $region43: #{model_forward.1} parent=1 // pred_check_branch
      %58 = sbr.rel (0) target = $region45
    $region44: #{model_forward.1} parent=1 // pred_region
      _
    $region45: #{model_forward.1} parent=1 // pred_fallthru
      _
    // Predicated region
    $region46: #{model_forward.1} parent=1 // pred_check
      _
    $region47: #{model_forward.1} parent=1 // pred_check_branch
      %60 = sbr.rel (0) target = $region49
    $region48: #{model_forward.1} parent=1 // pred_region
      _
    $region49: #{model_forward.1} parent=1 // pred_fallthru
      _
    // Predicated region
    $region50: #{model_forward.1} parent=1 // pred_check
      _
    $region51: #{model_forward.1} parent=1 // pred_check_branch
      %62 = sbr.rel (0) target = $region53
    $region52: #{model_forward.1} parent=1 // pred_region
      _
    $region53: #{model_forward.1} parent=1 // pred_fallthru
      _
    // Predicated region
    $region54: #{model_forward.1} parent=1 // pred_check
      _
    $region55: #{model_forward.1} parent=1 // pred_check_branch
      %64 = sbr.rel (0) target = $region57
    $region56: #{model_forward.1} parent=1 // pred_region
      _
    $region57: #{model_forward.1} parent=1 // pred_fallthru
      _
    // Predicated region
    $region58: #{model_forward.1} parent=1 // pred_check
      _
    $region59: #{model_forward.1} parent=1 // pred_check_branch
      %66 = sbr.rel (0) target = $region61
    $region60: #{model_forward.1} parent=1 // pred_region
      %68 = vsyncadd [#allocation6], 0
      %s69 = sshll.u32 %s14, 4
      %s70 = int_to_ptr.hbm [resolvable:$true] %s69
      %s71 = sshll.u32 [#allocation5], 4
      %s72 = int_to_ptr.vmem [resolvable:$true] %s71
      %77 = dma.hbm_to_vmem [thread:$0]  %s70, 8192, %s72, [#allocation6], 64, 64, 4
    $region61: #{model_forward.1} parent=1 // pred_fallthru
      _
    // Predicated region
    $region62: #{model_forward.1} parent=1 // pred_check
      _
    $region63: #{model_forward.1} parent=1 // pred_check_branch
      %79 = sbr.rel (0) target = $region65
    $region64: #{model_forward.1} parent=1 // pred_region
      _
    $region65: #{model_forward.1} parent=1 // pred_fallthru
      _
    // Predicated region
    $region66: #{model_forward.1} parent=1 // pred_check
      _
    $region67: #{model_forward.1} parent=1 // pred_check_branch
      %81 = sbr.rel (0) target = $region69
    $region68: #{model_forward.1} parent=1 // pred_region
      _
    $region69: #{model_forward.1} parent=1 // pred_fallthru
      _
    // Predicated region
    $region70: #{model_forward.1} parent=1 // pred_check
      _
    $region71: #{model_forward.1} parent=1 // pred_check_branch
      %83 = sbr.rel (0) target = $region73
    $region72: #{model_forward.1} parent=1 // pred_region
      _
    $region73: #{model_forward.1} parent=1 // pred_fallthru
      _
    // Predicated region
    $region74: #{model_forward.1} parent=1 // pred_check
      _
    $region75: #{model_forward.1} parent=1 // pred_check_branch
      %85 = sbr.rel (0) target = $region77
    $region76: #{model_forward.1} parent=1 // pred_region
      %87 = dma.done [#allocation3], 2048
    $region77: #{model_forward.1} parent=1 // pred_fallthru
      _
    // Predicated region
    $region78: #{model_forward.1} parent=1 // pred_check
      _
    $region79: #{model_forward.1} parent=1 // pred_check_branch
      %89 = sbr.rel (0) target = $region81
    $region80: #{model_forward.1} parent=1 // pred_region
      %91 = dma.done [#allocation6], 8192
    $region81: #{model_forward.1} parent=1 // pred_fallthru
      _
    %v93 = vld [vmem:[%s0] sm:$0xf]
    %v94 = vld [vmem:[%s0 + $0x4] sm:$0xf]
    %v95 = vld [vmem:[%s0 + $0x8] sm:$0xf]
    %v96 = vld [vmem:[%s0 + $0xc] sm:$0xf]
    %v97 = vld [vmem:[%s1] sm:$0xf]
    %v98 = vld [vmem:[%s1 + $0x4] sm:$0xf]
    %v99 = vld [vmem:[%s1 + $0x8] sm:$0xf]
    %v100 = vld [vmem:[%s1 + $0xc] sm:$0xf]
    %v101 = vld [vmem:[%s1 + $0x10] sm:$0xf]
    %v102 = vld [vmem:[%s1 + $0x14] sm:$0xf]
    %v103 = vld [vmem:[%s1 + $0x18] sm:$0xf]
    %v104 = vld [vmem:[%s1 + $0x1c] sm:$0xf]
    %v105 = vld [vmem:[%s2] sm:$0x1]
    %v107 = vperm.slane %v105, 0
    %v113 = vunpack.c.l.b16 %v93
    %v114 = vunpack.c.l.b16 %v94
    %v115 = vunpack.c.l.b16 %v95
    %v116 = vunpack.c.l.b16 %v96
    %v117 = vpack.c.b16 %v114, %v113
    %v118 = vpack.c.b16 %v116, %v115
    %v127 = vunpack.c.l.b16 %v97
    %v128 = vunpack.c.l.b16 %v98
    %v129 = vunpack.c.l.b16 %v99
    %v130 = vunpack.c.l.b16 %v100
    %v131 = vunpack.c.l.b16 %v101
    %v132 = vunpack.c.l.b16 %v102
    %v133 = vunpack.c.l.b16 %v103
    %v134 = vunpack.c.l.b16 %v104
    %v135 = vpack.c.b16 %v128, %v127
    %v136 = vpack.c.b16 %v130, %v129
    %v137 = vpack.c.b16 %v132, %v131
    %v138 = vpack.c.b16 %v134, %v133
    %vm143 = vcmask 523264
    %v145 = vsel %vm143, %v117, 0
    %v148 = vsel %vm143, %v118, 0
    %150 = vmatpush.bf16.msra.mxu0 0
    %151 = vmatpush.bf16.msra.mxu0 0
    %152 = vmatpush.bf16.msra.mxu0 0
    %153 = vmatpush.bf16.msra.mxu0 0
    %154 = vmatpush.bf16.msra.mxu0 %v138
    %155 = vmatpush.bf16.msra.mxu0 %v137
    %156 = vmatpush.bf16.msra.mxu0 %v136
    %157 = vmatpush.bf16.msra.mxu0 %v135
    %158 = vmatmul.bf16.gmra.mxu0 %v145
    %v159 = vpop.f32.mrf.mxu0
    %v160 = vadd.f32 %v107, %v159
    %v161 = vpop.f32.mrf.mxu0
    %v162 = vadd.f32 %v107, %v161
    %163 = vmatmul.bf16.gmra.mxu0 %v148
    %v164 = vpop.f32.mrf.mxu0
    %v165 = vadd.f32 %v107, %v164
    %v166 = vpop.f32.mrf.mxu0
    %v167 = vadd.f32 %v107, %v166
    %168 = vdwg.mxu0
    %v169 = vld [vmem:[%s3] sm:$0xff]
    %v170 = vld [vmem:[%s3 + $0x8] sm:$0xff]
    %v171 = vld [vmem:[%s3 + $0x10] sm:$0xff]
    %v172 = vld [vmem:[%s3 + $0x18] sm:$0xff]
    %v173 = vadd.f32 %v160, %v169
    %v174 = vadd.f32 %v162, %v170
    %v175 = vadd.f32 %v165, %v171
    %v176 = vadd.f32 %v167, %v172
    %v177 = vld [vmem:[%s4] sm:$0x1]
    %v178 = vld [vmem:[%s5] sm:$0x1]
    %179 = vadd.xlane.f32.xlu0 %v173
    %v180 = vpop.xlane.xlu0 %179
    %181 = vadd.xlane.f32.xlu0 %v174
    %v182 = vpop.xlane.xlu0 %181
    %183 = vadd.xlane.f32.xlu0 %v175
    %v184 = vpop.xlane.xlu0 %183
    %185 = vadd.xlane.f32.xlu0 %v176
    %v186 = vpop.xlane.xlu0 %185
    %v187 = vrcp.pop 128.0
    %v188 = vmul.f32 128.0, %v187
    %v189 = vsub.f32 1.0, %v188
    %v190 = vmul.f32 %v187, %v189
    %v191 = vadd.f32 %v187, %v190
    %vm192 = vweird.f32 %v187
    %v193 = vsel %vm192, %v187, %v191
    %v194 = vmul.f32 %v180, %v193
    %v195 = vmul.f32 %v182, %v193
    %v196 = vmul.f32 %v184, %v193
    %v197 = vmul.f32 %v186, %v193
    %v198 = vmul.f32 %v173, %v173
    %v199 = vmul.f32 %v174, %v174
    %v200 = vmul.f32 %v175, %v175
    %v201 = vmul.f32 %v176, %v176
    %202 = vadd.xlane.f32.xlu0 %v198
    %v203 = vpop.xlane.xlu0 %202
    %204 = vadd.xlane.f32.xlu0 %v199
    %v205 = vpop.xlane.xlu0 %204
    %206 = vadd.xlane.f32.xlu0 %v200
    %v207 = vpop.xlane.xlu0 %206
    %208 = vadd.xlane.f32.xlu0 %v201
    %v209 = vpop.xlane.xlu0 %208
    %v210 = vmul.f32 %v203, %v193
    %v211 = vmul.f32 %v205, %v193
    %v212 = vmul.f32 %v207, %v193
    %v213 = vmul.f32 %v209, %v193
    %v214 = vmul.f32 %v194, %v194
    %v215 = vmul.f32 %v195, %v195
    %v216 = vmul.f32 %v196, %v196
    %v217 = vmul.f32 %v197, %v197
    %v218 = vsub.f32 %v210, %v214
    %v219 = vsub.f32 %v211, %v215
    %v220 = vsub.f32 %v212, %v216
    %v221 = vsub.f32 %v213, %v217
    %v222 = vmax.f32 %v218, 0.0
    %v223 = vmax.f32 %v219, 0.0
    %v224 = vmax.f32 %v220, 0.0
    %v225 = vmax.f32 %v221, 0.0
    %v226 = vsub.f32 %v173, %v194
    %v227 = vsub.f32 %v174, %v195
    %v228 = vsub.f32 %v175, %v196
    %v229 = vsub.f32 %v176, %v197
    %v230 = vadd.f32 %v222, 1e-05
    %v231 = vadd.f32 %v223, 1e-05
    %v232 = vadd.f32 %v224, 1e-05
    %v233 = vadd.f32 %v225, 1e-05
    %v234 = vrsqrt.pop %v230
    %v235 = vmul.f32 %v234, %v230
    %v236 = vmul.f32 %v235, %v234
    %v237 = vmul.f32 0.5, %v236
    %v238 = vsub.f32 1.5, %v237
    %v239 = vmul.f32 %v234, %v238
    %vm240 = vweird.f32 %v230
    %vm241 = vweird.f32 %v234
    %vm242 = vmor %vm240, %vm241
    %v243 = vsel %vm242, %v234, %v239
    %v244 = vrsqrt.pop %v231
    %v245 = vmul.f32 %v244, %v231
    %v246 = vmul.f32 %v245, %v244
    %v247 = vmul.f32 0.5, %v246
    %v248 = vsub.f32 1.5, %v247
    %v249 = vmul.f32 %v244, %v248
    %vm250 = vweird.f32 %v231
    %vm251 = vweird.f32 %v244
    %vm252 = vmor %vm250, %vm251
    %v253 = vsel %vm252, %v244, %v249
    %v254 = vrsqrt.pop %v232
    %v255 = vmul.f32 %v254, %v232
    %v256 = vmul.f32 %v255, %v254
    %v257 = vmul.f32 0.5, %v256
    %v258 = vsub.f32 1.5, %v257
    %v259 = vmul.f32 %v254, %v258
    %vm260 = vweird.f32 %v232
    %vm261 = vweird.f32 %v254
    %vm262 = vmor %vm260, %vm261
    %v263 = vsel %vm262, %v254, %v259
    %v264 = vrsqrt.pop %v233
    %v265 = vmul.f32 %v264, %v233
    %v266 = vmul.f32 %v265, %v264
    %v267 = vmul.f32 0.5, %v266
    %v268 = vsub.f32 1.5, %v267
    %v269 = vmul.f32 %v264, %v268
    %vm270 = vweird.f32 %v233
    %vm271 = vweird.f32 %v264
    %vm272 = vmor %vm270, %vm271
    %v273 = vsel %vm272, %v264, %v269
    %v274 = vmul.f32 %v226, %v243
    %v275 = vmul.f32 %v227, %v253
    %v276 = vmul.f32 %v228, %v263
    %v277 = vmul.f32 %v229, %v273
    %v279 = vperm.slane %v177, 0
    %v281 = vmul.f32 %v274, %v279
    %v282 = vmul.f32 %v275, %v279
    %v283 = vmul.f32 %v276, %v279
    %v284 = vmul.f32 %v277, %v279
    %v286 = vperm.slane %v178, 0
    %v288 = vadd.f32 %v281, %v286
    %v289 = vadd.f32 %v282, %v286
    %v290 = vadd.f32 %v283, %v286
    %v291 = vadd.f32 %v284, %v286
    %v292 = vpack.c.bf16 %v289, %v288
    %v293 = vpack.c.bf16 %v291, %v290
    %v294 = vld [vmem:[%s6] sm:$0xff]
    %v295 = vld [vmem:[%s6 + $0x8] sm:$0xf]
    %v296 = vld [vmem:[%s6 + $0xc] sm:$0xff]
    %v297 = vld [vmem:[%s6 + $0x14] sm:$0xf]
    %v298 = vld [vmem:[%s6 + $0x18] sm:$0xff]
    %v299 = vld [vmem:[%s6 + $0x20] sm:$0xf]
    %v300 = vld [vmem:[%s6 + $0x24] sm:$0xff]
    %v301 = vld [vmem:[%s6 + $0x2c] sm:$0xf]
    %v302 = vld [vmem:[%s6 + $0x30] sm:$0xff]
    %v303 = vld [vmem:[%s6 + $0x38] sm:$0xf]
    %v304 = vld [vmem:[%s6 + $0x3c] sm:$0xff]
    %v305 = vld [vmem:[%s6 + $0x44] sm:$0xf]
    %v306 = vld [vmem:[%s6 + $0x48] sm:$0xff]
    %v307 = vld [vmem:[%s6 + $0x50] sm:$0xf]
    %v308 = vld [vmem:[%s6 + $0x54] sm:$0xff]
    %v309 = vld [vmem:[%s6 + $0x5c] sm:$0xf]
    %v310 = vld [vmem:[%s6 + $0x60] sm:$0xff]
    %v311 = vld [vmem:[%s6 + $0x68] sm:$0xf]
    %v312 = vld [vmem:[%s6 + $0x6c] sm:$0xff]
    %v313 = vld [vmem:[%s6 + $0x74] sm:$0xf]
    %v314 = vld [vmem:[%s6 + $0x78] sm:$0xff]
    %v315 = vld [vmem:[%s6 + $0x80] sm:$0xf]
    %v316 = vld [vmem:[%s6 + $0x84] sm:$0xff]
    %v317 = vld [vmem:[%s6 + $0x8c] sm:$0xf]
    %v318 = vld [vmem:[%s6 + $0x90] sm:$0xff]
    %v319 = vld [vmem:[%s6 + $0x98] sm:$0xf]
    %v320 = vld [vmem:[%s6 + $0x9c] sm:$0xff]
    %v321 = vld [vmem:[%s6 + $0xa4] sm:$0xf]
    %v322 = vld [vmem:[%s6 + $0xa8] sm:$0xff]
    %v323 = vld [vmem:[%s6 + $0xb0] sm:$0xf]
    %v324 = vld [vmem:[%s6 + $0xb4] sm:$0xff]
    %v325 = vld [vmem:[%s6 + $0xbc] sm:$0xf]
    %v326 = vld [vmem:[%s7] sm:$0x7]
    %v328 = vperm.slane %v326, 0
    %v329 = vperm.slane %v326, 1
    %v330 = vperm.slane %v326, 2
    %v366 = vunpack.c.l.b16 %v294
    %v367 = vunpack.c.h.b16 %v294
    %v368 = vunpack.c.l.b16 %v295
    %v369 = vunpack.c.l.b16 %v296
    %v370 = vunpack.c.h.b16 %v296
    %v371 = vunpack.c.l.b16 %v297
    %v372 = vunpack.c.l.b16 %v298
    %v373 = vunpack.c.h.b16 %v298
    %v374 = vunpack.c.l.b16 %v299
    %v375 = vunpack.c.l.b16 %v300
    %v376 = vunpack.c.h.b16 %v300
    %v377 = vunpack.c.l.b16 %v301
    %v378 = vunpack.c.l.b16 %v302
    %v379 = vunpack.c.h.b16 %v302
    %v380 = vunpack.c.l.b16 %v303
    %v381 = vunpack.c.l.b16 %v304
    %v382 = vunpack.c.h.b16 %v304
    %v383 = vunpack.c.l.b16 %v305
    %v384 = vunpack.c.l.b16 %v306
    %v385 = vunpack.c.h.b16 %v306
    %v386 = vunpack.c.l.b16 %v307
    %v387 = vunpack.c.l.b16 %v308
    %v388 = vunpack.c.h.b16 %v308
    %v389 = vunpack.c.l.b16 %v309
    %v390 = vunpack.c.l.b16 %v310
    %v391 = vunpack.c.h.b16 %v310
    %v392 = vunpack.c.l.b16 %v311
    %v393 = vunpack.c.l.b16 %v312
    %v394 = vunpack.c.h.b16 %v312
    %v395 = vunpack.c.l.b16 %v313
    %v396 = vunpack.c.l.b16 %v314
    %v397 = vunpack.c.h.b16 %v314
    %v398 = vunpack.c.l.b16 %v315
    %v399 = vunpack.c.l.b16 %v316
    %v400 = vunpack.c.h.b16 %v316
    %v401 = vunpack.c.l.b16 %v317
    %v402 = vunpack.c.l.b16 %v318
    %v403 = vunpack.c.h.b16 %v318
    %v404 = vunpack.c.l.b16 %v319
    %v405 = vunpack.c.l.b16 %v320
    %v406 = vunpack.c.h.b16 %v320
    %v407 = vunpack.c.l.b16 %v321
    %v408 = vunpack.c.l.b16 %v322
    %v409 = vunpack.c.h.b16 %v322
    %v410 = vunpack.c.l.b16 %v323
    %v411 = vunpack.c.l.b16 %v324
    %v412 = vunpack.c.h.b16 %v324
    %v413 = vunpack.c.l.b16 %v325
    %v414 = vpack.c.b16 %v369, %v366
    %v415 = vpack.c.b16 %v370, %v367
    %v416 = vpack.c.b16 %v371, %v368
    %v417 = vpack.c.b16 %v375, %v372
    %v418 = vpack.c.b16 %v376, %v373
    %v419 = vpack.c.b16 %v377, %v374
    %v420 = vpack.c.b16 %v381, %v378
    %v421 = vpack.c.b16 %v382, %v379
    %v422 = vpack.c.b16 %v383, %v380
    %v423 = vpack.c.b16 %v387, %v384
    %v424 = vpack.c.b16 %v388, %v385
    %v425 = vpack.c.b16 %v389, %v386
    %v426 = vpack.c.b16 %v393, %v390
    %v427 = vpack.c.b16 %v394, %v391
    %v428 = vpack.c.b16 %v395, %v392
    %v429 = vpack.c.b16 %v399, %v396
    %v430 = vpack.c.b16 %v400, %v397
    %v431 = vpack.c.b16 %v401, %v398
    %v432 = vpack.c.b16 %v405, %v402
    %v433 = vpack.c.b16 %v406, %v403
    %v434 = vpack.c.b16 %v407, %v404
    %v435 = vpack.c.b16 %v411, %v408
    %v436 = vpack.c.b16 %v412, %v409
    %v437 = vpack.c.b16 %v413, %v410
    %462 = vmatpush.bf16.msra.mxu0 %v435
    %463 = vmatpush.bf16.msra.mxu0 %v432
    %464 = vmatpush.bf16.msra.mxu0 %v429
    %465 = vmatpush.bf16.msra.mxu0 %v426
    %466 = vmatpush.bf16.msra.mxu0 %v423
    %467 = vmatpush.bf16.msra.mxu0 %v420
    %468 = vmatpush.bf16.msra.mxu0 %v417
    %469 = vmatpush.bf16.msra.mxu0 %v414
    %470 = vmatmul.bf16.gmra.mxu0 %v292
    %v471 = vpop.f32.mrf.mxu0
    %v472 = vadd.f32 %v328, %v471
    %v473 = vpop.f32.mrf.mxu0
    %v474 = vadd.f32 %v328, %v473
    %475 = vmatmul.bf16.gmra.mxu0 %v293
    %v476 = vpop.f32.mrf.mxu0
    %v477 = vadd.f32 %v328, %v476
    %v478 = vpop.f32.mrf.mxu0
    %v479 = vadd.f32 %v328, %v478
    %480 = vdwg.mxu0
    %481 = vmatpush.bf16.msra.mxu0 %v436
    %482 = vmatpush.bf16.msra.mxu0 %v433
    %483 = vmatpush.bf16.msra.mxu0 %v430
    %484 = vmatpush.bf16.msra.mxu0 %v427
    %485 = vmatpush.bf16.msra.mxu0 %v424
    %486 = vmatpush.bf16.msra.mxu0 %v421
    %487 = vmatpush.bf16.msra.mxu0 %v418
    %488 = vmatpush.bf16.msra.mxu0 %v415
    %489 = vmatmul.bf16.gmra.mxu0 %v292
    %v490 = vpop.f32.mrf.mxu0
    %v491 = vadd.f32 %v329, %v490
    %v492 = vpop.f32.mrf.mxu0
    %v493 = vadd.f32 %v329, %v492
    %494 = vmatmul.bf16.gmra.mxu0 %v293
    %v495 = vpop.f32.mrf.mxu0
    %v496 = vadd.f32 %v329, %v495
    %v497 = vpop.f32.mrf.mxu0
    %v498 = vadd.f32 %v329, %v497
    %499 = vdwg.mxu0
    %500 = vmatpush.bf16.msra.mxu0 %v437
    %501 = vmatpush.bf16.msra.mxu0 %v434
    %502 = vmatpush.bf16.msra.mxu0 %v431
    %503 = vmatpush.bf16.msra.mxu0 %v428
    %504 = vmatpush.bf16.msra.mxu0 %v425
    %505 = vmatpush.bf16.msra.mxu0 %v422
    %506 = vmatpush.bf16.msra.mxu0 %v419
    %507 = vmatpush.bf16.msra.mxu0 %v416
    %508 = vmatmul.bf16.gmra.mxu0 %v292
    %v509 = vpop.f32.mrf.mxu0
    %v510 = vadd.f32 %v330, %v509
    %v511 = vpop.f32.mrf.mxu0
    %v512 = vadd.f32 %v330, %v511
    %513 = vmatmul.bf16.gmra.mxu0 %v293
    %v514 = vpop.f32.mrf.mxu0
    %v515 = vadd.f32 %v330, %v514
    %v516 = vpop.f32.mrf.mxu0
    %v517 = vadd.f32 %v330, %v516
    %518 = vdwg.mxu0
    %523 = vrot.lane.b32.xlu0 %v472, 96
    %v524 = vpop.permute.xlu0 %523
    %525 = vrot.lane.b32.xlu0 %v474, 96
    %v526 = vpop.permute.xlu0 %525
    %527 = vrot.lane.b32.xlu0 %v477, 96
    %v528 = vpop.permute.xlu0 %527
    %529 = vrot.lane.b32.xlu0 %v479, 96
    %v530 = vpop.permute.xlu0 %529
    %535 = vrot.lane.b32.xlu0 %v472, 64
    %v536 = vpop.permute.xlu0 %535
    %537 = vrot.lane.b32.xlu0 %v474, 64
    %v538 = vpop.permute.xlu0 %537
    %539 = vrot.lane.b32.xlu0 %v477, 64
    %v540 = vpop.permute.xlu0 %539
    %541 = vrot.lane.b32.xlu0 %v479, 64
    %v542 = vpop.permute.xlu0 %541
    %547 = vrot.lane.b32.xlu0 %v472, 32
    %v548 = vpop.permute.xlu0 %547
    %549 = vrot.lane.b32.xlu0 %v474, 32
    %v550 = vpop.permute.xlu0 %549
    %551 = vrot.lane.b32.xlu0 %v477, 32
    %v552 = vpop.permute.xlu0 %551
    %553 = vrot.lane.b32.xlu0 %v479, 32
    %v554 = vpop.permute.xlu0 %553
    %v559 = vrot.slane %v536, 4
    %vm560 = vcmask 1047556
    %v561 = vsel %vm560, %v559, %v472
    %v562 = vrot.slane %v472, 4
    %v563 = vsel %vm560, %v536, %v562
    %v565 = vunpack.c.l.s4 1983009808
    %v566 = vunpack.c.0.s8 %v565
    %v567 = vperm.slane %v561, %v566
    %v569 = vunpack.c.l.s4 1983009808
    %v570 = vunpack.c.0.s8 %v569
    %v571 = vperm.slane %v563, %v570
    %v572 = vrot.slane %v548, 4
    %v573 = vsel %vm560, %v572, %v524
    %v574 = vrot.slane %v524, 4
    %v575 = vsel %vm560, %v548, %v574
    %v577 = vunpack.c.l.s4 1983009808
    %v578 = vunpack.c.0.s8 %v577
    %v579 = vperm.slane %v573, %v578
    %v581 = vunpack.c.l.s4 1983009808
    %v582 = vunpack.c.0.s8 %v581
    %v583 = vperm.slane %v575, %v582
    %v584 = vrot.slane %v579, 4
    %v585 = vsel %vm560, %v584, %v567
    %v586 = vrot.slane %v567, 4
    %v587 = vsel %vm560, %v579, %v586
    %v589 = vunpack.c.l.s4 1934713408
    %v590 = vunpack.c.0.s8 %v589
    %v591 = vperm.slane %v585, %v590
    %v593 = vunpack.c.l.s4 1934713408
    %v594 = vunpack.c.0.s8 %v593
    %v595 = vperm.slane %v587, %v594
    %v596 = vrot.slane %v583, 4
    %v597 = vsel %vm560, %v596, %v571
    %v598 = vrot.slane %v571, 4
    %v599 = vsel %vm560, %v583, %v598
    %v601 = vunpack.c.l.s4 1934713408
    %v602 = vunpack.c.0.s8 %v601
    %v603 = vperm.slane %v597, %v602
    %v605 = vunpack.c.l.s4 1934713408
    %v606 = vunpack.c.0.s8 %v605
    %v607 = vperm.slane %v599, %v606
    %v608 = vrot.slane %v591, 4
    %v609 = vsel %vm560, 0.0, %v608
    %v610 = vrot.slane %v595, 4
    %v611 = vsel %vm560, 0.0, %v610
    %v612 = vrot.slane %v603, 4
    %v613 = vsel %vm560, 0.0, %v612
    %v614 = vrot.slane %v607, 4
    %v615 = vsel %vm560, 0.0, %v614
    %v616 = vrot.slane %v538, 4
    %v617 = vsel %vm560, %v616, %v474
    %v618 = vrot.slane %v474, 4
    %v619 = vsel %vm560, %v538, %v618
    %v621 = vunpack.c.l.s4 1983009808
    %v622 = vunpack.c.0.s8 %v621
    %v623 = vperm.slane %v617, %v622
    %v625 = vunpack.c.l.s4 1983009808
    %v626 = vunpack.c.0.s8 %v625
    %v627 = vperm.slane %v619, %v626
    %v628 = vrot.slane %v550, 4
    %v629 = vsel %vm560, %v628, %v526
    %v630 = vrot.slane %v526, 4
    %v631 = vsel %vm560, %v550, %v630
    %v633 = vunpack.c.l.s4 1983009808
    %v634 = vunpack.c.0.s8 %v633
    %v635 = vperm.slane %v629, %v634
    %v637 = vunpack.c.l.s4 1983009808
    %v638 = vunpack.c.0.s8 %v637
    %v639 = vperm.slane %v631, %v638
    %v640 = vrot.slane %v635, 4
    %v641 = vsel %vm560, %v640, %v623
    %v642 = vrot.slane %v623, 4
    %v643 = vsel %vm560, %v635, %v642
    %v645 = vunpack.c.l.s4 1934713408
    %v646 = vunpack.c.0.s8 %v645
    %v647 = vperm.slane %v641, %v646
    %v649 = vunpack.c.l.s4 1934713408
    %v650 = vunpack.c.0.s8 %v649
    %v651 = vperm.slane %v643, %v650
    %v652 = vrot.slane %v639, 4
    %v653 = vsel %vm560, %v652, %v627
    %v654 = vrot.slane %v627, 4
    %v655 = vsel %vm560, %v639, %v654
    %v657 = vunpack.c.l.s4 1934713408
    %v658 = vunpack.c.0.s8 %v657
    %v659 = vperm.slane %v653, %v658
    %v661 = vunpack.c.l.s4 1934713408
    %v662 = vunpack.c.0.s8 %v661
    %v663 = vperm.slane %v655, %v662
    %v664 = vrot.slane %v647, 4
    %v665 = vsel %vm560, 0.0, %v664
    %v666 = vrot.slane %v651, 4
    %v667 = vsel %vm560, 0.0, %v666
    %v668 = vrot.slane %v659, 4
    %v669 = vsel %vm560, 0.0, %v668
    %v670 = vrot.slane %v663, 4
    %v671 = vsel %vm560, 0.0, %v670
    %v672 = vrot.slane %v540, 4
    %v673 = vsel %vm560, %v672, %v477
    %v674 = vrot.slane %v477, 4
    %v675 = vsel %vm560, %v540, %v674
    %v677 = vunpack.c.l.s4 1983009808
    %v678 = vunpack.c.0.s8 %v677
    %v679 = vperm.slane %v673, %v678
    %v681 = vunpack.c.l.s4 1983009808
    %v682 = vunpack.c.0.s8 %v681
    %v683 = vperm.slane %v675, %v682
    %v684 = vrot.slane %v552, 4
    %v685 = vsel %vm560, %v684, %v528
    %v686 = vrot.slane %v528, 4
    %v687 = vsel %vm560, %v552, %v686
    %v689 = vunpack.c.l.s4 1983009808
    %v690 = vunpack.c.0.s8 %v689
    %v691 = vperm.slane %v685, %v690
    %v693 = vunpack.c.l.s4 1983009808
    %v694 = vunpack.c.0.s8 %v693
    %v695 = vperm.slane %v687, %v694
    %v696 = vrot.slane %v691, 4
    %v697 = vsel %vm560, %v696, %v679
    %v698 = vrot.slane %v679, 4
    %v699 = vsel %vm560, %v691, %v698
    %v701 = vunpack.c.l.s4 1934713408
    %v702 = vunpack.c.0.s8 %v701
    %v703 = vperm.slane %v697, %v702
    %v705 = vunpack.c.l.s4 1934713408
    %v706 = vunpack.c.0.s8 %v705
    %v707 = vperm.slane %v699, %v706
    %v708 = vrot.slane %v695, 4
    %v709 = vsel %vm560, %v708, %v683
    %v710 = vrot.slane %v683, 4
    %v711 = vsel %vm560, %v695, %v710
    %v713 = vunpack.c.l.s4 1934713408
    %v714 = vunpack.c.0.s8 %v713
    %v715 = vperm.slane %v709, %v714
    %v717 = vunpack.c.l.s4 1934713408
    %v718 = vunpack.c.0.s8 %v717
    %v719 = vperm.slane %v711, %v718
    %v720 = vrot.slane %v703, 4
    %v721 = vsel %vm560, 0.0, %v720
    %v722 = vrot.slane %v707, 4
    %v723 = vsel %vm560, 0.0, %v722
    %v724 = vrot.slane %v715, 4
    %v725 = vsel %vm560, 0.0, %v724
    %v726 = vrot.slane %v719, 4
    %v727 = vsel %vm560, 0.0, %v726
    %v728 = vrot.slane %v542, 4
    %v729 = vsel %vm560, %v728, %v479
    %v730 = vrot.slane %v479, 4
    %v731 = vsel %vm560, %v542, %v730
    %v733 = vunpack.c.l.s4 1983009808
    %v734 = vunpack.c.0.s8 %v733
    %v735 = vperm.slane %v729, %v734
    %v737 = vunpack.c.l.s4 1983009808
    %v738 = vunpack.c.0.s8 %v737
    %v739 = vperm.slane %v731, %v738
    %v740 = vrot.slane %v554, 4
    %v741 = vsel %vm560, %v740, %v530
    %v742 = vrot.slane %v530, 4
    %v743 = vsel %vm560, %v554, %v742
    %v745 = vunpack.c.l.s4 1983009808
    %v746 = vunpack.c.0.s8 %v745
    %v747 = vperm.slane %v741, %v746
    %v749 = vunpack.c.l.s4 1983009808
    %v750 = vunpack.c.0.s8 %v749
    %v751 = vperm.slane %v743, %v750
    %v752 = vrot.slane %v747, 4
    %v753 = vsel %vm560, %v752, %v735
    %v754 = vrot.slane %v735, 4
    %v755 = vsel %vm560, %v747, %v754
    %v757 = vunpack.c.l.s4 1934713408
    %v758 = vunpack.c.0.s8 %v757
    %v759 = vperm.slane %v753, %v758
    %v761 = vunpack.c.l.s4 1934713408
    %v762 = vunpack.c.0.s8 %v761
    %v763 = vperm.slane %v755, %v762
    %v764 = vrot.slane %v751, 4
    %v765 = vsel %vm560, %v764, %v739
    %v766 = vrot.slane %v739, 4
    %v767 = vsel %vm560, %v751, %v766
    %v769 = vunpack.c.l.s4 1934713408
    %v770 = vunpack.c.0.s8 %v769
    %v771 = vperm.slane %v765, %v770
    %v773 = vunpack.c.l.s4 1934713408
    %v774 = vunpack.c.0.s8 %v773
    %v775 = vperm.slane %v767, %v774
    %v776 = vrot.slane %v759, 4
    %v777 = vsel %vm560, 0.0, %v776
    %v778 = vrot.slane %v763, 4
    %v779 = vsel %vm560, 0.0, %v778
    %v780 = vrot.slane %v771, 4
    %v781 = vsel %vm560, 0.0, %v780
    %v782 = vrot.slane %v775, 4
    %v783 = vsel %vm560, 0.0, %v782
    %v784 = vsel %vm560, %v610, %v591
    %v786 = vunpack.c.l.s4 1983009808
    %v787 = vunpack.c.0.s8 %v786
    %v788 = vperm.slane %v784, %v787
    %v789 = vrot.slane %v611, 4
    %v790 = vsel %vm560, %v789, %v609
    %v792 = vunpack.c.l.s4 1983009808
    %v793 = vunpack.c.0.s8 %v792
    %v794 = vperm.slane %v790, %v793
    %v795 = vsel %vm560, %v614, %v603
    %v797 = vunpack.c.l.s4 1983009808
    %v798 = vunpack.c.0.s8 %v797
    %v799 = vperm.slane %v795, %v798
    %v800 = vrot.slane %v615, 4
    %v801 = vsel %vm560, %v800, %v613
    %v803 = vunpack.c.l.s4 1983009808
    %v804 = vunpack.c.0.s8 %v803
    %v805 = vperm.slane %v801, %v804
    %v806 = vrot.slane %v794, 4
    %v807 = vsel %vm560, %v806, %v788
    %v808 = vrot.slane %v788, 4
    %v809 = vsel %vm560, %v794, %v808
    %v811 = vunpack.c.l.s4 1934713408
    %v812 = vunpack.c.0.s8 %v811
    %v813 = vperm.slane %v807, %v812
    %v815 = vunpack.c.l.s4 1934713408
    %v816 = vunpack.c.0.s8 %v815
    %v817 = vperm.slane %v809, %v816
    %v818 = vrot.slane %v805, 4
    %v819 = vsel %vm560, %v818, %v799
    %v820 = vrot.slane %v799, 4
    %v821 = vsel %vm560, %v805, %v820
    %v823 = vunpack.c.l.s4 1934713408
    %v824 = vunpack.c.0.s8 %v823
    %v825 = vperm.slane %v819, %v824
    %v827 = vunpack.c.l.s4 1934713408
    %v828 = vunpack.c.0.s8 %v827
    %v829 = vperm.slane %v821, %v828
    %v830 = vrot.slane %v825, 4
    %v831 = vsel %vm560, %v830, %v813
    %v832 = vrot.slane %v813, 4
    %v833 = vsel %vm560, %v825, %v832
    %v834 = vrot.slane %v829, 4
    %v835 = vsel %vm560, %v834, %v817
    %v836 = vrot.slane %v817, 4
    %v837 = vsel %vm560, %v829, %v836
    %v838 = vsel %vm560, %v666, %v647
    %v840 = vunpack.c.l.s4 1983009808
    %v841 = vunpack.c.0.s8 %v840
    %v842 = vperm.slane %v838, %v841
    %v843 = vrot.slane %v667, 4
    %v844 = vsel %vm560, %v843, %v665
    %v846 = vunpack.c.l.s4 1983009808
    %v847 = vunpack.c.0.s8 %v846
    %v848 = vperm.slane %v844, %v847
    %v849 = vsel %vm560, %v670, %v659
    %v851 = vunpack.c.l.s4 1983009808
    %v852 = vunpack.c.0.s8 %v851
    %v853 = vperm.slane %v849, %v852
    %v854 = vrot.slane %v671, 4
    %v855 = vsel %vm560, %v854, %v669
    %v857 = vunpack.c.l.s4 1983009808
    %v858 = vunpack.c.0.s8 %v857
    %v859 = vperm.slane %v855, %v858
    %v860 = vrot.slane %v848, 4
    %v861 = vsel %vm560, %v860, %v842
    %v862 = vrot.slane %v842, 4
    %v863 = vsel %vm560, %v848, %v862
    %v865 = vunpack.c.l.s4 1934713408
    %v866 = vunpack.c.0.s8 %v865
    %v867 = vperm.slane %v861, %v866
    %v869 = vunpack.c.l.s4 1934713408
    %v870 = vunpack.c.0.s8 %v869
    %v871 = vperm.slane %v863, %v870
    %v872 = vrot.slane %v859, 4
    %v873 = vsel %vm560, %v872, %v853
    %v874 = vrot.slane %v853, 4
    %v875 = vsel %vm560, %v859, %v874
    %v877 = vunpack.c.l.s4 1934713408
    %v878 = vunpack.c.0.s8 %v877
    %v879 = vperm.slane %v873, %v878
    %v881 = vunpack.c.l.s4 1934713408
    %v882 = vunpack.c.0.s8 %v881
    %v883 = vperm.slane %v875, %v882
    %v884 = vrot.slane %v879, 4
    %v885 = vsel %vm560, %v884, %v867
    %v886 = vrot.slane %v867, 4
    %v887 = vsel %vm560, %v879, %v886
    %v888 = vrot.slane %v883, 4
    %v889 = vsel %vm560, %v888, %v871
    %v890 = vrot.slane %v871, 4
    %v891 = vsel %vm560, %v883, %v890
    %v892 = vsel %vm560, %v722, %v703
    %v894 = vunpack.c.l.s4 1983009808
    %v895 = vunpack.c.0.s8 %v894
    %v896 = vperm.slane %v892, %v895
    %v897 = vrot.slane %v723, 4
    %v898 = vsel %vm560, %v897, %v721
    %v900 = vunpack.c.l.s4 1983009808
    %v901 = vunpack.c.0.s8 %v900
    %v902 = vperm.slane %v898, %v901
    %v903 = vsel %vm560, %v726, %v715
    %v905 = vunpack.c.l.s4 1983009808
    %v906 = vunpack.c.0.s8 %v905
    %v907 = vperm.slane %v903, %v906
    %v908 = vrot.slane %v727, 4
    %v909 = vsel %vm560, %v908, %v725
    %v911 = vunpack.c.l.s4 1983009808
    %v912 = vunpack.c.0.s8 %v911
    %v913 = vperm.slane %v909, %v912
    %v914 = vrot.slane %v902, 4
    %v915 = vsel %vm560, %v914, %v896
    %v916 = vrot.slane %v896, 4
    %v917 = vsel %vm560, %v902, %v916
    %v919 = vunpack.c.l.s4 1934713408
    %v920 = vunpack.c.0.s8 %v919
    %v921 = vperm.slane %v915, %v920
    %v923 = vunpack.c.l.s4 1934713408
    %v924 = vunpack.c.0.s8 %v923
    %v925 = vperm.slane %v917, %v924
    %v926 = vrot.slane %v913, 4
    %v927 = vsel %vm560, %v926, %v907
    %v928 = vrot.slane %v907, 4
    %v929 = vsel %vm560, %v913, %v928
    %v931 = vunpack.c.l.s4 1934713408
    %v932 = vunpack.c.0.s8 %v931
    %v933 = vperm.slane %v927, %v932
    %v935 = vunpack.c.l.s4 1934713408
    %v936 = vunpack.c.0.s8 %v935
    %v937 = vperm.slane %v929, %v936
    %v938 = vrot.slane %v933, 4
    %v939 = vsel %vm560, %v938, %v921
    %v940 = vrot.slane %v921, 4
    %v941 = vsel %vm560, %v933, %v940
    %v942 = vrot.slane %v937, 4
    %v943 = vsel %vm560, %v942, %v925
    %v944 = vrot.slane %v925, 4
    %v945 = vsel %vm560, %v937, %v944
    %v946 = vsel %vm560, %v778, %v759
    %v948 = vunpack.c.l.s4 1983009808
    %v949 = vunpack.c.0.s8 %v948
    %v950 = vperm.slane %v946, %v949
    %v951 = vrot.slane %v779, 4
    %v952 = vsel %vm560, %v951, %v777
    %v954 = vunpack.c.l.s4 1983009808
    %v955 = vunpack.c.0.s8 %v954
    %v956 = vperm.slane %v952, %v955
    %v957 = vsel %vm560, %v782, %v771
    %v959 = vunpack.c.l.s4 1983009808
    %v960 = vunpack.c.0.s8 %v959
    %v961 = vperm.slane %v957, %v960
    %v962 = vrot.slane %v783, 4
    %v963 = vsel %vm560, %v962, %v781
    %v965 = vunpack.c.l.s4 1983009808
    %v966 = vunpack.c.0.s8 %v965
    %v967 = vperm.slane %v963, %v966
    %v968 = vrot.slane %v956, 4
    %v969 = vsel %vm560, %v968, %v950
    %v970 = vrot.slane %v950, 4
    %v971 = vsel %vm560, %v956, %v970
    %v973 = vunpack.c.l.s4 1934713408
    %v974 = vunpack.c.0.s8 %v973
    %v975 = vperm.slane %v969, %v974
    %v977 = vunpack.c.l.s4 1934713408
    %v978 = vunpack.c.0.s8 %v977
    %v979 = vperm.slane %v971, %v978
    %v980 = vrot.slane %v967, 4
    %v981 = vsel %vm560, %v980, %v961
    %v982 = vrot.slane %v961, 4
    %v983 = vsel %vm560, %v967, %v982
    %v985 = vunpack.c.l.s4 1934713408
    %v986 = vunpack.c.0.s8 %v985
    %v987 = vperm.slane %v981, %v986
    %v989 = vunpack.c.l.s4 1934713408
    %v990 = vunpack.c.0.s8 %v989
    %v991 = vperm.slane %v983, %v990
    %v992 = vrot.slane %v987, 4
    %v993 = vsel %vm560, %v992, %v975
    %v994 = vrot.slane %v975, 4
    %v995 = vsel %vm560, %v987, %v994
    %v996 = vrot.slane %v991, 4
    %v997 = vsel %vm560, %v996, %v979
    %v998 = vrot.slane %v979, 4
    %v999 = vsel %vm560, %v991, %v998
    %v1000 = vpack.c.bf16 %v831, %v831
    %v1001 = vpack.c.bf16 %v885, %v885
    %v1002 = vpack.c.bf16 %v833, %v833
    %v1003 = vpack.c.bf16 %v887, %v887
    %v1004 = vpack.c.bf16 %v835, %v835
    %v1005 = vpack.c.bf16 %v889, %v889
    %v1006 = vpack.c.bf16 %v837, %v837
    %v1007 = vpack.c.bf16 %v891, %v891
    %v1008 = vpack.c.bf16 %v939, %v939
    %v1009 = vpack.c.bf16 %v993, %v993
    %v1010 = vpack.c.bf16 %v941, %v941
    %v1011 = vpack.c.bf16 %v995, %v995
    %v1012 = vpack.c.bf16 %v943, %v943
    %v1013 = vpack.c.bf16 %v997, %v997
    %v1014 = vpack.c.bf16 %v945, %v945
    %v1015 = vpack.c.bf16 %v999, %v999
    %1020 = vrot.lane.b32.xlu0 %v491, 96
    %v1021 = vpop.permute.xlu0 %1020
    %1022 = vrot.lane.b32.xlu0 %v493, 96
    %v1023 = vpop.permute.xlu0 %1022
    %1024 = vrot.lane.b32.xlu0 %v496, 96
    %v1025 = vpop.permute.xlu0 %1024
    %1026 = vrot.lane.b32.xlu0 %v498, 96
    %v1027 = vpop.permute.xlu0 %1026
    %1032 = vrot.lane.b32.xlu0 %v491, 64
    %v1033 = vpop.permute.xlu0 %1032
    %1034 = vrot.lane.b32.xlu0 %v493, 64
    %v1035 = vpop.permute.xlu0 %1034
    %1036 = vrot.lane.b32.xlu0 %v496, 64
    %v1037 = vpop.permute.xlu0 %1036
    %1038 = vrot.lane.b32.xlu0 %v498, 64
    %v1039 = vpop.permute.xlu0 %1038
    %1044 = vrot.lane.b32.xlu0 %v491, 32
    %v1045 = vpop.permute.xlu0 %1044
    %1046 = vrot.lane.b32.xlu0 %v493, 32
    %v1047 = vpop.permute.xlu0 %1046
    %1048 = vrot.lane.b32.xlu0 %v496, 32
    %v1049 = vpop.permute.xlu0 %1048
    %1050 = vrot.lane.b32.xlu0 %v498, 32
    %v1051 = vpop.permute.xlu0 %1050
    %v1056 = vrot.slane %v1033, 4
    %v1057 = vsel %vm560, %v1056, %v491
    %v1058 = vrot.slane %v491, 4
    %v1059 = vsel %vm560, %v1033, %v1058
    %v1061 = vunpack.c.l.s4 1983009808
    %v1062 = vunpack.c.0.s8 %v1061
    %v1063 = vperm.slane %v1057, %v1062
    %v1065 = vunpack.c.l.s4 1983009808
    %v1066 = vunpack.c.0.s8 %v1065
    %v1067 = vperm.slane %v1059, %v1066
    %v1068 = vrot.slane %v1045, 4
    %v1069 = vsel %vm560, %v1068, %v1021
    %v1070 = vrot.slane %v1021, 4
    %v1071 = vsel %vm560, %v1045, %v1070
    %v1073 = vunpack.c.l.s4 1983009808
    %v1074 = vunpack.c.0.s8 %v1073
    %v1075 = vperm.slane %v1069, %v1074
    %v1077 = vunpack.c.l.s4 1983009808
    %v1078 = vunpack.c.0.s8 %v1077
    %v1079 = vperm.slane %v1071, %v1078
    %v1080 = vrot.slane %v1075, 4
    %v1081 = vsel %vm560, %v1080, %v1063
    %v1082 = vrot.slane %v1063, 4
    %v1083 = vsel %vm560, %v1075, %v1082
    %v1085 = vunpack.c.l.s4 1934713408
    %v1086 = vunpack.c.0.s8 %v1085
    %v1087 = vperm.slane %v1081, %v1086
    %v1089 = vunpack.c.l.s4 1934713408
    %v1090 = vunpack.c.0.s8 %v1089
    %v1091 = vperm.slane %v1083, %v1090
    %v1092 = vrot.slane %v1079, 4
    %v1093 = vsel %vm560, %v1092, %v1067
    %v1094 = vrot.slane %v1067, 4
    %v1095 = vsel %vm560, %v1079, %v1094
    %v1097 = vunpack.c.l.s4 1934713408
    %v1098 = vunpack.c.0.s8 %v1097
    %v1099 = vperm.slane %v1093, %v1098
    %v1101 = vunpack.c.l.s4 1934713408
    %v1102 = vunpack.c.0.s8 %v1101
    %v1103 = vperm.slane %v1095, %v1102
    %v1104 = vrot.slane %v1087, 4
    %v1105 = vsel %vm560, 0.0, %v1104
    %v1106 = vrot.slane %v1091, 4
    %v1107 = vsel %vm560, 0.0, %v1106
    %v1108 = vrot.slane %v1099, 4
    %v1109 = vsel %vm560, 0.0, %v1108
    %v1110 = vrot.slane %v1103, 4
    %v1111 = vsel %vm560, 0.0, %v1110
    %v1112 = vrot.slane %v1035, 4
    %v1113 = vsel %vm560, %v1112, %v493
    %v1114 = vrot.slane %v493, 4
    %v1115 = vsel %vm560, %v1035, %v1114
    %v1117 = vunpack.c.l.s4 1983009808
    %v1118 = vunpack.c.0.s8 %v1117
    %v1119 = vperm.slane %v1113, %v1118
    %v1121 = vunpack.c.l.s4 1983009808
    %v1122 = vunpack.c.0.s8 %v1121
    %v1123 = vperm.slane %v1115, %v1122
    %v1124 = vrot.slane %v1047, 4
    %v1125 = vsel %vm560, %v1124, %v1023
    %v1126 = vrot.slane %v1023, 4
    %v1127 = vsel %vm560, %v1047, %v1126
    %v1129 = vunpack.c.l.s4 1983009808
    %v1130 = vunpack.c.0.s8 %v1129
    %v1131 = vperm.slane %v1125, %v1130
    %v1133 = vunpack.c.l.s4 1983009808
    %v1134 = vunpack.c.0.s8 %v1133
    %v1135 = vperm.slane %v1127, %v1134
    %v1136 = vrot.slane %v1131, 4
    %v1137 = vsel %vm560, %v1136, %v1119
    %v1138 = vrot.slane %v1119, 4
    %v1139 = vsel %vm560, %v1131, %v1138
    %v1141 = vunpack.c.l.s4 1934713408
    %v1142 = vunpack.c.0.s8 %v1141
    %v1143 = vperm.slane %v1137, %v1142
    %v1145 = vunpack.c.l.s4 1934713408
    %v1146 = vunpack.c.0.s8 %v1145
    %v1147 = vperm.slane %v1139, %v1146
    %v1148 = vrot.slane %v1135, 4
    %v1149 = vsel %vm560, %v1148, %v1123
    %v1150 = vrot.slane %v1123, 4
    %v1151 = vsel %vm560, %v1135, %v1150
    %v1153 = vunpack.c.l.s4 1934713408
    %v1154 = vunpack.c.0.s8 %v1153
    %v1155 = vperm.slane %v1149, %v1154
    %v1157 = vunpack.c.l.s4 1934713408
    %v1158 = vunpack.c.0.s8 %v1157
    %v1159 = vperm.slane %v1151, %v1158
    %v1160 = vrot.slane %v1143, 4
    %v1161 = vsel %vm560, 0.0, %v1160
    %v1162 = vrot.slane %v1147, 4
    %v1163 = vsel %vm560, 0.0, %v1162
    %v1164 = vrot.slane %v1155, 4
    %v1165 = vsel %vm560, 0.0, %v1164
    %v1166 = vrot.slane %v1159, 4
    %v1167 = vsel %vm560, 0.0, %v1166
    %v1168 = vrot.slane %v1037, 4
    %v1169 = vsel %vm560, %v1168, %v496
    %v1170 = vrot.slane %v496, 4
    %v1171 = vsel %vm560, %v1037, %v1170
    %v1173 = vunpack.c.l.s4 1983009808
    %v1174 = vunpack.c.0.s8 %v1173
    %v1175 = vperm.slane %v1169, %v1174
    %v1177 = vunpack.c.l.s4 1983009808
    %v1178 = vunpack.c.0.s8 %v1177
    %v1179 = vperm.slane %v1171, %v1178
    %v1180 = vrot.slane %v1049, 4
    %v1181 = vsel %vm560, %v1180, %v1025
    %v1182 = vrot.slane %v1025, 4
    %v1183 = vsel %vm560, %v1049, %v1182
    %v1185 = vunpack.c.l.s4 1983009808
    %v1186 = vunpack.c.0.s8 %v1185
    %v1187 = vperm.slane %v1181, %v1186
    %v1189 = vunpack.c.l.s4 1983009808
    %v1190 = vunpack.c.0.s8 %v1189
    %v1191 = vperm.slane %v1183, %v1190
    %v1192 = vrot.slane %v1187, 4
    %v1193 = vsel %vm560, %v1192, %v1175
    %v1194 = vrot.slane %v1175, 4
    %v1195 = vsel %vm560, %v1187, %v1194
    %v1197 = vunpack.c.l.s4 1934713408
    %v1198 = vunpack.c.0.s8 %v1197
    %v1199 = vperm.slane %v1193, %v1198
    %v1201 = vunpack.c.l.s4 1934713408
    %v1202 = vunpack.c.0.s8 %v1201
    %v1203 = vperm.slane %v1195, %v1202
    %v1204 = vrot.slane %v1191, 4
    %v1205 = vsel %vm560, %v1204, %v1179
    %v1206 = vrot.slane %v1179, 4
    %v1207 = vsel %vm560, %v1191, %v1206
    %v1209 = vunpack.c.l.s4 1934713408
    %v1210 = vunpack.c.0.s8 %v1209
    %v1211 = vperm.slane %v1205, %v1210
    %v1213 = vunpack.c.l.s4 1934713408
    %v1214 = vunpack.c.0.s8 %v1213
    %v1215 = vperm.slane %v1207, %v1214
    %v1216 = vrot.slane %v1199, 4
    %v1217 = vsel %vm560, 0.0, %v1216
    %v1218 = vrot.slane %v1203, 4
    %v1219 = vsel %vm560, 0.0, %v1218
    %v1220 = vrot.slane %v1211, 4
    %v1221 = vsel %vm560, 0.0, %v1220
    %v1222 = vrot.slane %v1215, 4
    %v1223 = vsel %vm560, 0.0, %v1222
    %v1224 = vrot.slane %v1039, 4
    %v1225 = vsel %vm560, %v1224, %v498
    %v1226 = vrot.slane %v498, 4
    %v1227 = vsel %vm560, %v1039, %v1226
    %v1229 = vunpack.c.l.s4 1983009808
    %v1230 = vunpack.c.0.s8 %v1229
    %v1231 = vperm.slane %v1225, %v1230
    %v1233 = vunpack.c.l.s4 1983009808
    %v1234 = vunpack.c.0.s8 %v1233
    %v1235 = vperm.slane %v1227, %v1234
    %v1236 = vrot.slane %v1051, 4
    %v1237 = vsel %vm560, %v1236, %v1027
    %v1238 = vrot.slane %v1027, 4
    %v1239 = vsel %vm560, %v1051, %v1238
    %v1241 = vunpack.c.l.s4 1983009808
    %v1242 = vunpack.c.0.s8 %v1241
    %v1243 = vperm.slane %v1237, %v1242
    %v1245 = vunpack.c.l.s4 1983009808
    %v1246 = vunpack.c.0.s8 %v1245
    %v1247 = vperm.slane %v1239, %v1246
    %v1248 = vrot.slane %v1243, 4
    %v1249 = vsel %vm560, %v1248, %v1231
    %v1250 = vrot.slane %v1231, 4
    %v1251 = vsel %vm560, %v1243, %v1250
    %v1253 = vunpack.c.l.s4 1934713408
    %v1254 = vunpack.c.0.s8 %v1253
    %v1255 = vperm.slane %v1249, %v1254
    %v1257 = vunpack.c.l.s4 1934713408
    %v1258 = vunpack.c.0.s8 %v1257
    %v1259 = vperm.slane %v1251, %v1258
    %v1260 = vrot.slane %v1247, 4
    %v1261 = vsel %vm560, %v1260, %v1235
    %v1262 = vrot.slane %v1235, 4
    %v1263 = vsel %vm560, %v1247, %v1262
    %v1265 = vunpack.c.l.s4 1934713408
    %v1266 = vunpack.c.0.s8 %v1265
    %v1267 = vperm.slane %v1261, %v1266
    %v1269 = vunpack.c.l.s4 1934713408
    %v1270 = vunpack.c.0.s8 %v1269
    %v1271 = vperm.slane %v1263, %v1270
    %v1272 = vrot.slane %v1255, 4
    %v1273 = vsel %vm560, 0.0, %v1272
    %v1274 = vrot.slane %v1259, 4
    %v1275 = vsel %vm560, 0.0, %v1274
    %v1276 = vrot.slane %v1267, 4
    %v1277 = vsel %vm560, 0.0, %v1276
    %v1278 = vrot.slane %v1271, 4
    %v1279 = vsel %vm560, 0.0, %v1278
    %v1280 = vsel %vm560, %v1106, %v1087
    %v1282 = vunpack.c.l.s4 1983009808
    %v1283 = vunpack.c.0.s8 %v1282
    %v1284 = vperm.slane %v1280, %v1283
    %v1285 = vrot.slane %v1107, 4
    %v1286 = vsel %vm560, %v1285, %v1105
    %v1288 = vunpack.c.l.s4 1983009808
    %v1289 = vunpack.c.0.s8 %v1288
    %v1290 = vperm.slane %v1286, %v1289
    %v1291 = vsel %vm560, %v1110, %v1099
    %v1293 = vunpack.c.l.s4 1983009808
    %v1294 = vunpack.c.0.s8 %v1293
    %v1295 = vperm.slane %v1291, %v1294
    %v1296 = vrot.slane %v1111, 4
    %v1297 = vsel %vm560, %v1296, %v1109
    %v1299 = vunpack.c.l.s4 1983009808
    %v1300 = vunpack.c.0.s8 %v1299
    %v1301 = vperm.slane %v1297, %v1300
    %v1302 = vrot.slane %v1290, 4
    %v1303 = vsel %vm560, %v1302, %v1284
    %v1304 = vrot.slane %v1284, 4
    %v1305 = vsel %vm560, %v1290, %v1304
    %v1307 = vunpack.c.l.s4 1934713408
    %v1308 = vunpack.c.0.s8 %v1307
    %v1309 = vperm.slane %v1303, %v1308
    %v1311 = vunpack.c.l.s4 1934713408
    %v1312 = vunpack.c.0.s8 %v1311
    %v1313 = vperm.slane %v1305, %v1312
    %v1314 = vrot.slane %v1301, 4
    %v1315 = vsel %vm560, %v1314, %v1295
    %v1316 = vrot.slane %v1295, 4
    %v1317 = vsel %vm560, %v1301, %v1316
    %v1319 = vunpack.c.l.s4 1934713408
    %v1320 = vunpack.c.0.s8 %v1319
    %v1321 = vperm.slane %v1315, %v1320
    %v1323 = vunpack.c.l.s4 1934713408
    %v1324 = vunpack.c.0.s8 %v1323
    %v1325 = vperm.slane %v1317, %v1324
    %v1326 = vrot.slane %v1321, 4
    %v1327 = vsel %vm560, %v1326, %v1309
    %v1328 = vrot.slane %v1309, 4
    %v1329 = vsel %vm560, %v1321, %v1328
    %v1330 = vrot.slane %v1325, 4
    %v1331 = vsel %vm560, %v1330, %v1313
    %v1332 = vrot.slane %v1313, 4
    %v1333 = vsel %vm560, %v1325, %v1332
    %v1334 = vsel %vm560, %v1162, %v1143
    %v1336 = vunpack.c.l.s4 1983009808
    %v1337 = vunpack.c.0.s8 %v1336
    %v1338 = vperm.slane %v1334, %v1337
    %v1339 = vrot.slane %v1163, 4
    %v1340 = vsel %vm560, %v1339, %v1161
    %v1342 = vunpack.c.l.s4 1983009808
    %v1343 = vunpack.c.0.s8 %v1342
    %v1344 = vperm.slane %v1340, %v1343
    %v1345 = vsel %vm560, %v1166, %v1155
    %v1347 = vunpack.c.l.s4 1983009808
    %v1348 = vunpack.c.0.s8 %v1347
    %v1349 = vperm.slane %v1345, %v1348
    %v1350 = vrot.slane %v1167, 4
    %v1351 = vsel %vm560, %v1350, %v1165
    %v1353 = vunpack.c.l.s4 1983009808
    %v1354 = vunpack.c.0.s8 %v1353
    %v1355 = vperm.slane %v1351, %v1354
    %v1356 = vrot.slane %v1344, 4
    %v1357 = vsel %vm560, %v1356, %v1338
    %v1358 = vrot.slane %v1338, 4
    %v1359 = vsel %vm560, %v1344, %v1358
    %v1361 = vunpack.c.l.s4 1934713408
    %v1362 = vunpack.c.0.s8 %v1361
    %v1363 = vperm.slane %v1357, %v1362
    %v1365 = vunpack.c.l.s4 1934713408
    %v1366 = vunpack.c.0.s8 %v1365
    %v1367 = vperm.slane %v1359, %v1366
    %v1368 = vrot.slane %v1355, 4
    %v1369 = vsel %vm560, %v1368, %v1349
    %v1370 = vrot.slane %v1349, 4
    %v1371 = vsel %vm560, %v1355, %v1370
    %v1373 = vunpack.c.l.s4 1934713408
    %v1374 = vunpack.c.0.s8 %v1373
    %v1375 = vperm.slane %v1369, %v1374
    %v1377 = vunpack.c.l.s4 1934713408
    %v1378 = vunpack.c.0.s8 %v1377
    %v1379 = vperm.slane %v1371, %v1378
    %v1380 = vrot.slane %v1375, 4
    %v1381 = vsel %vm560, %v1380, %v1363
    %v1382 = vrot.slane %v1363, 4
    %v1383 = vsel %vm560, %v1375, %v1382
    %v1384 = vrot.slane %v1379, 4
    %v1385 = vsel %vm560, %v1384, %v1367
    %v1386 = vrot.slane %v1367, 4
    %v1387 = vsel %vm560, %v1379, %v1386
    %v1388 = vsel %vm560, %v1218, %v1199
    %v1390 = vunpack.c.l.s4 1983009808
    %v1391 = vunpack.c.0.s8 %v1390
    %v1392 = vperm.slane %v1388, %v1391
    %v1393 = vrot.slane %v1219, 4
    %v1394 = vsel %vm560, %v1393, %v1217
    %v1396 = vunpack.c.l.s4 1983009808
    %v1397 = vunpack.c.0.s8 %v1396
    %v1398 = vperm.slane %v1394, %v1397
    %v1399 = vsel %vm560, %v1222, %v1211
    %v1401 = vunpack.c.l.s4 1983009808
    %v1402 = vunpack.c.0.s8 %v1401
    %v1403 = vperm.slane %v1399, %v1402
    %v1404 = vrot.slane %v1223, 4
    %v1405 = vsel %vm560, %v1404, %v1221
    %v1407 = vunpack.c.l.s4 1983009808
    %v1408 = vunpack.c.0.s8 %v1407
    %v1409 = vperm.slane %v1405, %v1408
    %v1410 = vrot.slane %v1398, 4
    %v1411 = vsel %vm560, %v1410, %v1392
    %v1412 = vrot.slane %v1392, 4
    %v1413 = vsel %vm560, %v1398, %v1412
    %v1415 = vunpack.c.l.s4 1934713408
    %v1416 = vunpack.c.0.s8 %v1415
    %v1417 = vperm.slane %v1411, %v1416
    %v1419 = vunpack.c.l.s4 1934713408
    %v1420 = vunpack.c.0.s8 %v1419
    %v1421 = vperm.slane %v1413, %v1420
    %v1422 = vrot.slane %v1409, 4
    %v1423 = vsel %vm560, %v1422, %v1403
    %v1424 = vrot.slane %v1403, 4
    %v1425 = vsel %vm560, %v1409, %v1424
    %v1427 = vunpack.c.l.s4 1934713408
    %v1428 = vunpack.c.0.s8 %v1427
    %v1429 = vperm.slane %v1423, %v1428
    %v1431 = vunpack.c.l.s4 1934713408
    %v1432 = vunpack.c.0.s8 %v1431
    %v1433 = vperm.slane %v1425, %v1432
    %v1434 = vrot.slane %v1429, 4
    %v1435 = vsel %vm560, %v1434, %v1417
    %v1436 = vrot.slane %v1417, 4
    %v1437 = vsel %vm560, %v1429, %v1436
    %v1438 = vrot.slane %v1433, 4
    %v1439 = vsel %vm560, %v1438, %v1421
    %v1440 = vrot.slane %v1421, 4
    %v1441 = vsel %vm560, %v1433, %v1440
    %v1442 = vsel %vm560, %v1274, %v1255
    %v1444 = vunpack.c.l.s4 1983009808
    %v1445 = vunpack.c.0.s8 %v1444
    %v1446 = vperm.slane %v1442, %v1445
    %v1447 = vrot.slane %v1275, 4
    %v1448 = vsel %vm560, %v1447, %v1273
    %v1450 = vunpack.c.l.s4 1983009808
    %v1451 = vunpack.c.0.s8 %v1450
    %v1452 = vperm.slane %v1448, %v1451
    %v1453 = vsel %vm560, %v1278, %v1267
    %v1455 = vunpack.c.l.s4 1983009808
    %v1456 = vunpack.c.0.s8 %v1455
    %v1457 = vperm.slane %v1453, %v1456
    %v1458 = vrot.slane %v1279, 4
    %v1459 = vsel %vm560, %v1458, %v1277
    %v1461 = vunpack.c.l.s4 1983009808
    %v1462 = vunpack.c.0.s8 %v1461
    %v1463 = vperm.slane %v1459, %v1462
    %v1464 = vrot.slane %v1452, 4
    %v1465 = vsel %vm560, %v1464, %v1446
    %v1466 = vrot.slane %v1446, 4
    %v1467 = vsel %vm560, %v1452, %v1466
    %v1469 = vunpack.c.l.s4 1934713408
    %v1470 = vunpack.c.0.s8 %v1469
    %v1471 = vperm.slane %v1465, %v1470
    %v1473 = vunpack.c.l.s4 1934713408
    %v1474 = vunpack.c.0.s8 %v1473
    %v1475 = vperm.slane %v1467, %v1474
    %v1476 = vrot.slane %v1463, 4
    %v1477 = vsel %vm560, %v1476, %v1457
    %v1478 = vrot.slane %v1457, 4
    %v1479 = vsel %vm560, %v1463, %v1478
    %v1481 = vunpack.c.l.s4 1934713408
    %v1482 = vunpack.c.0.s8 %v1481
    %v1483 = vperm.slane %v1477, %v1482
    %v1485 = vunpack.c.l.s4 1934713408
    %v1486 = vunpack.c.0.s8 %v1485
    %v1487 = vperm.slane %v1479, %v1486
    %v1488 = vrot.slane %v1483, 4
    %v1489 = vsel %vm560, %v1488, %v1471
    %v1490 = vrot.slane %v1471, 4
    %v1491 = vsel %vm560, %v1483, %v1490
    %v1492 = vrot.slane %v1487, 4
    %v1493 = vsel %vm560, %v1492, %v1475
    %v1494 = vrot.slane %v1475, 4
    %v1495 = vsel %vm560, %v1487, %v1494
    %v1496 = vpack.c.bf16 %v1327, %v1327
    %v1497 = vpack.c.bf16 %v1381, %v1381
    %v1498 = vpack.c.bf16 %v1329, %v1329
    %v1499 = vpack.c.bf16 %v1383, %v1383
    %v1500 = vpack.c.bf16 %v1331, %v1331
    %v1501 = vpack.c.bf16 %v1385, %v1385
    %v1502 = vpack.c.bf16 %v1333, %v1333
    %v1503 = vpack.c.bf16 %v1387, %v1387
    %v1504 = vpack.c.bf16 %v1435, %v1435
    %v1505 = vpack.c.bf16 %v1489, %v1489
    %v1506 = vpack.c.bf16 %v1437, %v1437
    %v1507 = vpack.c.bf16 %v1491, %v1491
    %v1508 = vpack.c.bf16 %v1439, %v1439
    %v1509 = vpack.c.bf16 %v1493, %v1493
    %v1510 = vpack.c.bf16 %v1441, %v1441
    %v1511 = vpack.c.bf16 %v1495, %v1495
    %1516 = vrot.lane.b32.xlu0 %v510, 96
    %v1517 = vpop.permute.xlu0 %1516
    %1518 = vrot.lane.b32.xlu0 %v512, 96
    %v1519 = vpop.permute.xlu0 %1518
    %1520 = vrot.lane.b32.xlu0 %v515, 96
    %v1521 = vpop.permute.xlu0 %1520
    %1522 = vrot.lane.b32.xlu0 %v517, 96
    %v1523 = vpop.permute.xlu0 %1522
    %1528 = vrot.lane.b32.xlu0 %v510, 64
    %v1529 = vpop.permute.xlu0 %1528
    %1530 = vrot.lane.b32.xlu0 %v512, 64
    %v1531 = vpop.permute.xlu0 %1530
    %1532 = vrot.lane.b32.xlu0 %v515, 64
    %v1533 = vpop.permute.xlu0 %1532
    %1534 = vrot.lane.b32.xlu0 %v517, 64
    %v1535 = vpop.permute.xlu0 %1534
    %1540 = vrot.lane.b32.xlu0 %v510, 32
    %v1541 = vpop.permute.xlu0 %1540
    %1542 = vrot.lane.b32.xlu0 %v512, 32
    %v1543 = vpop.permute.xlu0 %1542
    %1544 = vrot.lane.b32.xlu0 %v515, 32
    %v1545 = vpop.permute.xlu0 %1544
    %1546 = vrot.lane.b32.xlu0 %v517, 32
    %v1547 = vpop.permute.xlu0 %1546
    %v1552 = vrot.slane %v1529, 4
    %v1553 = vsel %vm560, %v1552, %v510
    %v1554 = vrot.slane %v510, 4
    %v1555 = vsel %vm560, %v1529, %v1554
    %v1557 = vunpack.c.l.s4 1983009808
    %v1558 = vunpack.c.0.s8 %v1557
    %v1559 = vperm.slane %v1553, %v1558
    %v1561 = vunpack.c.l.s4 1983009808
    %v1562 = vunpack.c.0.s8 %v1561
    %v1563 = vperm.slane %v1555, %v1562
    %v1564 = vrot.slane %v1541, 4
    %v1565 = vsel %vm560, %v1564, %v1517
    %v1566 = vrot.slane %v1517, 4
    %v1567 = vsel %vm560, %v1541, %v1566
    %v1569 = vunpack.c.l.s4 1983009808
    %v1570 = vunpack.c.0.s8 %v1569
    %v1571 = vperm.slane %v1565, %v1570
    %v1573 = vunpack.c.l.s4 1983009808
    %v1574 = vunpack.c.0.s8 %v1573
    %v1575 = vperm.slane %v1567, %v1574
    %v1576 = vrot.slane %v1571, 4
    %v1577 = vsel %vm560, %v1576, %v1559
    %v1578 = vrot.slane %v1559, 4
    %v1579 = vsel %vm560, %v1571, %v1578
    %v1581 = vunpack.c.l.s4 1934713408
    %v1582 = vunpack.c.0.s8 %v1581
    %v1583 = vperm.slane %v1577, %v1582
    %v1585 = vunpack.c.l.s4 1934713408
    %v1586 = vunpack.c.0.s8 %v1585
    %v1587 = vperm.slane %v1579, %v1586
    %v1588 = vrot.slane %v1575, 4
    %v1589 = vsel %vm560, %v1588, %v1563
    %v1590 = vrot.slane %v1563, 4
    %v1591 = vsel %vm560, %v1575, %v1590
    %v1593 = vunpack.c.l.s4 1934713408
    %v1594 = vunpack.c.0.s8 %v1593
    %v1595 = vperm.slane %v1589, %v1594
    %v1597 = vunpack.c.l.s4 1934713408
    %v1598 = vunpack.c.0.s8 %v1597
    %v1599 = vperm.slane %v1591, %v1598
    %v1600 = vrot.slane %v1583, 4
    %v1601 = vsel %vm560, 0.0, %v1600
    %v1602 = vrot.slane %v1587, 4
    %v1603 = vsel %vm560, 0.0, %v1602
    %v1604 = vrot.slane %v1595, 4
    %v1605 = vsel %vm560, 0.0, %v1604
    %v1606 = vrot.slane %v1599, 4
    %v1607 = vsel %vm560, 0.0, %v1606
    %v1608 = vrot.slane %v1531, 4
    %v1609 = vsel %vm560, %v1608, %v512
    %v1610 = vrot.slane %v512, 4
    %v1611 = vsel %vm560, %v1531, %v1610
    %v1613 = vunpack.c.l.s4 1983009808
    %v1614 = vunpack.c.0.s8 %v1613
    %v1615 = vperm.slane %v1609, %v1614
    %v1617 = vunpack.c.l.s4 1983009808
    %v1618 = vunpack.c.0.s8 %v1617
    %v1619 = vperm.slane %v1611, %v1618
    %v1620 = vrot.slane %v1543, 4
    %v1621 = vsel %vm560, %v1620, %v1519
    %v1622 = vrot.slane %v1519, 4
    %v1623 = vsel %vm560, %v1543, %v1622
    %v1625 = vunpack.c.l.s4 1983009808
    %v1626 = vunpack.c.0.s8 %v1625
    %v1627 = vperm.slane %v1621, %v1626
    %v1629 = vunpack.c.l.s4 1983009808
    %v1630 = vunpack.c.0.s8 %v1629
    %v1631 = vperm.slane %v1623, %v1630
    %v1632 = vrot.slane %v1627, 4
    %v1633 = vsel %vm560, %v1632, %v1615
    %v1634 = vrot.slane %v1615, 4
    %v1635 = vsel %vm560, %v1627, %v1634
    %v1637 = vunpack.c.l.s4 1934713408
    %v1638 = vunpack.c.0.s8 %v1637
    %v1639 = vperm.slane %v1633, %v1638
    %v1641 = vunpack.c.l.s4 1934713408
    %v1642 = vunpack.c.0.s8 %v1641
    %v1643 = vperm.slane %v1635, %v1642
    %v1644 = vrot.slane %v1631, 4
    %v1645 = vsel %vm560, %v1644, %v1619
    %v1646 = vrot.slane %v1619, 4
    %v1647 = vsel %vm560, %v1631, %v1646
    %v1649 = vunpack.c.l.s4 1934713408
    %v1650 = vunpack.c.0.s8 %v1649
    %v1651 = vperm.slane %v1645, %v1650
    %v1653 = vunpack.c.l.s4 1934713408
    %v1654 = vunpack.c.0.s8 %v1653
    %v1655 = vperm.slane %v1647, %v1654
    %v1656 = vrot.slane %v1639, 4
    %v1657 = vsel %vm560, 0.0, %v1656
    %v1658 = vrot.slane %v1643, 4
    %v1659 = vsel %vm560, 0.0, %v1658
    %v1660 = vrot.slane %v1651, 4
    %v1661 = vsel %vm560, 0.0, %v1660
    %v1662 = vrot.slane %v1655, 4
    %v1663 = vsel %vm560, 0.0, %v1662
    %v1664 = vrot.slane %v1533, 4
    %v1665 = vsel %vm560, %v1664, %v515
    %v1666 = vrot.slane %v515, 4
    %v1667 = vsel %vm560, %v1533, %v1666
    %v1669 = vunpack.c.l.s4 1983009808
    %v1670 = vunpack.c.0.s8 %v1669
    %v1671 = vperm.slane %v1665, %v1670
    %v1673 = vunpack.c.l.s4 1983009808
    %v1674 = vunpack.c.0.s8 %v1673
    %v1675 = vperm.slane %v1667, %v1674
    %v1676 = vrot.slane %v1545, 4
    %v1677 = vsel %vm560, %v1676, %v1521
    %v1678 = vrot.slane %v1521, 4
    %v1679 = vsel %vm560, %v1545, %v1678
    %v1681 = vunpack.c.l.s4 1983009808
    %v1682 = vunpack.c.0.s8 %v1681
    %v1683 = vperm.slane %v1677, %v1682
    %v1685 = vunpack.c.l.s4 1983009808
    %v1686 = vunpack.c.0.s8 %v1685
    %v1687 = vperm.slane %v1679, %v1686
    %v1688 = vrot.slane %v1683, 4
    %v1689 = vsel %vm560, %v1688, %v1671
    %v1690 = vrot.slane %v1671, 4
    %v1691 = vsel %vm560, %v1683, %v1690
    %v1693 = vunpack.c.l.s4 1934713408
    %v1694 = vunpack.c.0.s8 %v1693
    %v1695 = vperm.slane %v1689, %v1694
    %v1697 = vunpack.c.l.s4 1934713408
    %v1698 = vunpack.c.0.s8 %v1697
    %v1699 = vperm.slane %v1691, %v1698
    %v1700 = vrot.slane %v1687, 4
    %v1701 = vsel %vm560, %v1700, %v1675
    %v1702 = vrot.slane %v1675, 4
    %v1703 = vsel %vm560, %v1687, %v1702
    %v1705 = vunpack.c.l.s4 1934713408
    %v1706 = vunpack.c.0.s8 %v1705
    %v1707 = vperm.slane %v1701, %v1706
    %v1709 = vunpack.c.l.s4 1934713408
    %v1710 = vunpack.c.0.s8 %v1709
    %v1711 = vperm.slane %v1703, %v1710
    %v1712 = vrot.slane %v1695, 4
    %v1713 = vsel %vm560, 0.0, %v1712
    %v1714 = vrot.slane %v1699, 4
    %v1715 = vsel %vm560, 0.0, %v1714
    %v1716 = vrot.slane %v1707, 4
    %v1717 = vsel %vm560, 0.0, %v1716
    %v1718 = vrot.slane %v1711, 4
    %v1719 = vsel %vm560, 0.0, %v1718
    %v1720 = vrot.slane %v1535, 4
    %v1721 = vsel %vm560, %v1720, %v517
    %v1722 = vrot.slane %v517, 4
    %v1723 = vsel %vm560, %v1535, %v1722
    %v1725 = vunpack.c.l.s4 1983009808
    %v1726 = vunpack.c.0.s8 %v1725
    %v1727 = vperm.slane %v1721, %v1726
    %v1729 = vunpack.c.l.s4 1983009808
    %v1730 = vunpack.c.0.s8 %v1729
    %v1731 = vperm.slane %v1723, %v1730
    %v1732 = vrot.slane %v1547, 4
    %v1733 = vsel %vm560, %v1732, %v1523
    %v1734 = vrot.slane %v1523, 4
    %v1735 = vsel %vm560, %v1547, %v1734
    %v1737 = vunpack.c.l.s4 1983009808
    %v1738 = vunpack.c.0.s8 %v1737
    %v1739 = vperm.slane %v1733, %v1738
    %v1741 = vunpack.c.l.s4 1983009808
    %v1742 = vunpack.c.0.s8 %v1741
    %v1743 = vperm.slane %v1735, %v1742
    %v1744 = vrot.slane %v1739, 4
    %v1745 = vsel %vm560, %v1744, %v1727
    %v1746 = vrot.slane %v1727, 4
    %v1747 = vsel %vm560, %v1739, %v1746
    %v1749 = vunpack.c.l.s4 1934713408
    %v1750 = vunpack.c.0.s8 %v1749
    %v1751 = vperm.slane %v1745, %v1750
    %v1753 = vunpack.c.l.s4 1934713408
    %v1754 = vunpack.c.0.s8 %v1753
    %v1755 = vperm.slane %v1747, %v1754
    %v1756 = vrot.slane %v1743, 4
    %v1757 = vsel %vm560, %v1756, %v1731
    %v1758 = vrot.slane %v1731, 4
    %v1759 = vsel %vm560, %v1743, %v1758
    %v1761 = vunpack.c.l.s4 1934713408
    %v1762 = vunpack.c.0.s8 %v1761
    %v1763 = vperm.slane %v1757, %v1762
    %v1765 = vunpack.c.l.s4 1934713408
    %v1766 = vunpack.c.0.s8 %v1765
    %v1767 = vperm.slane %v1759, %v1766
    %v1768 = vrot.slane %v1751, 4
    %v1769 = vsel %vm560, 0.0, %v1768
    %v1770 = vrot.slane %v1755, 4
    %v1771 = vsel %vm560, 0.0, %v1770
    %v1772 = vrot.slane %v1763, 4
    %v1773 = vsel %vm560, 0.0, %v1772
    %v1774 = vrot.slane %v1767, 4
    %v1775 = vsel %vm560, 0.0, %v1774
    %v1776 = vsel %vm560, %v1602, %v1583
    %v1778 = vunpack.c.l.s4 1983009808
    %v1779 = vunpack.c.0.s8 %v1778
    %v1780 = vperm.slane %v1776, %v1779
    %v1781 = vrot.slane %v1603, 4
    %v1782 = vsel %vm560, %v1781, %v1601
    %v1784 = vunpack.c.l.s4 1983009808
    %v1785 = vunpack.c.0.s8 %v1784
    %v1786 = vperm.slane %v1782, %v1785
    %v1787 = vsel %vm560, %v1606, %v1595
    %v1789 = vunpack.c.l.s4 1983009808
    %v1790 = vunpack.c.0.s8 %v1789
    %v1791 = vperm.slane %v1787, %v1790
    %v1792 = vrot.slane %v1607, 4
    %v1793 = vsel %vm560, %v1792, %v1605
    %v1795 = vunpack.c.l.s4 1983009808
    %v1796 = vunpack.c.0.s8 %v1795
    %v1797 = vperm.slane %v1793, %v1796
    %v1798 = vrot.slane %v1786, 4
    %v1799 = vsel %vm560, %v1798, %v1780
    %v1800 = vrot.slane %v1780, 4
    %v1801 = vsel %vm560, %v1786, %v1800
    %v1803 = vunpack.c.l.s4 1934713408
    %v1804 = vunpack.c.0.s8 %v1803
    %v1805 = vperm.slane %v1799, %v1804
    %v1807 = vunpack.c.l.s4 1934713408
    %v1808 = vunpack.c.0.s8 %v1807
    %v1809 = vperm.slane %v1801, %v1808
    %v1810 = vrot.slane %v1797, 4
    %v1811 = vsel %vm560, %v1810, %v1791
    %v1812 = vrot.slane %v1791, 4
    %v1813 = vsel %vm560, %v1797, %v1812
    %v1815 = vunpack.c.l.s4 1934713408
    %v1816 = vunpack.c.0.s8 %v1815
    %v1817 = vperm.slane %v1811, %v1816
    %v1819 = vunpack.c.l.s4 1934713408
    %v1820 = vunpack.c.0.s8 %v1819
    %v1821 = vperm.slane %v1813, %v1820
    %v1822 = vrot.slane %v1817, 4
    %v1823 = vsel %vm560, %v1822, %v1805
    %v1824 = vrot.slane %v1805, 4
    %v1825 = vsel %vm560, %v1817, %v1824
    %v1826 = vrot.slane %v1821, 4
    %v1827 = vsel %vm560, %v1826, %v1809
    %v1828 = vrot.slane %v1809, 4
    %v1829 = vsel %vm560, %v1821, %v1828
    %v1830 = vsel %vm560, %v1658, %v1639
    %v1832 = vunpack.c.l.s4 1983009808
    %v1833 = vunpack.c.0.s8 %v1832
    %v1834 = vperm.slane %v1830, %v1833
    %v1835 = vrot.slane %v1659, 4
    %v1836 = vsel %vm560, %v1835, %v1657
    %v1838 = vunpack.c.l.s4 1983009808
    %v1839 = vunpack.c.0.s8 %v1838
    %v1840 = vperm.slane %v1836, %v1839
    %v1841 = vsel %vm560, %v1662, %v1651
    %v1843 = vunpack.c.l.s4 1983009808
    %v1844 = vunpack.c.0.s8 %v1843
    %v1845 = vperm.slane %v1841, %v1844
    %v1846 = vrot.slane %v1663, 4
    %v1847 = vsel %vm560, %v1846, %v1661
    %v1849 = vunpack.c.l.s4 1983009808
    %v1850 = vunpack.c.0.s8 %v1849
    %v1851 = vperm.slane %v1847, %v1850
    %v1852 = vrot.slane %v1840, 4
    %v1853 = vsel %vm560, %v1852, %v1834
    %v1854 = vrot.slane %v1834, 4
    %v1855 = vsel %vm560, %v1840, %v1854
    %v1857 = vunpack.c.l.s4 1934713408
    %v1858 = vunpack.c.0.s8 %v1857
    %v1859 = vperm.slane %v1853, %v1858
    %v1861 = vunpack.c.l.s4 1934713408
    %v1862 = vunpack.c.0.s8 %v1861
    %v1863 = vperm.slane %v1855, %v1862
    %v1864 = vrot.slane %v1851, 4
    %v1865 = vsel %vm560, %v1864, %v1845
    %v1866 = vrot.slane %v1845, 4
    %v1867 = vsel %vm560, %v1851, %v1866
    %v1869 = vunpack.c.l.s4 1934713408
    %v1870 = vunpack.c.0.s8 %v1869
    %v1871 = vperm.slane %v1865, %v1870
    %v1873 = vunpack.c.l.s4 1934713408
    %v1874 = vunpack.c.0.s8 %v1873
    %v1875 = vperm.slane %v1867, %v1874
    %v1876 = vrot.slane %v1871, 4
    %v1877 = vsel %vm560, %v1876, %v1859
    %v1878 = vrot.slane %v1859, 4
    %v1879 = vsel %vm560, %v1871, %v1878
    %v1880 = vrot.slane %v1875, 4
    %v1881 = vsel %vm560, %v1880, %v1863
    %v1882 = vrot.slane %v1863, 4
    %v1883 = vsel %vm560, %v1875, %v1882
    %v1884 = vsel %vm560, %v1714, %v1695
    %v1886 = vunpack.c.l.s4 1983009808
    %v1887 = vunpack.c.0.s8 %v1886
    %v1888 = vperm.slane %v1884, %v1887
    %v1889 = vrot.slane %v1715, 4
    %v1890 = vsel %vm560, %v1889, %v1713
    %v1892 = vunpack.c.l.s4 1983009808
    %v1893 = vunpack.c.0.s8 %v1892
    %v1894 = vperm.slane %v1890, %v1893
    %v1895 = vsel %vm560, %v1718, %v1707
    %v1897 = vunpack.c.l.s4 1983009808
    %v1898 = vunpack.c.0.s8 %v1897
    %v1899 = vperm.slane %v1895, %v1898
    %v1900 = vrot.slane %v1719, 4
    %v1901 = vsel %vm560, %v1900, %v1717
    %v1903 = vunpack.c.l.s4 1983009808
    %v1904 = vunpack.c.0.s8 %v1903
    %v1905 = vperm.slane %v1901, %v1904
    %v1906 = vrot.slane %v1894, 4
    %v1907 = vsel %vm560, %v1906, %v1888
    %v1908 = vrot.slane %v1888, 4
    %v1909 = vsel %vm560, %v1894, %v1908
    %v1911 = vunpack.c.l.s4 1934713408
    %v1912 = vunpack.c.0.s8 %v1911
    %v1913 = vperm.slane %v1907, %v1912
    %v1915 = vunpack.c.l.s4 1934713408
    %v1916 = vunpack.c.0.s8 %v1915
    %v1917 = vperm.slane %v1909, %v1916
    %v1918 = vrot.slane %v1905, 4
    %v1919 = vsel %vm560, %v1918, %v1899
    %v1920 = vrot.slane %v1899, 4
    %v1921 = vsel %vm560, %v1905, %v1920
    %v1923 = vunpack.c.l.s4 1934713408
    %v1924 = vunpack.c.0.s8 %v1923
    %v1925 = vperm.slane %v1919, %v1924
    %v1927 = vunpack.c.l.s4 1934713408
    %v1928 = vunpack.c.0.s8 %v1927
    %v1929 = vperm.slane %v1921, %v1928
    %v1930 = vrot.slane %v1925, 4
    %v1931 = vsel %vm560, %v1930, %v1913
    %v1932 = vrot.slane %v1913, 4
    %v1933 = vsel %vm560, %v1925, %v1932
    %v1934 = vrot.slane %v1929, 4
    %v1935 = vsel %vm560, %v1934, %v1917
    %v1936 = vrot.slane %v1917, 4
    %v1937 = vsel %vm560, %v1929, %v1936
    %v1938 = vsel %vm560, %v1770, %v1751
    %v1940 = vunpack.c.l.s4 1983009808
    %v1941 = vunpack.c.0.s8 %v1940
    %v1942 = vperm.slane %v1938, %v1941
    %v1943 = vrot.slane %v1771, 4
    %v1944 = vsel %vm560, %v1943, %v1769
    %v1946 = vunpack.c.l.s4 1983009808
    %v1947 = vunpack.c.0.s8 %v1946
    %v1948 = vperm.slane %v1944, %v1947
    %v1949 = vsel %vm560, %v1774, %v1763
    %v1951 = vunpack.c.l.s4 1983009808
    %v1952 = vunpack.c.0.s8 %v1951
    %v1953 = vperm.slane %v1949, %v1952
    %v1954 = vrot.slane %v1775, 4
    %v1955 = vsel %vm560, %v1954, %v1773
    %v1957 = vunpack.c.l.s4 1983009808
    %v1958 = vunpack.c.0.s8 %v1957
    %v1959 = vperm.slane %v1955, %v1958
    %v1960 = vrot.slane %v1948, 4
    %v1961 = vsel %vm560, %v1960, %v1942
    %v1962 = vrot.slane %v1942, 4
    %v1963 = vsel %vm560, %v1948, %v1962
    %v1965 = vunpack.c.l.s4 1934713408
    %v1966 = vunpack.c.0.s8 %v1965
    %v1967 = vperm.slane %v1961, %v1966
    %v1969 = vunpack.c.l.s4 1934713408
    %v1970 = vunpack.c.0.s8 %v1969
    %v1971 = vperm.slane %v1963, %v1970
    %v1972 = vrot.slane %v1959, 4
    %v1973 = vsel %vm560, %v1972, %v1953
    %v1974 = vrot.slane %v1953, 4
    %v1975 = vsel %vm560, %v1959, %v1974
    %v1977 = vunpack.c.l.s4 1934713408
    %v1978 = vunpack.c.0.s8 %v1977
    %v1979 = vperm.slane %v1973, %v1978
    %v1981 = vunpack.c.l.s4 1934713408
    %v1982 = vunpack.c.0.s8 %v1981
    %v1983 = vperm.slane %v1975, %v1982
    %v1984 = vrot.slane %v1979, 4
    %v1985 = vsel %vm560, %v1984, %v1967
    %v1986 = vrot.slane %v1967, 4
    %v1987 = vsel %vm560, %v1979, %v1986
    %v1988 = vrot.slane %v1983, 4
    %v1989 = vsel %vm560, %v1988, %v1971
    %v1990 = vrot.slane %v1971, 4
    %v1991 = vsel %vm560, %v1983, %v1990
    %v1992 = vpack.c.bf16 %v1823, %v1823
    %v1993 = vpack.c.bf16 %v1877, %v1877
    %v1994 = vpack.c.bf16 %v1825, %v1825
    %v1995 = vpack.c.bf16 %v1879, %v1879
    %v1996 = vpack.c.bf16 %v1827, %v1827
    %v1997 = vpack.c.bf16 %v1881, %v1881
    %v1998 = vpack.c.bf16 %v1829, %v1829
    %v1999 = vpack.c.bf16 %v1883, %v1883
    %v2000 = vpack.c.bf16 %v1931, %v1931
    %v2001 = vpack.c.bf16 %v1985, %v1985
    %v2002 = vpack.c.bf16 %v1933, %v1933
    %v2003 = vpack.c.bf16 %v1987, %v1987
    %v2004 = vpack.c.bf16 %v1935, %v1935
    %v2005 = vpack.c.bf16 %v1989, %v1989
    %v2006 = vpack.c.bf16 %v1937, %v1937
    %v2007 = vpack.c.bf16 %v1991, %v1991
    %v2010 = vunpack.c.l.b16 %v1000
    %v2011 = vunpack.c.l.b16 %v1001
    %v2012 = vpack.c.b16 %v2011, %v2010
    %v2015 = vunpack.c.l.b16 %v1496
    %v2016 = vunpack.c.l.b16 %v1497
    %v2017 = vpack.c.b16 %v2016, %v2015
    %vm2018 = vcmask 261120
    %v2020 = vsel %vm2018, %v2012, 0
    %v2023 = vsel %vm2018, %v2017, 0
    %2025 = vmatpush.bf16.xpose.msra.mxu0 0
    %2026 = vmatpush.bf16.xpose.msra.mxu0 0
    %2027 = vmatpush.bf16.xpose.msra.mxu0 0
    %2028 = vmatpush.bf16.xpose.msra.mxu0 0
    %2029 = vmatpush.bf16.xpose.msra.mxu0 0
    %2030 = vmatpush.bf16.xpose.msra.mxu0 0
    %2031 = vmatpush.bf16.xpose.msra.mxu0 0
    %2032 = vmatpush.bf16.xpose.msra.mxu0 %v2023
    %2033 = vmatmul.bf16.gmra.mxu0 %v2020
    %v2034 = vpop.f32.mrf.mxu0
    %v2035 = vadd.f32 0.0, %v2034
    %v2036 = vpop.f32.mrf.mxu0
    %v2037 = vadd.f32 0.0, %v2036
    %2038 = vdwg.mxu0
    %v2041 = vunpack.c.l.b16 %v1002
    %v2042 = vunpack.c.l.b16 %v1003
    %v2043 = vpack.c.b16 %v2042, %v2041
    %v2046 = vunpack.c.l.b16 %v1498
    %v2047 = vunpack.c.l.b16 %v1499
    %v2048 = vpack.c.b16 %v2047, %v2046
    %v2050 = vsel %vm2018, %v2043, 0
    %v2053 = vsel %vm2018, %v2048, 0
    %2055 = vmatpush.bf16.xpose.msra.mxu0 0
    %2056 = vmatpush.bf16.xpose.msra.mxu0 0
    %2057 = vmatpush.bf16.xpose.msra.mxu0 0
    %2058 = vmatpush.bf16.xpose.msra.mxu0 0
    %2059 = vmatpush.bf16.xpose.msra.mxu0 0
    %2060 = vmatpush.bf16.xpose.msra.mxu0 0
    %2061 = vmatpush.bf16.xpose.msra.mxu0 0
    %2062 = vmatpush.bf16.xpose.msra.mxu0 %v2053
    %2063 = vmatmul.bf16.gmra.mxu0 %v2050
    %v2064 = vpop.f32.mrf.mxu0
    %v2065 = vadd.f32 0.0, %v2064
    %v2066 = vpop.f32.mrf.mxu0
    %v2067 = vadd.f32 0.0, %v2066
    %2068 = vdwg.mxu0
    %v2071 = vunpack.c.l.b16 %v1004
    %v2072 = vunpack.c.l.b16 %v1005
    %v2073 = vpack.c.b16 %v2072, %v2071
    %v2076 = vunpack.c.l.b16 %v1500
    %v2077 = vunpack.c.l.b16 %v1501
    %v2078 = vpack.c.b16 %v2077, %v2076
    %v2080 = vsel %vm2018, %v2073, 0
    %v2083 = vsel %vm2018, %v2078, 0
    %2085 = vmatpush.bf16.xpose.msra.mxu0 0
    %2086 = vmatpush.bf16.xpose.msra.mxu0 0
    %2087 = vmatpush.bf16.xpose.msra.mxu0 0
    %2088 = vmatpush.bf16.xpose.msra.mxu0 0
    %2089 = vmatpush.bf16.xpose.msra.mxu0 0
    %2090 = vmatpush.bf16.xpose.msra.mxu0 0
    %2091 = vmatpush.bf16.xpose.msra.mxu0 0
    %2092 = vmatpush.bf16.xpose.msra.mxu0 %v2083
    %2093 = vmatmul.bf16.gmra.mxu0 %v2080
    %v2094 = vpop.f32.mrf.mxu0
    %v2095 = vadd.f32 0.0, %v2094
    %v2096 = vpop.f32.mrf.mxu0
    %v2097 = vadd.f32 0.0, %v2096
    %2098 = vdwg.mxu0
    %v2101 = vunpack.c.l.b16 %v1006
    %v2102 = vunpack.c.l.b16 %v1007
    %v2103 = vpack.c.b16 %v2102, %v2101
    %v2106 = vunpack.c.l.b16 %v1502
    %v2107 = vunpack.c.l.b16 %v1503
    %v2108 = vpack.c.b16 %v2107, %v2106
    %v2110 = vsel %vm2018, %v2103, 0
    %v2113 = vsel %vm2018, %v2108, 0
    %2115 = vmatpush.bf16.xpose.msra.mxu0 0
    %2116 = vmatpush.bf16.xpose.msra.mxu0 0
    %2117 = vmatpush.bf16.xpose.msra.mxu0 0
    %2118 = vmatpush.bf16.xpose.msra.mxu0 0
    %2119 = vmatpush.bf16.xpose.msra.mxu0 0
    %2120 = vmatpush.bf16.xpose.msra.mxu0 0
    %2121 = vmatpush.bf16.xpose.msra.mxu0 0
    %2122 = vmatpush.bf16.xpose.msra.mxu0 %v2113
    %2123 = vmatmul.bf16.gmra.mxu0 %v2110
    %v2124 = vpop.f32.mrf.mxu0
    %v2125 = vadd.f32 0.0, %v2124
    %v2126 = vpop.f32.mrf.mxu0
    %v2127 = vadd.f32 0.0, %v2126
    %2128 = vdwg.mxu0
    %v2131 = vunpack.c.l.b16 %v1008
    %v2132 = vunpack.c.l.b16 %v1009
    %v2133 = vpack.c.b16 %v2132, %v2131
    %v2136 = vunpack.c.l.b16 %v1504
    %v2137 = vunpack.c.l.b16 %v1505
    %v2138 = vpack.c.b16 %v2137, %v2136
    %v2140 = vsel %vm2018, %v2133, 0
    %v2143 = vsel %vm2018, %v2138, 0
    %2145 = vmatpush.bf16.xpose.msra.mxu0 0
    %2146 = vmatpush.bf16.xpose.msra.mxu0 0
    %2147 = vmatpush.bf16.xpose.msra.mxu0 0
    %2148 = vmatpush.bf16.xpose.msra.mxu0 0
    %2149 = vmatpush.bf16.xpose.msra.mxu0 0
    %2150 = vmatpush.bf16.xpose.msra.mxu0 0
    %2151 = vmatpush.bf16.xpose.msra.mxu0 0
    %2152 = vmatpush.bf16.xpose.msra.mxu0 %v2143
    %2153 = vmatmul.bf16.gmra.mxu0 %v2140
    %v2154 = vpop.f32.mrf.mxu0
    %v2155 = vadd.f32 0.0, %v2154
    %v2156 = vpop.f32.mrf.mxu0
    %v2157 = vadd.f32 0.0, %v2156
    %2158 = vdwg.mxu0
    %v2161 = vunpack.c.l.b16 %v1010
    %v2162 = vunpack.c.l.b16 %v1011
    %v2163 = vpack.c.b16 %v2162, %v2161
    %v2166 = vunpack.c.l.b16 %v1506
    %v2167 = vunpack.c.l.b16 %v1507
    %v2168 = vpack.c.b16 %v2167, %v2166
    %v2170 = vsel %vm2018, %v2163, 0
    %v2173 = vsel %vm2018, %v2168, 0
    %2175 = vmatpush.bf16.xpose.msra.mxu0 0
    %2176 = vmatpush.bf16.xpose.msra.mxu0 0
    %2177 = vmatpush.bf16.xpose.msra.mxu0 0
    %2178 = vmatpush.bf16.xpose.msra.mxu0 0
    %2179 = vmatpush.bf16.xpose.msra.mxu0 0
    %2180 = vmatpush.bf16.xpose.msra.mxu0 0
    %2181 = vmatpush.bf16.xpose.msra.mxu0 0
    %2182 = vmatpush.bf16.xpose.msra.mxu0 %v2173
    %2183 = vmatmul.bf16.gmra.mxu0 %v2170
    %v2184 = vpop.f32.mrf.mxu0
    %v2185 = vadd.f32 0.0, %v2184
    %v2186 = vpop.f32.mrf.mxu0
    %v2187 = vadd.f32 0.0, %v2186
    %2188 = vdwg.mxu0
    %v2191 = vunpack.c.l.b16 %v1012
    %v2192 = vunpack.c.l.b16 %v1013
    %v2193 = vpack.c.b16 %v2192, %v2191
    %v2196 = vunpack.c.l.b16 %v1508
    %v2197 = vunpack.c.l.b16 %v1509
    %v2198 = vpack.c.b16 %v2197, %v2196
    %v2200 = vsel %vm2018, %v2193, 0
    %v2203 = vsel %vm2018, %v2198, 0
    %2205 = vmatpush.bf16.xpose.msra.mxu0 0
    %2206 = vmatpush.bf16.xpose.msra.mxu0 0
    %2207 = vmatpush.bf16.xpose.msra.mxu0 0
    %2208 = vmatpush.bf16.xpose.msra.mxu0 0
    %2209 = vmatpush.bf16.xpose.msra.mxu0 0
    %2210 = vmatpush.bf16.xpose.msra.mxu0 0
    %2211 = vmatpush.bf16.xpose.msra.mxu0 0
    %2212 = vmatpush.bf16.xpose.msra.mxu0 %v2203
    %2213 = vmatmul.bf16.gmra.mxu0 %v2200
    %v2214 = vpop.f32.mrf.mxu0
    %v2215 = vadd.f32 0.0, %v2214
    %v2216 = vpop.f32.mrf.mxu0
    %v2217 = vadd.f32 0.0, %v2216
    %2218 = vdwg.mxu0
    %v2221 = vunpack.c.l.b16 %v1014
    %v2222 = vunpack.c.l.b16 %v1015
    %v2223 = vpack.c.b16 %v2222, %v2221
    %v2226 = vunpack.c.l.b16 %v1510
    %v2227 = vunpack.c.l.b16 %v1511
    %v2228 = vpack.c.b16 %v2227, %v2226
    %v2230 = vsel %vm2018, %v2223, 0
    %v2233 = vsel %vm2018, %v2228, 0
    %2235 = vmatpush.bf16.xpose.msra.mxu0 0
    %2236 = vmatpush.bf16.xpose.msra.mxu0 0
    %2237 = vmatpush.bf16.xpose.msra.mxu0 0
    %2238 = vmatpush.bf16.xpose.msra.mxu0 0
    %2239 = vmatpush.bf16.xpose.msra.mxu0 0
    %2240 = vmatpush.bf16.xpose.msra.mxu0 0
    %2241 = vmatpush.bf16.xpose.msra.mxu0 0
    %2242 = vmatpush.bf16.xpose.msra.mxu0 %v2233
    %2243 = vmatmul.bf16.gmra.mxu0 %v2230
    %v2244 = vpop.f32.mrf.mxu0
    %v2245 = vadd.f32 0.0, %v2244
    %v2246 = vpop.f32.mrf.mxu0
    %v2247 = vadd.f32 0.0, %v2246
    %2248 = vdwg.mxu0
    %vm2249 = vcmask 130048
    %v2250 = vsel %vm2249, %v2035, -inf
    %2251 = vmax.xlane.f32.xlu0 %v2250
    %v2252 = vpop.xlane.xlu0 %2251
    %v2253 = vsel %vm2249, %v2037, -inf
    %2254 = vmax.xlane.f32.xlu0 %v2253
    %v2255 = vpop.xlane.xlu0 %2254
    %v2256 = vsel %vm2249, %v2065, -inf
    %2257 = vmax.xlane.f32.xlu0 %v2256
    %v2258 = vpop.xlane.xlu0 %2257
    %v2259 = vsel %vm2249, %v2067, -inf
    %2260 = vmax.xlane.f32.xlu0 %v2259
    %v2261 = vpop.xlane.xlu0 %2260
    %v2262 = vsel %vm2249, %v2095, -inf
    %2263 = vmax.xlane.f32.xlu0 %v2262
    %v2264 = vpop.xlane.xlu0 %2263
    %v2265 = vsel %vm2249, %v2097, -inf
    %2266 = vmax.xlane.f32.xlu0 %v2265
    %v2267 = vpop.xlane.xlu0 %2266
    %v2268 = vsel %vm2249, %v2125, -inf
    %2269 = vmax.xlane.f32.xlu0 %v2268
    %v2270 = vpop.xlane.xlu0 %2269
    %v2271 = vsel %vm2249, %v2127, -inf
    %2272 = vmax.xlane.f32.xlu0 %v2271
    %v2273 = vpop.xlane.xlu0 %2272
    %v2274 = vsel %vm2249, %v2155, -inf
    %2275 = vmax.xlane.f32.xlu0 %v2274
    %v2276 = vpop.xlane.xlu0 %2275
    %v2277 = vsel %vm2249, %v2157, -inf
    %2278 = vmax.xlane.f32.xlu0 %v2277
    %v2279 = vpop.xlane.xlu0 %2278
    %v2280 = vsel %vm2249, %v2185, -inf
    %2281 = vmax.xlane.f32.xlu0 %v2280
    %v2282 = vpop.xlane.xlu0 %2281
    %v2283 = vsel %vm2249, %v2187, -inf
    %2284 = vmax.xlane.f32.xlu0 %v2283
    %v2285 = vpop.xlane.xlu0 %2284
    %v2286 = vsel %vm2249, %v2215, -inf
    %2287 = vmax.xlane.f32.xlu0 %v2286
    %v2288 = vpop.xlane.xlu0 %2287
    %v2289 = vsel %vm2249, %v2217, -inf
    %2290 = vmax.xlane.f32.xlu0 %v2289
    %v2291 = vpop.xlane.xlu0 %2290
    %v2292 = vsel %vm2249, %v2245, -inf
    %2293 = vmax.xlane.f32.xlu0 %v2292
    %v2294 = vpop.xlane.xlu0 %2293
    %v2295 = vsel %vm2249, %v2247, -inf
    %2296 = vmax.xlane.f32.xlu0 %v2295
    %v2297 = vpop.xlane.xlu0 %2296
    %v2298 = vsub.f32 %v2035, %v2252
    %v2299 = vsub.f32 %v2037, %v2255
    %v2300 = vsub.f32 %v2065, %v2258
    %v2301 = vsub.f32 %v2067, %v2261
    %v2302 = vsub.f32 %v2095, %v2264
    %v2303 = vsub.f32 %v2097, %v2267
    %v2304 = vsub.f32 %v2125, %v2270
    %v2305 = vsub.f32 %v2127, %v2273
    %v2306 = vsub.f32 %v2155, %v2276
    %v2307 = vsub.f32 %v2157, %v2279
    %v2308 = vsub.f32 %v2185, %v2282
    %v2309 = vsub.f32 %v2187, %v2285
    %v2310 = vsub.f32 %v2215, %v2288
    %v2311 = vsub.f32 %v2217, %v2291
    %v2312 = vsub.f32 %v2245, %v2294
    %v2313 = vsub.f32 %v2247, %v2297
    %v2314 = vmul.f32 %v2298, 1.442695
    %v2315 = vpow.pop %v2314
    %v2316 = vmul.f32 %v2299, 1.442695
    %v2317 = vpow.pop %v2316
    %v2318 = vmul.f32 %v2300, 1.442695
    %v2319 = vpow.pop %v2318
    %v2320 = vmul.f32 %v2301, 1.442695
    %v2321 = vpow.pop %v2320
    %v2322 = vmul.f32 %v2302, 1.442695
    %v2323 = vpow.pop %v2322
    %v2324 = vmul.f32 %v2303, 1.442695
    %v2325 = vpow.pop %v2324
    %v2326 = vmul.f32 %v2304, 1.442695
    %v2327 = vpow.pop %v2326
    %v2328 = vmul.f32 %v2305, 1.442695
    %v2329 = vpow.pop %v2328
    %v2330 = vmul.f32 %v2306, 1.442695
    %v2331 = vpow.pop %v2330
    %v2332 = vmul.f32 %v2307, 1.442695
    %v2333 = vpow.pop %v2332
    %v2334 = vmul.f32 %v2308, 1.442695
    %v2335 = vpow.pop %v2334
    %v2336 = vmul.f32 %v2309, 1.442695
    %v2337 = vpow.pop %v2336
    %v2338 = vmul.f32 %v2310, 1.442695
    %v2339 = vpow.pop %v2338
    %v2340 = vmul.f32 %v2311, 1.442695
    %v2341 = vpow.pop %v2340
    %v2342 = vmul.f32 %v2312, 1.442695
    %v2343 = vpow.pop %v2342
    %v2344 = vmul.f32 %v2313, 1.442695
    %v2345 = vpow.pop %v2344
    %v2346 = vsel %vm2249, %v2315, 0.0
    %2347 = vadd.xlane.f32.xlu0 %v2346
    %v2348 = vpop.xlane.xlu0 %2347
    %v2349 = vsel %vm2249, %v2317, 0.0
    %2350 = vadd.xlane.f32.xlu0 %v2349
    %v2351 = vpop.xlane.xlu0 %2350
    %v2352 = vsel %vm2249, %v2319, 0.0
    %2353 = vadd.xlane.f32.xlu0 %v2352
    %v2354 = vpop.xlane.xlu0 %2353
    %v2355 = vsel %vm2249, %v2321, 0.0
    %2356 = vadd.xlane.f32.xlu0 %v2355
    %v2357 = vpop.xlane.xlu0 %2356
    %v2358 = vsel %vm2249, %v2323, 0.0
    %2359 = vadd.xlane.f32.xlu0 %v2358
    %v2360 = vpop.xlane.xlu0 %2359
    %v2361 = vsel %vm2249, %v2325, 0.0
    %2362 = vadd.xlane.f32.xlu0 %v2361
    %v2363 = vpop.xlane.xlu0 %2362
    %v2364 = vsel %vm2249, %v2327, 0.0
    %2365 = vadd.xlane.f32.xlu0 %v2364
    %v2366 = vpop.xlane.xlu0 %2365
    %v2367 = vsel %vm2249, %v2329, 0.0
    %2368 = vadd.xlane.f32.xlu0 %v2367
    %v2369 = vpop.xlane.xlu0 %2368
    %v2370 = vsel %vm2249, %v2331, 0.0
    %2371 = vadd.xlane.f32.xlu0 %v2370
    %v2372 = vpop.xlane.xlu0 %2371
    %v2373 = vsel %vm2249, %v2333, 0.0
    %2374 = vadd.xlane.f32.xlu0 %v2373
    %v2375 = vpop.xlane.xlu0 %2374
    %v2376 = vsel %vm2249, %v2335, 0.0
    %2377 = vadd.xlane.f32.xlu0 %v2376
    %v2378 = vpop.xlane.xlu0 %2377
    %v2379 = vsel %vm2249, %v2337, 0.0
    %2380 = vadd.xlane.f32.xlu0 %v2379
    %v2381 = vpop.xlane.xlu0 %2380
    %v2382 = vsel %vm2249, %v2339, 0.0
    %2383 = vadd.xlane.f32.xlu0 %v2382
    %v2384 = vpop.xlane.xlu0 %2383
    %v2385 = vsel %vm2249, %v2341, 0.0
    %2386 = vadd.xlane.f32.xlu0 %v2385
    %v2387 = vpop.xlane.xlu0 %2386
    %v2388 = vsel %vm2249, %v2343, 0.0
    %2389 = vadd.xlane.f32.xlu0 %v2388
    %v2390 = vpop.xlane.xlu0 %2389
    %v2391 = vsel %vm2249, %v2345, 0.0
    %2392 = vadd.xlane.f32.xlu0 %v2391
    %v2393 = vpop.xlane.xlu0 %2392
    %v2394 = vrcp.pop %v2348
    %v2395 = vrcp.pop %v2351
    %v2396 = vrcp.pop %v2354
    %v2397 = vrcp.pop %v2357
    %v2398 = vrcp.pop %v2360
    %v2399 = vrcp.pop %v2363
    %v2400 = vrcp.pop %v2366
    %v2401 = vrcp.pop %v2369
    %v2402 = vrcp.pop %v2372
    %v2403 = vrcp.pop %v2375
    %v2404 = vrcp.pop %v2378
    %v2405 = vrcp.pop %v2381
    %v2406 = vrcp.pop %v2384
    %v2407 = vrcp.pop %v2387
    %v2408 = vrcp.pop %v2390
    %v2409 = vrcp.pop %v2393
    %v2410 = vmul.f32 %v2315, %v2394
    %v2411 = vmul.f32 %v2317, %v2395
    %v2412 = vmul.f32 %v2319, %v2396
    %v2413 = vmul.f32 %v2321, %v2397
    %v2414 = vmul.f32 %v2323, %v2398
    %v2415 = vmul.f32 %v2325, %v2399
    %v2416 = vmul.f32 %v2327, %v2400
    %v2417 = vmul.f32 %v2329, %v2401
    %v2418 = vmul.f32 %v2331, %v2402
    %v2419 = vmul.f32 %v2333, %v2403
    %v2420 = vmul.f32 %v2335, %v2404
    %v2421 = vmul.f32 %v2337, %v2405
    %v2422 = vmul.f32 %v2339, %v2406
    %v2423 = vmul.f32 %v2341, %v2407
    %v2424 = vmul.f32 %v2343, %v2408
    %v2425 = vmul.f32 %v2345, %v2409
    %v2426 = vpack.c.bf16 %v2410, %v2410
    %v2427 = vpack.c.bf16 %v2411, %v2411
    %v2428 = vpack.c.bf16 %v2412, %v2412
    %v2429 = vpack.c.bf16 %v2413, %v2413
    %v2430 = vpack.c.bf16 %v2414, %v2414
    %v2431 = vpack.c.bf16 %v2415, %v2415
    %v2432 = vpack.c.bf16 %v2416, %v2416
    %v2433 = vpack.c.bf16 %v2417, %v2417
    %v2434 = vpack.c.bf16 %v2418, %v2418
    %v2435 = vpack.c.bf16 %v2419, %v2419
    %v2436 = vpack.c.bf16 %v2420, %v2420
    %v2437 = vpack.c.bf16 %v2421, %v2421
    %v2438 = vpack.c.bf16 %v2422, %v2422
    %v2439 = vpack.c.bf16 %v2423, %v2423
    %v2440 = vpack.c.bf16 %v2424, %v2424
    %v2441 = vpack.c.bf16 %v2425, %v2425
    %v2444 = vunpack.c.l.b16 %v2426
    %v2445 = vunpack.c.l.b16 %v2427
    %v2446 = vpack.c.b16 %v2445, %v2444
    %v2449 = vunpack.c.l.b16 %v1992
    %v2450 = vunpack.c.l.b16 %v1993
    %v2451 = vpack.c.b16 %v2450, %v2449
    %v2454 = vsel %vm2249, %v2446, 0
    %2456 = vmatpush.bf16.msra.mxu0 0
    %2457 = vmatpush.bf16.msra.mxu0 0
    %2458 = vmatpush.bf16.msra.mxu0 0
    %2459 = vmatpush.bf16.msra.mxu0 0
    %2460 = vmatpush.bf16.msra.mxu0 0
    %2461 = vmatpush.bf16.msra.mxu0 0
    %2462 = vmatpush.bf16.msra.mxu0 0
    %2463 = vmatpush.bf16.msra.mxu0 %v2451
    %2464 = vmatmul.bf16.gmra.mxu0 %v2454
    %v2465 = vpop.f32.mrf.mxu0
    %v2466 = vadd.f32 0.0, %v2465
    %v2467 = vpop.f32.mrf.mxu0
    %v2468 = vadd.f32 0.0, %v2467
    %2469 = vdwg.mxu0
    %v2472 = vunpack.c.l.b16 %v2428
    %v2473 = vunpack.c.l.b16 %v2429
    %v2474 = vpack.c.b16 %v2473, %v2472
    %v2477 = vunpack.c.l.b16 %v1994
    %v2478 = vunpack.c.l.b16 %v1995
    %v2479 = vpack.c.b16 %v2478, %v2477
    %v2482 = vsel %vm2249, %v2474, 0
    %2484 = vmatpush.bf16.msra.mxu0 0
    %2485 = vmatpush.bf16.msra.mxu0 0
    %2486 = vmatpush.bf16.msra.mxu0 0
    %2487 = vmatpush.bf16.msra.mxu0 0
    %2488 = vmatpush.bf16.msra.mxu0 0
    %2489 = vmatpush.bf16.msra.mxu0 0
    %2490 = vmatpush.bf16.msra.mxu0 0
    %2491 = vmatpush.bf16.msra.mxu0 %v2479
    %2492 = vmatmul.bf16.gmra.mxu0 %v2482
    %v2493 = vpop.f32.mrf.mxu0
    %v2494 = vadd.f32 0.0, %v2493
    %v2495 = vpop.f32.mrf.mxu0
    %v2496 = vadd.f32 0.0, %v2495
    %2497 = vdwg.mxu0
    %v2500 = vunpack.c.l.b16 %v2430
    %v2501 = vunpack.c.l.b16 %v2431
    %v2502 = vpack.c.b16 %v2501, %v2500
    %v2505 = vunpack.c.l.b16 %v1996
    %v2506 = vunpack.c.l.b16 %v1997
    %v2507 = vpack.c.b16 %v2506, %v2505
    %v2510 = vsel %vm2249, %v2502, 0
    %2512 = vmatpush.bf16.msra.mxu0 0
    %2513 = vmatpush.bf16.msra.mxu0 0
    %2514 = vmatpush.bf16.msra.mxu0 0
    %2515 = vmatpush.bf16.msra.mxu0 0
    %2516 = vmatpush.bf16.msra.mxu0 0
    %2517 = vmatpush.bf16.msra.mxu0 0
    %2518 = vmatpush.bf16.msra.mxu0 0
    %2519 = vmatpush.bf16.msra.mxu0 %v2507
    %2520 = vmatmul.bf16.gmra.mxu0 %v2510
    %v2521 = vpop.f32.mrf.mxu0
    %v2522 = vadd.f32 0.0, %v2521
    %v2523 = vpop.f32.mrf.mxu0
    %v2524 = vadd.f32 0.0, %v2523
    %2525 = vdwg.mxu0
    %v2528 = vunpack.c.l.b16 %v2432
    %v2529 = vunpack.c.l.b16 %v2433
    %v2530 = vpack.c.b16 %v2529, %v2528
    %v2533 = vunpack.c.l.b16 %v1998
    %v2534 = vunpack.c.l.b16 %v1999
    %v2535 = vpack.c.b16 %v2534, %v2533
    %v2538 = vsel %vm2249, %v2530, 0
    %2540 = vmatpush.bf16.msra.mxu0 0
    %2541 = vmatpush.bf16.msra.mxu0 0
    %2542 = vmatpush.bf16.msra.mxu0 0
    %2543 = vmatpush.bf16.msra.mxu0 0
    %2544 = vmatpush.bf16.msra.mxu0 0
    %2545 = vmatpush.bf16.msra.mxu0 0
    %2546 = vmatpush.bf16.msra.mxu0 0
    %2547 = vmatpush.bf16.msra.mxu0 %v2535
    %2548 = vmatmul.bf16.gmra.mxu0 %v2538
    %v2549 = vpop.f32.mrf.mxu0
    %v2550 = vadd.f32 0.0, %v2549
    %v2551 = vpop.f32.mrf.mxu0
    %v2552 = vadd.f32 0.0, %v2551
    %2553 = vdwg.mxu0
    %v2556 = vunpack.c.l.b16 %v2434
    %v2557 = vunpack.c.l.b16 %v2435
    %v2558 = vpack.c.b16 %v2557, %v2556
    %v2561 = vunpack.c.l.b16 %v2000
    %v2562 = vunpack.c.l.b16 %v2001
    %v2563 = vpack.c.b16 %v2562, %v2561
    %v2566 = vsel %vm2249, %v2558, 0
    %2568 = vmatpush.bf16.msra.mxu0 0
    %2569 = vmatpush.bf16.msra.mxu0 0
    %2570 = vmatpush.bf16.msra.mxu0 0
    %2571 = vmatpush.bf16.msra.mxu0 0
    %2572 = vmatpush.bf16.msra.mxu0 0
    %2573 = vmatpush.bf16.msra.mxu0 0
    %2574 = vmatpush.bf16.msra.mxu0 0
    %2575 = vmatpush.bf16.msra.mxu0 %v2563
    %2576 = vmatmul.bf16.gmra.mxu0 %v2566
    %v2577 = vpop.f32.mrf.mxu0
    %v2578 = vadd.f32 0.0, %v2577
    %v2579 = vpop.f32.mrf.mxu0
    %v2580 = vadd.f32 0.0, %v2579
    %2581 = vdwg.mxu0
    %v2584 = vunpack.c.l.b16 %v2436
    %v2585 = vunpack.c.l.b16 %v2437
    %v2586 = vpack.c.b16 %v2585, %v2584
    %v2589 = vunpack.c.l.b16 %v2002
    %v2590 = vunpack.c.l.b16 %v2003
    %v2591 = vpack.c.b16 %v2590, %v2589
    %v2594 = vsel %vm2249, %v2586, 0
    %2596 = vmatpush.bf16.msra.mxu0 0
    %2597 = vmatpush.bf16.msra.mxu0 0
    %2598 = vmatpush.bf16.msra.mxu0 0
    %2599 = vmatpush.bf16.msra.mxu0 0
    %2600 = vmatpush.bf16.msra.mxu0 0
    %2601 = vmatpush.bf16.msra.mxu0 0
    %2602 = vmatpush.bf16.msra.mxu0 0
    %2603 = vmatpush.bf16.msra.mxu0 %v2591
    %2604 = vmatmul.bf16.gmra.mxu0 %v2594
    %v2605 = vpop.f32.mrf.mxu0
    %v2606 = vadd.f32 0.0, %v2605
    %v2607 = vpop.f32.mrf.mxu0
    %v2608 = vadd.f32 0.0, %v2607
    %2609 = vdwg.mxu0
    %v2612 = vunpack.c.l.b16 %v2438
    %v2613 = vunpack.c.l.b16 %v2439
    %v2614 = vpack.c.b16 %v2613, %v2612
    %v2617 = vunpack.c.l.b16 %v2004
    %v2618 = vunpack.c.l.b16 %v2005
    %v2619 = vpack.c.b16 %v2618, %v2617
    %v2622 = vsel %vm2249, %v2614, 0
    %2624 = vmatpush.bf16.msra.mxu0 0
    %2625 = vmatpush.bf16.msra.mxu0 0
    %2626 = vmatpush.bf16.msra.mxu0 0
    %2627 = vmatpush.bf16.msra.mxu0 0
    %2628 = vmatpush.bf16.msra.mxu0 0
    %2629 = vmatpush.bf16.msra.mxu0 0
    %2630 = vmatpush.bf16.msra.mxu0 0
    %2631 = vmatpush.bf16.msra.mxu0 %v2619
    %2632 = vmatmul.bf16.gmra.mxu0 %v2622
    %v2633 = vpop.f32.mrf.mxu0
    %v2634 = vadd.f32 0.0, %v2633
    %v2635 = vpop.f32.mrf.mxu0
    %v2636 = vadd.f32 0.0, %v2635
    %2637 = vdwg.mxu0
    %v2640 = vunpack.c.l.b16 %v2440
    %v2641 = vunpack.c.l.b16 %v2441
    %v2642 = vpack.c.b16 %v2641, %v2640
    %v2645 = vunpack.c.l.b16 %v2006
    %v2646 = vunpack.c.l.b16 %v2007
    %v2647 = vpack.c.b16 %v2646, %v2645
    %v2650 = vsel %vm2249, %v2642, 0
    %2652 = vmatpush.bf16.msra.mxu0 0
    %2653 = vmatpush.bf16.msra.mxu0 0
    %2654 = vmatpush.bf16.msra.mxu0 0
    %2655 = vmatpush.bf16.msra.mxu0 0
    %2656 = vmatpush.bf16.msra.mxu0 0
    %2657 = vmatpush.bf16.msra.mxu0 0
    %2658 = vmatpush.bf16.msra.mxu0 0
    %2659 = vmatpush.bf16.msra.mxu0 %v2647
    %2660 = vmatmul.bf16.gmra.mxu0 %v2650
    %v2661 = vpop.f32.mrf.mxu0
    %v2662 = vadd.f32 0.0, %v2661
    %v2663 = vpop.f32.mrf.mxu0
    %v2664 = vadd.f32 0.0, %v2663
    %2665 = vdwg.mxu0
    %v2666 = vrot.slane %v2522, 4
    %v2667 = vsel %vm560, %v2666, %v2466
    %v2668 = vrot.slane %v2466, 4
    %v2669 = vsel %vm560, %v2522, %v2668
    %v2671 = vunpack.c.l.s4 1983009808
    %v2672 = vunpack.c.0.s8 %v2671
    %v2673 = vperm.slane %v2667, %v2672
    %v2675 = vunpack.c.l.s4 1983009808
    %v2676 = vunpack.c.0.s8 %v2675
    %v2677 = vperm.slane %v2669, %v2676
    %v2678 = vrot.slane %v2550, 4
    %v2679 = vsel %vm560, %v2678, %v2494
    %v2680 = vrot.slane %v2494, 4
    %v2681 = vsel %vm560, %v2550, %v2680
    %v2683 = vunpack.c.l.s4 1983009808
    %v2684 = vunpack.c.0.s8 %v2683
    %v2685 = vperm.slane %v2679, %v2684
    %v2687 = vunpack.c.l.s4 1983009808
    %v2688 = vunpack.c.0.s8 %v2687
    %v2689 = vperm.slane %v2681, %v2688
    %v2690 = vrot.slane %v2685, 4
    %v2691 = vsel %vm560, %v2690, %v2673
    %v2692 = vrot.slane %v2673, 4
    %v2693 = vsel %vm560, %v2685, %v2692
    %v2695 = vunpack.c.l.s4 1934713408
    %v2696 = vunpack.c.0.s8 %v2695
    %v2697 = vperm.slane %v2691, %v2696
    %v2699 = vunpack.c.l.s4 1934713408
    %v2700 = vunpack.c.0.s8 %v2699
    %v2701 = vperm.slane %v2693, %v2700
    %v2702 = vrot.slane %v2689, 4
    %v2703 = vsel %vm560, %v2702, %v2677
    %v2704 = vrot.slane %v2677, 4
    %v2705 = vsel %vm560, %v2689, %v2704
    %v2707 = vunpack.c.l.s4 1934713408
    %v2708 = vunpack.c.0.s8 %v2707
    %v2709 = vperm.slane %v2703, %v2708
    %v2711 = vunpack.c.l.s4 1934713408
    %v2712 = vunpack.c.0.s8 %v2711
    %v2713 = vperm.slane %v2705, %v2712
    %v2714 = vrot.slane %v2697, 4
    %v2715 = vsel %vm560, 0.0, %v2714
    %v2716 = vrot.slane %v2701, 4
    %v2717 = vsel %vm560, 0.0, %v2716
    %v2718 = vrot.slane %v2709, 4
    %v2719 = vsel %vm560, 0.0, %v2718
    %v2720 = vrot.slane %v2713, 4
    %v2721 = vsel %vm560, 0.0, %v2720
    %v2722 = vrot.slane %v2524, 4
    %v2723 = vsel %vm560, %v2722, %v2468
    %v2724 = vrot.slane %v2468, 4
    %v2725 = vsel %vm560, %v2524, %v2724
    %v2727 = vunpack.c.l.s4 1983009808
    %v2728 = vunpack.c.0.s8 %v2727
    %v2729 = vperm.slane %v2723, %v2728
    %v2731 = vunpack.c.l.s4 1983009808
    %v2732 = vunpack.c.0.s8 %v2731
    %v2733 = vperm.slane %v2725, %v2732
    %v2734 = vrot.slane %v2552, 4
    %v2735 = vsel %vm560, %v2734, %v2496
    %v2736 = vrot.slane %v2496, 4
    %v2737 = vsel %vm560, %v2552, %v2736
    %v2739 = vunpack.c.l.s4 1983009808
    %v2740 = vunpack.c.0.s8 %v2739
    %v2741 = vperm.slane %v2735, %v2740
    %v2743 = vunpack.c.l.s4 1983009808
    %v2744 = vunpack.c.0.s8 %v2743
    %v2745 = vperm.slane %v2737, %v2744
    %v2746 = vrot.slane %v2741, 4
    %v2747 = vsel %vm560, %v2746, %v2729
    %v2748 = vrot.slane %v2729, 4
    %v2749 = vsel %vm560, %v2741, %v2748
    %v2751 = vunpack.c.l.s4 1934713408
    %v2752 = vunpack.c.0.s8 %v2751
    %v2753 = vperm.slane %v2747, %v2752
    %v2755 = vunpack.c.l.s4 1934713408
    %v2756 = vunpack.c.0.s8 %v2755
    %v2757 = vperm.slane %v2749, %v2756
    %v2758 = vrot.slane %v2745, 4
    %v2759 = vsel %vm560, %v2758, %v2733
    %v2760 = vrot.slane %v2733, 4
    %v2761 = vsel %vm560, %v2745, %v2760
    %v2763 = vunpack.c.l.s4 1934713408
    %v2764 = vunpack.c.0.s8 %v2763
    %v2765 = vperm.slane %v2759, %v2764
    %v2767 = vunpack.c.l.s4 1934713408
    %v2768 = vunpack.c.0.s8 %v2767
    %v2769 = vperm.slane %v2761, %v2768
    %v2770 = vrot.slane %v2753, 4
    %v2771 = vsel %vm560, 0.0, %v2770
    %v2772 = vrot.slane %v2757, 4
    %v2773 = vsel %vm560, 0.0, %v2772
    %v2774 = vrot.slane %v2765, 4
    %v2775 = vsel %vm560, 0.0, %v2774
    %v2776 = vrot.slane %v2769, 4
    %v2777 = vsel %vm560, 0.0, %v2776
    %v2778 = vrot.slane %v2634, 4
    %v2779 = vsel %vm560, %v2778, %v2578
    %v2780 = vrot.slane %v2578, 4
    %v2781 = vsel %vm560, %v2634, %v2780
    %v2783 = vunpack.c.l.s4 1983009808
    %v2784 = vunpack.c.0.s8 %v2783
    %v2785 = vperm.slane %v2779, %v2784
    %v2787 = vunpack.c.l.s4 1983009808
    %v2788 = vunpack.c.0.s8 %v2787
    %v2789 = vperm.slane %v2781, %v2788
    %v2790 = vrot.slane %v2662, 4
    %v2791 = vsel %vm560, %v2790, %v2606
    %v2792 = vrot.slane %v2606, 4
    %v2793 = vsel %vm560, %v2662, %v2792
    %v2795 = vunpack.c.l.s4 1983009808
    %v2796 = vunpack.c.0.s8 %v2795
    %v2797 = vperm.slane %v2791, %v2796
    %v2799 = vunpack.c.l.s4 1983009808
    %v2800 = vunpack.c.0.s8 %v2799
    %v2801 = vperm.slane %v2793, %v2800
    %v2802 = vrot.slane %v2797, 4
    %v2803 = vsel %vm560, %v2802, %v2785
    %v2804 = vrot.slane %v2785, 4
    %v2805 = vsel %vm560, %v2797, %v2804
    %v2807 = vunpack.c.l.s4 1934713408
    %v2808 = vunpack.c.0.s8 %v2807
    %v2809 = vperm.slane %v2803, %v2808
    %v2811 = vunpack.c.l.s4 1934713408
    %v2812 = vunpack.c.0.s8 %v2811
    %v2813 = vperm.slane %v2805, %v2812
    %v2814 = vrot.slane %v2801, 4
    %v2815 = vsel %vm560, %v2814, %v2789
    %v2816 = vrot.slane %v2789, 4
    %v2817 = vsel %vm560, %v2801, %v2816
    %v2819 = vunpack.c.l.s4 1934713408
    %v2820 = vunpack.c.0.s8 %v2819
    %v2821 = vperm.slane %v2815, %v2820
    %v2823 = vunpack.c.l.s4 1934713408
    %v2824 = vunpack.c.0.s8 %v2823
    %v2825 = vperm.slane %v2817, %v2824
    %v2826 = vrot.slane %v2809, 4
    %v2827 = vsel %vm560, 0.0, %v2826
    %v2828 = vrot.slane %v2813, 4
    %v2829 = vsel %vm560, 0.0, %v2828
    %v2830 = vrot.slane %v2821, 4
    %v2831 = vsel %vm560, 0.0, %v2830
    %v2832 = vrot.slane %v2825, 4
    %v2833 = vsel %vm560, 0.0, %v2832
    %v2834 = vrot.slane %v2636, 4
    %v2835 = vsel %vm560, %v2834, %v2580
    %v2836 = vrot.slane %v2580, 4
    %v2837 = vsel %vm560, %v2636, %v2836
    %v2839 = vunpack.c.l.s4 1983009808
    %v2840 = vunpack.c.0.s8 %v2839
    %v2841 = vperm.slane %v2835, %v2840
    %v2843 = vunpack.c.l.s4 1983009808
    %v2844 = vunpack.c.0.s8 %v2843
    %v2845 = vperm.slane %v2837, %v2844
    %v2846 = vrot.slane %v2664, 4
    %v2847 = vsel %vm560, %v2846, %v2608
    %v2848 = vrot.slane %v2608, 4
    %v2849 = vsel %vm560, %v2664, %v2848
    %v2851 = vunpack.c.l.s4 1983009808
    %v2852 = vunpack.c.0.s8 %v2851
    %v2853 = vperm.slane %v2847, %v2852
    %v2855 = vunpack.c.l.s4 1983009808
    %v2856 = vunpack.c.0.s8 %v2855
    %v2857 = vperm.slane %v2849, %v2856
    %v2858 = vrot.slane %v2853, 4
    %v2859 = vsel %vm560, %v2858, %v2841
    %v2860 = vrot.slane %v2841, 4
    %v2861 = vsel %vm560, %v2853, %v2860
    %v2863 = vunpack.c.l.s4 1934713408
    %v2864 = vunpack.c.0.s8 %v2863
    %v2865 = vperm.slane %v2859, %v2864
    %v2867 = vunpack.c.l.s4 1934713408
    %v2868 = vunpack.c.0.s8 %v2867
    %v2869 = vperm.slane %v2861, %v2868
    %v2870 = vrot.slane %v2857, 4
    %v2871 = vsel %vm560, %v2870, %v2845
    %v2872 = vrot.slane %v2845, 4
    %v2873 = vsel %vm560, %v2857, %v2872
    %v2875 = vunpack.c.l.s4 1934713408
    %v2876 = vunpack.c.0.s8 %v2875
    %v2877 = vperm.slane %v2871, %v2876
    %v2879 = vunpack.c.l.s4 1934713408
    %v2880 = vunpack.c.0.s8 %v2879
    %v2881 = vperm.slane %v2873, %v2880
    %v2882 = vrot.slane %v2865, 4
    %v2883 = vsel %vm560, 0.0, %v2882
    %v2884 = vrot.slane %v2869, 4
    %v2885 = vsel %vm560, 0.0, %v2884
    %v2886 = vrot.slane %v2877, 4
    %v2887 = vsel %vm560, 0.0, %v2886
    %v2888 = vrot.slane %v2881, 4
    %v2889 = vsel %vm560, 0.0, %v2888
    %v2890 = vsel %vm560, %v2716, %v2697
    %v2892 = vunpack.c.l.s4 1983009808
    %v2893 = vunpack.c.0.s8 %v2892
    %v2894 = vperm.slane %v2890, %v2893
    %v2895 = vrot.slane %v2717, 4
    %v2896 = vsel %vm560, %v2895, %v2715
    %v2898 = vunpack.c.l.s4 1983009808
    %v2899 = vunpack.c.0.s8 %v2898
    %v2900 = vperm.slane %v2896, %v2899
    %v2901 = vsel %vm560, %v2720, %v2709
    %v2903 = vunpack.c.l.s4 1983009808
    %v2904 = vunpack.c.0.s8 %v2903
    %v2905 = vperm.slane %v2901, %v2904
    %v2906 = vrot.slane %v2721, 4
    %v2907 = vsel %vm560, %v2906, %v2719
    %v2909 = vunpack.c.l.s4 1983009808
    %v2910 = vunpack.c.0.s8 %v2909
    %v2911 = vperm.slane %v2907, %v2910
    %v2912 = vrot.slane %v2900, 4
    %v2913 = vsel %vm560, %v2912, %v2894
    %v2914 = vrot.slane %v2894, 4
    %v2915 = vsel %vm560, %v2900, %v2914
    %v2917 = vunpack.c.l.s4 1934713408
    %v2918 = vunpack.c.0.s8 %v2917
    %v2919 = vperm.slane %v2913, %v2918
    %v2921 = vunpack.c.l.s4 1934713408
    %v2922 = vunpack.c.0.s8 %v2921
    %v2923 = vperm.slane %v2915, %v2922
    %v2924 = vrot.slane %v2911, 4
    %v2925 = vsel %vm560, %v2924, %v2905
    %v2926 = vrot.slane %v2905, 4
    %v2927 = vsel %vm560, %v2911, %v2926
    %v2929 = vunpack.c.l.s4 1934713408
    %v2930 = vunpack.c.0.s8 %v2929
    %v2931 = vperm.slane %v2925, %v2930
    %v2933 = vunpack.c.l.s4 1934713408
    %v2934 = vunpack.c.0.s8 %v2933
    %v2935 = vperm.slane %v2927, %v2934
    %v2936 = vrot.slane %v2931, 4
    %v2937 = vsel %vm560, %v2936, %v2919
    %v2938 = vrot.slane %v2919, 4
    %v2939 = vsel %vm560, %v2931, %v2938
    %v2940 = vrot.slane %v2935, 4
    %v2941 = vsel %vm560, %v2940, %v2923
    %v2942 = vrot.slane %v2923, 4
    %v2943 = vsel %vm560, %v2935, %v2942
    %v2944 = vsel %vm560, %v2772, %v2753
    %v2946 = vunpack.c.l.s4 1983009808
    %v2947 = vunpack.c.0.s8 %v2946
    %v2948 = vperm.slane %v2944, %v2947
    %v2949 = vrot.slane %v2773, 4
    %v2950 = vsel %vm560, %v2949, %v2771
    %v2952 = vunpack.c.l.s4 1983009808
    %v2953 = vunpack.c.0.s8 %v2952
    %v2954 = vperm.slane %v2950, %v2953
    %v2955 = vsel %vm560, %v2776, %v2765
    %v2957 = vunpack.c.l.s4 1983009808
    %v2958 = vunpack.c.0.s8 %v2957
    %v2959 = vperm.slane %v2955, %v2958
    %v2960 = vrot.slane %v2777, 4
    %v2961 = vsel %vm560, %v2960, %v2775
    %v2963 = vunpack.c.l.s4 1983009808
    %v2964 = vunpack.c.0.s8 %v2963
    %v2965 = vperm.slane %v2961, %v2964
    %v2966 = vrot.slane %v2954, 4
    %v2967 = vsel %vm560, %v2966, %v2948
    %v2968 = vrot.slane %v2948, 4
    %v2969 = vsel %vm560, %v2954, %v2968
    %v2971 = vunpack.c.l.s4 1934713408
    %v2972 = vunpack.c.0.s8 %v2971
    %v2973 = vperm.slane %v2967, %v2972
    %v2975 = vunpack.c.l.s4 1934713408
    %v2976 = vunpack.c.0.s8 %v2975
    %v2977 = vperm.slane %v2969, %v2976
    %v2978 = vrot.slane %v2965, 4
    %v2979 = vsel %vm560, %v2978, %v2959
    %v2980 = vrot.slane %v2959, 4
    %v2981 = vsel %vm560, %v2965, %v2980
    %v2983 = vunpack.c.l.s4 1934713408
    %v2984 = vunpack.c.0.s8 %v2983
    %v2985 = vperm.slane %v2979, %v2984
    %v2987 = vunpack.c.l.s4 1934713408
    %v2988 = vunpack.c.0.s8 %v2987
    %v2989 = vperm.slane %v2981, %v2988
    %v2990 = vrot.slane %v2985, 4
    %v2991 = vsel %vm560, %v2990, %v2973
    %v2992 = vrot.slane %v2973, 4
    %v2993 = vsel %vm560, %v2985, %v2992
    %v2994 = vrot.slane %v2989, 4
    %v2995 = vsel %vm560, %v2994, %v2977
    %v2996 = vrot.slane %v2977, 4
    %v2997 = vsel %vm560, %v2989, %v2996
    %v2998 = vsel %vm560, %v2828, %v2809
    %v3000 = vunpack.c.l.s4 1983009808
    %v3001 = vunpack.c.0.s8 %v3000
    %v3002 = vperm.slane %v2998, %v3001
    %v3003 = vrot.slane %v2829, 4
    %v3004 = vsel %vm560, %v3003, %v2827
    %v3006 = vunpack.c.l.s4 1983009808
    %v3007 = vunpack.c.0.s8 %v3006
    %v3008 = vperm.slane %v3004, %v3007
    %v3009 = vsel %vm560, %v2832, %v2821
    %v3011 = vunpack.c.l.s4 1983009808
    %v3012 = vunpack.c.0.s8 %v3011
    %v3013 = vperm.slane %v3009, %v3012
    %v3014 = vrot.slane %v2833, 4
    %v3015 = vsel %vm560, %v3014, %v2831
    %v3017 = vunpack.c.l.s4 1983009808
    %v3018 = vunpack.c.0.s8 %v3017
    %v3019 = vperm.slane %v3015, %v3018
    %v3020 = vrot.slane %v3008, 4
    %v3021 = vsel %vm560, %v3020, %v3002
    %v3022 = vrot.slane %v3002, 4
    %v3023 = vsel %vm560, %v3008, %v3022
    %v3025 = vunpack.c.l.s4 1934713408
    %v3026 = vunpack.c.0.s8 %v3025
    %v3027 = vperm.slane %v3021, %v3026
    %v3029 = vunpack.c.l.s4 1934713408
    %v3030 = vunpack.c.0.s8 %v3029
    %v3031 = vperm.slane %v3023, %v3030
    %v3032 = vrot.slane %v3019, 4
    %v3033 = vsel %vm560, %v3032, %v3013
    %v3034 = vrot.slane %v3013, 4
    %v3035 = vsel %vm560, %v3019, %v3034
    %v3037 = vunpack.c.l.s4 1934713408
    %v3038 = vunpack.c.0.s8 %v3037
    %v3039 = vperm.slane %v3033, %v3038
    %v3041 = vunpack.c.l.s4 1934713408
    %v3042 = vunpack.c.0.s8 %v3041
    %v3043 = vperm.slane %v3035, %v3042
    %v3044 = vrot.slane %v3039, 4
    %v3045 = vsel %vm560, %v3044, %v3027
    %v3046 = vrot.slane %v3027, 4
    %v3047 = vsel %vm560, %v3039, %v3046
    %v3048 = vrot.slane %v3043, 4
    %v3049 = vsel %vm560, %v3048, %v3031
    %v3050 = vrot.slane %v3031, 4
    %v3051 = vsel %vm560, %v3043, %v3050
    %v3052 = vsel %vm560, %v2884, %v2865
    %v3054 = vunpack.c.l.s4 1983009808
    %v3055 = vunpack.c.0.s8 %v3054
    %v3056 = vperm.slane %v3052, %v3055
    %v3057 = vrot.slane %v2885, 4
    %v3058 = vsel %vm560, %v3057, %v2883
    %v3060 = vunpack.c.l.s4 1983009808
    %v3061 = vunpack.c.0.s8 %v3060
    %v3062 = vperm.slane %v3058, %v3061
    %v3063 = vsel %vm560, %v2888, %v2877
    %v3065 = vunpack.c.l.s4 1983009808
    %v3066 = vunpack.c.0.s8 %v3065
    %v3067 = vperm.slane %v3063, %v3066
    %v3068 = vrot.slane %v2889, 4
    %v3069 = vsel %vm560, %v3068, %v2887
    %v3071 = vunpack.c.l.s4 1983009808
    %v3072 = vunpack.c.0.s8 %v3071
    %v3073 = vperm.slane %v3069, %v3072
    %v3074 = vrot.slane %v3062, 4
    %v3075 = vsel %vm560, %v3074, %v3056
    %v3076 = vrot.slane %v3056, 4
    %v3077 = vsel %vm560, %v3062, %v3076
    %v3079 = vunpack.c.l.s4 1934713408
    %v3080 = vunpack.c.0.s8 %v3079
    %v3081 = vperm.slane %v3075, %v3080
    %v3083 = vunpack.c.l.s4 1934713408
    %v3084 = vunpack.c.0.s8 %v3083
    %v3085 = vperm.slane %v3077, %v3084
    %v3086 = vrot.slane %v3073, 4
    %v3087 = vsel %vm560, %v3086, %v3067
    %v3088 = vrot.slane %v3067, 4
    %v3089 = vsel %vm560, %v3073, %v3088
    %v3091 = vunpack.c.l.s4 1934713408
    %v3092 = vunpack.c.0.s8 %v3091
    %v3093 = vperm.slane %v3087, %v3092
    %v3095 = vunpack.c.l.s4 1934713408
    %v3096 = vunpack.c.0.s8 %v3095
    %v3097 = vperm.slane %v3089, %v3096
    %v3098 = vrot.slane %v3093, 4
    %v3099 = vsel %vm560, %v3098, %v3081
    %v3100 = vrot.slane %v3081, 4
    %v3101 = vsel %vm560, %v3093, %v3100
    %v3102 = vrot.slane %v3097, 4
    %v3103 = vsel %vm560, %v3102, %v3085
    %v3104 = vrot.slane %v3085, 4
    %v3105 = vsel %vm560, %v3097, %v3104
    %3110 = vrot.lane.b32.xlu0 %v2939, 32
    %v3111 = vpop.permute.xlu0 %3110
    %3112 = vrot.lane.b32.xlu0 %v2993, 32
    %v3113 = vpop.permute.xlu0 %3112
    %3114 = vrot.lane.b32.xlu0 %v3047, 32
    %v3115 = vpop.permute.xlu0 %3114
    %3116 = vrot.lane.b32.xlu0 %v3101, 32
    %v3117 = vpop.permute.xlu0 %3116
    %3126 = vrot.lane.b32.xlu0 %v2941, 64
    %v3127 = vpop.permute.xlu0 %3126
    %3128 = vrot.lane.b32.xlu0 %v2995, 64
    %v3129 = vpop.permute.xlu0 %3128
    %3130 = vrot.lane.b32.xlu0 %v3049, 64
    %v3131 = vpop.permute.xlu0 %3130
    %3132 = vrot.lane.b32.xlu0 %v3103, 64
    %v3133 = vpop.permute.xlu0 %3132
    %3142 = vrot.lane.b32.xlu0 %v2943, 96
    %v3143 = vpop.permute.xlu0 %3142
    %3144 = vrot.lane.b32.xlu0 %v2997, 96
    %v3145 = vpop.permute.xlu0 %3144
    %3146 = vrot.lane.b32.xlu0 %v3051, 96
    %v3147 = vpop.permute.xlu0 %3146
    %3148 = vrot.lane.b32.xlu0 %v3105, 96
    %v3149 = vpop.permute.xlu0 %3148
    %v3154 = vsel %vm2018, %v2937, %v3111
    %v3155 = vsel %vm2018, %v2991, %v3113
    %v3156 = vsel %vm2018, %v3045, %v3115
    %v3157 = vsel %vm2018, %v3099, %v3117
    %v3158 = vsel %vm143, %v3154, %v3127
    %v3159 = vsel %vm143, %v3155, %v3129
    %v3160 = vsel %vm143, %v3156, %v3131
    %v3161 = vsel %vm143, %v3157, %v3133
    %vm3162 = vcmask 785408
    %v3163 = vsel %vm3162, %v3158, %v3143
    %v3164 = vsel %vm3162, %v3159, %v3145
    %v3165 = vsel %vm3162, %v3160, %v3147
    %v3166 = vsel %vm3162, %v3161, %v3149
    %v3167 = vpack.c.bf16 %v3164, %v3163
    %v3168 = vpack.c.bf16 %v3166, %v3165
    %v3169 = vld [vmem:[#allocation2] sm:$0xf]
    %v3170 = vld [vmem:[#allocation2 + $0x4] sm:$0xf]
    %v3171 = vld [vmem:[#allocation2 + $0x8] sm:$0xf]
    %v3172 = vld [vmem:[#allocation2 + $0xc] sm:$0xf]
    %v3173 = vld [vmem:[#allocation2 + $0x10] sm:$0xf]
    %v3174 = vld [vmem:[#allocation2 + $0x14] sm:$0xf]
    %v3175 = vld [vmem:[#allocation2 + $0x18] sm:$0xf]
    %v3176 = vld [vmem:[#allocation2 + $0x1c] sm:$0xf]
    %v3177 = vld [vmem:[#allocation2 + $0x20] sm:$0xf]
    %v3178 = vld [vmem:[#allocation2 + $0x24] sm:$0xf]
    %v3179 = vld [vmem:[#allocation2 + $0x28] sm:$0xf]
    %v3180 = vld [vmem:[#allocation2 + $0x2c] sm:$0xf]
    %v3181 = vld [vmem:[#allocation2 + $0x30] sm:$0xf]
    %v3182 = vld [vmem:[#allocation2 + $0x34] sm:$0xf]
    %v3183 = vld [vmem:[#allocation2 + $0x38] sm:$0xf]
    %v3184 = vld [vmem:[#allocation2 + $0x3c] sm:$0xf]
    %v3185 = vld [vmem:[%s9] sm:$0x1]
    %v3187 = vperm.slane %v3185, 0
    %v3205 = vunpack.c.l.b16 %v3169
    %v3206 = vunpack.c.l.b16 %v3170
    %v3207 = vunpack.c.l.b16 %v3171
    %v3208 = vunpack.c.l.b16 %v3172
    %v3209 = vunpack.c.l.b16 %v3173
    %v3210 = vunpack.c.l.b16 %v3174
    %v3211 = vunpack.c.l.b16 %v3175
    %v3212 = vunpack.c.l.b16 %v3176
    %v3213 = vunpack.c.l.b16 %v3177
    %v3214 = vunpack.c.l.b16 %v3178
    %v3215 = vunpack.c.l.b16 %v3179
    %v3216 = vunpack.c.l.b16 %v3180
    %v3217 = vunpack.c.l.b16 %v3181
    %v3218 = vunpack.c.l.b16 %v3182
    %v3219 = vunpack.c.l.b16 %v3183
    %v3220 = vunpack.c.l.b16 %v3184
    %v3221 = vpack.c.b16 %v3206, %v3205
    %v3222 = vpack.c.b16 %v3208, %v3207
    %v3223 = vpack.c.b16 %v3210, %v3209
    %v3224 = vpack.c.b16 %v3212, %v3211
    %v3225 = vpack.c.b16 %v3214, %v3213
    %v3226 = vpack.c.b16 %v3216, %v3215
    %v3227 = vpack.c.b16 %v3218, %v3217
    %v3228 = vpack.c.b16 %v3220, %v3219
    %3237 = vmatpush.bf16.msra.mxu0 %v3228
    %3238 = vmatpush.bf16.msra.mxu0 %v3227
    %3239 = vmatpush.bf16.msra.mxu0 %v3226
    %3240 = vmatpush.bf16.msra.mxu0 %v3225
    %3241 = vmatpush.bf16.msra.mxu0 %v3224
    %3242 = vmatpush.bf16.msra.mxu0 %v3223
    %3243 = vmatpush.bf16.msra.mxu0 %v3222
    %3244 = vmatpush.bf16.msra.mxu0 %v3221
    %3245 = vmatmul.bf16.gmra.mxu0 %v3167
    %v3246 = vpop.f32.mrf.mxu0
    %v3247 = vadd.f32 %v3187, %v3246
    %v3248 = vpop.f32.mrf.mxu0
    %v3249 = vadd.f32 %v3187, %v3248
    %3250 = vmatmul.bf16.gmra.mxu0 %v3168
    %v3251 = vpop.f32.mrf.mxu0
    %v3252 = vadd.f32 %v3187, %v3251
    %v3253 = vpop.f32.mrf.mxu0
    %v3254 = vadd.f32 %v3187, %v3253
    %3255 = vdwg.mxu0
    %v3256 = vadd.f32 %v173, %v3247
    %v3257 = vadd.f32 %v174, %v3249
    %v3258 = vadd.f32 %v175, %v3252
    %v3259 = vadd.f32 %v176, %v3254
    %v3260 = vld [vmem:[%s10] sm:$0x1]
    %v3261 = vld [vmem:[%s11] sm:$0x1]
    %3262 = vadd.xlane.f32.xlu0 %v3256
    %v3263 = vpop.xlane.xlu0 %3262
    %3264 = vadd.xlane.f32.xlu0 %v3257
    %v3265 = vpop.xlane.xlu0 %3264
    %3266 = vadd.xlane.f32.xlu0 %v3258
    %v3267 = vpop.xlane.xlu0 %3266
    %3268 = vadd.xlane.f32.xlu0 %v3259
    %v3269 = vpop.xlane.xlu0 %3268
    %v3270 = vmul.f32 %v3263, %v193
    %v3271 = vmul.f32 %v3265, %v193
    %v3272 = vmul.f32 %v3267, %v193
    %v3273 = vmul.f32 %v3269, %v193
    %v3274 = vmul.f32 %v3256, %v3256
    %v3275 = vmul.f32 %v3257, %v3257
    %v3276 = vmul.f32 %v3258, %v3258
    %v3277 = vmul.f32 %v3259, %v3259
    %3278 = vadd.xlane.f32.xlu0 %v3274
    %v3279 = vpop.xlane.xlu0 %3278
    %3280 = vadd.xlane.f32.xlu0 %v3275
    %v3281 = vpop.xlane.xlu0 %3280
    %3282 = vadd.xlane.f32.xlu0 %v3276
    %v3283 = vpop.xlane.xlu0 %3282
    %3284 = vadd.xlane.f32.xlu0 %v3277
    %v3285 = vpop.xlane.xlu0 %3284
    %v3286 = vmul.f32 %v3279, %v193
    %v3287 = vmul.f32 %v3281, %v193
    %v3288 = vmul.f32 %v3283, %v193
    %v3289 = vmul.f32 %v3285, %v193
    %v3290 = vmul.f32 %v3270, %v3270
    %v3291 = vmul.f32 %v3271, %v3271
    %v3292 = vmul.f32 %v3272, %v3272
    %v3293 = vmul.f32 %v3273, %v3273
    %v3294 = vsub.f32 %v3286, %v3290
    %v3295 = vsub.f32 %v3287, %v3291
    %v3296 = vsub.f32 %v3288, %v3292
    %v3297 = vsub.f32 %v3289, %v3293
    %v3298 = vmax.f32 %v3294, 0.0
    %v3299 = vmax.f32 %v3295, 0.0
    %v3300 = vmax.f32 %v3296, 0.0
    %v3301 = vmax.f32 %v3297, 0.0
    %v3302 = vsub.f32 %v3256, %v3270
    %v3303 = vsub.f32 %v3257, %v3271
    %v3304 = vsub.f32 %v3258, %v3272
    %v3305 = vsub.f32 %v3259, %v3273
    %v3306 = vadd.f32 %v3298, 1e-05
    %v3307 = vadd.f32 %v3299, 1e-05
    %v3308 = vadd.f32 %v3300, 1e-05
    %v3309 = vadd.f32 %v3301, 1e-05
    %v3310 = vrsqrt.pop %v3306
    %v3311 = vmul.f32 %v3310, %v3306
    %v3312 = vmul.f32 %v3311, %v3310
    %v3313 = vmul.f32 0.5, %v3312
    %v3314 = vsub.f32 1.5, %v3313
    %v3315 = vmul.f32 %v3310, %v3314
    %vm3316 = vweird.f32 %v3306
    %vm3317 = vweird.f32 %v3310
    %vm3318 = vmor %vm3316, %vm3317
    %v3319 = vsel %vm3318, %v3310, %v3315
    %v3320 = vrsqrt.pop %v3307
    %v3321 = vmul.f32 %v3320, %v3307
    %v3322 = vmul.f32 %v3321, %v3320
    %v3323 = vmul.f32 0.5, %v3322
    %v3324 = vsub.f32 1.5, %v3323
    %v3325 = vmul.f32 %v3320, %v3324
    %vm3326 = vweird.f32 %v3307
    %vm3327 = vweird.f32 %v3320
    %vm3328 = vmor %vm3326, %vm3327
    %v3329 = vsel %vm3328, %v3320, %v3325
    %v3330 = vrsqrt.pop %v3308
    %v3331 = vmul.f32 %v3330, %v3308
    %v3332 = vmul.f32 %v3331, %v3330
    %v3333 = vmul.f32 0.5, %v3332
    %v3334 = vsub.f32 1.5, %v3333
    %v3335 = vmul.f32 %v3330, %v3334
    %vm3336 = vweird.f32 %v3308
    %vm3337 = vweird.f32 %v3330
    %vm3338 = vmor %vm3336, %vm3337
    %v3339 = vsel %vm3338, %v3330, %v3335
    %v3340 = vrsqrt.pop %v3309
    %v3341 = vmul.f32 %v3340, %v3309
    %v3342 = vmul.f32 %v3341, %v3340
    %v3343 = vmul.f32 0.5, %v3342
    %v3344 = vsub.f32 1.5, %v3343
    %v3345 = vmul.f32 %v3340, %v3344
    %vm3346 = vweird.f32 %v3309
    %vm3347 = vweird.f32 %v3340
    %vm3348 = vmor %vm3346, %vm3347
    %v3349 = vsel %vm3348, %v3340, %v3345
    %v3350 = vmul.f32 %v3302, %v3319
    %v3351 = vmul.f32 %v3303, %v3329
    %v3352 = vmul.f32 %v3304, %v3339
    %v3353 = vmul.f32 %v3305, %v3349
    %v3355 = vperm.slane %v3260, 0
    %v3357 = vmul.f32 %v3350, %v3355
    %v3358 = vmul.f32 %v3351, %v3355
    %v3359 = vmul.f32 %v3352, %v3355
    %v3360 = vmul.f32 %v3353, %v3355
    %v3362 = vperm.slane %v3261, 0
    %v3364 = vadd.f32 %v3357, %v3362
    %v3365 = vadd.f32 %v3358, %v3362
    %v3366 = vadd.f32 %v3359, %v3362
    %v3367 = vadd.f32 %v3360, %v3362
    %v3368 = vpack.c.bf16 %v3365, %v3364
    %v3369 = vpack.c.bf16 %v3367, %v3366
    %v3370 = vld [vmem:[%s12] sm:$0xff]
    %v3371 = vld [vmem:[%s12 + $0x8] sm:$0xff]
    %v3372 = vld [vmem:[%s12 + $0x10] sm:$0xff]
    %v3373 = vld [vmem:[%s12 + $0x18] sm:$0xff]
    %v3374 = vld [vmem:[%s12 + $0x20] sm:$0xff]
    %v3375 = vld [vmem:[%s12 + $0x28] sm:$0xff]
    %v3376 = vld [vmem:[%s12 + $0x30] sm:$0xff]
    %v3377 = vld [vmem:[%s12 + $0x38] sm:$0xff]
    %v3378 = vld [vmem:[%s12 + $0x40] sm:$0xff]
    %v3379 = vld [vmem:[%s12 + $0x48] sm:$0xff]
    %v3380 = vld [vmem:[%s12 + $0x50] sm:$0xff]
    %v3381 = vld [vmem:[%s12 + $0x58] sm:$0xff]
    %v3382 = vld [vmem:[%s12 + $0x60] sm:$0xff]
    %v3383 = vld [vmem:[%s12 + $0x68] sm:$0xff]
    %v3384 = vld [vmem:[%s12 + $0x70] sm:$0xff]
    %v3385 = vld [vmem:[%s12 + $0x78] sm:$0xff]
    %v3386 = vld [vmem:[%s12 + $0x80] sm:$0xff]
    %v3387 = vld [vmem:[%s12 + $0x88] sm:$0xff]
    %v3388 = vld [vmem:[%s12 + $0x90] sm:$0xff]
    %v3389 = vld [vmem:[%s12 + $0x98] sm:$0xff]
    %v3390 = vld [vmem:[%s12 + $0xa0] sm:$0xff]
    %v3391 = vld [vmem:[%s12 + $0xa8] sm:$0xff]
    %v3392 = vld [vmem:[%s12 + $0xb0] sm:$0xff]
    %v3393 = vld [vmem:[%s12 + $0xb8] sm:$0xff]
    %v3394 = vld [vmem:[%s12 + $0xc0] sm:$0xff]
    %v3395 = vld [vmem:[%s12 + $0xc8] sm:$0xff]
    %v3396 = vld [vmem:[%s12 + $0xd0] sm:$0xff]
    %v3397 = vld [vmem:[%s12 + $0xd8] sm:$0xff]
    %v3398 = vld [vmem:[%s12 + $0xe0] sm:$0xff]
    %v3399 = vld [vmem:[%s12 + $0xe8] sm:$0xff]
    %v3400 = vld [vmem:[%s12 + $0xf0] sm:$0xff]
    %v3401 = vld [vmem:[%s12 + $0xf8] sm:$0xff]
    %v3402 = vld [vmem:[%s13] sm:$0xf]
    %v3404 = vperm.slane %v3402, 0
    %v3405 = vperm.slane %v3402, 1
    %v3406 = vperm.slane %v3402, 2
    %v3407 = vperm.slane %v3402, 3
    %v3444 = vunpack.c.l.b16 %v3370
    %v3445 = vunpack.c.h.b16 %v3370
    %v3446 = vunpack.c.l.b16 %v3371
    %v3447 = vunpack.c.h.b16 %v3371
    %v3448 = vunpack.c.l.b16 %v3372
    %v3449 = vunpack.c.h.b16 %v3372
    %v3450 = vunpack.c.l.b16 %v3373
    %v3451 = vunpack.c.h.b16 %v3373
    %v3452 = vunpack.c.l.b16 %v3374
    %v3453 = vunpack.c.h.b16 %v3374
    %v3454 = vunpack.c.l.b16 %v3375
    %v3455 = vunpack.c.h.b16 %v3375
    %v3456 = vunpack.c.l.b16 %v3376
    %v3457 = vunpack.c.h.b16 %v3376
    %v3458 = vunpack.c.l.b16 %v3377
    %v3459 = vunpack.c.h.b16 %v3377
    %v3460 = vunpack.c.l.b16 %v3378
    %v3461 = vunpack.c.h.b16 %v3378
    %v3462 = vunpack.c.l.b16 %v3379
    %v3463 = vunpack.c.h.b16 %v3379
    %v3464 = vunpack.c.l.b16 %v3380
    %v3465 = vunpack.c.h.b16 %v3380
    %v3466 = vunpack.c.l.b16 %v3381
    %v3467 = vunpack.c.h.b16 %v3381
    %v3468 = vunpack.c.l.b16 %v3382
    %v3469 = vunpack.c.h.b16 %v3382
    %v3470 = vunpack.c.l.b16 %v3383
    %v3471 = vunpack.c.h.b16 %v3383
    %v3472 = vunpack.c.l.b16 %v3384
    %v3473 = vunpack.c.h.b16 %v3384
    %v3474 = vunpack.c.l.b16 %v3385
    %v3475 = vunpack.c.h.b16 %v3385
    %v3476 = vunpack.c.l.b16 %v3386
    %v3477 = vunpack.c.h.b16 %v3386
    %v3478 = vunpack.c.l.b16 %v3387
    %v3479 = vunpack.c.h.b16 %v3387
    %v3480 = vunpack.c.l.b16 %v3388
    %v3481 = vunpack.c.h.b16 %v3388
    %v3482 = vunpack.c.l.b16 %v3389
    %v3483 = vunpack.c.h.b16 %v3389
    %v3484 = vunpack.c.l.b16 %v3390
    %v3485 = vunpack.c.h.b16 %v3390
    %v3486 = vunpack.c.l.b16 %v3391
    %v3487 = vunpack.c.h.b16 %v3391
    %v3488 = vunpack.c.l.b16 %v3392
    %v3489 = vunpack.c.h.b16 %v3392
    %v3490 = vunpack.c.l.b16 %v3393
    %v3491 = vunpack.c.h.b16 %v3393
    %v3492 = vunpack.c.l.b16 %v3394
    %v3493 = vunpack.c.h.b16 %v3394
    %v3494 = vunpack.c.l.b16 %v3395
    %v3495 = vunpack.c.h.b16 %v3395
    %v3496 = vunpack.c.l.b16 %v3396
    %v3497 = vunpack.c.h.b16 %v3396
    %v3498 = vunpack.c.l.b16 %v3397
    %v3499 = vunpack.c.h.b16 %v3397
    %v3500 = vunpack.c.l.b16 %v3398
    %v3501 = vunpack.c.h.b16 %v3398
    %v3502 = vunpack.c.l.b16 %v3399
    %v3503 = vunpack.c.h.b16 %v3399
    %v3504 = vunpack.c.l.b16 %v3400
    %v3505 = vunpack.c.h.b16 %v3400
    %v3506 = vunpack.c.l.b16 %v3401
    %v3507 = vunpack.c.h.b16 %v3401
    %v3508 = vpack.c.b16 %v3448, %v3444
    %v3509 = vpack.c.b16 %v3449, %v3445
    %v3510 = vpack.c.b16 %v3450, %v3446
    %v3511 = vpack.c.b16 %v3451, %v3447
    %v3512 = vpack.c.b16 %v3456, %v3452
    %v3513 = vpack.c.b16 %v3457, %v3453
    %v3514 = vpack.c.b16 %v3458, %v3454
    %v3515 = vpack.c.b16 %v3459, %v3455
    %v3516 = vpack.c.b16 %v3464, %v3460
    %v3517 = vpack.c.b16 %v3465, %v3461
    %v3518 = vpack.c.b16 %v3466, %v3462
    %v3519 = vpack.c.b16 %v3467, %v3463
    %v3520 = vpack.c.b16 %v3472, %v3468
    %v3521 = vpack.c.b16 %v3473, %v3469
    %v3522 = vpack.c.b16 %v3474, %v3470
    %v3523 = vpack.c.b16 %v3475, %v3471
    %v3524 = vpack.c.b16 %v3480, %v3476
    %v3525 = vpack.c.b16 %v3481, %v3477
    %v3526 = vpack.c.b16 %v3482, %v3478
    %v3527 = vpack.c.b16 %v3483, %v3479
    %v3528 = vpack.c.b16 %v3488, %v3484
    %v3529 = vpack.c.b16 %v3489, %v3485
    %v3530 = vpack.c.b16 %v3490, %v3486
    %v3531 = vpack.c.b16 %v3491, %v3487
    %v3532 = vpack.c.b16 %v3496, %v3492
    %v3533 = vpack.c.b16 %v3497, %v3493
    %v3534 = vpack.c.b16 %v3498, %v3494
    %v3535 = vpack.c.b16 %v3499, %v3495
    %v3536 = vpack.c.b16 %v3504, %v3500
    %v3537 = vpack.c.b16 %v3505, %v3501
    %v3538 = vpack.c.b16 %v3506, %v3502
    %v3539 = vpack.c.b16 %v3507, %v3503
    %3572 = vmatpush.bf16.msra.mxu0 %v3536
    %3573 = vmatpush.bf16.msra.mxu0 %v3532
    %3574 = vmatpush.bf16.msra.mxu0 %v3528
    %3575 = vmatpush.bf16.msra.mxu0 %v3524
    %3576 = vmatpush.bf16.msra.mxu0 %v3520
    %3577 = vmatpush.bf16.msra.mxu0 %v3516
    %3578 = vmatpush.bf16.msra.mxu0 %v3512
    %3579 = vmatpush.bf16.msra.mxu0 %v3508
    %3580 = vmatmul.bf16.gmra.mxu0 %v3368
    %v3581 = vpop.f32.mrf.mxu0
    %v3582 = vadd.f32 %v3404, %v3581
    %v3583 = vpop.f32.mrf.mxu0
    %v3584 = vadd.f32 %v3404, %v3583
    %3585 = vmatmul.bf16.gmra.mxu0 %v3369
    %v3586 = vpop.f32.mrf.mxu0
    %v3587 = vadd.f32 %v3404, %v3586
    %v3588 = vpop.f32.mrf.mxu0
    %v3589 = vadd.f32 %v3404, %v3588
    %3590 = vdwg.mxu0
    %3591 = vmatpush.bf16.msra.mxu0 %v3537
    %3592 = vmatpush.bf16.msra.mxu0 %v3533
    %3593 = vmatpush.bf16.msra.mxu0 %v3529
    %3594 = vmatpush.bf16.msra.mxu0 %v3525
    %3595 = vmatpush.bf16.msra.mxu0 %v3521
    %3596 = vmatpush.bf16.msra.mxu0 %v3517
    %3597 = vmatpush.bf16.msra.mxu0 %v3513
    %3598 = vmatpush.bf16.msra.mxu0 %v3509
    %3599 = vmatmul.bf16.gmra.mxu0 %v3368
    %v3600 = vpop.f32.mrf.mxu0
    %v3601 = vadd.f32 %v3405, %v3600
    %v3602 = vpop.f32.mrf.mxu0
    %v3603 = vadd.f32 %v3405, %v3602
    %3604 = vmatmul.bf16.gmra.mxu0 %v3369
    %v3605 = vpop.f32.mrf.mxu0
    %v3606 = vadd.f32 %v3405, %v3605
    %v3607 = vpop.f32.mrf.mxu0
    %v3608 = vadd.f32 %v3405, %v3607
    %3609 = vdwg.mxu0
    %3610 = vmatpush.bf16.msra.mxu0 %v3538
    %3611 = vmatpush.bf16.msra.mxu0 %v3534
    %3612 = vmatpush.bf16.msra.mxu0 %v3530
    %3613 = vmatpush.bf16.msra.mxu0 %v3526
    %3614 = vmatpush.bf16.msra.mxu0 %v3522
    %3615 = vmatpush.bf16.msra.mxu0 %v3518
    %3616 = vmatpush.bf16.msra.mxu0 %v3514
    %3617 = vmatpush.bf16.msra.mxu0 %v3510
    %3618 = vmatmul.bf16.gmra.mxu0 %v3368
    %v3619 = vpop.f32.mrf.mxu0
    %v3620 = vadd.f32 %v3406, %v3619
    %v3621 = vpop.f32.mrf.mxu0
    %v3622 = vadd.f32 %v3406, %v3621
    %3623 = vmatmul.bf16.gmra.mxu0 %v3369
    %v3624 = vpop.f32.mrf.mxu0
    %v3625 = vadd.f32 %v3406, %v3624
    %v3626 = vpop.f32.mrf.mxu0
    %v3627 = vadd.f32 %v3406, %v3626
    %3628 = vdwg.mxu0
    %3629 = vmatpush.bf16.msra.mxu0 %v3539
    %3630 = vmatpush.bf16.msra.mxu0 %v3535
    %3631 = vmatpush.bf16.msra.mxu0 %v3531
    %3632 = vmatpush.bf16.msra.mxu0 %v3527
    %3633 = vmatpush.bf16.msra.mxu0 %v3523
    %3634 = vmatpush.bf16.msra.mxu0 %v3519
    %3635 = vmatpush.bf16.msra.mxu0 %v3515
    %3636 = vmatpush.bf16.msra.mxu0 %v3511
    %3637 = vmatmul.bf16.gmra.mxu0 %v3368
    %v3638 = vpop.f32.mrf.mxu0
    %v3639 = vadd.f32 %v3407, %v3638
    %v3640 = vpop.f32.mrf.mxu0
    %v3641 = vadd.f32 %v3407, %v3640
    %3642 = vmatmul.bf16.gmra.mxu0 %v3369
    %v3643 = vpop.f32.mrf.mxu0
    %v3644 = vadd.f32 %v3407, %v3643
    %v3645 = vpop.f32.mrf.mxu0
    %v3646 = vadd.f32 %v3407, %v3645
    %3647 = vdwg.mxu0
    %v3648 = vmul.f32 %v3582, 0.5
    %v3649 = vmul.f32 %v3601, 0.5
    %v3650 = vmul.f32 %v3620, 0.5
    %v3651 = vmul.f32 %v3639, 0.5
    %v3652 = vmul.f32 %v3584, 0.5
    %v3653 = vmul.f32 %v3603, 0.5
    %v3654 = vmul.f32 %v3622, 0.5
    %v3655 = vmul.f32 %v3641, 0.5
    %v3656 = vmul.f32 %v3587, 0.5
    %v3657 = vmul.f32 %v3606, 0.5
    %v3658 = vmul.f32 %v3625, 0.5
    %v3659 = vmul.f32 %v3644, 0.5
    %v3660 = vmul.f32 %v3589, 0.5
    %v3661 = vmul.f32 %v3608, 0.5
    %v3662 = vmul.f32 %v3627, 0.5
    %v3663 = vmul.f32 %v3646, 0.5
    %v3664 = vmul.f32 %v3582, 0.70710677
    %v3665 = vmul.f32 %v3601, 0.70710677
    %v3666 = vmul.f32 %v3620, 0.70710677
    %v3667 = vmul.f32 %v3639, 0.70710677
    %v3668 = vmul.f32 %v3584, 0.70710677
    %v3669 = vmul.f32 %v3603, 0.70710677
    %v3670 = vmul.f32 %v3622, 0.70710677
    %v3671 = vmul.f32 %v3641, 0.70710677
    %v3672 = vmul.f32 %v3587, 0.70710677
    %v3673 = vmul.f32 %v3606, 0.70710677
    %v3674 = vmul.f32 %v3625, 0.70710677
    %v3675 = vmul.f32 %v3644, 0.70710677
    %v3676 = vmul.f32 %v3589, 0.70710677
    %v3677 = vmul.f32 %v3608, 0.70710677
    %v3678 = vmul.f32 %v3627, 0.70710677
    %v3679 = vmul.f32 %v3646, 0.70710677
    %v3680 = vmul.f32 %v3664, %v3664
    %v3681 = vmin.f32 16.0, %v3680
    %v3682 = vmul.f32 %v3681, 2.1237322e-06
    %v3683 = vadd.f32 %v3682, 0.00028619796
    %v3684 = vmul.f32 %v3681, %v3683
    %v3685 = vadd.f32 %v3684, 0.0036580483
    %v3686 = vmul.f32 %v3681, %v3685
    %v3687 = vadd.f32 %v3686, 0.05243302
    %v3688 = vmul.f32 %v3681, %v3687
    %v3689 = vadd.f32 %v3688, 0.18741608
    %v3690 = vmul.f32 %v3681, %v3689
    %v3691 = vadd.f32 %v3690, 1.1283791
    %v3692 = vmul.f32 %v3664, %v3691
    %v3693 = vmul.f32 %v3681, 3.8918573e-05
    %v3694 = vadd.f32 %v3693, 0.001143296
    %v3695 = vmul.f32 %v3681, %v3694
    %v3696 = vadd.f32 %v3695, 0.014752088
    %v3697 = vmul.f32 %v3681, %v3696
    %v3698 = vadd.f32 %v3697, 0.112945676
    %v3699 = vmul.f32 %v3681, %v3698
    %v3700 = vadd.f32 %v3699, 0.4994258
    %v3701 = vmul.f32 %v3681, %v3700
    %v3702 = vadd.f32 %v3701, 1.0
    %v3703 = vrcp.pop %v3702
    %v3704 = vmul.f32 %v3702, %v3703
    %v3705 = vsub.f32 1.0, %v3704
    %v3706 = vmul.f32 %v3703, %v3705
    %v3707 = vadd.f32 %v3703, %v3706
    %vm3708 = vweird.f32 %v3702
    %vm3709 = vweird.f32 %v3703
    %vm3710 = vmor %vm3708, %vm3709
    %v3711 = vsel %vm3710, %v3703, %v3707
    %v3712 = vand.u32 2147483647, %v3702
    %vm3713 = vcmp.eq.f32.partialorder %v3712, 8.507059e+37
    %v3714 = vand.u32 %v3702, 2147483648
    %v3715 = vor.u32 1.1754944e-38, %v3714
    %v3716 = vsel %vm3713, %v3715, %v3711
    %v3717 = vmul.f32 %v3692, %v3716
    %v3718 = vmin.f32 %v3717, 1.0
    %v3719 = vmax.f32 %v3718, -1.0
    %v3720 = vmul.f32 %v3665, %v3665
    %v3721 = vmin.f32 16.0, %v3720
    %v3722 = vmul.f32 %v3721, 2.1237322e-06
    %v3723 = vadd.f32 %v3722, 0.00028619796
    %v3724 = vmul.f32 %v3721, %v3723
    %v3725 = vadd.f32 %v3724, 0.0036580483
    %v3726 = vmul.f32 %v3721, %v3725
    %v3727 = vadd.f32 %v3726, 0.05243302
    %v3728 = vmul.f32 %v3721, %v3727
    %v3729 = vadd.f32 %v3728, 0.18741608
    %v3730 = vmul.f32 %v3721, %v3729
    %v3731 = vadd.f32 %v3730, 1.1283791
    %v3732 = vmul.f32 %v3665, %v3731
    %v3733 = vmul.f32 %v3721, 3.8918573e-05
    %v3734 = vadd.f32 %v3733, 0.001143296
    %v3735 = vmul.f32 %v3721, %v3734
    %v3736 = vadd.f32 %v3735, 0.014752088
    %v3737 = vmul.f32 %v3721, %v3736
    %v3738 = vadd.f32 %v3737, 0.112945676
    %v3739 = vmul.f32 %v3721, %v3738
    %v3740 = vadd.f32 %v3739, 0.4994258
    %v3741 = vmul.f32 %v3721, %v3740
    %v3742 = vadd.f32 %v3741, 1.0
    %v3743 = vrcp.pop %v3742
    %v3744 = vmul.f32 %v3742, %v3743
    %v3745 = vsub.f32 1.0, %v3744
    %v3746 = vmul.f32 %v3743, %v3745
    %v3747 = vadd.f32 %v3743, %v3746
    %vm3748 = vweird.f32 %v3742
    %vm3749 = vweird.f32 %v3743
    %vm3750 = vmor %vm3748, %vm3749
    %v3751 = vsel %vm3750, %v3743, %v3747
    %v3752 = vand.u32 2147483647, %v3742
    %vm3753 = vcmp.eq.f32.partialorder %v3752, 8.507059e+37
    %v3754 = vand.u32 %v3742, 2147483648
    %v3755 = vor.u32 1.1754944e-38, %v3754
    %v3756 = vsel %vm3753, %v3755, %v3751
    %v3757 = vmul.f32 %v3732, %v3756
    %v3758 = vmin.f32 %v3757, 1.0
    %v3759 = vmax.f32 %v3758, -1.0
    %v3760 = vmul.f32 %v3666, %v3666
    %v3761 = vmin.f32 16.0, %v3760
    %v3762 = vmul.f32 %v3761, 2.1237322e-06
    %v3763 = vadd.f32 %v3762, 0.00028619796
    %v3764 = vmul.f32 %v3761, %v3763
    %v3765 = vadd.f32 %v3764, 0.0036580483
    %v3766 = vmul.f32 %v3761, %v3765
    %v3767 = vadd.f32 %v3766, 0.05243302
    %v3768 = vmul.f32 %v3761, %v3767
    %v3769 = vadd.f32 %v3768, 0.18741608
    %v3770 = vmul.f32 %v3761, %v3769
    %v3771 = vadd.f32 %v3770, 1.1283791
    %v3772 = vmul.f32 %v3666, %v3771
    %v3773 = vmul.f32 %v3761, 3.8918573e-05
    %v3774 = vadd.f32 %v3773, 0.001143296
    %v3775 = vmul.f32 %v3761, %v3774
    %v3776 = vadd.f32 %v3775, 0.014752088
    %v3777 = vmul.f32 %v3761, %v3776
    %v3778 = vadd.f32 %v3777, 0.112945676
    %v3779 = vmul.f32 %v3761, %v3778
    %v3780 = vadd.f32 %v3779, 0.4994258
    %v3781 = vmul.f32 %v3761, %v3780
    %v3782 = vadd.f32 %v3781, 1.0
    %v3783 = vrcp.pop %v3782
    %v3784 = vmul.f32 %v3782, %v3783
    %v3785 = vsub.f32 1.0, %v3784
    %v3786 = vmul.f32 %v3783, %v3785
    %v3787 = vadd.f32 %v3783, %v3786
    %vm3788 = vweird.f32 %v3782
    %vm3789 = vweird.f32 %v3783
    %vm3790 = vmor %vm3788, %vm3789
    %v3791 = vsel %vm3790, %v3783, %v3787
    %v3792 = vand.u32 2147483647, %v3782
    %vm3793 = vcmp.eq.f32.partialorder %v3792, 8.507059e+37
    %v3794 = vand.u32 %v3782, 2147483648
    %v3795 = vor.u32 1.1754944e-38, %v3794
    %v3796 = vsel %vm3793, %v3795, %v3791
    %v3797 = vmul.f32 %v3772, %v3796
    %v3798 = vmin.f32 %v3797, 1.0
    %v3799 = vmax.f32 %v3798, -1.0
    %v3800 = vmul.f32 %v3667, %v3667
    %v3801 = vmin.f32 16.0, %v3800
    %v3802 = vmul.f32 %v3801, 2.1237322e-06
    %v3803 = vadd.f32 %v3802, 0.00028619796
    %v3804 = vmul.f32 %v3801, %v3803
    %v3805 = vadd.f32 %v3804, 0.0036580483
    %v3806 = vmul.f32 %v3801, %v3805
    %v3807 = vadd.f32 %v3806, 0.05243302
    %v3808 = vmul.f32 %v3801, %v3807
    %v3809 = vadd.f32 %v3808, 0.18741608
    %v3810 = vmul.f32 %v3801, %v3809
    %v3811 = vadd.f32 %v3810, 1.1283791
    %v3812 = vmul.f32 %v3667, %v3811
    %v3813 = vmul.f32 %v3801, 3.8918573e-05
    %v3814 = vadd.f32 %v3813, 0.001143296
    %v3815 = vmul.f32 %v3801, %v3814
    %v3816 = vadd.f32 %v3815, 0.014752088
    %v3817 = vmul.f32 %v3801, %v3816
    %v3818 = vadd.f32 %v3817, 0.112945676
    %v3819 = vmul.f32 %v3801, %v3818
    %v3820 = vadd.f32 %v3819, 0.4994258
    %v3821 = vmul.f32 %v3801, %v3820
    %v3822 = vadd.f32 %v3821, 1.0
    %v3823 = vrcp.pop %v3822
    %v3824 = vmul.f32 %v3822, %v3823
    %v3825 = vsub.f32 1.0, %v3824
    %v3826 = vmul.f32 %v3823, %v3825
    %v3827 = vadd.f32 %v3823, %v3826
    %vm3828 = vweird.f32 %v3822
    %vm3829 = vweird.f32 %v3823
    %vm3830 = vmor %vm3828, %vm3829
    %v3831 = vsel %vm3830, %v3823, %v3827
    %v3832 = vand.u32 2147483647, %v3822
    %vm3833 = vcmp.eq.f32.partialorder %v3832, 8.507059e+37
    %v3834 = vand.u32 %v3822, 2147483648
    %v3835 = vor.u32 1.1754944e-38, %v3834
    %v3836 = vsel %vm3833, %v3835, %v3831
    %v3837 = vmul.f32 %v3812, %v3836
    %v3838 = vmin.f32 %v3837, 1.0
    %v3839 = vmax.f32 %v3838, -1.0
    %v3840 = vmul.f32 %v3668, %v3668
    %v3841 = vmin.f32 16.0, %v3840
    %v3842 = vmul.f32 %v3841, 2.1237322e-06
    %v3843 = vadd.f32 %v3842, 0.00028619796
    %v3844 = vmul.f32 %v3841, %v3843
    %v3845 = vadd.f32 %v3844, 0.0036580483
    %v3846 = vmul.f32 %v3841, %v3845
    %v3847 = vadd.f32 %v3846, 0.05243302
    %v3848 = vmul.f32 %v3841, %v3847
    %v3849 = vadd.f32 %v3848, 0.18741608
    %v3850 = vmul.f32 %v3841, %v3849
    %v3851 = vadd.f32 %v3850, 1.1283791
    %v3852 = vmul.f32 %v3668, %v3851
    %v3853 = vmul.f32 %v3841, 3.8918573e-05
    %v3854 = vadd.f32 %v3853, 0.001143296
    %v3855 = vmul.f32 %v3841, %v3854
    %v3856 = vadd.f32 %v3855, 0.014752088
    %v3857 = vmul.f32 %v3841, %v3856
    %v3858 = vadd.f32 %v3857, 0.112945676
    %v3859 = vmul.f32 %v3841, %v3858
    %v3860 = vadd.f32 %v3859, 0.4994258
    %v3861 = vmul.f32 %v3841, %v3860
    %v3862 = vadd.f32 %v3861, 1.0
    %v3863 = vrcp.pop %v3862
    %v3864 = vmul.f32 %v3862, %v3863
    %v3865 = vsub.f32 1.0, %v3864
    %v3866 = vmul.f32 %v3863, %v3865
    %v3867 = vadd.f32 %v3863, %v3866
    %vm3868 = vweird.f32 %v3862
    %vm3869 = vweird.f32 %v3863
    %vm3870 = vmor %vm3868, %vm3869
    %v3871 = vsel %vm3870, %v3863, %v3867
    %v3872 = vand.u32 2147483647, %v3862
    %vm3873 = vcmp.eq.f32.partialorder %v3872, 8.507059e+37
    %v3874 = vand.u32 %v3862, 2147483648
    %v3875 = vor.u32 1.1754944e-38, %v3874
    %v3876 = vsel %vm3873, %v3875, %v3871
    %v3877 = vmul.f32 %v3852, %v3876
    %v3878 = vmin.f32 %v3877, 1.0
    %v3879 = vmax.f32 %v3878, -1.0
    %v3880 = vmul.f32 %v3669, %v3669
    %v3881 = vmin.f32 16.0, %v3880
    %v3882 = vmul.f32 %v3881, 2.1237322e-06
    %v3883 = vadd.f32 %v3882, 0.00028619796
    %v3884 = vmul.f32 %v3881, %v3883
    %v3885 = vadd.f32 %v3884, 0.0036580483
    %v3886 = vmul.f32 %v3881, %v3885
    %v3887 = vadd.f32 %v3886, 0.05243302
    %v3888 = vmul.f32 %v3881, %v3887
    %v3889 = vadd.f32 %v3888, 0.18741608
    %v3890 = vmul.f32 %v3881, %v3889
    %v3891 = vadd.f32 %v3890, 1.1283791
    %v3892 = vmul.f32 %v3669, %v3891
    %v3893 = vmul.f32 %v3881, 3.8918573e-05
    %v3894 = vadd.f32 %v3893, 0.001143296
    %v3895 = vmul.f32 %v3881, %v3894
    %v3896 = vadd.f32 %v3895, 0.014752088
    %v3897 = vmul.f32 %v3881, %v3896
    %v3898 = vadd.f32 %v3897, 0.112945676
    %v3899 = vmul.f32 %v3881, %v3898
    %v3900 = vadd.f32 %v3899, 0.4994258
    %v3901 = vmul.f32 %v3881, %v3900
    %v3902 = vadd.f32 %v3901, 1.0
    %v3903 = vrcp.pop %v3902
    %v3904 = vmul.f32 %v3902, %v3903
    %v3905 = vsub.f32 1.0, %v3904
    %v3906 = vmul.f32 %v3903, %v3905
    %v3907 = vadd.f32 %v3903, %v3906
    %vm3908 = vweird.f32 %v3902
    %vm3909 = vweird.f32 %v3903
    %vm3910 = vmor %vm3908, %vm3909
    %v3911 = vsel %vm3910, %v3903, %v3907
    %v3912 = vand.u32 2147483647, %v3902
    %vm3913 = vcmp.eq.f32.partialorder %v3912, 8.507059e+37
    %v3914 = vand.u32 %v3902, 2147483648
    %v3915 = vor.u32 1.1754944e-38, %v3914
    %v3916 = vsel %vm3913, %v3915, %v3911
    %v3917 = vmul.f32 %v3892, %v3916
    %v3918 = vmin.f32 %v3917, 1.0
    %v3919 = vmax.f32 %v3918, -1.0
    %v3920 = vmul.f32 %v3670, %v3670
    %v3921 = vmin.f32 16.0, %v3920
    %v3922 = vmul.f32 %v3921, 2.1237322e-06
    %v3923 = vadd.f32 %v3922, 0.00028619796
    %v3924 = vmul.f32 %v3921, %v3923
    %v3925 = vadd.f32 %v3924, 0.0036580483
    %v3926 = vmul.f32 %v3921, %v3925
    %v3927 = vadd.f32 %v3926, 0.05243302
    %v3928 = vmul.f32 %v3921, %v3927
    %v3929 = vadd.f32 %v3928, 0.18741608
    %v3930 = vmul.f32 %v3921, %v3929
    %v3931 = vadd.f32 %v3930, 1.1283791
    %v3932 = vmul.f32 %v3670, %v3931
    %v3933 = vmul.f32 %v3921, 3.8918573e-05
    %v3934 = vadd.f32 %v3933, 0.001143296
    %v3935 = vmul.f32 %v3921, %v3934
    %v3936 = vadd.f32 %v3935, 0.014752088
    %v3937 = vmul.f32 %v3921, %v3936
    %v3938 = vadd.f32 %v3937, 0.112945676
    %v3939 = vmul.f32 %v3921, %v3938
    %v3940 = vadd.f32 %v3939, 0.4994258
    %v3941 = vmul.f32 %v3921, %v3940
    %v3942 = vadd.f32 %v3941, 1.0
    %v3943 = vrcp.pop %v3942
    %v3944 = vmul.f32 %v3942, %v3943
    %v3945 = vsub.f32 1.0, %v3944
    %v3946 = vmul.f32 %v3943, %v3945
    %v3947 = vadd.f32 %v3943, %v3946
    %vm3948 = vweird.f32 %v3942
    %vm3949 = vweird.f32 %v3943
    %vm3950 = vmor %vm3948, %vm3949
    %v3951 = vsel %vm3950, %v3943, %v3947
    %v3952 = vand.u32 2147483647, %v3942
    %vm3953 = vcmp.eq.f32.partialorder %v3952, 8.507059e+37
    %v3954 = vand.u32 %v3942, 2147483648
    %v3955 = vor.u32 1.1754944e-38, %v3954
    %v3956 = vsel %vm3953, %v3955, %v3951
    %v3957 = vmul.f32 %v3932, %v3956
    %v3958 = vmin.f32 %v3957, 1.0
    %v3959 = vmax.f32 %v3958, -1.0
    %v3960 = vmul.f32 %v3671, %v3671
    %v3961 = vmin.f32 16.0, %v3960
    %v3962 = vmul.f32 %v3961, 2.1237322e-06
    %v3963 = vadd.f32 %v3962, 0.00028619796
    %v3964 = vmul.f32 %v3961, %v3963
    %v3965 = vadd.f32 %v3964, 0.0036580483
    %v3966 = vmul.f32 %v3961, %v3965
    %v3967 = vadd.f32 %v3966, 0.05243302
    %v3968 = vmul.f32 %v3961, %v3967
    %v3969 = vadd.f32 %v3968, 0.18741608
    %v3970 = vmul.f32 %v3961, %v3969
    %v3971 = vadd.f32 %v3970, 1.1283791
    %v3972 = vmul.f32 %v3671, %v3971
    %v3973 = vmul.f32 %v3961, 3.8918573e-05
    %v3974 = vadd.f32 %v3973, 0.001143296
    %v3975 = vmul.f32 %v3961, %v3974
    %v3976 = vadd.f32 %v3975, 0.014752088
    %v3977 = vmul.f32 %v3961, %v3976
    %v3978 = vadd.f32 %v3977, 0.112945676
    %v3979 = vmul.f32 %v3961, %v3978
    %v3980 = vadd.f32 %v3979, 0.4994258
    %v3981 = vmul.f32 %v3961, %v3980
    %v3982 = vadd.f32 %v3981, 1.0
    %v3983 = vrcp.pop %v3982
    %v3984 = vmul.f32 %v3982, %v3983
    %v3985 = vsub.f32 1.0, %v3984
    %v3986 = vmul.f32 %v3983, %v3985
    %v3987 = vadd.f32 %v3983, %v3986
    %vm3988 = vweird.f32 %v3982
    %vm3989 = vweird.f32 %v3983
    %vm3990 = vmor %vm3988, %vm3989
    %v3991 = vsel %vm3990, %v3983, %v3987
    %v3992 = vand.u32 2147483647, %v3982
    %vm3993 = vcmp.eq.f32.partialorder %v3992, 8.507059e+37
    %v3994 = vand.u32 %v3982, 2147483648
    %v3995 = vor.u32 1.1754944e-38, %v3994
    %v3996 = vsel %vm3993, %v3995, %v3991
    %v3997 = vmul.f32 %v3972, %v3996
    %v3998 = vmin.f32 %v3997, 1.0
    %v3999 = vmax.f32 %v3998, -1.0
    %v4000 = vmul.f32 %v3672, %v3672
    %v4001 = vmin.f32 16.0, %v4000
    %v4002 = vmul.f32 %v4001, 2.1237322e-06
    %v4003 = vadd.f32 %v4002, 0.00028619796
    %v4004 = vmul.f32 %v4001, %v4003
    %v4005 = vadd.f32 %v4004, 0.0036580483
    %v4006 = vmul.f32 %v4001, %v4005
    %v4007 = vadd.f32 %v4006, 0.05243302
    %v4008 = vmul.f32 %v4001, %v4007
    %v4009 = vadd.f32 %v4008, 0.18741608
    %v4010 = vmul.f32 %v4001, %v4009
    %v4011 = vadd.f32 %v4010, 1.1283791
    %v4012 = vmul.f32 %v3672, %v4011
    %v4013 = vmul.f32 %v4001, 3.8918573e-05
    %v4014 = vadd.f32 %v4013, 0.001143296
    %v4015 = vmul.f32 %v4001, %v4014
    %v4016 = vadd.f32 %v4015, 0.014752088
    %v4017 = vmul.f32 %v4001, %v4016
    %v4018 = vadd.f32 %v4017, 0.112945676
    %v4019 = vmul.f32 %v4001, %v4018
    %v4020 = vadd.f32 %v4019, 0.4994258
    %v4021 = vmul.f32 %v4001, %v4020
    %v4022 = vadd.f32 %v4021, 1.0
    %v4023 = vrcp.pop %v4022
    %v4024 = vmul.f32 %v4022, %v4023
    %v4025 = vsub.f32 1.0, %v4024
    %v4026 = vmul.f32 %v4023, %v4025
    %v4027 = vadd.f32 %v4023, %v4026
    %vm4028 = vweird.f32 %v4022
    %vm4029 = vweird.f32 %v4023
    %vm4030 = vmor %vm4028, %vm4029
    %v4031 = vsel %vm4030, %v4023, %v4027
    %v4032 = vand.u32 2147483647, %v4022
    %vm4033 = vcmp.eq.f32.partialorder %v4032, 8.507059e+37
    %v4034 = vand.u32 %v4022, 2147483648
    %v4035 = vor.u32 1.1754944e-38, %v4034
    %v4036 = vsel %vm4033, %v4035, %v4031
    %v4037 = vmul.f32 %v4012, %v4036
    %v4038 = vmin.f32 %v4037, 1.0
    %v4039 = vmax.f32 %v4038, -1.0
    %v4040 = vmul.f32 %v3673, %v3673
    %v4041 = vmin.f32 16.0, %v4040
    %v4042 = vmul.f32 %v4041, 2.1237322e-06
    %v4043 = vadd.f32 %v4042, 0.00028619796
    %v4044 = vmul.f32 %v4041, %v4043
    %v4045 = vadd.f32 %v4044, 0.0036580483
    %v4046 = vmul.f32 %v4041, %v4045
    %v4047 = vadd.f32 %v4046, 0.05243302
    %v4048 = vmul.f32 %v4041, %v4047
    %v4049 = vadd.f32 %v4048, 0.18741608
    %v4050 = vmul.f32 %v4041, %v4049
    %v4051 = vadd.f32 %v4050, 1.1283791
    %v4052 = vmul.f32 %v3673, %v4051
    %v4053 = vmul.f32 %v4041, 3.8918573e-05
    %v4054 = vadd.f32 %v4053, 0.001143296
    %v4055 = vmul.f32 %v4041, %v4054
    %v4056 = vadd.f32 %v4055, 0.014752088
    %v4057 = vmul.f32 %v4041, %v4056
    %v4058 = vadd.f32 %v4057, 0.112945676
    %v4059 = vmul.f32 %v4041, %v4058
    %v4060 = vadd.f32 %v4059, 0.4994258
    %v4061 = vmul.f32 %v4041, %v4060
    %v4062 = vadd.f32 %v4061, 1.0
    %v4063 = vrcp.pop %v4062
    %v4064 = vmul.f32 %v4062, %v4063
    %v4065 = vsub.f32 1.0, %v4064
    %v4066 = vmul.f32 %v4063, %v4065
    %v4067 = vadd.f32 %v4063, %v4066
    %vm4068 = vweird.f32 %v4062
    %vm4069 = vweird.f32 %v4063
    %vm4070 = vmor %vm4068, %vm4069
    %v4071 = vsel %vm4070, %v4063, %v4067
    %v4072 = vand.u32 2147483647, %v4062
    %vm4073 = vcmp.eq.f32.partialorder %v4072, 8.507059e+37
    %v4074 = vand.u32 %v4062, 2147483648
    %v4075 = vor.u32 1.1754944e-38, %v4074
    %v4076 = vsel %vm4073, %v4075, %v4071
    %v4077 = vmul.f32 %v4052, %v4076
    %v4078 = vmin.f32 %v4077, 1.0
    %v4079 = vmax.f32 %v4078, -1.0
    %v4080 = vmul.f32 %v3674, %v3674
    %v4081 = vmin.f32 16.0, %v4080
    %v4082 = vmul.f32 %v4081, 2.1237322e-06
    %v4083 = vadd.f32 %v4082, 0.00028619796
    %v4084 = vmul.f32 %v4081, %v4083
    %v4085 = vadd.f32 %v4084, 0.0036580483
    %v4086 = vmul.f32 %v4081, %v4085
    %v4087 = vadd.f32 %v4086, 0.05243302
    %v4088 = vmul.f32 %v4081, %v4087
    %v4089 = vadd.f32 %v4088, 0.18741608
    %v4090 = vmul.f32 %v4081, %v4089
    %v4091 = vadd.f32 %v4090, 1.1283791
    %v4092 = vmul.f32 %v3674, %v4091
    %v4093 = vmul.f32 %v4081, 3.8918573e-05
    %v4094 = vadd.f32 %v4093, 0.001143296
    %v4095 = vmul.f32 %v4081, %v4094
    %v4096 = vadd.f32 %v4095, 0.014752088
    %v4097 = vmul.f32 %v4081, %v4096
    %v4098 = vadd.f32 %v4097, 0.112945676
    %v4099 = vmul.f32 %v4081, %v4098
    %v4100 = vadd.f32 %v4099, 0.4994258
    %v4101 = vmul.f32 %v4081, %v4100
    %v4102 = vadd.f32 %v4101, 1.0
    %v4103 = vrcp.pop %v4102
    %v4104 = vmul.f32 %v4102, %v4103
    %v4105 = vsub.f32 1.0, %v4104
    %v4106 = vmul.f32 %v4103, %v4105
    %v4107 = vadd.f32 %v4103, %v4106
    %vm4108 = vweird.f32 %v4102
    %vm4109 = vweird.f32 %v4103
    %vm4110 = vmor %vm4108, %vm4109
    %v4111 = vsel %vm4110, %v4103, %v4107
    %v4112 = vand.u32 2147483647, %v4102
    %vm4113 = vcmp.eq.f32.partialorder %v4112, 8.507059e+37
    %v4114 = vand.u32 %v4102, 2147483648
    %v4115 = vor.u32 1.1754944e-38, %v4114
    %v4116 = vsel %vm4113, %v4115, %v4111
    %v4117 = vmul.f32 %v4092, %v4116
    %v4118 = vmin.f32 %v4117, 1.0
    %v4119 = vmax.f32 %v4118, -1.0
    %v4120 = vmul.f32 %v3675, %v3675
    %v4121 = vmin.f32 16.0, %v4120
    %v4122 = vmul.f32 %v4121, 2.1237322e-06
    %v4123 = vadd.f32 %v4122, 0.00028619796
    %v4124 = vmul.f32 %v4121, %v4123
    %v4125 = vadd.f32 %v4124, 0.0036580483
    %v4126 = vmul.f32 %v4121, %v4125
    %v4127 = vadd.f32 %v4126, 0.05243302
    %v4128 = vmul.f32 %v4121, %v4127
    %v4129 = vadd.f32 %v4128, 0.18741608
    %v4130 = vmul.f32 %v4121, %v4129
    %v4131 = vadd.f32 %v4130, 1.1283791
    %v4132 = vmul.f32 %v3675, %v4131
    %v4133 = vmul.f32 %v4121, 3.8918573e-05
    %v4134 = vadd.f32 %v4133, 0.001143296
    %v4135 = vmul.f32 %v4121, %v4134
    %v4136 = vadd.f32 %v4135, 0.014752088
    %v4137 = vmul.f32 %v4121, %v4136
    %v4138 = vadd.f32 %v4137, 0.112945676
    %v4139 = vmul.f32 %v4121, %v4138
    %v4140 = vadd.f32 %v4139, 0.4994258
    %v4141 = vmul.f32 %v4121, %v4140
    %v4142 = vadd.f32 %v4141, 1.0
    %v4143 = vrcp.pop %v4142
    %v4144 = vmul.f32 %v4142, %v4143
    %v4145 = vsub.f32 1.0, %v4144
    %v4146 = vmul.f32 %v4143, %v4145
    %v4147 = vadd.f32 %v4143, %v4146
    %vm4148 = vweird.f32 %v4142
    %vm4149 = vweird.f32 %v4143
    %vm4150 = vmor %vm4148, %vm4149
    %v4151 = vsel %vm4150, %v4143, %v4147
    %v4152 = vand.u32 2147483647, %v4142
    %vm4153 = vcmp.eq.f32.partialorder %v4152, 8.507059e+37
    %v4154 = vand.u32 %v4142, 2147483648
    %v4155 = vor.u32 1.1754944e-38, %v4154
    %v4156 = vsel %vm4153, %v4155, %v4151
    %v4157 = vmul.f32 %v4132, %v4156
    %v4158 = vmin.f32 %v4157, 1.0
    %v4159 = vmax.f32 %v4158, -1.0
    %v4160 = vmul.f32 %v3676, %v3676
    %v4161 = vmin.f32 16.0, %v4160
    %v4162 = vmul.f32 %v4161, 2.1237322e-06
    %v4163 = vadd.f32 %v4162, 0.00028619796
    %v4164 = vmul.f32 %v4161, %v4163
    %v4165 = vadd.f32 %v4164, 0.0036580483
    %v4166 = vmul.f32 %v4161, %v4165
    %v4167 = vadd.f32 %v4166, 0.05243302
    %v4168 = vmul.f32 %v4161, %v4167
    %v4169 = vadd.f32 %v4168, 0.18741608
    %v4170 = vmul.f32 %v4161, %v4169
    %v4171 = vadd.f32 %v4170, 1.1283791
    %v4172 = vmul.f32 %v3676, %v4171
    %v4173 = vmul.f32 %v4161, 3.8918573e-05
    %v4174 = vadd.f32 %v4173, 0.001143296
    %v4175 = vmul.f32 %v4161, %v4174
    %v4176 = vadd.f32 %v4175, 0.014752088
    %v4177 = vmul.f32 %v4161, %v4176
    %v4178 = vadd.f32 %v4177, 0.112945676
    %v4179 = vmul.f32 %v4161, %v4178
    %v4180 = vadd.f32 %v4179, 0.4994258
    %v4181 = vmul.f32 %v4161, %v4180
    %v4182 = vadd.f32 %v4181, 1.0
    %v4183 = vrcp.pop %v4182
    %v4184 = vmul.f32 %v4182, %v4183
    %v4185 = vsub.f32 1.0, %v4184
    %v4186 = vmul.f32 %v4183, %v4185
    %v4187 = vadd.f32 %v4183, %v4186
    %vm4188 = vweird.f32 %v4182
    %vm4189 = vweird.f32 %v4183
    %vm4190 = vmor %vm4188, %vm4189
    %v4191 = vsel %vm4190, %v4183, %v4187
    %v4192 = vand.u32 2147483647, %v4182
    %vm4193 = vcmp.eq.f32.partialorder %v4192, 8.507059e+37
    %v4194 = vand.u32 %v4182, 2147483648
    %v4195 = vor.u32 1.1754944e-38, %v4194
    %v4196 = vsel %vm4193, %v4195, %v4191
    %v4197 = vmul.f32 %v4172, %v4196
    %v4198 = vmin.f32 %v4197, 1.0
    %v4199 = vmax.f32 %v4198, -1.0
    %v4200 = vmul.f32 %v3677, %v3677
    %v4201 = vmin.f32 16.0, %v4200
    %v4202 = vmul.f32 %v4201, 2.1237322e-06
    %v4203 = vadd.f32 %v4202, 0.00028619796
    %v4204 = vmul.f32 %v4201, %v4203
    %v4205 = vadd.f32 %v4204, 0.0036580483
    %v4206 = vmul.f32 %v4201, %v4205
    %v4207 = vadd.f32 %v4206, 0.05243302
    %v4208 = vmul.f32 %v4201, %v4207
    %v4209 = vadd.f32 %v4208, 0.18741608
    %v4210 = vmul.f32 %v4201, %v4209
    %v4211 = vadd.f32 %v4210, 1.1283791
    %v4212 = vmul.f32 %v3677, %v4211
    %v4213 = vmul.f32 %v4201, 3.8918573e-05
    %v4214 = vadd.f32 %v4213, 0.001143296
    %v4215 = vmul.f32 %v4201, %v4214
    %v4216 = vadd.f32 %v4215, 0.014752088
    %v4217 = vmul.f32 %v4201, %v4216
    %v4218 = vadd.f32 %v4217, 0.112945676
    %v4219 = vmul.f32 %v4201, %v4218
    %v4220 = vadd.f32 %v4219, 0.4994258
    %v4221 = vmul.f32 %v4201, %v4220
    %v4222 = vadd.f32 %v4221, 1.0
    %v4223 = vrcp.pop %v4222
    %v4224 = vmul.f32 %v4222, %v4223
    %v4225 = vsub.f32 1.0, %v4224
    %v4226 = vmul.f32 %v4223, %v4225
    %v4227 = vadd.f32 %v4223, %v4226
    %vm4228 = vweird.f32 %v4222
    %vm4229 = vweird.f32 %v4223
    %vm4230 = vmor %vm4228, %vm4229
    %v4231 = vsel %vm4230, %v4223, %v4227
    %v4232 = vand.u32 2147483647, %v4222
    %vm4233 = vcmp.eq.f32.partialorder %v4232, 8.507059e+37
    %v4234 = vand.u32 %v4222, 2147483648
    %v4235 = vor.u32 1.1754944e-38, %v4234
    %v4236 = vsel %vm4233, %v4235, %v4231
    %v4237 = vmul.f32 %v4212, %v4236
    %v4238 = vmin.f32 %v4237, 1.0
    %v4239 = vmax.f32 %v4238, -1.0
    %v4240 = vmul.f32 %v3678, %v3678
    %v4241 = vmin.f32 16.0, %v4240
    %v4242 = vmul.f32 %v4241, 2.1237322e-06
    %v4243 = vadd.f32 %v4242, 0.00028619796
    %v4244 = vmul.f32 %v4241, %v4243
    %v4245 = vadd.f32 %v4244, 0.0036580483
    %v4246 = vmul.f32 %v4241, %v4245
    %v4247 = vadd.f32 %v4246, 0.05243302
    %v4248 = vmul.f32 %v4241, %v4247
    %v4249 = vadd.f32 %v4248, 0.18741608
    %v4250 = vmul.f32 %v4241, %v4249
    %v4251 = vadd.f32 %v4250, 1.1283791
    %v4252 = vmul.f32 %v3678, %v4251
    %v4253 = vmul.f32 %v4241, 3.8918573e-05
    %v4254 = vadd.f32 %v4253, 0.001143296
    %v4255 = vmul.f32 %v4241, %v4254
    %v4256 = vadd.f32 %v4255, 0.014752088
    %v4257 = vmul.f32 %v4241, %v4256
    %v4258 = vadd.f32 %v4257, 0.112945676
    %v4259 = vmul.f32 %v4241, %v4258
    %v4260 = vadd.f32 %v4259, 0.4994258
    %v4261 = vmul.f32 %v4241, %v4260
    %v4262 = vadd.f32 %v4261, 1.0
    %v4263 = vrcp.pop %v4262
    %v4264 = vmul.f32 %v4262, %v4263
    %v4265 = vsub.f32 1.0, %v4264
    %v4266 = vmul.f32 %v4263, %v4265
    %v4267 = vadd.f32 %v4263, %v4266
    %vm4268 = vweird.f32 %v4262
    %vm4269 = vweird.f32 %v4263
    %vm4270 = vmor %vm4268, %vm4269
    %v4271 = vsel %vm4270, %v4263, %v4267
    %v4272 = vand.u32 2147483647, %v4262
    %vm4273 = vcmp.eq.f32.partialorder %v4272, 8.507059e+37
    %v4274 = vand.u32 %v4262, 2147483648
    %v4275 = vor.u32 1.1754944e-38, %v4274
    %v4276 = vsel %vm4273, %v4275, %v4271
    %v4277 = vmul.f32 %v4252, %v4276
    %v4278 = vmin.f32 %v4277, 1.0
    %v4279 = vmax.f32 %v4278, -1.0
    %v4280 = vmul.f32 %v3679, %v3679
    %v4281 = vmin.f32 16.0, %v4280
    %v4282 = vmul.f32 %v4281, 2.1237322e-06
    %v4283 = vadd.f32 %v4282, 0.00028619796
    %v4284 = vmul.f32 %v4281, %v4283
    %v4285 = vadd.f32 %v4284, 0.0036580483
    %v4286 = vmul.f32 %v4281, %v4285
    %v4287 = vadd.f32 %v4286, 0.05243302
    %v4288 = vmul.f32 %v4281, %v4287
    %v4289 = vadd.f32 %v4288, 0.18741608
    %v4290 = vmul.f32 %v4281, %v4289
    %v4291 = vadd.f32 %v4290, 1.1283791
    %v4292 = vmul.f32 %v3679, %v4291
    %v4293 = vmul.f32 %v4281, 3.8918573e-05
    %v4294 = vadd.f32 %v4293, 0.001143296
    %v4295 = vmul.f32 %v4281, %v4294
    %v4296 = vadd.f32 %v4295, 0.014752088
    %v4297 = vmul.f32 %v4281, %v4296
    %v4298 = vadd.f32 %v4297, 0.112945676
    %v4299 = vmul.f32 %v4281, %v4298
    %v4300 = vadd.f32 %v4299, 0.4994258
    %v4301 = vmul.f32 %v4281, %v4300
    %v4302 = vadd.f32 %v4301, 1.0
    %v4303 = vrcp.pop %v4302
    %v4304 = vmul.f32 %v4302, %v4303
    %v4305 = vsub.f32 1.0, %v4304
    %v4306 = vmul.f32 %v4303, %v4305
    %v4307 = vadd.f32 %v4303, %v4306
    %vm4308 = vweird.f32 %v4302
    %vm4309 = vweird.f32 %v4303
    %vm4310 = vmor %vm4308, %vm4309
    %v4311 = vsel %vm4310, %v4303, %v4307
    %v4312 = vand.u32 2147483647, %v4302
    %vm4313 = vcmp.eq.f32.partialorder %v4312, 8.507059e+37
    %v4314 = vand.u32 %v4302, 2147483648
    %v4315 = vor.u32 1.1754944e-38, %v4314
    %v4316 = vsel %vm4313, %v4315, %v4311
    %v4317 = vmul.f32 %v4292, %v4316
    %v4318 = vmin.f32 %v4317, 1.0
    %v4319 = vmax.f32 %v4318, -1.0
    %v4320 = vadd.f32 %v3719, 1.0
    %v4321 = vadd.f32 %v3759, 1.0
    %v4322 = vadd.f32 %v3799, 1.0
    %v4323 = vadd.f32 %v3839, 1.0
    %v4324 = vadd.f32 %v3879, 1.0
    %v4325 = vadd.f32 %v3919, 1.0
    %v4326 = vadd.f32 %v3959, 1.0
    %v4327 = vadd.f32 %v3999, 1.0
    %v4328 = vadd.f32 %v4039, 1.0
    %v4329 = vadd.f32 %v4079, 1.0
    %v4330 = vadd.f32 %v4119, 1.0
    %v4331 = vadd.f32 %v4159, 1.0
    %v4332 = vadd.f32 %v4199, 1.0
    %v4333 = vadd.f32 %v4239, 1.0
    %v4334 = vadd.f32 %v4279, 1.0
    %v4335 = vadd.f32 %v4319, 1.0
    %v4336 = vmul.f32 %v3648, %v4320
    %v4337 = vmul.f32 %v3649, %v4321
    %v4338 = vmul.f32 %v3650, %v4322
    %v4339 = vmul.f32 %v3651, %v4323
    %v4340 = vmul.f32 %v3652, %v4324
    %v4341 = vmul.f32 %v3653, %v4325
    %v4342 = vmul.f32 %v3654, %v4326
    %v4343 = vmul.f32 %v3655, %v4327
    %v4344 = vmul.f32 %v3656, %v4328
    %v4345 = vmul.f32 %v3657, %v4329
    %v4346 = vmul.f32 %v3658, %v4330
    %v4347 = vmul.f32 %v3659, %v4331
    %v4348 = vmul.f32 %v3660, %v4332
    %v4349 = vmul.f32 %v3661, %v4333
    %v4350 = vmul.f32 %v3662, %v4334
    %v4351 = vmul.f32 %v3663, %v4335
    %v4352 = vpack.c.bf16 %v4340, %v4336
    %v4353 = vpack.c.bf16 %v4341, %v4337
    %v4354 = vpack.c.bf16 %v4342, %v4338
    %v4355 = vpack.c.bf16 %v4343, %v4339
    %v4356 = vpack.c.bf16 %v4348, %v4344
    %v4357 = vpack.c.bf16 %v4349, %v4345
    %v4358 = vpack.c.bf16 %v4350, %v4346
    %v4359 = vpack.c.bf16 %v4351, %v4347
    %v4360 = vld [vmem:[#allocation5] sm:$0xf]
    %v4361 = vld [vmem:[#allocation5 + $0x4] sm:$0xf]
    %v4362 = vld [vmem:[#allocation5 + $0x8] sm:$0xf]
    %v4363 = vld [vmem:[#allocation5 + $0xc] sm:$0xf]
    %v4364 = vld [vmem:[#allocation5 + $0x10] sm:$0xf]
    %v4365 = vld [vmem:[#allocation5 + $0x14] sm:$0xf]
    %v4366 = vld [vmem:[#allocation5 + $0x18] sm:$0xf]
    %v4367 = vld [vmem:[#allocation5 + $0x1c] sm:$0xf]
    %v4368 = vld [vmem:[#allocation5 + $0x20] sm:$0xf]
    %v4369 = vld [vmem:[#allocation5 + $0x24] sm:$0xf]
    %v4370 = vld [vmem:[#allocation5 + $0x28] sm:$0xf]
    %v4371 = vld [vmem:[#allocation5 + $0x2c] sm:$0xf]
    %v4372 = vld [vmem:[#allocation5 + $0x30] sm:$0xf]
    %v4373 = vld [vmem:[#allocation5 + $0x34] sm:$0xf]
    %v4374 = vld [vmem:[#allocation5 + $0x38] sm:$0xf]
    %v4375 = vld [vmem:[#allocation5 + $0x3c] sm:$0xf]
    %v4376 = vld [vmem:[#allocation5 + $0x40] sm:$0xf]
    %v4377 = vld [vmem:[#allocation5 + $0x44] sm:$0xf]
    %v4378 = vld [vmem:[#allocation5 + $0x48] sm:$0xf]
    %v4379 = vld [vmem:[#allocation5 + $0x4c] sm:$0xf]
    %v4380 = vld [vmem:[#allocation5 + $0x50] sm:$0xf]
    %v4381 = vld [vmem:[#allocation5 + $0x54] sm:$0xf]
    %v4382 = vld [vmem:[#allocation5 + $0x58] sm:$0xf]
    %v4383 = vld [vmem:[#allocation5 + $0x5c] sm:$0xf]
    %v4384 = vld [vmem:[#allocation5 + $0x60] sm:$0xf]
    %v4385 = vld [vmem:[#allocation5 + $0x64] sm:$0xf]
    %v4386 = vld [vmem:[#allocation5 + $0x68] sm:$0xf]
    %v4387 = vld [vmem:[#allocation5 + $0x6c] sm:$0xf]
    %v4388 = vld [vmem:[#allocation5 + $0x70] sm:$0xf]
    %v4389 = vld [vmem:[#allocation5 + $0x74] sm:$0xf]
    %v4390 = vld [vmem:[#allocation5 + $0x78] sm:$0xf]
    %v4391 = vld [vmem:[#allocation5 + $0x7c] sm:$0xf]
    %v4392 = vld [vmem:[#allocation5 + $0x80] sm:$0xf]
    %v4393 = vld [vmem:[#allocation5 + $0x84] sm:$0xf]
    %v4394 = vld [vmem:[#allocation5 + $0x88] sm:$0xf]
    %v4395 = vld [vmem:[#allocation5 + $0x8c] sm:$0xf]
    %v4396 = vld [vmem:[#allocation5 + $0x90] sm:$0xf]
    %v4397 = vld [vmem:[#allocation5 + $0x94] sm:$0xf]
    %v4398 = vld [vmem:[#allocation5 + $0x98] sm:$0xf]
    %v4399 = vld [vmem:[#allocation5 + $0x9c] sm:$0xf]
    %v4400 = vld [vmem:[#allocation5 + $0xa0] sm:$0xf]
    %v4401 = vld [vmem:[#allocation5 + $0xa4] sm:$0xf]
    %v4402 = vld [vmem:[#allocation5 + $0xa8] sm:$0xf]
    %v4403 = vld [vmem:[#allocation5 + $0xac] sm:$0xf]
    %v4404 = vld [vmem:[#allocation5 + $0xb0] sm:$0xf]
    %v4405 = vld [vmem:[#allocation5 + $0xb4] sm:$0xf]
    %v4406 = vld [vmem:[#allocation5 + $0xb8] sm:$0xf]
    %v4407 = vld [vmem:[#allocation5 + $0xbc] sm:$0xf]
    %v4408 = vld [vmem:[#allocation5 + $0xc0] sm:$0xf]
    %v4409 = vld [vmem:[#allocation5 + $0xc4] sm:$0xf]
    %v4410 = vld [vmem:[#allocation5 + $0xc8] sm:$0xf]
    %v4411 = vld [vmem:[#allocation5 + $0xcc] sm:$0xf]
    %v4412 = vld [vmem:[#allocation5 + $0xd0] sm:$0xf]
    %v4413 = vld [vmem:[#allocation5 + $0xd4] sm:$0xf]
    %v4414 = vld [vmem:[#allocation5 + $0xd8] sm:$0xf]
    %v4415 = vld [vmem:[#allocation5 + $0xdc] sm:$0xf]
    %v4416 = vld [vmem:[#allocation5 + $0xe0] sm:$0xf]
    %v4417 = vld [vmem:[#allocation5 + $0xe4] sm:$0xf]
    %v4418 = vld [vmem:[#allocation5 + $0xe8] sm:$0xf]
    %v4419 = vld [vmem:[#allocation5 + $0xec] sm:$0xf]
    %v4420 = vld [vmem:[#allocation5 + $0xf0] sm:$0xf]
    %v4421 = vld [vmem:[#allocation5 + $0xf4] sm:$0xf]
    %v4422 = vld [vmem:[#allocation5 + $0xf8] sm:$0xf]
    %v4423 = vld [vmem:[#allocation5 + $0xfc] sm:$0xf]
    %v4424 = vld [vmem:[%s15] sm:$0x1]
    %v4426 = vperm.slane %v4424, 0
    %v4492 = vunpack.c.l.b16 %v4360
    %v4493 = vunpack.c.l.b16 %v4361
    %v4494 = vunpack.c.l.b16 %v4362
    %v4495 = vunpack.c.l.b16 %v4363
    %v4496 = vunpack.c.l.b16 %v4364
    %v4497 = vunpack.c.l.b16 %v4365
    %v4498 = vunpack.c.l.b16 %v4366
    %v4499 = vunpack.c.l.b16 %v4367
    %v4500 = vunpack.c.l.b16 %v4368
    %v4501 = vunpack.c.l.b16 %v4369
    %v4502 = vunpack.c.l.b16 %v4370
    %v4503 = vunpack.c.l.b16 %v4371
    %v4504 = vunpack.c.l.b16 %v4372
    %v4505 = vunpack.c.l.b16 %v4373
    %v4506 = vunpack.c.l.b16 %v4374
    %v4507 = vunpack.c.l.b16 %v4375
    %v4508 = vunpack.c.l.b16 %v4376
    %v4509 = vunpack.c.l.b16 %v4377
    %v4510 = vunpack.c.l.b16 %v4378
    %v4511 = vunpack.c.l.b16 %v4379
    %v4512 = vunpack.c.l.b16 %v4380
    %v4513 = vunpack.c.l.b16 %v4381
    %v4514 = vunpack.c.l.b16 %v4382
    %v4515 = vunpack.c.l.b16 %v4383
    %v4516 = vunpack.c.l.b16 %v4384
    %v4517 = vunpack.c.l.b16 %v4385
    %v4518 = vunpack.c.l.b16 %v4386
    %v4519 = vunpack.c.l.b16 %v4387
    %v4520 = vunpack.c.l.b16 %v4388
    %v4521 = vunpack.c.l.b16 %v4389
    %v4522 = vunpack.c.l.b16 %v4390
    %v4523 = vunpack.c.l.b16 %v4391
    %v4524 = vunpack.c.l.b16 %v4392
    %v4525 = vunpack.c.l.b16 %v4393
    %v4526 = vunpack.c.l.b16 %v4394
    %v4527 = vunpack.c.l.b16 %v4395
    %v4528 = vunpack.c.l.b16 %v4396
    %v4529 = vunpack.c.l.b16 %v4397
    %v4530 = vunpack.c.l.b16 %v4398
    %v4531 = vunpack.c.l.b16 %v4399
    %v4532 = vunpack.c.l.b16 %v4400
    %v4533 = vunpack.c.l.b16 %v4401
    %v4534 = vunpack.c.l.b16 %v4402
    %v4535 = vunpack.c.l.b16 %v4403
    %v4536 = vunpack.c.l.b16 %v4404
    %v4537 = vunpack.c.l.b16 %v4405
    %v4538 = vunpack.c.l.b16 %v4406
    %v4539 = vunpack.c.l.b16 %v4407
    %v4540 = vunpack.c.l.b16 %v4408
    %v4541 = vunpack.c.l.b16 %v4409
    %v4542 = vunpack.c.l.b16 %v4410
    %v4543 = vunpack.c.l.b16 %v4411
    %v4544 = vunpack.c.l.b16 %v4412
    %v4545 = vunpack.c.l.b16 %v4413
    %v4546 = vunpack.c.l.b16 %v4414
    %v4547 = vunpack.c.l.b16 %v4415
    %v4548 = vunpack.c.l.b16 %v4416
    %v4549 = vunpack.c.l.b16 %v4417
    %v4550 = vunpack.c.l.b16 %v4418
    %v4551 = vunpack.c.l.b16 %v4419
    %v4552 = vunpack.c.l.b16 %v4420
    %v4553 = vunpack.c.l.b16 %v4421
    %v4554 = vunpack.c.l.b16 %v4422
    %v4555 = vunpack.c.l.b16 %v4423
    %v4556 = vpack.c.b16 %v4493, %v4492
    %v4557 = vpack.c.b16 %v4495, %v4494
    %v4558 = vpack.c.b16 %v4497, %v4496
    %v4559 = vpack.c.b16 %v4499, %v4498
    %v4560 = vpack.c.b16 %v4501, %v4500
    %v4561 = vpack.c.b16 %v4503, %v4502
    %v4562 = vpack.c.b16 %v4505, %v4504
    %v4563 = vpack.c.b16 %v4507, %v4506
    %v4564 = vpack.c.b16 %v4509, %v4508
    %v4565 = vpack.c.b16 %v4511, %v4510
    %v4566 = vpack.c.b16 %v4513, %v4512
    %v4567 = vpack.c.b16 %v4515, %v4514
    %v4568 = vpack.c.b16 %v4517, %v4516
    %v4569 = vpack.c.b16 %v4519, %v4518
    %v4570 = vpack.c.b16 %v4521, %v4520
    %v4571 = vpack.c.b16 %v4523, %v4522
    %v4572 = vpack.c.b16 %v4525, %v4524
    %v4573 = vpack.c.b16 %v4527, %v4526
    %v4574 = vpack.c.b16 %v4529, %v4528
    %v4575 = vpack.c.b16 %v4531, %v4530
    %v4576 = vpack.c.b16 %v4533, %v4532
    %v4577 = vpack.c.b16 %v4535, %v4534
    %v4578 = vpack.c.b16 %v4537, %v4536
    %v4579 = vpack.c.b16 %v4539, %v4538
    %v4580 = vpack.c.b16 %v4541, %v4540
    %v4581 = vpack.c.b16 %v4543, %v4542
    %v4582 = vpack.c.b16 %v4545, %v4544
    %v4583 = vpack.c.b16 %v4547, %v4546
    %v4584 = vpack.c.b16 %v4549, %v4548
    %v4585 = vpack.c.b16 %v4551, %v4550
    %v4586 = vpack.c.b16 %v4553, %v4552
    %v4587 = vpack.c.b16 %v4555, %v4554
    %4620 = vmatpush.bf16.msra.mxu0 %v4563
    %4621 = vmatpush.bf16.msra.mxu0 %v4562
    %4622 = vmatpush.bf16.msra.mxu0 %v4561
    %4623 = vmatpush.bf16.msra.mxu0 %v4560
    %4624 = vmatpush.bf16.msra.mxu0 %v4559
    %4625 = vmatpush.bf16.msra.mxu0 %v4558
    %4626 = vmatpush.bf16.msra.mxu0 %v4557
    %4627 = vmatpush.bf16.msra.mxu0 %v4556
    %4628 = vmatmul.bf16.gmra.mxu0 %v4352
    %v4629 = vpop.f32.mrf.mxu0
    %v4630 = vadd.f32 %v4426, %v4629
    %v4631 = vpop.f32.mrf.mxu0
    %v4632 = vadd.f32 %v4426, %v4631
    %4633 = vmatmul.bf16.gmra.mxu0 %v4356
    %v4634 = vpop.f32.mrf.mxu0
    %v4635 = vadd.f32 %v4426, %v4634
    %v4636 = vpop.f32.mrf.mxu0
    %v4637 = vadd.f32 %v4426, %v4636
    %4638 = vdwg.mxu0
    %4639 = vmatpush.bf16.msra.mxu0 %v4571
    %4640 = vmatpush.bf16.msra.mxu0 %v4570
    %4641 = vmatpush.bf16.msra.mxu0 %v4569
    %4642 = vmatpush.bf16.msra.mxu0 %v4568
    %4643 = vmatpush.bf16.msra.mxu0 %v4567
    %4644 = vmatpush.bf16.msra.mxu0 %v4566
    %4645 = vmatpush.bf16.msra.mxu0 %v4565
    %4646 = vmatpush.bf16.msra.mxu0 %v4564
    %4647 = vmatmul.bf16.gmra.mxu0 %v4353
    %v4648 = vpop.f32.mrf.mxu0
    %v4649 = vadd.f32 %v4630, %v4648
    %v4650 = vpop.f32.mrf.mxu0
    %v4651 = vadd.f32 %v4632, %v4650
    %4652 = vmatmul.bf16.gmra.mxu0 %v4357
    %v4653 = vpop.f32.mrf.mxu0
    %v4654 = vadd.f32 %v4635, %v4653
    %v4655 = vpop.f32.mrf.mxu0
    %v4656 = vadd.f32 %v4637, %v4655
    %4657 = vdwg.mxu0
    %4658 = vmatpush.bf16.msra.mxu0 %v4579
    %4659 = vmatpush.bf16.msra.mxu0 %v4578
    %4660 = vmatpush.bf16.msra.mxu0 %v4577
    %4661 = vmatpush.bf16.msra.mxu0 %v4576
    %4662 = vmatpush.bf16.msra.mxu0 %v4575
    %4663 = vmatpush.bf16.msra.mxu0 %v4574
    %4664 = vmatpush.bf16.msra.mxu0 %v4573
    %4665 = vmatpush.bf16.msra.mxu0 %v4572
    %4666 = vmatmul.bf16.gmra.mxu0 %v4354
    %v4667 = vpop.f32.mrf.mxu0
    %v4668 = vadd.f32 %v4649, %v4667
    %v4669 = vpop.f32.mrf.mxu0
    %v4670 = vadd.f32 %v4651, %v4669
    %4671 = vmatmul.bf16.gmra.mxu0 %v4358
    %v4672 = vpop.f32.mrf.mxu0
    %v4673 = vadd.f32 %v4654, %v4672
    %v4674 = vpop.f32.mrf.mxu0
    %v4675 = vadd.f32 %v4656, %v4674
    %4676 = vdwg.mxu0
    %4677 = vmatpush.bf16.msra.mxu0 %v4587
    %4678 = vmatpush.bf16.msra.mxu0 %v4586
    %4679 = vmatpush.bf16.msra.mxu0 %v4585
    %4680 = vmatpush.bf16.msra.mxu0 %v4584
    %4681 = vmatpush.bf16.msra.mxu0 %v4583
    %4682 = vmatpush.bf16.msra.mxu0 %v4582
    %4683 = vmatpush.bf16.msra.mxu0 %v4581
    %4684 = vmatpush.bf16.msra.mxu0 %v4580
    %4685 = vmatmul.bf16.gmra.mxu0 %v4355
    %v4686 = vpop.f32.mrf.mxu0
    %v4687 = vadd.f32 %v4668, %v4686
    %v4688 = vpop.f32.mrf.mxu0
    %v4689 = vadd.f32 %v4670, %v4688
    %4690 = vmatmul.bf16.gmra.mxu0 %v4359
    %v4691 = vpop.f32.mrf.mxu0
    %v4692 = vadd.f32 %v4673, %v4691
    %v4693 = vpop.f32.mrf.mxu0
    %v4694 = vadd.f32 %v4675, %v4693
    %4695 = vdwg.mxu0
    %v4696 = vadd.f32 %v3256, %v4687
    %v4697 = vadd.f32 %v3257, %v4689
    %v4698 = vadd.f32 %v3258, %v4692
    %v4699 = vadd.f32 %v3259, %v4694
    %s4700 = scalar_lea.vmem %s4, 1
    %v4701 = vld [vmem:[%s4700] sm:$0x1]
    %s4702 = scalar_lea.vmem %s5, 1
    %v4703 = vld [vmem:[%s4702] sm:$0x1]
    %4704 = vadd.xlane.f32.xlu0 %v4696
    %v4705 = vpop.xlane.xlu0 %4704
    %4706 = vadd.xlane.f32.xlu0 %v4697
    %v4707 = vpop.xlane.xlu0 %4706
    %4708 = vadd.xlane.f32.xlu0 %v4698
    %v4709 = vpop.xlane.xlu0 %4708
    %4710 = vadd.xlane.f32.xlu0 %v4699
    %v4711 = vpop.xlane.xlu0 %4710
    %v4712 = vmul.f32 %v4705, %v193
    %v4713 = vmul.f32 %v4707, %v193
    %v4714 = vmul.f32 %v4709, %v193
    %v4715 = vmul.f32 %v4711, %v193
    %v4716 = vmul.f32 %v4696, %v4696
    %v4717 = vmul.f32 %v4697, %v4697
    %v4718 = vmul.f32 %v4698, %v4698
    %v4719 = vmul.f32 %v4699, %v4699
    %4720 = vadd.xlane.f32.xlu0 %v4716
    %v4721 = vpop.xlane.xlu0 %4720
    %4722 = vadd.xlane.f32.xlu0 %v4717
    %v4723 = vpop.xlane.xlu0 %4722
    %4724 = vadd.xlane.f32.xlu0 %v4718
    %v4725 = vpop.xlane.xlu0 %4724
    %4726 = vadd.xlane.f32.xlu0 %v4719
    %v4727 = vpop.xlane.xlu0 %4726
    %v4728 = vmul.f32 %v4721, %v193
    %v4729 = vmul.f32 %v4723, %v193
    %v4730 = vmul.f32 %v4725, %v193
    %v4731 = vmul.f32 %v4727, %v193
    %v4732 = vmul.f32 %v4712, %v4712
    %v4733 = vmul.f32 %v4713, %v4713
    %v4734 = vmul.f32 %v4714, %v4714
    %v4735 = vmul.f32 %v4715, %v4715
    %v4736 = vsub.f32 %v4728, %v4732
    %v4737 = vsub.f32 %v4729, %v4733
    %v4738 = vsub.f32 %v4730, %v4734
    %v4739 = vsub.f32 %v4731, %v4735
    %v4740 = vmax.f32 %v4736, 0.0
    %v4741 = vmax.f32 %v4737, 0.0
    %v4742 = vmax.f32 %v4738, 0.0
    %v4743 = vmax.f32 %v4739, 0.0
    %v4744 = vsub.f32 %v4696, %v4712
    %v4745 = vsub.f32 %v4697, %v4713
    %v4746 = vsub.f32 %v4698, %v4714
    %v4747 = vsub.f32 %v4699, %v4715
    %v4748 = vadd.f32 %v4740, 1e-05
    %v4749 = vadd.f32 %v4741, 1e-05
    %v4750 = vadd.f32 %v4742, 1e-05
    %v4751 = vadd.f32 %v4743, 1e-05
    %v4752 = vrsqrt.pop %v4748
    %v4753 = vmul.f32 %v4752, %v4748
    %v4754 = vmul.f32 %v4753, %v4752
    %v4755 = vmul.f32 0.5, %v4754
    %v4756 = vsub.f32 1.5, %v4755
    %v4757 = vmul.f32 %v4752, %v4756
    %vm4758 = vweird.f32 %v4748
    %vm4759 = vweird.f32 %v4752
    %vm4760 = vmor %vm4758, %vm4759
    %v4761 = vsel %vm4760, %v4752, %v4757
    %v4762 = vrsqrt.pop %v4749
    %v4763 = vmul.f32 %v4762, %v4749
    %v4764 = vmul.f32 %v4763, %v4762
    %v4765 = vmul.f32 0.5, %v4764
    %v4766 = vsub.f32 1.5, %v4765
    %v4767 = vmul.f32 %v4762, %v4766
    %vm4768 = vweird.f32 %v4749
    %vm4769 = vweird.f32 %v4762
    %vm4770 = vmor %vm4768, %vm4769
    %v4771 = vsel %vm4770, %v4762, %v4767
    %v4772 = vrsqrt.pop %v4750
    %v4773 = vmul.f32 %v4772, %v4750
    %v4774 = vmul.f32 %v4773, %v4772
    %v4775 = vmul.f32 0.5, %v4774
    %v4776 = vsub.f32 1.5, %v4775
    %v4777 = vmul.f32 %v4772, %v4776
    %vm4778 = vweird.f32 %v4750
    %vm4779 = vweird.f32 %v4772
    %vm4780 = vmor %vm4778, %vm4779
    %v4781 = vsel %vm4780, %v4772, %v4777
    %v4782 = vrsqrt.pop %v4751
    %v4783 = vmul.f32 %v4782, %v4751
    %v4784 = vmul.f32 %v4783, %v4782
    %v4785 = vmul.f32 0.5, %v4784
    %v4786 = vsub.f32 1.5, %v4785
    %v4787 = vmul.f32 %v4782, %v4786
    %vm4788 = vweird.f32 %v4751
    %vm4789 = vweird.f32 %v4782
    %vm4790 = vmor %vm4788, %vm4789
    %v4791 = vsel %vm4790, %v4782, %v4787
    %v4792 = vmul.f32 %v4744, %v4761
    %v4793 = vmul.f32 %v4745, %v4771
    %v4794 = vmul.f32 %v4746, %v4781
    %v4795 = vmul.f32 %v4747, %v4791
    %v4797 = vperm.slane %v4701, 0
    %v4799 = vmul.f32 %v4792, %v4797
    %v4800 = vmul.f32 %v4793, %v4797
    %v4801 = vmul.f32 %v4794, %v4797
    %v4802 = vmul.f32 %v4795, %v4797
    %v4804 = vperm.slane %v4703, 0
    %v4806 = vadd.f32 %v4799, %v4804
    %v4807 = vadd.f32 %v4800, %v4804
    %v4808 = vadd.f32 %v4801, %v4804
    %v4809 = vadd.f32 %v4802, %v4804
    %v4810 = vpack.c.bf16 %v4807, %v4806
    %v4811 = vpack.c.bf16 %v4809, %v4808
    %s4812 = scalar_lea.vmem %s6, 192
    %v4813 = vld [vmem:[%s4812] sm:$0xff]
    %v4814 = vld [vmem:[%s4812 + $0x8] sm:$0xf]
    %v4815 = vld [vmem:[%s4812 + $0xc] sm:$0xff]
    %v4816 = vld [vmem:[%s4812 + $0x14] sm:$0xf]
    %v4817 = vld [vmem:[%s4812 + $0x18] sm:$0xff]
    %v4818 = vld [vmem:[%s4812 + $0x20] sm:$0xf]
    %v4819 = vld [vmem:[%s4812 + $0x24] sm:$0xff]
    %v4820 = vld [vmem:[%s4812 + $0x2c] sm:$0xf]
    %v4821 = vld [vmem:[%s4812 + $0x30] sm:$0xff]
    %v4822 = vld [vmem:[%s4812 + $0x38] sm:$0xf]
    %v4823 = vld [vmem:[%s4812 + $0x3c] sm:$0xff]
    %v4824 = vld [vmem:[%s4812 + $0x44] sm:$0xf]
    %v4825 = vld [vmem:[%s4812 + $0x48] sm:$0xff]
    %v4826 = vld [vmem:[%s4812 + $0x50] sm:$0xf]
    %v4827 = vld [vmem:[%s4812 + $0x54] sm:$0xff]
    %v4828 = vld [vmem:[%s4812 + $0x5c] sm:$0xf]
    %v4829 = vld [vmem:[%s4812 + $0x60] sm:$0xff]
    %v4830 = vld [vmem:[%s4812 + $0x68] sm:$0xf]
    %v4831 = vld [vmem:[%s4812 + $0x6c] sm:$0xff]
    %v4832 = vld [vmem:[%s4812 + $0x74] sm:$0xf]
    %v4833 = vld [vmem:[%s4812 + $0x78] sm:$0xff]
    %v4834 = vld [vmem:[%s4812 + $0x80] sm:$0xf]
    %v4835 = vld [vmem:[%s4812 + $0x84] sm:$0xff]
    %v4836 = vld [vmem:[%s4812 + $0x8c] sm:$0xf]
    %v4837 = vld [vmem:[%s4812 + $0x90] sm:$0xff]
    %v4838 = vld [vmem:[%s4812 + $0x98] sm:$0xf]
    %v4839 = vld [vmem:[%s4812 + $0x9c] sm:$0xff]
    %v4840 = vld [vmem:[%s4812 + $0xa4] sm:$0xf]
    %v4841 = vld [vmem:[%s4812 + $0xa8] sm:$0xff]
    %v4842 = vld [vmem:[%s4812 + $0xb0] sm:$0xf]
    %v4843 = vld [vmem:[%s4812 + $0xb4] sm:$0xff]
    %v4844 = vld [vmem:[%s4812 + $0xbc] sm:$0xf]
    %s4845 = scalar_lea.vmem %s7, 3
    %v4846 = vld [vmem:[%s4845] sm:$0x7]
    %v4848 = vperm.slane %v4846, 0
    %v4849 = vperm.slane %v4846, 1
    %v4850 = vperm.slane %v4846, 2
    %v4886 = vunpack.c.l.b16 %v4813
    %v4887 = vunpack.c.h.b16 %v4813
    %v4888 = vunpack.c.l.b16 %v4814
    %v4889 = vunpack.c.l.b16 %v4815
    %v4890 = vunpack.c.h.b16 %v4815
    %v4891 = vunpack.c.l.b16 %v4816
    %v4892 = vunpack.c.l.b16 %v4817
    %v4893 = vunpack.c.h.b16 %v4817
    %v4894 = vunpack.c.l.b16 %v4818
    %v4895 = vunpack.c.l.b16 %v4819
    %v4896 = vunpack.c.h.b16 %v4819
    %v4897 = vunpack.c.l.b16 %v4820
    %v4898 = vunpack.c.l.b16 %v4821
    %v4899 = vunpack.c.h.b16 %v4821
    %v4900 = vunpack.c.l.b16 %v4822
    %v4901 = vunpack.c.l.b16 %v4823
    %v4902 = vunpack.c.h.b16 %v4823
    %v4903 = vunpack.c.l.b16 %v4824
    %v4904 = vunpack.c.l.b16 %v4825
    %v4905 = vunpack.c.h.b16 %v4825
    %v4906 = vunpack.c.l.b16 %v4826
    %v4907 = vunpack.c.l.b16 %v4827
    %v4908 = vunpack.c.h.b16 %v4827
    %v4909 = vunpack.c.l.b16 %v4828
    %v4910 = vunpack.c.l.b16 %v4829
    %v4911 = vunpack.c.h.b16 %v4829
    %v4912 = vunpack.c.l.b16 %v4830
    %v4913 = vunpack.c.l.b16 %v4831
    %v4914 = vunpack.c.h.b16 %v4831
    %v4915 = vunpack.c.l.b16 %v4832
    %v4916 = vunpack.c.l.b16 %v4833
    %v4917 = vunpack.c.h.b16 %v4833
    %v4918 = vunpack.c.l.b16 %v4834
    %v4919 = vunpack.c.l.b16 %v4835
    %v4920 = vunpack.c.h.b16 %v4835
    %v4921 = vunpack.c.l.b16 %v4836
    %v4922 = vunpack.c.l.b16 %v4837
    %v4923 = vunpack.c.h.b16 %v4837
    %v4924 = vunpack.c.l.b16 %v4838
    %v4925 = vunpack.c.l.b16 %v4839
    %v4926 = vunpack.c.h.b16 %v4839
    %v4927 = vunpack.c.l.b16 %v4840
    %v4928 = vunpack.c.l.b16 %v4841
    %v4929 = vunpack.c.h.b16 %v4841
    %v4930 = vunpack.c.l.b16 %v4842
    %v4931 = vunpack.c.l.b16 %v4843
    %v4932 = vunpack.c.h.b16 %v4843
    %v4933 = vunpack.c.l.b16 %v4844
    %v4934 = vpack.c.b16 %v4889, %v4886
    %v4935 = vpack.c.b16 %v4890, %v4887
    %v4936 = vpack.c.b16 %v4891, %v4888
    %v4937 = vpack.c.b16 %v4895, %v4892
    %v4938 = vpack.c.b16 %v4896, %v4893
    %v4939 = vpack.c.b16 %v4897, %v4894
    %v4940 = vpack.c.b16 %v4901, %v4898
    %v4941 = vpack.c.b16 %v4902, %v4899
    %v4942 = vpack.c.b16 %v4903, %v4900
    %v4943 = vpack.c.b16 %v4907, %v4904
    %v4944 = vpack.c.b16 %v4908, %v4905
    %v4945 = vpack.c.b16 %v4909, %v4906
    %v4946 = vpack.c.b16 %v4913, %v4910
    %v4947 = vpack.c.b16 %v4914, %v4911
    %v4948 = vpack.c.b16 %v4915, %v4912
    %v4949 = vpack.c.b16 %v4919, %v4916
    %v4950 = vpack.c.b16 %v4920, %v4917
    %v4951 = vpack.c.b16 %v4921, %v4918
    %v4952 = vpack.c.b16 %v4925, %v4922
    %v4953 = vpack.c.b16 %v4926, %v4923
    %v4954 = vpack.c.b16 %v4927, %v4924
    %v4955 = vpack.c.b16 %v4931, %v4928
    %v4956 = vpack.c.b16 %v4932, %v4929
    %v4957 = vpack.c.b16 %v4933, %v4930
    %4982 = vmatpush.bf16.msra.mxu0 %v4955
    %4983 = vmatpush.bf16.msra.mxu0 %v4952
    %4984 = vmatpush.bf16.msra.mxu0 %v4949
    %4985 = vmatpush.bf16.msra.mxu0 %v4946
    %4986 = vmatpush.bf16.msra.mxu0 %v4943
    %4987 = vmatpush.bf16.msra.mxu0 %v4940
    %4988 = vmatpush.bf16.msra.mxu0 %v4937
    %4989 = vmatpush.bf16.msra.mxu0 %v4934
    %4990 = vmatmul.bf16.gmra.mxu0 %v4810
    %v4991 = vpop.f32.mrf.mxu0
    %v4992 = vadd.f32 %v4848, %v4991
    %v4993 = vpop.f32.mrf.mxu0
    %v4994 = vadd.f32 %v4848, %v4993
    %4995 = vmatmul.bf16.gmra.mxu0 %v4811
    %v4996 = vpop.f32.mrf.mxu0
    %v4997 = vadd.f32 %v4848, %v4996
    %v4998 = vpop.f32.mrf.mxu0
    %v4999 = vadd.f32 %v4848, %v4998
    %5000 = vdwg.mxu0
    %5001 = vmatpush.bf16.msra.mxu0 %v4956
    %5002 = vmatpush.bf16.msra.mxu0 %v4953
    %5003 = vmatpush.bf16.msra.mxu0 %v4950
    %5004 = vmatpush.bf16.msra.mxu0 %v4947
    %5005 = vmatpush.bf16.msra.mxu0 %v4944
    %5006 = vmatpush.bf16.msra.mxu0 %v4941
    %5007 = vmatpush.bf16.msra.mxu0 %v4938
    %5008 = vmatpush.bf16.msra.mxu0 %v4935
    %5009 = vmatmul.bf16.gmra.mxu0 %v4810
    %v5010 = vpop.f32.mrf.mxu0
    %v5011 = vadd.f32 %v4849, %v5010
    %v5012 = vpop.f32.mrf.mxu0
    %v5013 = vadd.f32 %v4849, %v5012
    %5014 = vmatmul.bf16.gmra.mxu0 %v4811
    %v5015 = vpop.f32.mrf.mxu0
    %v5016 = vadd.f32 %v4849, %v5015
    %v5017 = vpop.f32.mrf.mxu0
    %v5018 = vadd.f32 %v4849, %v5017
    %5019 = vdwg.mxu0
    %5020 = vmatpush.bf16.msra.mxu0 %v4957
    %5021 = vmatpush.bf16.msra.mxu0 %v4954
    %5022 = vmatpush.bf16.msra.mxu0 %v4951
    %5023 = vmatpush.bf16.msra.mxu0 %v4948
    %5024 = vmatpush.bf16.msra.mxu0 %v4945
    %5025 = vmatpush.bf16.msra.mxu0 %v4942
    %5026 = vmatpush.bf16.msra.mxu0 %v4939
    %5027 = vmatpush.bf16.msra.mxu0 %v4936
    %5028 = vmatmul.bf16.gmra.mxu0 %v4810
    %v5029 = vpop.f32.mrf.mxu0
    %v5030 = vadd.f32 %v4850, %v5029
    %v5031 = vpop.f32.mrf.mxu0
    %v5032 = vadd.f32 %v4850, %v5031
    %5033 = vmatmul.bf16.gmra.mxu0 %v4811
    %v5034 = vpop.f32.mrf.mxu0
    %v5035 = vadd.f32 %v4850, %v5034
    %v5036 = vpop.f32.mrf.mxu0
    %v5037 = vadd.f32 %v4850, %v5036
    %5038 = vdwg.mxu0
    %5043 = vrot.lane.b32.xlu0 %v4992, 96
    %v5044 = vpop.permute.xlu0 %5043
    %5045 = vrot.lane.b32.xlu0 %v4994, 96
    %v5046 = vpop.permute.xlu0 %5045
    %5047 = vrot.lane.b32.xlu0 %v4997, 96
    %v5048 = vpop.permute.xlu0 %5047
    %5049 = vrot.lane.b32.xlu0 %v4999, 96
    %v5050 = vpop.permute.xlu0 %5049
    %5055 = vrot.lane.b32.xlu0 %v4992, 64
    %v5056 = vpop.permute.xlu0 %5055
    %5057 = vrot.lane.b32.xlu0 %v4994, 64
    %v5058 = vpop.permute.xlu0 %5057
    %5059 = vrot.lane.b32.xlu0 %v4997, 64
    %v5060 = vpop.permute.xlu0 %5059
    %5061 = vrot.lane.b32.xlu0 %v4999, 64
    %v5062 = vpop.permute.xlu0 %5061
    %5067 = vrot.lane.b32.xlu0 %v4992, 32
    %v5068 = vpop.permute.xlu0 %5067
    %5069 = vrot.lane.b32.xlu0 %v4994, 32
    %v5070 = vpop.permute.xlu0 %5069
    %5071 = vrot.lane.b32.xlu0 %v4997, 32
    %v5072 = vpop.permute.xlu0 %5071
    %5073 = vrot.lane.b32.xlu0 %v4999, 32
    %v5074 = vpop.permute.xlu0 %5073
    %v5079 = vrot.slane %v5056, 4
    %v5080 = vsel %vm560, %v5079, %v4992
    %v5081 = vrot.slane %v4992, 4
    %v5082 = vsel %vm560, %v5056, %v5081
    %v5084 = vunpack.c.l.s4 1983009808
    %v5085 = vunpack.c.0.s8 %v5084
    %v5086 = vperm.slane %v5080, %v5085
    %v5088 = vunpack.c.l.s4 1983009808
    %v5089 = vunpack.c.0.s8 %v5088
    %v5090 = vperm.slane %v5082, %v5089
    %v5091 = vrot.slane %v5068, 4
    %v5092 = vsel %vm560, %v5091, %v5044
    %v5093 = vrot.slane %v5044, 4
    %v5094 = vsel %vm560, %v5068, %v5093
    %v5096 = vunpack.c.l.s4 1983009808
    %v5097 = vunpack.c.0.s8 %v5096
    %v5098 = vperm.slane %v5092, %v5097
    %v5100 = vunpack.c.l.s4 1983009808
    %v5101 = vunpack.c.0.s8 %v5100
    %v5102 = vperm.slane %v5094, %v5101
    %v5103 = vrot.slane %v5098, 4
    %v5104 = vsel %vm560, %v5103, %v5086
    %v5105 = vrot.slane %v5086, 4
    %v5106 = vsel %vm560, %v5098, %v5105
    %v5108 = vunpack.c.l.s4 1934713408
    %v5109 = vunpack.c.0.s8 %v5108
    %v5110 = vperm.slane %v5104, %v5109
    %v5112 = vunpack.c.l.s4 1934713408
    %v5113 = vunpack.c.0.s8 %v5112
    %v5114 = vperm.slane %v5106, %v5113
    %v5115 = vrot.slane %v5102, 4
    %v5116 = vsel %vm560, %v5115, %v5090
    %v5117 = vrot.slane %v5090, 4
    %v5118 = vsel %vm560, %v5102, %v5117
    %v5120 = vunpack.c.l.s4 1934713408
    %v5121 = vunpack.c.0.s8 %v5120
    %v5122 = vperm.slane %v5116, %v5121
    %v5124 = vunpack.c.l.s4 1934713408
    %v5125 = vunpack.c.0.s8 %v5124
    %v5126 = vperm.slane %v5118, %v5125
    %v5127 = vrot.slane %v5110, 4
    %v5128 = vsel %vm560, 0.0, %v5127
    %v5129 = vrot.slane %v5114, 4
    %v5130 = vsel %vm560, 0.0, %v5129
    %v5131 = vrot.slane %v5122, 4
    %v5132 = vsel %vm560, 0.0, %v5131
    %v5133 = vrot.slane %v5126, 4
    %v5134 = vsel %vm560, 0.0, %v5133
    %v5135 = vrot.slane %v5058, 4
    %v5136 = vsel %vm560, %v5135, %v4994
    %v5137 = vrot.slane %v4994, 4
    %v5138 = vsel %vm560, %v5058, %v5137
    %v5140 = vunpack.c.l.s4 1983009808
    %v5141 = vunpack.c.0.s8 %v5140
    %v5142 = vperm.slane %v5136, %v5141
    %v5144 = vunpack.c.l.s4 1983009808
    %v5145 = vunpack.c.0.s8 %v5144
    %v5146 = vperm.slane %v5138, %v5145
    %v5147 = vrot.slane %v5070, 4
    %v5148 = vsel %vm560, %v5147, %v5046
    %v5149 = vrot.slane %v5046, 4
    %v5150 = vsel %vm560, %v5070, %v5149
    %v5152 = vunpack.c.l.s4 1983009808
    %v5153 = vunpack.c.0.s8 %v5152
    %v5154 = vperm.slane %v5148, %v5153
    %v5156 = vunpack.c.l.s4 1983009808
    %v5157 = vunpack.c.0.s8 %v5156
    %v5158 = vperm.slane %v5150, %v5157
    %v5159 = vrot.slane %v5154, 4
    %v5160 = vsel %vm560, %v5159, %v5142
    %v5161 = vrot.slane %v5142, 4
    %v5162 = vsel %vm560, %v5154, %v5161
    %v5164 = vunpack.c.l.s4 1934713408
    %v5165 = vunpack.c.0.s8 %v5164
    %v5166 = vperm.slane %v5160, %v5165
    %v5168 = vunpack.c.l.s4 1934713408
    %v5169 = vunpack.c.0.s8 %v5168
    %v5170 = vperm.slane %v5162, %v5169
    %v5171 = vrot.slane %v5158, 4
    %v5172 = vsel %vm560, %v5171, %v5146
    %v5173 = vrot.slane %v5146, 4
    %v5174 = vsel %vm560, %v5158, %v5173
    %v5176 = vunpack.c.l.s4 1934713408
    %v5177 = vunpack.c.0.s8 %v5176
    %v5178 = vperm.slane %v5172, %v5177
    %v5180 = vunpack.c.l.s4 1934713408
    %v5181 = vunpack.c.0.s8 %v5180
    %v5182 = vperm.slane %v5174, %v5181
    %v5183 = vrot.slane %v5166, 4
    %v5184 = vsel %vm560, 0.0, %v5183
    %v5185 = vrot.slane %v5170, 4
    %v5186 = vsel %vm560, 0.0, %v5185
    %v5187 = vrot.slane %v5178, 4
    %v5188 = vsel %vm560, 0.0, %v5187
    %v5189 = vrot.slane %v5182, 4
    %v5190 = vsel %vm560, 0.0, %v5189
    %v5191 = vrot.slane %v5060, 4
    %v5192 = vsel %vm560, %v5191, %v4997
    %v5193 = vrot.slane %v4997, 4
    %v5194 = vsel %vm560, %v5060, %v5193
    %v5196 = vunpack.c.l.s4 1983009808
    %v5197 = vunpack.c.0.s8 %v5196
    %v5198 = vperm.slane %v5192, %v5197
    %v5200 = vunpack.c.l.s4 1983009808
    %v5201 = vunpack.c.0.s8 %v5200
    %v5202 = vperm.slane %v5194, %v5201
    %v5203 = vrot.slane %v5072, 4
    %v5204 = vsel %vm560, %v5203, %v5048
    %v5205 = vrot.slane %v5048, 4
    %v5206 = vsel %vm560, %v5072, %v5205
    %v5208 = vunpack.c.l.s4 1983009808
    %v5209 = vunpack.c.0.s8 %v5208
    %v5210 = vperm.slane %v5204, %v5209
    %v5212 = vunpack.c.l.s4 1983009808
    %v5213 = vunpack.c.0.s8 %v5212
    %v5214 = vperm.slane %v5206, %v5213
    %v5215 = vrot.slane %v5210, 4
    %v5216 = vsel %vm560, %v5215, %v5198
    %v5217 = vrot.slane %v5198, 4
    %v5218 = vsel %vm560, %v5210, %v5217
    %v5220 = vunpack.c.l.s4 1934713408
    %v5221 = vunpack.c.0.s8 %v5220
    %v5222 = vperm.slane %v5216, %v5221
    %v5224 = vunpack.c.l.s4 1934713408
    %v5225 = vunpack.c.0.s8 %v5224
    %v5226 = vperm.slane %v5218, %v5225
    %v5227 = vrot.slane %v5214, 4
    %v5228 = vsel %vm560, %v5227, %v5202
    %v5229 = vrot.slane %v5202, 4
    %v5230 = vsel %vm560, %v5214, %v5229
    %v5232 = vunpack.c.l.s4 1934713408
    %v5233 = vunpack.c.0.s8 %v5232
    %v5234 = vperm.slane %v5228, %v5233
    %v5236 = vunpack.c.l.s4 1934713408
    %v5237 = vunpack.c.0.s8 %v5236
    %v5238 = vperm.slane %v5230, %v5237
    %v5239 = vrot.slane %v5222, 4
    %v5240 = vsel %vm560, 0.0, %v5239
    %v5241 = vrot.slane %v5226, 4
    %v5242 = vsel %vm560, 0.0, %v5241
    %v5243 = vrot.slane %v5234, 4
    %v5244 = vsel %vm560, 0.0, %v5243
    %v5245 = vrot.slane %v5238, 4
    %v5246 = vsel %vm560, 0.0, %v5245
    %v5247 = vrot.slane %v5062, 4
    %v5248 = vsel %vm560, %v5247, %v4999
    %v5249 = vrot.slane %v4999, 4
    %v5250 = vsel %vm560, %v5062, %v5249
    %v5252 = vunpack.c.l.s4 1983009808
    %v5253 = vunpack.c.0.s8 %v5252
    %v5254 = vperm.slane %v5248, %v5253
    %v5256 = vunpack.c.l.s4 1983009808
    %v5257 = vunpack.c.0.s8 %v5256
    %v5258 = vperm.slane %v5250, %v5257
    %v5259 = vrot.slane %v5074, 4
    %v5260 = vsel %vm560, %v5259, %v5050
    %v5261 = vrot.slane %v5050, 4
    %v5262 = vsel %vm560, %v5074, %v5261
    %v5264 = vunpack.c.l.s4 1983009808
    %v5265 = vunpack.c.0.s8 %v5264
    %v5266 = vperm.slane %v5260, %v5265
    %v5268 = vunpack.c.l.s4 1983009808
    %v5269 = vunpack.c.0.s8 %v5268
    %v5270 = vperm.slane %v5262, %v5269
    %v5271 = vrot.slane %v5266, 4
    %v5272 = vsel %vm560, %v5271, %v5254
    %v5273 = vrot.slane %v5254, 4
    %v5274 = vsel %vm560, %v5266, %v5273
    %v5276 = vunpack.c.l.s4 1934713408
    %v5277 = vunpack.c.0.s8 %v5276
    %v5278 = vperm.slane %v5272, %v5277
    %v5280 = vunpack.c.l.s4 1934713408
    %v5281 = vunpack.c.0.s8 %v5280
    %v5282 = vperm.slane %v5274, %v5281
    %v5283 = vrot.slane %v5270, 4
    %v5284 = vsel %vm560, %v5283, %v5258
    %v5285 = vrot.slane %v5258, 4
    %v5286 = vsel %vm560, %v5270, %v5285
    %v5288 = vunpack.c.l.s4 1934713408
    %v5289 = vunpack.c.0.s8 %v5288
    %v5290 = vperm.slane %v5284, %v5289
    %v5292 = vunpack.c.l.s4 1934713408
    %v5293 = vunpack.c.0.s8 %v5292
    %v5294 = vperm.slane %v5286, %v5293
    %v5295 = vrot.slane %v5278, 4
    %v5296 = vsel %vm560, 0.0, %v5295
    %v5297 = vrot.slane %v5282, 4
    %v5298 = vsel %vm560, 0.0, %v5297
    %v5299 = vrot.slane %v5290, 4
    %v5300 = vsel %vm560, 0.0, %v5299
    %v5301 = vrot.slane %v5294, 4
    %v5302 = vsel %vm560, 0.0, %v5301
    %v5303 = vsel %vm560, %v5129, %v5110
    %v5305 = vunpack.c.l.s4 1983009808
    %v5306 = vunpack.c.0.s8 %v5305
    %v5307 = vperm.slane %v5303, %v5306
    %v5308 = vrot.slane %v5130, 4
    %v5309 = vsel %vm560, %v5308, %v5128
    %v5311 = vunpack.c.l.s4 1983009808
    %v5312 = vunpack.c.0.s8 %v5311
    %v5313 = vperm.slane %v5309, %v5312
    %v5314 = vsel %vm560, %v5133, %v5122
    %v5316 = vunpack.c.l.s4 1983009808
    %v5317 = vunpack.c.0.s8 %v5316
    %v5318 = vperm.slane %v5314, %v5317
    %v5319 = vrot.slane %v5134, 4
    %v5320 = vsel %vm560, %v5319, %v5132
    %v5322 = vunpack.c.l.s4 1983009808
    %v5323 = vunpack.c.0.s8 %v5322
    %v5324 = vperm.slane %v5320, %v5323
    %v5325 = vrot.slane %v5313, 4
    %v5326 = vsel %vm560, %v5325, %v5307
    %v5327 = vrot.slane %v5307, 4
    %v5328 = vsel %vm560, %v5313, %v5327
    %v5330 = vunpack.c.l.s4 1934713408
    %v5331 = vunpack.c.0.s8 %v5330
    %v5332 = vperm.slane %v5326, %v5331
    %v5334 = vunpack.c.l.s4 1934713408
    %v5335 = vunpack.c.0.s8 %v5334
    %v5336 = vperm.slane %v5328, %v5335
    %v5337 = vrot.slane %v5324, 4
    %v5338 = vsel %vm560, %v5337, %v5318
    %v5339 = vrot.slane %v5318, 4
    %v5340 = vsel %vm560, %v5324, %v5339
    %v5342 = vunpack.c.l.s4 1934713408
    %v5343 = vunpack.c.0.s8 %v5342
    %v5344 = vperm.slane %v5338, %v5343
    %v5346 = vunpack.c.l.s4 1934713408
    %v5347 = vunpack.c.0.s8 %v5346
    %v5348 = vperm.slane %v5340, %v5347
    %v5349 = vrot.slane %v5344, 4
    %v5350 = vsel %vm560, %v5349, %v5332
    %v5351 = vrot.slane %v5332, 4
    %v5352 = vsel %vm560, %v5344, %v5351
    %v5353 = vrot.slane %v5348, 4
    %v5354 = vsel %vm560, %v5353, %v5336
    %v5355 = vrot.slane %v5336, 4
    %v5356 = vsel %vm560, %v5348, %v5355
    %v5357 = vsel %vm560, %v5185, %v5166
    %v5359 = vunpack.c.l.s4 1983009808
    %v5360 = vunpack.c.0.s8 %v5359
    %v5361 = vperm.slane %v5357, %v5360
    %v5362 = vrot.slane %v5186, 4
    %v5363 = vsel %vm560, %v5362, %v5184
    %v5365 = vunpack.c.l.s4 1983009808
    %v5366 = vunpack.c.0.s8 %v5365
    %v5367 = vperm.slane %v5363, %v5366
    %v5368 = vsel %vm560, %v5189, %v5178
    %v5370 = vunpack.c.l.s4 1983009808
    %v5371 = vunpack.c.0.s8 %v5370
    %v5372 = vperm.slane %v5368, %v5371
    %v5373 = vrot.slane %v5190, 4
    %v5374 = vsel %vm560, %v5373, %v5188
    %v5376 = vunpack.c.l.s4 1983009808
    %v5377 = vunpack.c.0.s8 %v5376
    %v5378 = vperm.slane %v5374, %v5377
    %v5379 = vrot.slane %v5367, 4
    %v5380 = vsel %vm560, %v5379, %v5361
    %v5381 = vrot.slane %v5361, 4
    %v5382 = vsel %vm560, %v5367, %v5381
    %v5384 = vunpack.c.l.s4 1934713408
    %v5385 = vunpack.c.0.s8 %v5384
    %v5386 = vperm.slane %v5380, %v5385
    %v5388 = vunpack.c.l.s4 1934713408
    %v5389 = vunpack.c.0.s8 %v5388
    %v5390 = vperm.slane %v5382, %v5389
    %v5391 = vrot.slane %v5378, 4
    %v5392 = vsel %vm560, %v5391, %v5372
    %v5393 = vrot.slane %v5372, 4
    %v5394 = vsel %vm560, %v5378, %v5393
    %v5396 = vunpack.c.l.s4 1934713408
    %v5397 = vunpack.c.0.s8 %v5396
    %v5398 = vperm.slane %v5392, %v5397
    %v5400 = vunpack.c.l.s4 1934713408
    %v5401 = vunpack.c.0.s8 %v5400
    %v5402 = vperm.slane %v5394, %v5401
    %v5403 = vrot.slane %v5398, 4
    %v5404 = vsel %vm560, %v5403, %v5386
    %v5405 = vrot.slane %v5386, 4
    %v5406 = vsel %vm560, %v5398, %v5405
    %v5407 = vrot.slane %v5402, 4
    %v5408 = vsel %vm560, %v5407, %v5390
    %v5409 = vrot.slane %v5390, 4
    %v5410 = vsel %vm560, %v5402, %v5409
    %v5411 = vsel %vm560, %v5241, %v5222
    %v5413 = vunpack.c.l.s4 1983009808
    %v5414 = vunpack.c.0.s8 %v5413
    %v5415 = vperm.slane %v5411, %v5414
    %v5416 = vrot.slane %v5242, 4
    %v5417 = vsel %vm560, %v5416, %v5240
    %v5419 = vunpack.c.l.s4 1983009808
    %v5420 = vunpack.c.0.s8 %v5419
    %v5421 = vperm.slane %v5417, %v5420
    %v5422 = vsel %vm560, %v5245, %v5234
    %v5424 = vunpack.c.l.s4 1983009808
    %v5425 = vunpack.c.0.s8 %v5424
    %v5426 = vperm.slane %v5422, %v5425
    %v5427 = vrot.slane %v5246, 4
    %v5428 = vsel %vm560, %v5427, %v5244
    %v5430 = vunpack.c.l.s4 1983009808
    %v5431 = vunpack.c.0.s8 %v5430
    %v5432 = vperm.slane %v5428, %v5431
    %v5433 = vrot.slane %v5421, 4
    %v5434 = vsel %vm560, %v5433, %v5415
    %v5435 = vrot.slane %v5415, 4
    %v5436 = vsel %vm560, %v5421, %v5435
    %v5438 = vunpack.c.l.s4 1934713408
    %v5439 = vunpack.c.0.s8 %v5438
    %v5440 = vperm.slane %v5434, %v5439
    %v5442 = vunpack.c.l.s4 1934713408
    %v5443 = vunpack.c.0.s8 %v5442
    %v5444 = vperm.slane %v5436, %v5443
    %v5445 = vrot.slane %v5432, 4
    %v5446 = vsel %vm560, %v5445, %v5426
    %v5447 = vrot.slane %v5426, 4
    %v5448 = vsel %vm560, %v5432, %v5447
    %v5450 = vunpack.c.l.s4 1934713408
    %v5451 = vunpack.c.0.s8 %v5450
    %v5452 = vperm.slane %v5446, %v5451
    %v5454 = vunpack.c.l.s4 1934713408
    %v5455 = vunpack.c.0.s8 %v5454
    %v5456 = vperm.slane %v5448, %v5455
    %v5457 = vrot.slane %v5452, 4
    %v5458 = vsel %vm560, %v5457, %v5440
    %v5459 = vrot.slane %v5440, 4
    %v5460 = vsel %vm560, %v5452, %v5459
    %v5461 = vrot.slane %v5456, 4
    %v5462 = vsel %vm560, %v5461, %v5444
    %v5463 = vrot.slane %v5444, 4
    %v5464 = vsel %vm560, %v5456, %v5463
    %v5465 = vsel %vm560, %v5297, %v5278
    %v5467 = vunpack.c.l.s4 1983009808
    %v5468 = vunpack.c.0.s8 %v5467
    %v5469 = vperm.slane %v5465, %v5468
    %v5470 = vrot.slane %v5298, 4
    %v5471 = vsel %vm560, %v5470, %v5296
    %v5473 = vunpack.c.l.s4 1983009808
    %v5474 = vunpack.c.0.s8 %v5473
    %v5475 = vperm.slane %v5471, %v5474
    %v5476 = vsel %vm560, %v5301, %v5290
    %v5478 = vunpack.c.l.s4 1983009808
    %v5479 = vunpack.c.0.s8 %v5478
    %v5480 = vperm.slane %v5476, %v5479
    %v5481 = vrot.slane %v5302, 4
    %v5482 = vsel %vm560, %v5481, %v5300
    %v5484 = vunpack.c.l.s4 1983009808
    %v5485 = vunpack.c.0.s8 %v5484
    %v5486 = vperm.slane %v5482, %v5485
    %v5487 = vrot.slane %v5475, 4
    %v5488 = vsel %vm560, %v5487, %v5469
    %v5489 = vrot.slane %v5469, 4
    %v5490 = vsel %vm560, %v5475, %v5489
    %v5492 = vunpack.c.l.s4 1934713408
    %v5493 = vunpack.c.0.s8 %v5492
    %v5494 = vperm.slane %v5488, %v5493
    %v5496 = vunpack.c.l.s4 1934713408
    %v5497 = vunpack.c.0.s8 %v5496
    %v5498 = vperm.slane %v5490, %v5497
    %v5499 = vrot.slane %v5486, 4
    %v5500 = vsel %vm560, %v5499, %v5480
    %v5501 = vrot.slane %v5480, 4
    %v5502 = vsel %vm560, %v5486, %v5501
    %v5504 = vunpack.c.l.s4 1934713408
    %v5505 = vunpack.c.0.s8 %v5504
    %v5506 = vperm.slane %v5500, %v5505
    %v5508 = vunpack.c.l.s4 1934713408
    %v5509 = vunpack.c.0.s8 %v5508
    %v5510 = vperm.slane %v5502, %v5509
    %v5511 = vrot.slane %v5506, 4
    %v5512 = vsel %vm560, %v5511, %v5494
    %v5513 = vrot.slane %v5494, 4
    %v5514 = vsel %vm560, %v5506, %v5513
    %v5515 = vrot.slane %v5510, 4
    %v5516 = vsel %vm560, %v5515, %v5498
    %v5517 = vrot.slane %v5498, 4
    %v5518 = vsel %vm560, %v5510, %v5517
    %v5519 = vpack.c.bf16 %v5350, %v5350
    %v5520 = vpack.c.bf16 %v5404, %v5404
    %v5521 = vpack.c.bf16 %v5352, %v5352
    %v5522 = vpack.c.bf16 %v5406, %v5406
    %v5523 = vpack.c.bf16 %v5354, %v5354
    %v5524 = vpack.c.bf16 %v5408, %v5408
    %v5525 = vpack.c.bf16 %v5356, %v5356
    %v5526 = vpack.c.bf16 %v5410, %v5410
    %v5527 = vpack.c.bf16 %v5458, %v5458
    %v5528 = vpack.c.bf16 %v5512, %v5512
    %v5529 = vpack.c.bf16 %v5460, %v5460
    %v5530 = vpack.c.bf16 %v5514, %v5514
    %v5531 = vpack.c.bf16 %v5462, %v5462
    %v5532 = vpack.c.bf16 %v5516, %v5516
    %v5533 = vpack.c.bf16 %v5464, %v5464
    %v5534 = vpack.c.bf16 %v5518, %v5518
    %5539 = vrot.lane.b32.xlu0 %v5011, 96
    %v5540 = vpop.permute.xlu0 %5539
    %5541 = vrot.lane.b32.xlu0 %v5013, 96
    %v5542 = vpop.permute.xlu0 %5541
    %5543 = vrot.lane.b32.xlu0 %v5016, 96
    %v5544 = vpop.permute.xlu0 %5543
    %5545 = vrot.lane.b32.xlu0 %v5018, 96
    %v5546 = vpop.permute.xlu0 %5545
    %5551 = vrot.lane.b32.xlu0 %v5011, 64
    %v5552 = vpop.permute.xlu0 %5551
    %5553 = vrot.lane.b32.xlu0 %v5013, 64
    %v5554 = vpop.permute.xlu0 %5553
    %5555 = vrot.lane.b32.xlu0 %v5016, 64
    %v5556 = vpop.permute.xlu0 %5555
    %5557 = vrot.lane.b32.xlu0 %v5018, 64
    %v5558 = vpop.permute.xlu0 %5557
    %5563 = vrot.lane.b32.xlu0 %v5011, 32
    %v5564 = vpop.permute.xlu0 %5563
    %5565 = vrot.lane.b32.xlu0 %v5013, 32
    %v5566 = vpop.permute.xlu0 %5565
    %5567 = vrot.lane.b32.xlu0 %v5016, 32
    %v5568 = vpop.permute.xlu0 %5567
    %5569 = vrot.lane.b32.xlu0 %v5018, 32
    %v5570 = vpop.permute.xlu0 %5569
    %v5575 = vrot.slane %v5552, 4
    %v5576 = vsel %vm560, %v5575, %v5011
    %v5577 = vrot.slane %v5011, 4
    %v5578 = vsel %vm560, %v5552, %v5577
    %v5580 = vunpack.c.l.s4 1983009808
    %v5581 = vunpack.c.0.s8 %v5580
    %v5582 = vperm.slane %v5576, %v5581
    %v5584 = vunpack.c.l.s4 1983009808
    %v5585 = vunpack.c.0.s8 %v5584
    %v5586 = vperm.slane %v5578, %v5585
    %v5587 = vrot.slane %v5564, 4
    %v5588 = vsel %vm560, %v5587, %v5540
    %v5589 = vrot.slane %v5540, 4
    %v5590 = vsel %vm560, %v5564, %v5589
    %v5592 = vunpack.c.l.s4 1983009808
    %v5593 = vunpack.c.0.s8 %v5592
    %v5594 = vperm.slane %v5588, %v5593
    %v5596 = vunpack.c.l.s4 1983009808
    %v5597 = vunpack.c.0.s8 %v5596
    %v5598 = vperm.slane %v5590, %v5597
    %v5599 = vrot.slane %v5594, 4
    %v5600 = vsel %vm560, %v5599, %v5582
    %v5601 = vrot.slane %v5582, 4
    %v5602 = vsel %vm560, %v5594, %v5601
    %v5604 = vunpack.c.l.s4 1934713408
    %v5605 = vunpack.c.0.s8 %v5604
    %v5606 = vperm.slane %v5600, %v5605
    %v5608 = vunpack.c.l.s4 1934713408
    %v5609 = vunpack.c.0.s8 %v5608
    %v5610 = vperm.slane %v5602, %v5609
    %v5611 = vrot.slane %v5598, 4
    %v5612 = vsel %vm560, %v5611, %v5586
    %v5613 = vrot.slane %v5586, 4
    %v5614 = vsel %vm560, %v5598, %v5613
    %v5616 = vunpack.c.l.s4 1934713408
    %v5617 = vunpack.c.0.s8 %v5616
    %v5618 = vperm.slane %v5612, %v5617
    %v5620 = vunpack.c.l.s4 1934713408
    %v5621 = vunpack.c.0.s8 %v5620
    %v5622 = vperm.slane %v5614, %v5621
    %v5623 = vrot.slane %v5606, 4
    %v5624 = vsel %vm560, 0.0, %v5623
    %v5625 = vrot.slane %v5610, 4
    %v5626 = vsel %vm560, 0.0, %v5625
    %v5627 = vrot.slane %v5618, 4
    %v5628 = vsel %vm560, 0.0, %v5627
    %v5629 = vrot.slane %v5622, 4
    %v5630 = vsel %vm560, 0.0, %v5629
    %v5631 = vrot.slane %v5554, 4
    %v5632 = vsel %vm560, %v5631, %v5013
    %v5633 = vrot.slane %v5013, 4
    %v5634 = vsel %vm560, %v5554, %v5633
    %v5636 = vunpack.c.l.s4 1983009808
    %v5637 = vunpack.c.0.s8 %v5636
    %v5638 = vperm.slane %v5632, %v5637
    %v5640 = vunpack.c.l.s4 1983009808
    %v5641 = vunpack.c.0.s8 %v5640
    %v5642 = vperm.slane %v5634, %v5641
    %v5643 = vrot.slane %v5566, 4
    %v5644 = vsel %vm560, %v5643, %v5542
    %v5645 = vrot.slane %v5542, 4
    %v5646 = vsel %vm560, %v5566, %v5645
    %v5648 = vunpack.c.l.s4 1983009808
    %v5649 = vunpack.c.0.s8 %v5648
    %v5650 = vperm.slane %v5644, %v5649
    %v5652 = vunpack.c.l.s4 1983009808
    %v5653 = vunpack.c.0.s8 %v5652
    %v5654 = vperm.slane %v5646, %v5653
    %v5655 = vrot.slane %v5650, 4
    %v5656 = vsel %vm560, %v5655, %v5638
    %v5657 = vrot.slane %v5638, 4
    %v5658 = vsel %vm560, %v5650, %v5657
    %v5660 = vunpack.c.l.s4 1934713408
    %v5661 = vunpack.c.0.s8 %v5660
    %v5662 = vperm.slane %v5656, %v5661
    %v5664 = vunpack.c.l.s4 1934713408
    %v5665 = vunpack.c.0.s8 %v5664
    %v5666 = vperm.slane %v5658, %v5665
    %v5667 = vrot.slane %v5654, 4
    %v5668 = vsel %vm560, %v5667, %v5642
    %v5669 = vrot.slane %v5642, 4
    %v5670 = vsel %vm560, %v5654, %v5669
    %v5672 = vunpack.c.l.s4 1934713408
    %v5673 = vunpack.c.0.s8 %v5672
    %v5674 = vperm.slane %v5668, %v5673
    %v5676 = vunpack.c.l.s4 1934713408
    %v5677 = vunpack.c.0.s8 %v5676
    %v5678 = vperm.slane %v5670, %v5677
    %v5679 = vrot.slane %v5662, 4
    %v5680 = vsel %vm560, 0.0, %v5679
    %v5681 = vrot.slane %v5666, 4
    %v5682 = vsel %vm560, 0.0, %v5681
    %v5683 = vrot.slane %v5674, 4
    %v5684 = vsel %vm560, 0.0, %v5683
    %v5685 = vrot.slane %v5678, 4
    %v5686 = vsel %vm560, 0.0, %v5685
    %v5687 = vrot.slane %v5556, 4
    %v5688 = vsel %vm560, %v5687, %v5016
    %v5689 = vrot.slane %v5016, 4
    %v5690 = vsel %vm560, %v5556, %v5689
    %v5692 = vunpack.c.l.s4 1983009808
    %v5693 = vunpack.c.0.s8 %v5692
    %v5694 = vperm.slane %v5688, %v5693
    %v5696 = vunpack.c.l.s4 1983009808
    %v5697 = vunpack.c.0.s8 %v5696
    %v5698 = vperm.slane %v5690, %v5697
    %v5699 = vrot.slane %v5568, 4
    %v5700 = vsel %vm560, %v5699, %v5544
    %v5701 = vrot.slane %v5544, 4
    %v5702 = vsel %vm560, %v5568, %v5701
    %v5704 = vunpack.c.l.s4 1983009808
    %v5705 = vunpack.c.0.s8 %v5704
    %v5706 = vperm.slane %v5700, %v5705
    %v5708 = vunpack.c.l.s4 1983009808
    %v5709 = vunpack.c.0.s8 %v5708
    %v5710 = vperm.slane %v5702, %v5709
    %v5711 = vrot.slane %v5706, 4
    %v5712 = vsel %vm560, %v5711, %v5694
    %v5713 = vrot.slane %v5694, 4
    %v5714 = vsel %vm560, %v5706, %v5713
    %v5716 = vunpack.c.l.s4 1934713408
    %v5717 = vunpack.c.0.s8 %v5716
    %v5718 = vperm.slane %v5712, %v5717
    %v5720 = vunpack.c.l.s4 1934713408
    %v5721 = vunpack.c.0.s8 %v5720
    %v5722 = vperm.slane %v5714, %v5721
    %v5723 = vrot.slane %v5710, 4
    %v5724 = vsel %vm560, %v5723, %v5698
    %v5725 = vrot.slane %v5698, 4
    %v5726 = vsel %vm560, %v5710, %v5725
    %v5728 = vunpack.c.l.s4 1934713408
    %v5729 = vunpack.c.0.s8 %v5728
    %v5730 = vperm.slane %v5724, %v5729
    %v5732 = vunpack.c.l.s4 1934713408
    %v5733 = vunpack.c.0.s8 %v5732
    %v5734 = vperm.slane %v5726, %v5733
    %v5735 = vrot.slane %v5718, 4
    %v5736 = vsel %vm560, 0.0, %v5735
    %v5737 = vrot.slane %v5722, 4
    %v5738 = vsel %vm560, 0.0, %v5737
    %v5739 = vrot.slane %v5730, 4
    %v5740 = vsel %vm560, 0.0, %v5739
    %v5741 = vrot.slane %v5734, 4
    %v5742 = vsel %vm560, 0.0, %v5741
    %v5743 = vrot.slane %v5558, 4
    %v5744 = vsel %vm560, %v5743, %v5018
    %v5745 = vrot.slane %v5018, 4
    %v5746 = vsel %vm560, %v5558, %v5745
    %v5748 = vunpack.c.l.s4 1983009808
    %v5749 = vunpack.c.0.s8 %v5748
    %v5750 = vperm.slane %v5744, %v5749
    %v5752 = vunpack.c.l.s4 1983009808
    %v5753 = vunpack.c.0.s8 %v5752
    %v5754 = vperm.slane %v5746, %v5753
    %v5755 = vrot.slane %v5570, 4
    %v5756 = vsel %vm560, %v5755, %v5546
    %v5757 = vrot.slane %v5546, 4
    %v5758 = vsel %vm560, %v5570, %v5757
    %v5760 = vunpack.c.l.s4 1983009808
    %v5761 = vunpack.c.0.s8 %v5760
    %v5762 = vperm.slane %v5756, %v5761
    %v5764 = vunpack.c.l.s4 1983009808
    %v5765 = vunpack.c.0.s8 %v5764
    %v5766 = vperm.slane %v5758, %v5765
    %v5767 = vrot.slane %v5762, 4
    %v5768 = vsel %vm560, %v5767, %v5750
    %v5769 = vrot.slane %v5750, 4
    %v5770 = vsel %vm560, %v5762, %v5769
    %v5772 = vunpack.c.l.s4 1934713408
    %v5773 = vunpack.c.0.s8 %v5772
    %v5774 = vperm.slane %v5768, %v5773
    %v5776 = vunpack.c.l.s4 1934713408
    %v5777 = vunpack.c.0.s8 %v5776
    %v5778 = vperm.slane %v5770, %v5777
    %v5779 = vrot.slane %v5766, 4
    %v5780 = vsel %vm560, %v5779, %v5754
    %v5781 = vrot.slane %v5754, 4
    %v5782 = vsel %vm560, %v5766, %v5781
    %v5784 = vunpack.c.l.s4 1934713408
    %v5785 = vunpack.c.0.s8 %v5784
    %v5786 = vperm.slane %v5780, %v5785
    %v5788 = vunpack.c.l.s4 1934713408
    %v5789 = vunpack.c.0.s8 %v5788
    %v5790 = vperm.slane %v5782, %v5789
    %v5791 = vrot.slane %v5774, 4
    %v5792 = vsel %vm560, 0.0, %v5791
    %v5793 = vrot.slane %v5778, 4
    %v5794 = vsel %vm560, 0.0, %v5793
    %v5795 = vrot.slane %v5786, 4
    %v5796 = vsel %vm560, 0.0, %v5795
    %v5797 = vrot.slane %v5790, 4
    %v5798 = vsel %vm560, 0.0, %v5797
    %v5799 = vsel %vm560, %v5625, %v5606
    %v5801 = vunpack.c.l.s4 1983009808
    %v5802 = vunpack.c.0.s8 %v5801
    %v5803 = vperm.slane %v5799, %v5802
    %v5804 = vrot.slane %v5626, 4
    %v5805 = vsel %vm560, %v5804, %v5624
    %v5807 = vunpack.c.l.s4 1983009808
    %v5808 = vunpack.c.0.s8 %v5807
    %v5809 = vperm.slane %v5805, %v5808
    %v5810 = vsel %vm560, %v5629, %v5618
    %v5812 = vunpack.c.l.s4 1983009808
    %v5813 = vunpack.c.0.s8 %v5812
    %v5814 = vperm.slane %v5810, %v5813
    %v5815 = vrot.slane %v5630, 4
    %v5816 = vsel %vm560, %v5815, %v5628
    %v5818 = vunpack.c.l.s4 1983009808
    %v5819 = vunpack.c.0.s8 %v5818
    %v5820 = vperm.slane %v5816, %v5819
    %v5821 = vrot.slane %v5809, 4
    %v5822 = vsel %vm560, %v5821, %v5803
    %v5823 = vrot.slane %v5803, 4
    %v5824 = vsel %vm560, %v5809, %v5823
    %v5826 = vunpack.c.l.s4 1934713408
    %v5827 = vunpack.c.0.s8 %v5826
    %v5828 = vperm.slane %v5822, %v5827
    %v5830 = vunpack.c.l.s4 1934713408
    %v5831 = vunpack.c.0.s8 %v5830
    %v5832 = vperm.slane %v5824, %v5831
    %v5833 = vrot.slane %v5820, 4
    %v5834 = vsel %vm560, %v5833, %v5814
    %v5835 = vrot.slane %v5814, 4
    %v5836 = vsel %vm560, %v5820, %v5835
    %v5838 = vunpack.c.l.s4 1934713408
    %v5839 = vunpack.c.0.s8 %v5838
    %v5840 = vperm.slane %v5834, %v5839
    %v5842 = vunpack.c.l.s4 1934713408
    %v5843 = vunpack.c.0.s8 %v5842
    %v5844 = vperm.slane %v5836, %v5843
    %v5845 = vrot.slane %v5840, 4
    %v5846 = vsel %vm560, %v5845, %v5828
    %v5847 = vrot.slane %v5828, 4
    %v5848 = vsel %vm560, %v5840, %v5847
    %v5849 = vrot.slane %v5844, 4
    %v5850 = vsel %vm560, %v5849, %v5832
    %v5851 = vrot.slane %v5832, 4
    %v5852 = vsel %vm560, %v5844, %v5851
    %v5853 = vsel %vm560, %v5681, %v5662
    %v5855 = vunpack.c.l.s4 1983009808
    %v5856 = vunpack.c.0.s8 %v5855
    %v5857 = vperm.slane %v5853, %v5856
    %v5858 = vrot.slane %v5682, 4
    %v5859 = vsel %vm560, %v5858, %v5680
    %v5861 = vunpack.c.l.s4 1983009808
    %v5862 = vunpack.c.0.s8 %v5861
    %v5863 = vperm.slane %v5859, %v5862
    %v5864 = vsel %vm560, %v5685, %v5674
    %v5866 = vunpack.c.l.s4 1983009808
    %v5867 = vunpack.c.0.s8 %v5866
    %v5868 = vperm.slane %v5864, %v5867
    %v5869 = vrot.slane %v5686, 4
    %v5870 = vsel %vm560, %v5869, %v5684
    %v5872 = vunpack.c.l.s4 1983009808
    %v5873 = vunpack.c.0.s8 %v5872
    %v5874 = vperm.slane %v5870, %v5873
    %v5875 = vrot.slane %v5863, 4
    %v5876 = vsel %vm560, %v5875, %v5857
    %v5877 = vrot.slane %v5857, 4
    %v5878 = vsel %vm560, %v5863, %v5877
    %v5880 = vunpack.c.l.s4 1934713408
    %v5881 = vunpack.c.0.s8 %v5880
    %v5882 = vperm.slane %v5876, %v5881
    %v5884 = vunpack.c.l.s4 1934713408
    %v5885 = vunpack.c.0.s8 %v5884
    %v5886 = vperm.slane %v5878, %v5885
    %v5887 = vrot.slane %v5874, 4
    %v5888 = vsel %vm560, %v5887, %v5868
    %v5889 = vrot.slane %v5868, 4
    %v5890 = vsel %vm560, %v5874, %v5889
    %v5892 = vunpack.c.l.s4 1934713408
    %v5893 = vunpack.c.0.s8 %v5892
    %v5894 = vperm.slane %v5888, %v5893
    %v5896 = vunpack.c.l.s4 1934713408
    %v5897 = vunpack.c.0.s8 %v5896
    %v5898 = vperm.slane %v5890, %v5897
    %v5899 = vrot.slane %v5894, 4
    %v5900 = vsel %vm560, %v5899, %v5882
    %v5901 = vrot.slane %v5882, 4
    %v5902 = vsel %vm560, %v5894, %v5901
    %v5903 = vrot.slane %v5898, 4
    %v5904 = vsel %vm560, %v5903, %v5886
    %v5905 = vrot.slane %v5886, 4
    %v5906 = vsel %vm560, %v5898, %v5905
    %v5907 = vsel %vm560, %v5737, %v5718
    %v5909 = vunpack.c.l.s4 1983009808
    %v5910 = vunpack.c.0.s8 %v5909
    %v5911 = vperm.slane %v5907, %v5910
    %v5912 = vrot.slane %v5738, 4
    %v5913 = vsel %vm560, %v5912, %v5736
    %v5915 = vunpack.c.l.s4 1983009808
    %v5916 = vunpack.c.0.s8 %v5915
    %v5917 = vperm.slane %v5913, %v5916
    %v5918 = vsel %vm560, %v5741, %v5730
    %v5920 = vunpack.c.l.s4 1983009808
    %v5921 = vunpack.c.0.s8 %v5920
    %v5922 = vperm.slane %v5918, %v5921
    %v5923 = vrot.slane %v5742, 4
    %v5924 = vsel %vm560, %v5923, %v5740
    %v5926 = vunpack.c.l.s4 1983009808
    %v5927 = vunpack.c.0.s8 %v5926
    %v5928 = vperm.slane %v5924, %v5927
    %v5929 = vrot.slane %v5917, 4
    %v5930 = vsel %vm560, %v5929, %v5911
    %v5931 = vrot.slane %v5911, 4
    %v5932 = vsel %vm560, %v5917, %v5931
    %v5934 = vunpack.c.l.s4 1934713408
    %v5935 = vunpack.c.0.s8 %v5934
    %v5936 = vperm.slane %v5930, %v5935
    %v5938 = vunpack.c.l.s4 1934713408
    %v5939 = vunpack.c.0.s8 %v5938
    %v5940 = vperm.slane %v5932, %v5939
    %v5941 = vrot.slane %v5928, 4
    %v5942 = vsel %vm560, %v5941, %v5922
    %v5943 = vrot.slane %v5922, 4
    %v5944 = vsel %vm560, %v5928, %v5943
    %v5946 = vunpack.c.l.s4 1934713408
    %v5947 = vunpack.c.0.s8 %v5946
    %v5948 = vperm.slane %v5942, %v5947
    %v5950 = vunpack.c.l.s4 1934713408
    %v5951 = vunpack.c.0.s8 %v5950
    %v5952 = vperm.slane %v5944, %v5951
    %v5953 = vrot.slane %v5948, 4
    %v5954 = vsel %vm560, %v5953, %v5936
    %v5955 = vrot.slane %v5936, 4
    %v5956 = vsel %vm560, %v5948, %v5955
    %v5957 = vrot.slane %v5952, 4
    %v5958 = vsel %vm560, %v5957, %v5940
    %v5959 = vrot.slane %v5940, 4
    %v5960 = vsel %vm560, %v5952, %v5959
    %v5961 = vsel %vm560, %v5793, %v5774
    %v5963 = vunpack.c.l.s4 1983009808
    %v5964 = vunpack.c.0.s8 %v5963
    %v5965 = vperm.slane %v5961, %v5964
    %v5966 = vrot.slane %v5794, 4
    %v5967 = vsel %vm560, %v5966, %v5792
    %v5969 = vunpack.c.l.s4 1983009808
    %v5970 = vunpack.c.0.s8 %v5969
    %v5971 = vperm.slane %v5967, %v5970
    %v5972 = vsel %vm560, %v5797, %v5786
    %v5974 = vunpack.c.l.s4 1983009808
    %v5975 = vunpack.c.0.s8 %v5974
    %v5976 = vperm.slane %v5972, %v5975
    %v5977 = vrot.slane %v5798, 4
    %v5978 = vsel %vm560, %v5977, %v5796
    %v5980 = vunpack.c.l.s4 1983009808
    %v5981 = vunpack.c.0.s8 %v5980
    %v5982 = vperm.slane %v5978, %v5981
    %v5983 = vrot.slane %v5971, 4
    %v5984 = vsel %vm560, %v5983, %v5965
    %v5985 = vrot.slane %v5965, 4
    %v5986 = vsel %vm560, %v5971, %v5985
    %v5988 = vunpack.c.l.s4 1934713408
    %v5989 = vunpack.c.0.s8 %v5988
    %v5990 = vperm.slane %v5984, %v5989
    %v5992 = vunpack.c.l.s4 1934713408
    %v5993 = vunpack.c.0.s8 %v5992
    %v5994 = vperm.slane %v5986, %v5993
    %v5995 = vrot.slane %v5982, 4
    %v5996 = vsel %vm560, %v5995, %v5976
    %v5997 = vrot.slane %v5976, 4
    %v5998 = vsel %vm560, %v5982, %v5997
    %v6000 = vunpack.c.l.s4 1934713408
    %v6001 = vunpack.c.0.s8 %v6000
    %v6002 = vperm.slane %v5996, %v6001
    %v6004 = vunpack.c.l.s4 1934713408
    %v6005 = vunpack.c.0.s8 %v6004
    %v6006 = vperm.slane %v5998, %v6005
    %v6007 = vrot.slane %v6002, 4
    %v6008 = vsel %vm560, %v6007, %v5990
    %v6009 = vrot.slane %v5990, 4
    %v6010 = vsel %vm560, %v6002, %v6009
    %v6011 = vrot.slane %v6006, 4
    %v6012 = vsel %vm560, %v6011, %v5994
    %v6013 = vrot.slane %v5994, 4
    %v6014 = vsel %vm560, %v6006, %v6013
    %v6015 = vpack.c.bf16 %v5846, %v5846
    %v6016 = vpack.c.bf16 %v5900, %v5900
    %v6017 = vpack.c.bf16 %v5848, %v5848
    %v6018 = vpack.c.bf16 %v5902, %v5902
    %v6019 = vpack.c.bf16 %v5850, %v5850
    %v6020 = vpack.c.bf16 %v5904, %v5904
    %v6021 = vpack.c.bf16 %v5852, %v5852
    %v6022 = vpack.c.bf16 %v5906, %v5906
    %v6023 = vpack.c.bf16 %v5954, %v5954
    %v6024 = vpack.c.bf16 %v6008, %v6008
    %v6025 = vpack.c.bf16 %v5956, %v5956
    %v6026 = vpack.c.bf16 %v6010, %v6010
    %v6027 = vpack.c.bf16 %v5958, %v5958
    %v6028 = vpack.c.bf16 %v6012, %v6012
    %v6029 = vpack.c.bf16 %v5960, %v5960
    %v6030 = vpack.c.bf16 %v6014, %v6014
    %6035 = vrot.lane.b32.xlu0 %v5030, 96
    %v6036 = vpop.permute.xlu0 %6035
    %6037 = vrot.lane.b32.xlu0 %v5032, 96
    %v6038 = vpop.permute.xlu0 %6037
    %6039 = vrot.lane.b32.xlu0 %v5035, 96
    %v6040 = vpop.permute.xlu0 %6039
    %6041 = vrot.lane.b32.xlu0 %v5037, 96
    %v6042 = vpop.permute.xlu0 %6041
    %6047 = vrot.lane.b32.xlu0 %v5030, 64
    %v6048 = vpop.permute.xlu0 %6047
    %6049 = vrot.lane.b32.xlu0 %v5032, 64
    %v6050 = vpop.permute.xlu0 %6049
    %6051 = vrot.lane.b32.xlu0 %v5035, 64
    %v6052 = vpop.permute.xlu0 %6051
    %6053 = vrot.lane.b32.xlu0 %v5037, 64
    %v6054 = vpop.permute.xlu0 %6053
    %6059 = vrot.lane.b32.xlu0 %v5030, 32
    %v6060 = vpop.permute.xlu0 %6059
    %6061 = vrot.lane.b32.xlu0 %v5032, 32
    %v6062 = vpop.permute.xlu0 %6061
    %6063 = vrot.lane.b32.xlu0 %v5035, 32
    %v6064 = vpop.permute.xlu0 %6063
    %6065 = vrot.lane.b32.xlu0 %v5037, 32
    %v6066 = vpop.permute.xlu0 %6065
    %v6071 = vrot.slane %v6048, 4
    %v6072 = vsel %vm560, %v6071, %v5030
    %v6073 = vrot.slane %v5030, 4
    %v6074 = vsel %vm560, %v6048, %v6073
    %v6076 = vunpack.c.l.s4 1983009808
    %v6077 = vunpack.c.0.s8 %v6076
    %v6078 = vperm.slane %v6072, %v6077
    %v6080 = vunpack.c.l.s4 1983009808
    %v6081 = vunpack.c.0.s8 %v6080
    %v6082 = vperm.slane %v6074, %v6081
    %v6083 = vrot.slane %v6060, 4
    %v6084 = vsel %vm560, %v6083, %v6036
    %v6085 = vrot.slane %v6036, 4
    %v6086 = vsel %vm560, %v6060, %v6085
    %v6088 = vunpack.c.l.s4 1983009808
    %v6089 = vunpack.c.0.s8 %v6088
    %v6090 = vperm.slane %v6084, %v6089
    %v6092 = vunpack.c.l.s4 1983009808
    %v6093 = vunpack.c.0.s8 %v6092
    %v6094 = vperm.slane %v6086, %v6093
    %v6095 = vrot.slane %v6090, 4
    %v6096 = vsel %vm560, %v6095, %v6078
    %v6097 = vrot.slane %v6078, 4
    %v6098 = vsel %vm560, %v6090, %v6097
    %v6100 = vunpack.c.l.s4 1934713408
    %v6101 = vunpack.c.0.s8 %v6100
    %v6102 = vperm.slane %v6096, %v6101
    %v6104 = vunpack.c.l.s4 1934713408
    %v6105 = vunpack.c.0.s8 %v6104
    %v6106 = vperm.slane %v6098, %v6105
    %v6107 = vrot.slane %v6094, 4
    %v6108 = vsel %vm560, %v6107, %v6082
    %v6109 = vrot.slane %v6082, 4
    %v6110 = vsel %vm560, %v6094, %v6109
    %v6112 = vunpack.c.l.s4 1934713408
    %v6113 = vunpack.c.0.s8 %v6112
    %v6114 = vperm.slane %v6108, %v6113
    %v6116 = vunpack.c.l.s4 1934713408
    %v6117 = vunpack.c.0.s8 %v6116
    %v6118 = vperm.slane %v6110, %v6117
    %v6119 = vrot.slane %v6102, 4
    %v6120 = vsel %vm560, 0.0, %v6119
    %v6121 = vrot.slane %v6106, 4
    %v6122 = vsel %vm560, 0.0, %v6121
    %v6123 = vrot.slane %v6114, 4
    %v6124 = vsel %vm560, 0.0, %v6123
    %v6125 = vrot.slane %v6118, 4
    %v6126 = vsel %vm560, 0.0, %v6125
    %v6127 = vrot.slane %v6050, 4
    %v6128 = vsel %vm560, %v6127, %v5032
    %v6129 = vrot.slane %v5032, 4
    %v6130 = vsel %vm560, %v6050, %v6129
    %v6132 = vunpack.c.l.s4 1983009808
    %v6133 = vunpack.c.0.s8 %v6132
    %v6134 = vperm.slane %v6128, %v6133
    %v6136 = vunpack.c.l.s4 1983009808
    %v6137 = vunpack.c.0.s8 %v6136
    %v6138 = vperm.slane %v6130, %v6137
    %v6139 = vrot.slane %v6062, 4
    %v6140 = vsel %vm560, %v6139, %v6038
    %v6141 = vrot.slane %v6038, 4
    %v6142 = vsel %vm560, %v6062, %v6141
    %v6144 = vunpack.c.l.s4 1983009808
    %v6145 = vunpack.c.0.s8 %v6144
    %v6146 = vperm.slane %v6140, %v6145
    %v6148 = vunpack.c.l.s4 1983009808
    %v6149 = vunpack.c.0.s8 %v6148
    %v6150 = vperm.slane %v6142, %v6149
    %v6151 = vrot.slane %v6146, 4
    %v6152 = vsel %vm560, %v6151, %v6134
    %v6153 = vrot.slane %v6134, 4
    %v6154 = vsel %vm560, %v6146, %v6153
    %v6156 = vunpack.c.l.s4 1934713408
    %v6157 = vunpack.c.0.s8 %v6156
    %v6158 = vperm.slane %v6152, %v6157
    %v6160 = vunpack.c.l.s4 1934713408
    %v6161 = vunpack.c.0.s8 %v6160
    %v6162 = vperm.slane %v6154, %v6161
    %v6163 = vrot.slane %v6150, 4
    %v6164 = vsel %vm560, %v6163, %v6138
    %v6165 = vrot.slane %v6138, 4
    %v6166 = vsel %vm560, %v6150, %v6165
    %v6168 = vunpack.c.l.s4 1934713408
    %v6169 = vunpack.c.0.s8 %v6168
    %v6170 = vperm.slane %v6164, %v6169
    %v6172 = vunpack.c.l.s4 1934713408
    %v6173 = vunpack.c.0.s8 %v6172
    %v6174 = vperm.slane %v6166, %v6173
    %v6175 = vrot.slane %v6158, 4
    %v6176 = vsel %vm560, 0.0, %v6175
    %v6177 = vrot.slane %v6162, 4
    %v6178 = vsel %vm560, 0.0, %v6177
    %v6179 = vrot.slane %v6170, 4
    %v6180 = vsel %vm560, 0.0, %v6179
    %v6181 = vrot.slane %v6174, 4
    %v6182 = vsel %vm560, 0.0, %v6181
    %v6183 = vrot.slane %v6052, 4
    %v6184 = vsel %vm560, %v6183, %v5035
    %v6185 = vrot.slane %v5035, 4
    %v6186 = vsel %vm560, %v6052, %v6185
    %v6188 = vunpack.c.l.s4 1983009808
    %v6189 = vunpack.c.0.s8 %v6188
    %v6190 = vperm.slane %v6184, %v6189
    %v6192 = vunpack.c.l.s4 1983009808
    %v6193 = vunpack.c.0.s8 %v6192
    %v6194 = vperm.slane %v6186, %v6193
    %v6195 = vrot.slane %v6064, 4
    %v6196 = vsel %vm560, %v6195, %v6040
    %v6197 = vrot.slane %v6040, 4
    %v6198 = vsel %vm560, %v6064, %v6197
    %v6200 = vunpack.c.l.s4 1983009808
    %v6201 = vunpack.c.0.s8 %v6200
    %v6202 = vperm.slane %v6196, %v6201
    %v6204 = vunpack.c.l.s4 1983009808
    %v6205 = vunpack.c.0.s8 %v6204
    %v6206 = vperm.slane %v6198, %v6205
    %v6207 = vrot.slane %v6202, 4
    %v6208 = vsel %vm560, %v6207, %v6190
    %v6209 = vrot.slane %v6190, 4
    %v6210 = vsel %vm560, %v6202, %v6209
    %v6212 = vunpack.c.l.s4 1934713408
    %v6213 = vunpack.c.0.s8 %v6212
    %v6214 = vperm.slane %v6208, %v6213
    %v6216 = vunpack.c.l.s4 1934713408
    %v6217 = vunpack.c.0.s8 %v6216
    %v6218 = vperm.slane %v6210, %v6217
    %v6219 = vrot.slane %v6206, 4
    %v6220 = vsel %vm560, %v6219, %v6194
    %v6221 = vrot.slane %v6194, 4
    %v6222 = vsel %vm560, %v6206, %v6221
    %v6224 = vunpack.c.l.s4 1934713408
    %v6225 = vunpack.c.0.s8 %v6224
    %v6226 = vperm.slane %v6220, %v6225
    %v6228 = vunpack.c.l.s4 1934713408
    %v6229 = vunpack.c.0.s8 %v6228
    %v6230 = vperm.slane %v6222, %v6229
    %v6231 = vrot.slane %v6214, 4
    %v6232 = vsel %vm560, 0.0, %v6231
    %v6233 = vrot.slane %v6218, 4
    %v6234 = vsel %vm560, 0.0, %v6233
    %v6235 = vrot.slane %v6226, 4
    %v6236 = vsel %vm560, 0.0, %v6235
    %v6237 = vrot.slane %v6230, 4
    %v6238 = vsel %vm560, 0.0, %v6237
    %v6239 = vrot.slane %v6054, 4
    %v6240 = vsel %vm560, %v6239, %v5037
    %v6241 = vrot.slane %v5037, 4
    %v6242 = vsel %vm560, %v6054, %v6241
    %v6244 = vunpack.c.l.s4 1983009808
    %v6245 = vunpack.c.0.s8 %v6244
    %v6246 = vperm.slane %v6240, %v6245
    %v6248 = vunpack.c.l.s4 1983009808
    %v6249 = vunpack.c.0.s8 %v6248
    %v6250 = vperm.slane %v6242, %v6249
    %v6251 = vrot.slane %v6066, 4
    %v6252 = vsel %vm560, %v6251, %v6042
    %v6253 = vrot.slane %v6042, 4
    %v6254 = vsel %vm560, %v6066, %v6253
    %v6256 = vunpack.c.l.s4 1983009808
    %v6257 = vunpack.c.0.s8 %v6256
    %v6258 = vperm.slane %v6252, %v6257
    %v6260 = vunpack.c.l.s4 1983009808
    %v6261 = vunpack.c.0.s8 %v6260
    %v6262 = vperm.slane %v6254, %v6261
    %v6263 = vrot.slane %v6258, 4
    %v6264 = vsel %vm560, %v6263, %v6246
    %v6265 = vrot.slane %v6246, 4
    %v6266 = vsel %vm560, %v6258, %v6265
    %v6268 = vunpack.c.l.s4 1934713408
    %v6269 = vunpack.c.0.s8 %v6268
    %v6270 = vperm.slane %v6264, %v6269
    %v6272 = vunpack.c.l.s4 1934713408
    %v6273 = vunpack.c.0.s8 %v6272
    %v6274 = vperm.slane %v6266, %v6273
    %v6275 = vrot.slane %v6262, 4
    %v6276 = vsel %vm560, %v6275, %v6250
    %v6277 = vrot.slane %v6250, 4
    %v6278 = vsel %vm560, %v6262, %v6277
    %v6280 = vunpack.c.l.s4 1934713408
    %v6281 = vunpack.c.0.s8 %v6280
    %v6282 = vperm.slane %v6276, %v6281
    %v6284 = vunpack.c.l.s4 1934713408
    %v6285 = vunpack.c.0.s8 %v6284
    %v6286 = vperm.slane %v6278, %v6285
    %v6287 = vrot.slane %v6270, 4
    %v6288 = vsel %vm560, 0.0, %v6287
    %v6289 = vrot.slane %v6274, 4
    %v6290 = vsel %vm560, 0.0, %v6289
    %v6291 = vrot.slane %v6282, 4
    %v6292 = vsel %vm560, 0.0, %v6291
    %v6293 = vrot.slane %v6286, 4
    %v6294 = vsel %vm560, 0.0, %v6293
    %v6295 = vsel %vm560, %v6121, %v6102
    %v6297 = vunpack.c.l.s4 1983009808
    %v6298 = vunpack.c.0.s8 %v6297
    %v6299 = vperm.slane %v6295, %v6298
    %v6300 = vrot.slane %v6122, 4
    %v6301 = vsel %vm560, %v6300, %v6120
    %v6303 = vunpack.c.l.s4 1983009808
    %v6304 = vunpack.c.0.s8 %v6303
    %v6305 = vperm.slane %v6301, %v6304
    %v6306 = vsel %vm560, %v6125, %v6114
    %v6308 = vunpack.c.l.s4 1983009808
    %v6309 = vunpack.c.0.s8 %v6308
    %v6310 = vperm.slane %v6306, %v6309
    %v6311 = vrot.slane %v6126, 4
    %v6312 = vsel %vm560, %v6311, %v6124
    %v6314 = vunpack.c.l.s4 1983009808
    %v6315 = vunpack.c.0.s8 %v6314
    %v6316 = vperm.slane %v6312, %v6315
    %v6317 = vrot.slane %v6305, 4
    %v6318 = vsel %vm560, %v6317, %v6299
    %v6319 = vrot.slane %v6299, 4
    %v6320 = vsel %vm560, %v6305, %v6319
    %v6322 = vunpack.c.l.s4 1934713408
    %v6323 = vunpack.c.0.s8 %v6322
    %v6324 = vperm.slane %v6318, %v6323
    %v6326 = vunpack.c.l.s4 1934713408
    %v6327 = vunpack.c.0.s8 %v6326
    %v6328 = vperm.slane %v6320, %v6327
    %v6329 = vrot.slane %v6316, 4
    %v6330 = vsel %vm560, %v6329, %v6310
    %v6331 = vrot.slane %v6310, 4
    %v6332 = vsel %vm560, %v6316, %v6331
    %v6334 = vunpack.c.l.s4 1934713408
    %v6335 = vunpack.c.0.s8 %v6334
    %v6336 = vperm.slane %v6330, %v6335
    %v6338 = vunpack.c.l.s4 1934713408
    %v6339 = vunpack.c.0.s8 %v6338
    %v6340 = vperm.slane %v6332, %v6339
    %v6341 = vrot.slane %v6336, 4
    %v6342 = vsel %vm560, %v6341, %v6324
    %v6343 = vrot.slane %v6324, 4
    %v6344 = vsel %vm560, %v6336, %v6343
    %v6345 = vrot.slane %v6340, 4
    %v6346 = vsel %vm560, %v6345, %v6328
    %v6347 = vrot.slane %v6328, 4
    %v6348 = vsel %vm560, %v6340, %v6347
    %v6349 = vsel %vm560, %v6177, %v6158
    %v6351 = vunpack.c.l.s4 1983009808
    %v6352 = vunpack.c.0.s8 %v6351
    %v6353 = vperm.slane %v6349, %v6352
    %v6354 = vrot.slane %v6178, 4
    %v6355 = vsel %vm560, %v6354, %v6176
    %v6357 = vunpack.c.l.s4 1983009808
    %v6358 = vunpack.c.0.s8 %v6357
    %v6359 = vperm.slane %v6355, %v6358
    %v6360 = vsel %vm560, %v6181, %v6170
    %v6362 = vunpack.c.l.s4 1983009808
    %v6363 = vunpack.c.0.s8 %v6362
    %v6364 = vperm.slane %v6360, %v6363
    %v6365 = vrot.slane %v6182, 4
    %v6366 = vsel %vm560, %v6365, %v6180
    %v6368 = vunpack.c.l.s4 1983009808
    %v6369 = vunpack.c.0.s8 %v6368
    %v6370 = vperm.slane %v6366, %v6369
    %v6371 = vrot.slane %v6359, 4
    %v6372 = vsel %vm560, %v6371, %v6353
    %v6373 = vrot.slane %v6353, 4
    %v6374 = vsel %vm560, %v6359, %v6373
    %v6376 = vunpack.c.l.s4 1934713408
    %v6377 = vunpack.c.0.s8 %v6376
    %v6378 = vperm.slane %v6372, %v6377
    %v6380 = vunpack.c.l.s4 1934713408
    %v6381 = vunpack.c.0.s8 %v6380
    %v6382 = vperm.slane %v6374, %v6381
    %v6383 = vrot.slane %v6370, 4
    %v6384 = vsel %vm560, %v6383, %v6364
    %v6385 = vrot.slane %v6364, 4
    %v6386 = vsel %vm560, %v6370, %v6385
    %v6388 = vunpack.c.l.s4 1934713408
    %v6389 = vunpack.c.0.s8 %v6388
    %v6390 = vperm.slane %v6384, %v6389
    %v6392 = vunpack.c.l.s4 1934713408
    %v6393 = vunpack.c.0.s8 %v6392
    %v6394 = vperm.slane %v6386, %v6393
    %v6395 = vrot.slane %v6390, 4
    %v6396 = vsel %vm560, %v6395, %v6378
    %v6397 = vrot.slane %v6378, 4
    %v6398 = vsel %vm560, %v6390, %v6397
    %v6399 = vrot.slane %v6394, 4
    %v6400 = vsel %vm560, %v6399, %v6382
    %v6401 = vrot.slane %v6382, 4
    %v6402 = vsel %vm560, %v6394, %v6401
    %v6403 = vsel %vm560, %v6233, %v6214
    %v6405 = vunpack.c.l.s4 1983009808
    %v6406 = vunpack.c.0.s8 %v6405
    %v6407 = vperm.slane %v6403, %v6406
    %v6408 = vrot.slane %v6234, 4
    %v6409 = vsel %vm560, %v6408, %v6232
    %v6411 = vunpack.c.l.s4 1983009808
    %v6412 = vunpack.c.0.s8 %v6411
    %v6413 = vperm.slane %v6409, %v6412
    %v6414 = vsel %vm560, %v6237, %v6226
    %v6416 = vunpack.c.l.s4 1983009808
    %v6417 = vunpack.c.0.s8 %v6416
    %v6418 = vperm.slane %v6414, %v6417
    %v6419 = vrot.slane %v6238, 4
    %v6420 = vsel %vm560, %v6419, %v6236
    %v6422 = vunpack.c.l.s4 1983009808
    %v6423 = vunpack.c.0.s8 %v6422
    %v6424 = vperm.slane %v6420, %v6423
    %v6425 = vrot.slane %v6413, 4
    %v6426 = vsel %vm560, %v6425, %v6407
    %v6427 = vrot.slane %v6407, 4
    %v6428 = vsel %vm560, %v6413, %v6427
    %v6430 = vunpack.c.l.s4 1934713408
    %v6431 = vunpack.c.0.s8 %v6430
    %v6432 = vperm.slane %v6426, %v6431
    %v6434 = vunpack.c.l.s4 1934713408
    %v6435 = vunpack.c.0.s8 %v6434
    %v6436 = vperm.slane %v6428, %v6435
    %v6437 = vrot.slane %v6424, 4
    %v6438 = vsel %vm560, %v6437, %v6418
    %v6439 = vrot.slane %v6418, 4
    %v6440 = vsel %vm560, %v6424, %v6439
    %v6442 = vunpack.c.l.s4 1934713408
    %v6443 = vunpack.c.0.s8 %v6442
    %v6444 = vperm.slane %v6438, %v6443
    %v6446 = vunpack.c.l.s4 1934713408
    %v6447 = vunpack.c.0.s8 %v6446
    %v6448 = vperm.slane %v6440, %v6447
    %v6449 = vrot.slane %v6444, 4
    %v6450 = vsel %vm560, %v6449, %v6432
    %v6451 = vrot.slane %v6432, 4
    %v6452 = vsel %vm560, %v6444, %v6451
    %v6453 = vrot.slane %v6448, 4
    %v6454 = vsel %vm560, %v6453, %v6436
    %v6455 = vrot.slane %v6436, 4
    %v6456 = vsel %vm560, %v6448, %v6455
    %v6457 = vsel %vm560, %v6289, %v6270
    %v6459 = vunpack.c.l.s4 1983009808
    %v6460 = vunpack.c.0.s8 %v6459
    %v6461 = vperm.slane %v6457, %v6460
    %v6462 = vrot.slane %v6290, 4
    %v6463 = vsel %vm560, %v6462, %v6288
    %v6465 = vunpack.c.l.s4 1983009808
    %v6466 = vunpack.c.0.s8 %v6465
    %v6467 = vperm.slane %v6463, %v6466
    %v6468 = vsel %vm560, %v6293, %v6282
    %v6470 = vunpack.c.l.s4 1983009808
    %v6471 = vunpack.c.0.s8 %v6470
    %v6472 = vperm.slane %v6468, %v6471
    %v6473 = vrot.slane %v6294, 4
    %v6474 = vsel %vm560, %v6473, %v6292
    %v6476 = vunpack.c.l.s4 1983009808
    %v6477 = vunpack.c.0.s8 %v6476
    %v6478 = vperm.slane %v6474, %v6477
    %v6479 = vrot.slane %v6467, 4
    %v6480 = vsel %vm560, %v6479, %v6461
    %v6481 = vrot.slane %v6461, 4
    %v6482 = vsel %vm560, %v6467, %v6481
    %v6484 = vunpack.c.l.s4 1934713408
    %v6485 = vunpack.c.0.s8 %v6484
    %v6486 = vperm.slane %v6480, %v6485
    %v6488 = vunpack.c.l.s4 1934713408
    %v6489 = vunpack.c.0.s8 %v6488
    %v6490 = vperm.slane %v6482, %v6489
    %v6491 = vrot.slane %v6478, 4
    %v6492 = vsel %vm560, %v6491, %v6472
    %v6493 = vrot.slane %v6472, 4
    %v6494 = vsel %vm560, %v6478, %v6493
    %v6496 = vunpack.c.l.s4 1934713408
    %v6497 = vunpack.c.0.s8 %v6496
    %v6498 = vperm.slane %v6492, %v6497
    %v6500 = vunpack.c.l.s4 1934713408
    %v6501 = vunpack.c.0.s8 %v6500
    %v6502 = vperm.slane %v6494, %v6501
    %v6503 = vrot.slane %v6498, 4
    %v6504 = vsel %vm560, %v6503, %v6486
    %v6505 = vrot.slane %v6486, 4
    %v6506 = vsel %vm560, %v6498, %v6505
    %v6507 = vrot.slane %v6502, 4
    %v6508 = vsel %vm560, %v6507, %v6490
    %v6509 = vrot.slane %v6490, 4
    %v6510 = vsel %vm560, %v6502, %v6509
    %v6511 = vpack.c.bf16 %v6342, %v6342
    %v6512 = vpack.c.bf16 %v6396, %v6396
    %v6513 = vpack.c.bf16 %v6344, %v6344
    %v6514 = vpack.c.bf16 %v6398, %v6398
    %v6515 = vpack.c.bf16 %v6346, %v6346
    %v6516 = vpack.c.bf16 %v6400, %v6400
    %v6517 = vpack.c.bf16 %v6348, %v6348
    %v6518 = vpack.c.bf16 %v6402, %v6402
    %v6519 = vpack.c.bf16 %v6450, %v6450
    %v6520 = vpack.c.bf16 %v6504, %v6504
    %v6521 = vpack.c.bf16 %v6452, %v6452
    %v6522 = vpack.c.bf16 %v6506, %v6506
    %v6523 = vpack.c.bf16 %v6454, %v6454
    %v6524 = vpack.c.bf16 %v6508, %v6508
    %v6525 = vpack.c.bf16 %v6456, %v6456
    %v6526 = vpack.c.bf16 %v6510, %v6510
    %v6529 = vunpack.c.l.b16 %v5519
    %v6530 = vunpack.c.l.b16 %v5520
    %v6531 = vpack.c.b16 %v6530, %v6529
    %v6534 = vunpack.c.l.b16 %v6015
    %v6535 = vunpack.c.l.b16 %v6016
    %v6536 = vpack.c.b16 %v6535, %v6534
    %v6538 = vsel %vm2018, %v6531, 0
    %v6541 = vsel %vm2018, %v6536, 0
    %6543 = vmatpush.bf16.xpose.msra.mxu0 0
    %6544 = vmatpush.bf16.xpose.msra.mxu0 0
    %6545 = vmatpush.bf16.xpose.msra.mxu0 0
    %6546 = vmatpush.bf16.xpose.msra.mxu0 0
    %6547 = vmatpush.bf16.xpose.msra.mxu0 0
    %6548 = vmatpush.bf16.xpose.msra.mxu0 0
    %6549 = vmatpush.bf16.xpose.msra.mxu0 0
    %6550 = vmatpush.bf16.xpose.msra.mxu0 %v6541
    %6551 = vmatmul.bf16.gmra.mxu0 %v6538
    %v6552 = vpop.f32.mrf.mxu0
    %v6553 = vadd.f32 0.0, %v6552
    %v6554 = vpop.f32.mrf.mxu0
    %v6555 = vadd.f32 0.0, %v6554
    %6556 = vdwg.mxu0
    %v6559 = vunpack.c.l.b16 %v5521
    %v6560 = vunpack.c.l.b16 %v5522
    %v6561 = vpack.c.b16 %v6560, %v6559
    %v6564 = vunpack.c.l.b16 %v6017
    %v6565 = vunpack.c.l.b16 %v6018
    %v6566 = vpack.c.b16 %v6565, %v6564
    %v6568 = vsel %vm2018, %v6561, 0
    %v6571 = vsel %vm2018, %v6566, 0
    %6573 = vmatpush.bf16.xpose.msra.mxu0 0
    %6574 = vmatpush.bf16.xpose.msra.mxu0 0
    %6575 = vmatpush.bf16.xpose.msra.mxu0 0
    %6576 = vmatpush.bf16.xpose.msra.mxu0 0
    %6577 = vmatpush.bf16.xpose.msra.mxu0 0
    %6578 = vmatpush.bf16.xpose.msra.mxu0 0
    %6579 = vmatpush.bf16.xpose.msra.mxu0 0
    %6580 = vmatpush.bf16.xpose.msra.mxu0 %v6571
    %6581 = vmatmul.bf16.gmra.mxu0 %v6568
    %v6582 = vpop.f32.mrf.mxu0
    %v6583 = vadd.f32 0.0, %v6582
    %v6584 = vpop.f32.mrf.mxu0
    %v6585 = vadd.f32 0.0, %v6584
    %6586 = vdwg.mxu0
    %v6589 = vunpack.c.l.b16 %v5523
    %v6590 = vunpack.c.l.b16 %v5524
    %v6591 = vpack.c.b16 %v6590, %v6589
    %v6594 = vunpack.c.l.b16 %v6019
    %v6595 = vunpack.c.l.b16 %v6020
    %v6596 = vpack.c.b16 %v6595, %v6594
    %v6598 = vsel %vm2018, %v6591, 0
    %v6601 = vsel %vm2018, %v6596, 0
    %6603 = vmatpush.bf16.xpose.msra.mxu0 0
    %6604 = vmatpush.bf16.xpose.msra.mxu0 0
    %6605 = vmatpush.bf16.xpose.msra.mxu0 0
    %6606 = vmatpush.bf16.xpose.msra.mxu0 0
    %6607 = vmatpush.bf16.xpose.msra.mxu0 0
    %6608 = vmatpush.bf16.xpose.msra.mxu0 0
    %6609 = vmatpush.bf16.xpose.msra.mxu0 0
    %6610 = vmatpush.bf16.xpose.msra.mxu0 %v6601
    %6611 = vmatmul.bf16.gmra.mxu0 %v6598
    %v6612 = vpop.f32.mrf.mxu0
    %v6613 = vadd.f32 0.0, %v6612
    %v6614 = vpop.f32.mrf.mxu0
    %v6615 = vadd.f32 0.0, %v6614
    %6616 = vdwg.mxu0
    %v6619 = vunpack.c.l.b16 %v5525
    %v6620 = vunpack.c.l.b16 %v5526
    %v6621 = vpack.c.b16 %v6620, %v6619
    %v6624 = vunpack.c.l.b16 %v6021
    %v6625 = vunpack.c.l.b16 %v6022
    %v6626 = vpack.c.b16 %v6625, %v6624
    %v6628 = vsel %vm2018, %v6621, 0
    %v6631 = vsel %vm2018, %v6626, 0
    %6633 = vmatpush.bf16.xpose.msra.mxu0 0
    %6634 = vmatpush.bf16.xpose.msra.mxu0 0
    %6635 = vmatpush.bf16.xpose.msra.mxu0 0
    %6636 = vmatpush.bf16.xpose.msra.mxu0 0
    %6637 = vmatpush.bf16.xpose.msra.mxu0 0
    %6638 = vmatpush.bf16.xpose.msra.mxu0 0
    %6639 = vmatpush.bf16.xpose.msra.mxu0 0
    %6640 = vmatpush.bf16.xpose.msra.mxu0 %v6631
    %6641 = vmatmul.bf16.gmra.mxu0 %v6628
    %v6642 = vpop.f32.mrf.mxu0
    %v6643 = vadd.f32 0.0, %v6642
    %v6644 = vpop.f32.mrf.mxu0
    %v6645 = vadd.f32 0.0, %v6644
    %6646 = vdwg.mxu0
    %v6649 = vunpack.c.l.b16 %v5527
    %v6650 = vunpack.c.l.b16 %v5528
    %v6651 = vpack.c.b16 %v6650, %v6649
    %v6654 = vunpack.c.l.b16 %v6023
    %v6655 = vunpack.c.l.b16 %v6024
    %v6656 = vpack.c.b16 %v6655, %v6654
    %v6658 = vsel %vm2018, %v6651, 0
    %v6661 = vsel %vm2018, %v6656, 0
    %6663 = vmatpush.bf16.xpose.msra.mxu0 0
    %6664 = vmatpush.bf16.xpose.msra.mxu0 0
    %6665 = vmatpush.bf16.xpose.msra.mxu0 0
    %6666 = vmatpush.bf16.xpose.msra.mxu0 0
    %6667 = vmatpush.bf16.xpose.msra.mxu0 0
    %6668 = vmatpush.bf16.xpose.msra.mxu0 0
    %6669 = vmatpush.bf16.xpose.msra.mxu0 0
    %6670 = vmatpush.bf16.xpose.msra.mxu0 %v6661
    %6671 = vmatmul.bf16.gmra.mxu0 %v6658
    %v6672 = vpop.f32.mrf.mxu0
    %v6673 = vadd.f32 0.0, %v6672
    %v6674 = vpop.f32.mrf.mxu0
    %v6675 = vadd.f32 0.0, %v6674
    %6676 = vdwg.mxu0
    %v6679 = vunpack.c.l.b16 %v5529
    %v6680 = vunpack.c.l.b16 %v5530
    %v6681 = vpack.c.b16 %v6680, %v6679
    %v6684 = vunpack.c.l.b16 %v6025
    %v6685 = vunpack.c.l.b16 %v6026
    %v6686 = vpack.c.b16 %v6685, %v6684
    %v6688 = vsel %vm2018, %v6681, 0
    %v6691 = vsel %vm2018, %v6686, 0
    %6693 = vmatpush.bf16.xpose.msra.mxu0 0
    %6694 = vmatpush.bf16.xpose.msra.mxu0 0
    %6695 = vmatpush.bf16.xpose.msra.mxu0 0
    %6696 = vmatpush.bf16.xpose.msra.mxu0 0
    %6697 = vmatpush.bf16.xpose.msra.mxu0 0
    %6698 = vmatpush.bf16.xpose.msra.mxu0 0
    %6699 = vmatpush.bf16.xpose.msra.mxu0 0
    %6700 = vmatpush.bf16.xpose.msra.mxu0 %v6691
    %6701 = vmatmul.bf16.gmra.mxu0 %v6688
    %v6702 = vpop.f32.mrf.mxu0
    %v6703 = vadd.f32 0.0, %v6702
    %v6704 = vpop.f32.mrf.mxu0
    %v6705 = vadd.f32 0.0, %v6704
    %6706 = vdwg.mxu0
    %v6709 = vunpack.c.l.b16 %v5531
    %v6710 = vunpack.c.l.b16 %v5532
    %v6711 = vpack.c.b16 %v6710, %v6709
    %v6714 = vunpack.c.l.b16 %v6027
    %v6715 = vunpack.c.l.b16 %v6028
    %v6716 = vpack.c.b16 %v6715, %v6714
    %v6718 = vsel %vm2018, %v6711, 0
    %v6721 = vsel %vm2018, %v6716, 0
    %6723 = vmatpush.bf16.xpose.msra.mxu0 0
    %6724 = vmatpush.bf16.xpose.msra.mxu0 0
    %6725 = vmatpush.bf16.xpose.msra.mxu0 0
    %6726 = vmatpush.bf16.xpose.msra.mxu0 0
    %6727 = vmatpush.bf16.xpose.msra.mxu0 0
    %6728 = vmatpush.bf16.xpose.msra.mxu0 0
    %6729 = vmatpush.bf16.xpose.msra.mxu0 0
    %6730 = vmatpush.bf16.xpose.msra.mxu0 %v6721
    %6731 = vmatmul.bf16.gmra.mxu0 %v6718
    %v6732 = vpop.f32.mrf.mxu0
    %v6733 = vadd.f32 0.0, %v6732
    %v6734 = vpop.f32.mrf.mxu0
    %v6735 = vadd.f32 0.0, %v6734
    %6736 = vdwg.mxu0
    %v6739 = vunpack.c.l.b16 %v5533
    %v6740 = vunpack.c.l.b16 %v5534
    %v6741 = vpack.c.b16 %v6740, %v6739
    %v6744 = vunpack.c.l.b16 %v6029
    %v6745 = vunpack.c.l.b16 %v6030
    %v6746 = vpack.c.b16 %v6745, %v6744
    %v6748 = vsel %vm2018, %v6741, 0
    %v6751 = vsel %vm2018, %v6746, 0
    %6753 = vmatpush.bf16.xpose.msra.mxu0 0
    %6754 = vmatpush.bf16.xpose.msra.mxu0 0
    %6755 = vmatpush.bf16.xpose.msra.mxu0 0
    %6756 = vmatpush.bf16.xpose.msra.mxu0 0
    %6757 = vmatpush.bf16.xpose.msra.mxu0 0
    %6758 = vmatpush.bf16.xpose.msra.mxu0 0
    %6759 = vmatpush.bf16.xpose.msra.mxu0 0
    %6760 = vmatpush.bf16.xpose.msra.mxu0 %v6751
    %6761 = vmatmul.bf16.gmra.mxu0 %v6748
    %v6762 = vpop.f32.mrf.mxu0
    %v6763 = vadd.f32 0.0, %v6762
    %v6764 = vpop.f32.mrf.mxu0
    %v6765 = vadd.f32 0.0, %v6764
    %6766 = vdwg.mxu0
    %v6767 = vsel %vm2249, %v6553, -inf
    %6768 = vmax.xlane.f32.xlu0 %v6767
    %v6769 = vpop.xlane.xlu0 %6768
    %v6770 = vsel %vm2249, %v6555, -inf
    %6771 = vmax.xlane.f32.xlu0 %v6770
    %v6772 = vpop.xlane.xlu0 %6771
    %v6773 = vsel %vm2249, %v6583, -inf
    %6774 = vmax.xlane.f32.xlu0 %v6773
    %v6775 = vpop.xlane.xlu0 %6774
    %v6776 = vsel %vm2249, %v6585, -inf
    %6777 = vmax.xlane.f32.xlu0 %v6776
    %v6778 = vpop.xlane.xlu0 %6777
    %v6779 = vsel %vm2249, %v6613, -inf
    %6780 = vmax.xlane.f32.xlu0 %v6779
    %v6781 = vpop.xlane.xlu0 %6780
    %v6782 = vsel %vm2249, %v6615, -inf
    %6783 = vmax.xlane.f32.xlu0 %v6782
    %v6784 = vpop.xlane.xlu0 %6783
    %v6785 = vsel %vm2249, %v6643, -inf
    %6786 = vmax.xlane.f32.xlu0 %v6785
    %v6787 = vpop.xlane.xlu0 %6786
    %v6788 = vsel %vm2249, %v6645, -inf
    %6789 = vmax.xlane.f32.xlu0 %v6788
    %v6790 = vpop.xlane.xlu0 %6789
    %v6791 = vsel %vm2249, %v6673, -inf
    %6792 = vmax.xlane.f32.xlu0 %v6791
    %v6793 = vpop.xlane.xlu0 %6792
    %v6794 = vsel %vm2249, %v6675, -inf
    %6795 = vmax.xlane.f32.xlu0 %v6794
    %v6796 = vpop.xlane.xlu0 %6795
    %v6797 = vsel %vm2249, %v6703, -inf
    %6798 = vmax.xlane.f32.xlu0 %v6797
    %v6799 = vpop.xlane.xlu0 %6798
    %v6800 = vsel %vm2249, %v6705, -inf
    %6801 = vmax.xlane.f32.xlu0 %v6800
    %v6802 = vpop.xlane.xlu0 %6801
    %v6803 = vsel %vm2249, %v6733, -inf
    %6804 = vmax.xlane.f32.xlu0 %v6803
    %v6805 = vpop.xlane.xlu0 %6804
    %v6806 = vsel %vm2249, %v6735, -inf
    %6807 = vmax.xlane.f32.xlu0 %v6806
    %v6808 = vpop.xlane.xlu0 %6807
    %v6809 = vsel %vm2249, %v6763, -inf
    %6810 = vmax.xlane.f32.xlu0 %v6809
    %v6811 = vpop.xlane.xlu0 %6810
    %v6812 = vsel %vm2249, %v6765, -inf
    %6813 = vmax.xlane.f32.xlu0 %v6812
    %v6814 = vpop.xlane.xlu0 %6813
    %v6815 = vsub.f32 %v6553, %v6769
    %v6816 = vsub.f32 %v6555, %v6772
    %v6817 = vsub.f32 %v6583, %v6775
    %v6818 = vsub.f32 %v6585, %v6778
    %v6819 = vsub.f32 %v6613, %v6781
    %v6820 = vsub.f32 %v6615, %v6784
    %v6821 = vsub.f32 %v6643, %v6787
    %v6822 = vsub.f32 %v6645, %v6790
    %v6823 = vsub.f32 %v6673, %v6793
    %v6824 = vsub.f32 %v6675, %v6796
    %v6825 = vsub.f32 %v6703, %v6799
    %v6826 = vsub.f32 %v6705, %v6802
    %v6827 = vsub.f32 %v6733, %v6805
    %v6828 = vsub.f32 %v6735, %v6808
    %v6829 = vsub.f32 %v6763, %v6811
    %v6830 = vsub.f32 %v6765, %v6814
    %v6831 = vmul.f32 %v6815, 1.442695
    %v6832 = vpow.pop %v6831
    %v6833 = vmul.f32 %v6816, 1.442695
    %v6834 = vpow.pop %v6833
    %v6835 = vmul.f32 %v6817, 1.442695
    %v6836 = vpow.pop %v6835
    %v6837 = vmul.f32 %v6818, 1.442695
    %v6838 = vpow.pop %v6837
    %v6839 = vmul.f32 %v6819, 1.442695
    %v6840 = vpow.pop %v6839
    %v6841 = vmul.f32 %v6820, 1.442695
    %v6842 = vpow.pop %v6841
    %v6843 = vmul.f32 %v6821, 1.442695
    %v6844 = vpow.pop %v6843
    %v6845 = vmul.f32 %v6822, 1.442695
    %v6846 = vpow.pop %v6845
    %v6847 = vmul.f32 %v6823, 1.442695
    %v6848 = vpow.pop %v6847
    %v6849 = vmul.f32 %v6824, 1.442695
    %v6850 = vpow.pop %v6849
    %v6851 = vmul.f32 %v6825, 1.442695
    %v6852 = vpow.pop %v6851
    %v6853 = vmul.f32 %v6826, 1.442695
    %v6854 = vpow.pop %v6853
    %v6855 = vmul.f32 %v6827, 1.442695
    %v6856 = vpow.pop %v6855
    %v6857 = vmul.f32 %v6828, 1.442695
    %v6858 = vpow.pop %v6857
    %v6859 = vmul.f32 %v6829, 1.442695
    %v6860 = vpow.pop %v6859
    %v6861 = vmul.f32 %v6830, 1.442695
    %v6862 = vpow.pop %v6861
    %v6863 = vsel %vm2249, %v6832, 0.0
    %6864 = vadd.xlane.f32.xlu0 %v6863
    %v6865 = vpop.xlane.xlu0 %6864
    %v6866 = vsel %vm2249, %v6834, 0.0
    %6867 = vadd.xlane.f32.xlu0 %v6866
    %v6868 = vpop.xlane.xlu0 %6867
    %v6869 = vsel %vm2249, %v6836, 0.0
    %6870 = vadd.xlane.f32.xlu0 %v6869
    %v6871 = vpop.xlane.xlu0 %6870
    %v6872 = vsel %vm2249, %v6838, 0.0
    %6873 = vadd.xlane.f32.xlu0 %v6872
    %v6874 = vpop.xlane.xlu0 %6873
    %v6875 = vsel %vm2249, %v6840, 0.0
    %6876 = vadd.xlane.f32.xlu0 %v6875
    %v6877 = vpop.xlane.xlu0 %6876
    %v6878 = vsel %vm2249, %v6842, 0.0
    %6879 = vadd.xlane.f32.xlu0 %v6878
    %v6880 = vpop.xlane.xlu0 %6879
    %v6881 = vsel %vm2249, %v6844, 0.0
    %6882 = vadd.xlane.f32.xlu0 %v6881
    %v6883 = vpop.xlane.xlu0 %6882
    %v6884 = vsel %vm2249, %v6846, 0.0
    %6885 = vadd.xlane.f32.xlu0 %v6884
    %v6886 = vpop.xlane.xlu0 %6885
    %v6887 = vsel %vm2249, %v6848, 0.0
    %6888 = vadd.xlane.f32.xlu0 %v6887
    %v6889 = vpop.xlane.xlu0 %6888
    %v6890 = vsel %vm2249, %v6850, 0.0
    %6891 = vadd.xlane.f32.xlu0 %v6890
    %v6892 = vpop.xlane.xlu0 %6891
    %v6893 = vsel %vm2249, %v6852, 0.0
    %6894 = vadd.xlane.f32.xlu0 %v6893
    %v6895 = vpop.xlane.xlu0 %6894
    %v6896 = vsel %vm2249, %v6854, 0.0
    %6897 = vadd.xlane.f32.xlu0 %v6896
    %v6898 = vpop.xlane.xlu0 %6897
    %v6899 = vsel %vm2249, %v6856, 0.0
    %6900 = vadd.xlane.f32.xlu0 %v6899
    %v6901 = vpop.xlane.xlu0 %6900
    %v6902 = vsel %vm2249, %v6858, 0.0
    %6903 = vadd.xlane.f32.xlu0 %v6902
    %v6904 = vpop.xlane.xlu0 %6903
    %v6905 = vsel %vm2249, %v6860, 0.0
    %6906 = vadd.xlane.f32.xlu0 %v6905
    %v6907 = vpop.xlane.xlu0 %6906
    %v6908 = vsel %vm2249, %v6862, 0.0
    %6909 = vadd.xlane.f32.xlu0 %v6908
    %v6910 = vpop.xlane.xlu0 %6909
    %v6911 = vrcp.pop %v6865
    %v6912 = vrcp.pop %v6868
    %v6913 = vrcp.pop %v6871
    %v6914 = vrcp.pop %v6874
    %v6915 = vrcp.pop %v6877
    %v6916 = vrcp.pop %v6880
    %v6917 = vrcp.pop %v6883
    %v6918 = vrcp.pop %v6886
    %v6919 = vrcp.pop %v6889
    %v6920 = vrcp.pop %v6892
    %v6921 = vrcp.pop %v6895
    %v6922 = vrcp.pop %v6898
    %v6923 = vrcp.pop %v6901
    %v6924 = vrcp.pop %v6904
    %v6925 = vrcp.pop %v6907
    %v6926 = vrcp.pop %v6910
    %v6927 = vmul.f32 %v6832, %v6911
    %v6928 = vmul.f32 %v6834, %v6912
    %v6929 = vmul.f32 %v6836, %v6913
    %v6930 = vmul.f32 %v6838, %v6914
    %v6931 = vmul.f32 %v6840, %v6915
    %v6932 = vmul.f32 %v6842, %v6916
    %v6933 = vmul.f32 %v6844, %v6917
    %v6934 = vmul.f32 %v6846, %v6918
    %v6935 = vmul.f32 %v6848, %v6919
    %v6936 = vmul.f32 %v6850, %v6920
    %v6937 = vmul.f32 %v6852, %v6921
    %v6938 = vmul.f32 %v6854, %v6922
    %v6939 = vmul.f32 %v6856, %v6923
    %v6940 = vmul.f32 %v6858, %v6924
    %v6941 = vmul.f32 %v6860, %v6925
    %v6942 = vmul.f32 %v6862, %v6926
    %v6943 = vpack.c.bf16 %v6927, %v6927
    %v6944 = vpack.c.bf16 %v6928, %v6928
    %v6945 = vpack.c.bf16 %v6929, %v6929
    %v6946 = vpack.c.bf16 %v6930, %v6930
    %v6947 = vpack.c.bf16 %v6931, %v6931
    %v6948 = vpack.c.bf16 %v6932, %v6932
    %v6949 = vpack.c.bf16 %v6933, %v6933
    %v6950 = vpack.c.bf16 %v6934, %v6934
    %v6951 = vpack.c.bf16 %v6935, %v6935
    %v6952 = vpack.c.bf16 %v6936, %v6936
    %v6953 = vpack.c.bf16 %v6937, %v6937
    %v6954 = vpack.c.bf16 %v6938, %v6938
    %v6955 = vpack.c.bf16 %v6939, %v6939
    %v6956 = vpack.c.bf16 %v6940, %v6940
    %v6957 = vpack.c.bf16 %v6941, %v6941
    %v6958 = vpack.c.bf16 %v6942, %v6942
    %v6961 = vunpack.c.l.b16 %v6943
    %v6962 = vunpack.c.l.b16 %v6944
    %v6963 = vpack.c.b16 %v6962, %v6961
    %v6966 = vunpack.c.l.b16 %v6511
    %v6967 = vunpack.c.l.b16 %v6512
    %v6968 = vpack.c.b16 %v6967, %v6966
    %v6971 = vsel %vm2249, %v6963, 0
    %6973 = vmatpush.bf16.msra.mxu0 0
    %6974 = vmatpush.bf16.msra.mxu0 0
    %6975 = vmatpush.bf16.msra.mxu0 0
    %6976 = vmatpush.bf16.msra.mxu0 0
    %6977 = vmatpush.bf16.msra.mxu0 0
    %6978 = vmatpush.bf16.msra.mxu0 0
    %6979 = vmatpush.bf16.msra.mxu0 0
    %6980 = vmatpush.bf16.msra.mxu0 %v6968
    %6981 = vmatmul.bf16.gmra.mxu0 %v6971
    %v6982 = vpop.f32.mrf.mxu0
    %v6983 = vadd.f32 0.0, %v6982
    %v6984 = vpop.f32.mrf.mxu0
    %v6985 = vadd.f32 0.0, %v6984
    %6986 = vdwg.mxu0
    %v6989 = vunpack.c.l.b16 %v6945
    %v6990 = vunpack.c.l.b16 %v6946
    %v6991 = vpack.c.b16 %v6990, %v6989
    %v6994 = vunpack.c.l.b16 %v6513
    %v6995 = vunpack.c.l.b16 %v6514
    %v6996 = vpack.c.b16 %v6995, %v6994
    %v6999 = vsel %vm2249, %v6991, 0
    %7001 = vmatpush.bf16.msra.mxu0 0
    %7002 = vmatpush.bf16.msra.mxu0 0
    %7003 = vmatpush.bf16.msra.mxu0 0
    %7004 = vmatpush.bf16.msra.mxu0 0
    %7005 = vmatpush.bf16.msra.mxu0 0
    %7006 = vmatpush.bf16.msra.mxu0 0
    %7007 = vmatpush.bf16.msra.mxu0 0
    %7008 = vmatpush.bf16.msra.mxu0 %v6996
    %7009 = vmatmul.bf16.gmra.mxu0 %v6999
    %v7010 = vpop.f32.mrf.mxu0
    %v7011 = vadd.f32 0.0, %v7010
    %v7012 = vpop.f32.mrf.mxu0
    %v7013 = vadd.f32 0.0, %v7012
    %7014 = vdwg.mxu0
    %v7017 = vunpack.c.l.b16 %v6947
    %v7018 = vunpack.c.l.b16 %v6948
    %v7019 = vpack.c.b16 %v7018, %v7017
    %v7022 = vunpack.c.l.b16 %v6515
    %v7023 = vunpack.c.l.b16 %v6516
    %v7024 = vpack.c.b16 %v7023, %v7022
    %v7027 = vsel %vm2249, %v7019, 0
    %7029 = vmatpush.bf16.msra.mxu0 0
    %7030 = vmatpush.bf16.msra.mxu0 0
    %7031 = vmatpush.bf16.msra.mxu0 0
    %7032 = vmatpush.bf16.msra.mxu0 0
    %7033 = vmatpush.bf16.msra.mxu0 0
    %7034 = vmatpush.bf16.msra.mxu0 0
    %7035 = vmatpush.bf16.msra.mxu0 0
    %7036 = vmatpush.bf16.msra.mxu0 %v7024
    %7037 = vmatmul.bf16.gmra.mxu0 %v7027
    %v7038 = vpop.f32.mrf.mxu0
    %v7039 = vadd.f32 0.0, %v7038
    %v7040 = vpop.f32.mrf.mxu0
    %v7041 = vadd.f32 0.0, %v7040
    %7042 = vdwg.mxu0
    %v7045 = vunpack.c.l.b16 %v6949
    %v7046 = vunpack.c.l.b16 %v6950
    %v7047 = vpack.c.b16 %v7046, %v7045
    %v7050 = vunpack.c.l.b16 %v6517
    %v7051 = vunpack.c.l.b16 %v6518
    %v7052 = vpack.c.b16 %v7051, %v7050
    %v7055 = vsel %vm2249, %v7047, 0
    %7057 = vmatpush.bf16.msra.mxu0 0
    %7058 = vmatpush.bf16.msra.mxu0 0
    %7059 = vmatpush.bf16.msra.mxu0 0
    %7060 = vmatpush.bf16.msra.mxu0 0
    %7061 = vmatpush.bf16.msra.mxu0 0
    %7062 = vmatpush.bf16.msra.mxu0 0
    %7063 = vmatpush.bf16.msra.mxu0 0
    %7064 = vmatpush.bf16.msra.mxu0 %v7052
    %7065 = vmatmul.bf16.gmra.mxu0 %v7055
    %v7066 = vpop.f32.mrf.mxu0
    %v7067 = vadd.f32 0.0, %v7066
    %v7068 = vpop.f32.mrf.mxu0
    %v7069 = vadd.f32 0.0, %v7068
    %7070 = vdwg.mxu0
    %v7073 = vunpack.c.l.b16 %v6951
    %v7074 = vunpack.c.l.b16 %v6952
    %v7075 = vpack.c.b16 %v7074, %v7073
    %v7078 = vunpack.c.l.b16 %v6519
    %v7079 = vunpack.c.l.b16 %v6520
    %v7080 = vpack.c.b16 %v7079, %v7078
    %v7083 = vsel %vm2249, %v7075, 0
    %7085 = vmatpush.bf16.msra.mxu0 0
    %7086 = vmatpush.bf16.msra.mxu0 0
    %7087 = vmatpush.bf16.msra.mxu0 0
    %7088 = vmatpush.bf16.msra.mxu0 0
    %7089 = vmatpush.bf16.msra.mxu0 0
    %7090 = vmatpush.bf16.msra.mxu0 0
    %7091 = vmatpush.bf16.msra.mxu0 0
    %7092 = vmatpush.bf16.msra.mxu0 %v7080
    %7093 = vmatmul.bf16.gmra.mxu0 %v7083
    %v7094 = vpop.f32.mrf.mxu0
    %v7095 = vadd.f32 0.0, %v7094
    %v7096 = vpop.f32.mrf.mxu0
    %v7097 = vadd.f32 0.0, %v7096
    %7098 = vdwg.mxu0
    %v7101 = vunpack.c.l.b16 %v6953
    %v7102 = vunpack.c.l.b16 %v6954
    %v7103 = vpack.c.b16 %v7102, %v7101
    %v7106 = vunpack.c.l.b16 %v6521
    %v7107 = vunpack.c.l.b16 %v6522
    %v7108 = vpack.c.b16 %v7107, %v7106
    %v7111 = vsel %vm2249, %v7103, 0
    %7113 = vmatpush.bf16.msra.mxu0 0
    %7114 = vmatpush.bf16.msra.mxu0 0
    %7115 = vmatpush.bf16.msra.mxu0 0
    %7116 = vmatpush.bf16.msra.mxu0 0
    %7117 = vmatpush.bf16.msra.mxu0 0
    %7118 = vmatpush.bf16.msra.mxu0 0
    %7119 = vmatpush.bf16.msra.mxu0 0
    %7120 = vmatpush.bf16.msra.mxu0 %v7108
    %7121 = vmatmul.bf16.gmra.mxu0 %v7111
    %v7122 = vpop.f32.mrf.mxu0
    %v7123 = vadd.f32 0.0, %v7122
    %v7124 = vpop.f32.mrf.mxu0
    %v7125 = vadd.f32 0.0, %v7124
    %7126 = vdwg.mxu0
    %v7129 = vunpack.c.l.b16 %v6955
    %v7130 = vunpack.c.l.b16 %v6956
    %v7131 = vpack.c.b16 %v7130, %v7129
    %v7134 = vunpack.c.l.b16 %v6523
    %v7135 = vunpack.c.l.b16 %v6524
    %v7136 = vpack.c.b16 %v7135, %v7134
    %v7139 = vsel %vm2249, %v7131, 0
    %7141 = vmatpush.bf16.msra.mxu0 0
    %7142 = vmatpush.bf16.msra.mxu0 0
    %7143 = vmatpush.bf16.msra.mxu0 0
    %7144 = vmatpush.bf16.msra.mxu0 0
    %7145 = vmatpush.bf16.msra.mxu0 0
    %7146 = vmatpush.bf16.msra.mxu0 0
    %7147 = vmatpush.bf16.msra.mxu0 0
    %7148 = vmatpush.bf16.msra.mxu0 %v7136
    %7149 = vmatmul.bf16.gmra.mxu0 %v7139
    %v7150 = vpop.f32.mrf.mxu0
    %v7151 = vadd.f32 0.0, %v7150
    %v7152 = vpop.f32.mrf.mxu0
    %v7153 = vadd.f32 0.0, %v7152
    %7154 = vdwg.mxu0
    %v7157 = vunpack.c.l.b16 %v6957
    %v7158 = vunpack.c.l.b16 %v6958
    %v7159 = vpack.c.b16 %v7158, %v7157
    %v7162 = vunpack.c.l.b16 %v6525
    %v7163 = vunpack.c.l.b16 %v6526
    %v7164 = vpack.c.b16 %v7163, %v7162
    %v7167 = vsel %vm2249, %v7159, 0
    %7169 = vmatpush.bf16.msra.mxu0 0
    %7170 = vmatpush.bf16.msra.mxu0 0
    %7171 = vmatpush.bf16.msra.mxu0 0
    %7172 = vmatpush.bf16.msra.mxu0 0
    %7173 = vmatpush.bf16.msra.mxu0 0
    %7174 = vmatpush.bf16.msra.mxu0 0
    %7175 = vmatpush.bf16.msra.mxu0 0
    %7176 = vmatpush.bf16.msra.mxu0 %v7164
    %7177 = vmatmul.bf16.gmra.mxu0 %v7167
    %v7178 = vpop.f32.mrf.mxu0
    %v7179 = vadd.f32 0.0, %v7178
    %v7180 = vpop.f32.mrf.mxu0
    %v7181 = vadd.f32 0.0, %v7180
    %7182 = vdwg.mxu0
    %v7183 = vrot.slane %v7039, 4
    %v7184 = vsel %vm560, %v7183, %v6983
    %v7185 = vrot.slane %v6983, 4
    %v7186 = vsel %vm560, %v7039, %v7185
    %v7188 = vunpack.c.l.s4 1983009808
    %v7189 = vunpack.c.0.s8 %v7188
    %v7190 = vperm.slane %v7184, %v7189
    %v7192 = vunpack.c.l.s4 1983009808
    %v7193 = vunpack.c.0.s8 %v7192
    %v7194 = vperm.slane %v7186, %v7193
    %v7195 = vrot.slane %v7067, 4
    %v7196 = vsel %vm560, %v7195, %v7011
    %v7197 = vrot.slane %v7011, 4
    %v7198 = vsel %vm560, %v7067, %v7197
    %v7200 = vunpack.c.l.s4 1983009808
    %v7201 = vunpack.c.0.s8 %v7200
    %v7202 = vperm.slane %v7196, %v7201
    %v7204 = vunpack.c.l.s4 1983009808
    %v7205 = vunpack.c.0.s8 %v7204
    %v7206 = vperm.slane %v7198, %v7205
    %v7207 = vrot.slane %v7202, 4
    %v7208 = vsel %vm560, %v7207, %v7190
    %v7209 = vrot.slane %v7190, 4
    %v7210 = vsel %vm560, %v7202, %v7209
    %v7212 = vunpack.c.l.s4 1934713408
    %v7213 = vunpack.c.0.s8 %v7212
    %v7214 = vperm.slane %v7208, %v7213
    %v7216 = vunpack.c.l.s4 1934713408
    %v7217 = vunpack.c.0.s8 %v7216
    %v7218 = vperm.slane %v7210, %v7217
    %v7219 = vrot.slane %v7206, 4
    %v7220 = vsel %vm560, %v7219, %v7194
    %v7221 = vrot.slane %v7194, 4
    %v7222 = vsel %vm560, %v7206, %v7221
    %v7224 = vunpack.c.l.s4 1934713408
    %v7225 = vunpack.c.0.s8 %v7224
    %v7226 = vperm.slane %v7220, %v7225
    %v7228 = vunpack.c.l.s4 1934713408
    %v7229 = vunpack.c.0.s8 %v7228
    %v7230 = vperm.slane %v7222, %v7229
    %v7231 = vrot.slane %v7214, 4
    %v7232 = vsel %vm560, 0.0, %v7231
    %v7233 = vrot.slane %v7218, 4
    %v7234 = vsel %vm560, 0.0, %v7233
    %v7235 = vrot.slane %v7226, 4
    %v7236 = vsel %vm560, 0.0, %v7235
    %v7237 = vrot.slane %v7230, 4
    %v7238 = vsel %vm560, 0.0, %v7237
    %v7239 = vrot.slane %v7041, 4
    %v7240 = vsel %vm560, %v7239, %v6985
    %v7241 = vrot.slane %v6985, 4
    %v7242 = vsel %vm560, %v7041, %v7241
    %v7244 = vunpack.c.l.s4 1983009808
    %v7245 = vunpack.c.0.s8 %v7244
    %v7246 = vperm.slane %v7240, %v7245
    %v7248 = vunpack.c.l.s4 1983009808
    %v7249 = vunpack.c.0.s8 %v7248
    %v7250 = vperm.slane %v7242, %v7249
    %v7251 = vrot.slane %v7069, 4
    %v7252 = vsel %vm560, %v7251, %v7013
    %v7253 = vrot.slane %v7013, 4
    %v7254 = vsel %vm560, %v7069, %v7253
    %v7256 = vunpack.c.l.s4 1983009808
    %v7257 = vunpack.c.0.s8 %v7256
    %v7258 = vperm.slane %v7252, %v7257
    %v7260 = vunpack.c.l.s4 1983009808
    %v7261 = vunpack.c.0.s8 %v7260
    %v7262 = vperm.slane %v7254, %v7261
    %v7263 = vrot.slane %v7258, 4
    %v7264 = vsel %vm560, %v7263, %v7246
    %v7265 = vrot.slane %v7246, 4
    %v7266 = vsel %vm560, %v7258, %v7265
    %v7268 = vunpack.c.l.s4 1934713408
    %v7269 = vunpack.c.0.s8 %v7268
    %v7270 = vperm.slane %v7264, %v7269
    %v7272 = vunpack.c.l.s4 1934713408
    %v7273 = vunpack.c.0.s8 %v7272
    %v7274 = vperm.slane %v7266, %v7273
    %v7275 = vrot.slane %v7262, 4
    %v7276 = vsel %vm560, %v7275, %v7250
    %v7277 = vrot.slane %v7250, 4
    %v7278 = vsel %vm560, %v7262, %v7277
    %v7280 = vunpack.c.l.s4 1934713408
    %v7281 = vunpack.c.0.s8 %v7280
    %v7282 = vperm.slane %v7276, %v7281
    %v7284 = vunpack.c.l.s4 1934713408
    %v7285 = vunpack.c.0.s8 %v7284
    %v7286 = vperm.slane %v7278, %v7285
    %v7287 = vrot.slane %v7270, 4
    %v7288 = vsel %vm560, 0.0, %v7287
    %v7289 = vrot.slane %v7274, 4
    %v7290 = vsel %vm560, 0.0, %v7289
    %v7291 = vrot.slane %v7282, 4
    %v7292 = vsel %vm560, 0.0, %v7291
    %v7293 = vrot.slane %v7286, 4
    %v7294 = vsel %vm560, 0.0, %v7293
    %v7295 = vrot.slane %v7151, 4
    %v7296 = vsel %vm560, %v7295, %v7095
    %v7297 = vrot.slane %v7095, 4
    %v7298 = vsel %vm560, %v7151, %v7297
    %v7300 = vunpack.c.l.s4 1983009808
    %v7301 = vunpack.c.0.s8 %v7300
    %v7302 = vperm.slane %v7296, %v7301
    %v7304 = vunpack.c.l.s4 1983009808
    %v7305 = vunpack.c.0.s8 %v7304
    %v7306 = vperm.slane %v7298, %v7305
    %v7307 = vrot.slane %v7179, 4
    %v7308 = vsel %vm560, %v7307, %v7123
    %v7309 = vrot.slane %v7123, 4
    %v7310 = vsel %vm560, %v7179, %v7309
    %v7312 = vunpack.c.l.s4 1983009808
    %v7313 = vunpack.c.0.s8 %v7312
    %v7314 = vperm.slane %v7308, %v7313
    %v7316 = vunpack.c.l.s4 1983009808
    %v7317 = vunpack.c.0.s8 %v7316
    %v7318 = vperm.slane %v7310, %v7317
    %v7319 = vrot.slane %v7314, 4
    %v7320 = vsel %vm560, %v7319, %v7302
    %v7321 = vrot.slane %v7302, 4
    %v7322 = vsel %vm560, %v7314, %v7321
    %v7324 = vunpack.c.l.s4 1934713408
    %v7325 = vunpack.c.0.s8 %v7324
    %v7326 = vperm.slane %v7320, %v7325
    %v7328 = vunpack.c.l.s4 1934713408
    %v7329 = vunpack.c.0.s8 %v7328
    %v7330 = vperm.slane %v7322, %v7329
    %v7331 = vrot.slane %v7318, 4
    %v7332 = vsel %vm560, %v7331, %v7306
    %v7333 = vrot.slane %v7306, 4
    %v7334 = vsel %vm560, %v7318, %v7333
    %v7336 = vunpack.c.l.s4 1934713408
    %v7337 = vunpack.c.0.s8 %v7336
    %v7338 = vperm.slane %v7332, %v7337
    %v7340 = vunpack.c.l.s4 1934713408
    %v7341 = vunpack.c.0.s8 %v7340
    %v7342 = vperm.slane %v7334, %v7341
    %v7343 = vrot.slane %v7326, 4
    %v7344 = vsel %vm560, 0.0, %v7343
    %v7345 = vrot.slane %v7330, 4
    %v7346 = vsel %vm560, 0.0, %v7345
    %v7347 = vrot.slane %v7338, 4
    %v7348 = vsel %vm560, 0.0, %v7347
    %v7349 = vrot.slane %v7342, 4
    %v7350 = vsel %vm560, 0.0, %v7349
    %v7351 = vrot.slane %v7153, 4
    %v7352 = vsel %vm560, %v7351, %v7097
    %v7353 = vrot.slane %v7097, 4
    %v7354 = vsel %vm560, %v7153, %v7353
    %v7356 = vunpack.c.l.s4 1983009808
    %v7357 = vunpack.c.0.s8 %v7356
    %v7358 = vperm.slane %v7352, %v7357
    %v7360 = vunpack.c.l.s4 1983009808
    %v7361 = vunpack.c.0.s8 %v7360
    %v7362 = vperm.slane %v7354, %v7361
    %v7363 = vrot.slane %v7181, 4
    %v7364 = vsel %vm560, %v7363, %v7125
    %v7365 = vrot.slane %v7125, 4
    %v7366 = vsel %vm560, %v7181, %v7365
    %v7368 = vunpack.c.l.s4 1983009808
    %v7369 = vunpack.c.0.s8 %v7368
    %v7370 = vperm.slane %v7364, %v7369
    %v7372 = vunpack.c.l.s4 1983009808
    %v7373 = vunpack.c.0.s8 %v7372
    %v7374 = vperm.slane %v7366, %v7373
    %v7375 = vrot.slane %v7370, 4
    %v7376 = vsel %vm560, %v7375, %v7358
    %v7377 = vrot.slane %v7358, 4
    %v7378 = vsel %vm560, %v7370, %v7377
    %v7380 = vunpack.c.l.s4 1934713408
    %v7381 = vunpack.c.0.s8 %v7380
    %v7382 = vperm.slane %v7376, %v7381
    %v7384 = vunpack.c.l.s4 1934713408
    %v7385 = vunpack.c.0.s8 %v7384
    %v7386 = vperm.slane %v7378, %v7385
    %v7387 = vrot.slane %v7374, 4
    %v7388 = vsel %vm560, %v7387, %v7362
    %v7389 = vrot.slane %v7362, 4
    %v7390 = vsel %vm560, %v7374, %v7389
    %v7392 = vunpack.c.l.s4 1934713408
    %v7393 = vunpack.c.0.s8 %v7392
    %v7394 = vperm.slane %v7388, %v7393
    %v7396 = vunpack.c.l.s4 1934713408
    %v7397 = vunpack.c.0.s8 %v7396
    %v7398 = vperm.slane %v7390, %v7397
    %v7399 = vrot.slane %v7382, 4
    %v7400 = vsel %vm560, 0.0, %v7399
    %v7401 = vrot.slane %v7386, 4
    %v7402 = vsel %vm560, 0.0, %v7401
    %v7403 = vrot.slane %v7394, 4
    %v7404 = vsel %vm560, 0.0, %v7403
    %v7405 = vrot.slane %v7398, 4
    %v7406 = vsel %vm560, 0.0, %v7405
    %v7407 = vsel %vm560, %v7233, %v7214
    %v7409 = vunpack.c.l.s4 1983009808
    %v7410 = vunpack.c.0.s8 %v7409
    %v7411 = vperm.slane %v7407, %v7410
    %v7412 = vrot.slane %v7234, 4
    %v7413 = vsel %vm560, %v7412, %v7232
    %v7415 = vunpack.c.l.s4 1983009808
    %v7416 = vunpack.c.0.s8 %v7415
    %v7417 = vperm.slane %v7413, %v7416
    %v7418 = vsel %vm560, %v7237, %v7226
    %v7420 = vunpack.c.l.s4 1983009808
    %v7421 = vunpack.c.0.s8 %v7420
    %v7422 = vperm.slane %v7418, %v7421
    %v7423 = vrot.slane %v7238, 4
    %v7424 = vsel %vm560, %v7423, %v7236
    %v7426 = vunpack.c.l.s4 1983009808
    %v7427 = vunpack.c.0.s8 %v7426
    %v7428 = vperm.slane %v7424, %v7427
    %v7429 = vrot.slane %v7417, 4
    %v7430 = vsel %vm560, %v7429, %v7411
    %v7431 = vrot.slane %v7411, 4
    %v7432 = vsel %vm560, %v7417, %v7431
    %v7434 = vunpack.c.l.s4 1934713408
    %v7435 = vunpack.c.0.s8 %v7434
    %v7436 = vperm.slane %v7430, %v7435
    %v7438 = vunpack.c.l.s4 1934713408
    %v7439 = vunpack.c.0.s8 %v7438
    %v7440 = vperm.slane %v7432, %v7439
    %v7441 = vrot.slane %v7428, 4
    %v7442 = vsel %vm560, %v7441, %v7422
    %v7443 = vrot.slane %v7422, 4
    %v7444 = vsel %vm560, %v7428, %v7443
    %v7446 = vunpack.c.l.s4 1934713408
    %v7447 = vunpack.c.0.s8 %v7446
    %v7448 = vperm.slane %v7442, %v7447
    %v7450 = vunpack.c.l.s4 1934713408
    %v7451 = vunpack.c.0.s8 %v7450
    %v7452 = vperm.slane %v7444, %v7451
    %v7453 = vrot.slane %v7448, 4
    %v7454 = vsel %vm560, %v7453, %v7436
    %v7455 = vrot.slane %v7436, 4
    %v7456 = vsel %vm560, %v7448, %v7455
    %v7457 = vrot.slane %v7452, 4
    %v7458 = vsel %vm560, %v7457, %v7440
    %v7459 = vrot.slane %v7440, 4
    %v7460 = vsel %vm560, %v7452, %v7459
    %v7461 = vsel %vm560, %v7289, %v7270
    %v7463 = vunpack.c.l.s4 1983009808
    %v7464 = vunpack.c.0.s8 %v7463
    %v7465 = vperm.slane %v7461, %v7464
    %v7466 = vrot.slane %v7290, 4
    %v7467 = vsel %vm560, %v7466, %v7288
    %v7469 = vunpack.c.l.s4 1983009808
    %v7470 = vunpack.c.0.s8 %v7469
    %v7471 = vperm.slane %v7467, %v7470
    %v7472 = vsel %vm560, %v7293, %v7282
    %v7474 = vunpack.c.l.s4 1983009808
    %v7475 = vunpack.c.0.s8 %v7474
    %v7476 = vperm.slane %v7472, %v7475
    %v7477 = vrot.slane %v7294, 4
    %v7478 = vsel %vm560, %v7477, %v7292
    %v7480 = vunpack.c.l.s4 1983009808
    %v7481 = vunpack.c.0.s8 %v7480
    %v7482 = vperm.slane %v7478, %v7481
    %v7483 = vrot.slane %v7471, 4
    %v7484 = vsel %vm560, %v7483, %v7465
    %v7485 = vrot.slane %v7465, 4
    %v7486 = vsel %vm560, %v7471, %v7485
    %v7488 = vunpack.c.l.s4 1934713408
    %v7489 = vunpack.c.0.s8 %v7488
    %v7490 = vperm.slane %v7484, %v7489
    %v7492 = vunpack.c.l.s4 1934713408
    %v7493 = vunpack.c.0.s8 %v7492
    %v7494 = vperm.slane %v7486, %v7493
    %v7495 = vrot.slane %v7482, 4
    %v7496 = vsel %vm560, %v7495, %v7476
    %v7497 = vrot.slane %v7476, 4
    %v7498 = vsel %vm560, %v7482, %v7497
    %v7500 = vunpack.c.l.s4 1934713408
    %v7501 = vunpack.c.0.s8 %v7500
    %v7502 = vperm.slane %v7496, %v7501
    %v7504 = vunpack.c.l.s4 1934713408
    %v7505 = vunpack.c.0.s8 %v7504
    %v7506 = vperm.slane %v7498, %v7505
    %v7507 = vrot.slane %v7502, 4
    %v7508 = vsel %vm560, %v7507, %v7490
    %v7509 = vrot.slane %v7490, 4
    %v7510 = vsel %vm560, %v7502, %v7509
    %v7511 = vrot.slane %v7506, 4
    %v7512 = vsel %vm560, %v7511, %v7494
    %v7513 = vrot.slane %v7494, 4
    %v7514 = vsel %vm560, %v7506, %v7513
    %v7515 = vsel %vm560, %v7345, %v7326
    %v7517 = vunpack.c.l.s4 1983009808
    %v7518 = vunpack.c.0.s8 %v7517
    %v7519 = vperm.slane %v7515, %v7518
    %v7520 = vrot.slane %v7346, 4
    %v7521 = vsel %vm560, %v7520, %v7344
    %v7523 = vunpack.c.l.s4 1983009808
    %v7524 = vunpack.c.0.s8 %v7523
    %v7525 = vperm.slane %v7521, %v7524
    %v7526 = vsel %vm560, %v7349, %v7338
    %v7528 = vunpack.c.l.s4 1983009808
    %v7529 = vunpack.c.0.s8 %v7528
    %v7530 = vperm.slane %v7526, %v7529
    %v7531 = vrot.slane %v7350, 4
    %v7532 = vsel %vm560, %v7531, %v7348
    %v7534 = vunpack.c.l.s4 1983009808
    %v7535 = vunpack.c.0.s8 %v7534
    %v7536 = vperm.slane %v7532, %v7535
    %v7537 = vrot.slane %v7525, 4
    %v7538 = vsel %vm560, %v7537, %v7519
    %v7539 = vrot.slane %v7519, 4
    %v7540 = vsel %vm560, %v7525, %v7539
    %v7542 = vunpack.c.l.s4 1934713408
    %v7543 = vunpack.c.0.s8 %v7542
    %v7544 = vperm.slane %v7538, %v7543
    %v7546 = vunpack.c.l.s4 1934713408
    %v7547 = vunpack.c.0.s8 %v7546
    %v7548 = vperm.slane %v7540, %v7547
    %v7549 = vrot.slane %v7536, 4
    %v7550 = vsel %vm560, %v7549, %v7530
    %v7551 = vrot.slane %v7530, 4
    %v7552 = vsel %vm560, %v7536, %v7551
    %v7554 = vunpack.c.l.s4 1934713408
    %v7555 = vunpack.c.0.s8 %v7554
    %v7556 = vperm.slane %v7550, %v7555
    %v7558 = vunpack.c.l.s4 1934713408
    %v7559 = vunpack.c.0.s8 %v7558
    %v7560 = vperm.slane %v7552, %v7559
    %v7561 = vrot.slane %v7556, 4
    %v7562 = vsel %vm560, %v7561, %v7544
    %v7563 = vrot.slane %v7544, 4
    %v7564 = vsel %vm560, %v7556, %v7563
    %v7565 = vrot.slane %v7560, 4
    %v7566 = vsel %vm560, %v7565, %v7548
    %v7567 = vrot.slane %v7548, 4
    %v7568 = vsel %vm560, %v7560, %v7567
    %v7569 = vsel %vm560, %v7401, %v7382
    %v7571 = vunpack.c.l.s4 1983009808
    %v7572 = vunpack.c.0.s8 %v7571
    %v7573 = vperm.slane %v7569, %v7572
    %v7574 = vrot.slane %v7402, 4
    %v7575 = vsel %vm560, %v7574, %v7400
    %v7577 = vunpack.c.l.s4 1983009808
    %v7578 = vunpack.c.0.s8 %v7577
    %v7579 = vperm.slane %v7575, %v7578
    %v7580 = vsel %vm560, %v7405, %v7394
    %v7582 = vunpack.c.l.s4 1983009808
    %v7583 = vunpack.c.0.s8 %v7582
    %v7584 = vperm.slane %v7580, %v7583
    %v7585 = vrot.slane %v7406, 4
    %v7586 = vsel %vm560, %v7585, %v7404
    %v7588 = vunpack.c.l.s4 1983009808
    %v7589 = vunpack.c.0.s8 %v7588
    %v7590 = vperm.slane %v7586, %v7589
    %v7591 = vrot.slane %v7579, 4
    %v7592 = vsel %vm560, %v7591, %v7573
    %v7593 = vrot.slane %v7573, 4
    %v7594 = vsel %vm560, %v7579, %v7593
    %v7596 = vunpack.c.l.s4 1934713408
    %v7597 = vunpack.c.0.s8 %v7596
    %v7598 = vperm.slane %v7592, %v7597
    %v7600 = vunpack.c.l.s4 1934713408
    %v7601 = vunpack.c.0.s8 %v7600
    %v7602 = vperm.slane %v7594, %v7601
    %v7603 = vrot.slane %v7590, 4
    %v7604 = vsel %vm560, %v7603, %v7584
    %v7605 = vrot.slane %v7584, 4
    %v7606 = vsel %vm560, %v7590, %v7605
    %v7608 = vunpack.c.l.s4 1934713408
    %v7609 = vunpack.c.0.s8 %v7608
    %v7610 = vperm.slane %v7604, %v7609
    %v7612 = vunpack.c.l.s4 1934713408
    %v7613 = vunpack.c.0.s8 %v7612
    %v7614 = vperm.slane %v7606, %v7613
    %v7615 = vrot.slane %v7610, 4
    %v7616 = vsel %vm560, %v7615, %v7598
    %v7617 = vrot.slane %v7598, 4
    %v7618 = vsel %vm560, %v7610, %v7617
    %v7619 = vrot.slane %v7614, 4
    %v7620 = vsel %vm560, %v7619, %v7602
    %v7621 = vrot.slane %v7602, 4
    %v7622 = vsel %vm560, %v7614, %v7621
    %7627 = vrot.lane.b32.xlu0 %v7456, 32
    %v7628 = vpop.permute.xlu0 %7627
    %7629 = vrot.lane.b32.xlu0 %v7510, 32
    %v7630 = vpop.permute.xlu0 %7629
    %7631 = vrot.lane.b32.xlu0 %v7564, 32
    %v7632 = vpop.permute.xlu0 %7631
    %7633 = vrot.lane.b32.xlu0 %v7618, 32
    %v7634 = vpop.permute.xlu0 %7633
    %7643 = vrot.lane.b32.xlu0 %v7458, 64
    %v7644 = vpop.permute.xlu0 %7643
    %7645 = vrot.lane.b32.xlu0 %v7512, 64
    %v7646 = vpop.permute.xlu0 %7645
    %7647 = vrot.lane.b32.xlu0 %v7566, 64
    %v7648 = vpop.permute.xlu0 %7647
    %7649 = vrot.lane.b32.xlu0 %v7620, 64
    %v7650 = vpop.permute.xlu0 %7649
    %7659 = vrot.lane.b32.xlu0 %v7460, 96
    %v7660 = vpop.permute.xlu0 %7659
    %7661 = vrot.lane.b32.xlu0 %v7514, 96
    %v7662 = vpop.permute.xlu0 %7661
    %7663 = vrot.lane.b32.xlu0 %v7568, 96
    %v7664 = vpop.permute.xlu0 %7663
    %7665 = vrot.lane.b32.xlu0 %v7622, 96
    %v7666 = vpop.permute.xlu0 %7665
    %v7671 = vsel %vm2018, %v7454, %v7628
    %v7672 = vsel %vm2018, %v7508, %v7630
    %v7673 = vsel %vm2018, %v7562, %v7632
    %v7674 = vsel %vm2018, %v7616, %v7634
    %v7675 = vsel %vm143, %v7671, %v7644
    %v7676 = vsel %vm143, %v7672, %v7646
    %v7677 = vsel %vm143, %v7673, %v7648
    %v7678 = vsel %vm143, %v7674, %v7650
    %v7679 = vsel %vm3162, %v7675, %v7660
    %v7680 = vsel %vm3162, %v7676, %v7662
    %v7681 = vsel %vm3162, %v7677, %v7664
    %v7682 = vsel %vm3162, %v7678, %v7666
    %v7683 = vpack.c.bf16 %v7680, %v7679
    %v7684 = vpack.c.bf16 %v7682, %v7681
    %s7685 = scalar_lea.vmem [#allocation2], 64
    %v7686 = vld [vmem:[%s7685] sm:$0xf]
    %v7687 = vld [vmem:[%s7685 + $0x4] sm:$0xf]
    %v7688 = vld [vmem:[%s7685 + $0x8] sm:$0xf]
    %v7689 = vld [vmem:[%s7685 + $0xc] sm:$0xf]
    %v7690 = vld [vmem:[%s7685 + $0x10] sm:$0xf]
    %v7691 = vld [vmem:[%s7685 + $0x14] sm:$0xf]
    %v7692 = vld [vmem:[%s7685 + $0x18] sm:$0xf]
    %v7693 = vld [vmem:[%s7685 + $0x1c] sm:$0xf]
    %v7694 = vld [vmem:[%s7685 + $0x20] sm:$0xf]
    %v7695 = vld [vmem:[%s7685 + $0x24] sm:$0xf]
    %v7696 = vld [vmem:[%s7685 + $0x28] sm:$0xf]
    %v7697 = vld [vmem:[%s7685 + $0x2c] sm:$0xf]
    %v7698 = vld [vmem:[%s7685 + $0x30] sm:$0xf]
    %v7699 = vld [vmem:[%s7685 + $0x34] sm:$0xf]
    %v7700 = vld [vmem:[%s7685 + $0x38] sm:$0xf]
    %v7701 = vld [vmem:[%s7685 + $0x3c] sm:$0xf]
    %s7702 = scalar_lea.vmem %s9, 1
    %v7703 = vld [vmem:[%s7702] sm:$0x1]
    %v7705 = vperm.slane %v7703, 0
    %v7723 = vunpack.c.l.b16 %v7686
    %v7724 = vunpack.c.l.b16 %v7687
    %v7725 = vunpack.c.l.b16 %v7688
    %v7726 = vunpack.c.l.b16 %v7689
    %v7727 = vunpack.c.l.b16 %v7690
    %v7728 = vunpack.c.l.b16 %v7691
    %v7729 = vunpack.c.l.b16 %v7692
    %v7730 = vunpack.c.l.b16 %v7693
    %v7731 = vunpack.c.l.b16 %v7694
    %v7732 = vunpack.c.l.b16 %v7695
    %v7733 = vunpack.c.l.b16 %v7696
    %v7734 = vunpack.c.l.b16 %v7697
    %v7735 = vunpack.c.l.b16 %v7698
    %v7736 = vunpack.c.l.b16 %v7699
    %v7737 = vunpack.c.l.b16 %v7700
    %v7738 = vunpack.c.l.b16 %v7701
    %v7739 = vpack.c.b16 %v7724, %v7723
    %v7740 = vpack.c.b16 %v7726, %v7725
    %v7741 = vpack.c.b16 %v7728, %v7727
    %v7742 = vpack.c.b16 %v7730, %v7729
    %v7743 = vpack.c.b16 %v7732, %v7731
    %v7744 = vpack.c.b16 %v7734, %v7733
    %v7745 = vpack.c.b16 %v7736, %v7735
    %v7746 = vpack.c.b16 %v7738, %v7737
    %7755 = vmatpush.bf16.msra.mxu0 %v7746
    %7756 = vmatpush.bf16.msra.mxu0 %v7745
    %7757 = vmatpush.bf16.msra.mxu0 %v7744
    %7758 = vmatpush.bf16.msra.mxu0 %v7743
    %7759 = vmatpush.bf16.msra.mxu0 %v7742
    %7760 = vmatpush.bf16.msra.mxu0 %v7741
    %7761 = vmatpush.bf16.msra.mxu0 %v7740
    %7762 = vmatpush.bf16.msra.mxu0 %v7739
    %7763 = vmatmul.bf16.gmra.mxu0 %v7683
    %v7764 = vpop.f32.mrf.mxu0
    %v7765 = vadd.f32 %v7705, %v7764
    %v7766 = vpop.f32.mrf.mxu0
    %v7767 = vadd.f32 %v7705, %v7766
    %7768 = vmatmul.bf16.gmra.mxu0 %v7684
    %v7769 = vpop.f32.mrf.mxu0
    %v7770 = vadd.f32 %v7705, %v7769
    %v7771 = vpop.f32.mrf.mxu0
    %v7772 = vadd.f32 %v7705, %v7771
    %7773 = vdwg.mxu0
    %v7774 = vadd.f32 %v4696, %v7765
    %v7775 = vadd.f32 %v4697, %v7767
    %v7776 = vadd.f32 %v4698, %v7770
    %v7777 = vadd.f32 %v4699, %v7772
    %s7778 = scalar_lea.vmem %s10, 1
    %v7779 = vld [vmem:[%s7778] sm:$0x1]
    %s7780 = scalar_lea.vmem %s11, 1
    %v7781 = vld [vmem:[%s7780] sm:$0x1]
    %7782 = vadd.xlane.f32.xlu0 %v7774
    %v7783 = vpop.xlane.xlu0 %7782
    %7784 = vadd.xlane.f32.xlu0 %v7775
    %v7785 = vpop.xlane.xlu0 %7784
    %7786 = vadd.xlane.f32.xlu0 %v7776
    %v7787 = vpop.xlane.xlu0 %7786
    %7788 = vadd.xlane.f32.xlu0 %v7777
    %v7789 = vpop.xlane.xlu0 %7788
    %v7790 = vmul.f32 %v7783, %v193
    %v7791 = vmul.f32 %v7785, %v193
    %v7792 = vmul.f32 %v7787, %v193
    %v7793 = vmul.f32 %v7789, %v193
    %v7794 = vmul.f32 %v7774, %v7774
    %v7795 = vmul.f32 %v7775, %v7775
    %v7796 = vmul.f32 %v7776, %v7776
    %v7797 = vmul.f32 %v7777, %v7777
    %7798 = vadd.xlane.f32.xlu0 %v7794
    %v7799 = vpop.xlane.xlu0 %7798
    %7800 = vadd.xlane.f32.xlu0 %v7795
    %v7801 = vpop.xlane.xlu0 %7800
    %7802 = vadd.xlane.f32.xlu0 %v7796
    %v7803 = vpop.xlane.xlu0 %7802
    %7804 = vadd.xlane.f32.xlu0 %v7797
    %v7805 = vpop.xlane.xlu0 %7804
    %v7806 = vmul.f32 %v7799, %v193
    %v7807 = vmul.f32 %v7801, %v193
    %v7808 = vmul.f32 %v7803, %v193
    %v7809 = vmul.f32 %v7805, %v193
    %v7810 = vmul.f32 %v7790, %v7790
    %v7811 = vmul.f32 %v7791, %v7791
    %v7812 = vmul.f32 %v7792, %v7792
    %v7813 = vmul.f32 %v7793, %v7793
    %v7814 = vsub.f32 %v7806, %v7810
    %v7815 = vsub.f32 %v7807, %v7811
    %v7816 = vsub.f32 %v7808, %v7812
    %v7817 = vsub.f32 %v7809, %v7813
    %v7818 = vmax.f32 %v7814, 0.0
    %v7819 = vmax.f32 %v7815, 0.0
    %v7820 = vmax.f32 %v7816, 0.0
    %v7821 = vmax.f32 %v7817, 0.0
    %v7822 = vsub.f32 %v7774, %v7790
    %v7823 = vsub.f32 %v7775, %v7791
    %v7824 = vsub.f32 %v7776, %v7792
    %v7825 = vsub.f32 %v7777, %v7793
    %v7826 = vadd.f32 %v7818, 1e-05
    %v7827 = vadd.f32 %v7819, 1e-05
    %v7828 = vadd.f32 %v7820, 1e-05
    %v7829 = vadd.f32 %v7821, 1e-05
    %v7830 = vrsqrt.pop %v7826
    %v7831 = vmul.f32 %v7830, %v7826
    %v7832 = vmul.f32 %v7831, %v7830
    %v7833 = vmul.f32 0.5, %v7832
    %v7834 = vsub.f32 1.5, %v7833
    %v7835 = vmul.f32 %v7830, %v7834
    %vm7836 = vweird.f32 %v7826
    %vm7837 = vweird.f32 %v7830
    %vm7838 = vmor %vm7836, %vm7837
    %v7839 = vsel %vm7838, %v7830, %v7835
    %v7840 = vrsqrt.pop %v7827
    %v7841 = vmul.f32 %v7840, %v7827
    %v7842 = vmul.f32 %v7841, %v7840
    %v7843 = vmul.f32 0.5, %v7842
    %v7844 = vsub.f32 1.5, %v7843
    %v7845 = vmul.f32 %v7840, %v7844
    %vm7846 = vweird.f32 %v7827
    %vm7847 = vweird.f32 %v7840
    %vm7848 = vmor %vm7846, %vm7847
    %v7849 = vsel %vm7848, %v7840, %v7845
    %v7850 = vrsqrt.pop %v7828
    %v7851 = vmul.f32 %v7850, %v7828
    %v7852 = vmul.f32 %v7851, %v7850
    %v7853 = vmul.f32 0.5, %v7852
    %v7854 = vsub.f32 1.5, %v7853
    %v7855 = vmul.f32 %v7850, %v7854
    %vm7856 = vweird.f32 %v7828
    %vm7857 = vweird.f32 %v7850
    %vm7858 = vmor %vm7856, %vm7857
    %v7859 = vsel %vm7858, %v7850, %v7855
    %v7860 = vrsqrt.pop %v7829
    %v7861 = vmul.f32 %v7860, %v7829
    %v7862 = vmul.f32 %v7861, %v7860
    %v7863 = vmul.f32 0.5, %v7862
    %v7864 = vsub.f32 1.5, %v7863
    %v7865 = vmul.f32 %v7860, %v7864
    %vm7866 = vweird.f32 %v7829
    %vm7867 = vweird.f32 %v7860
    %vm7868 = vmor %vm7866, %vm7867
    %v7869 = vsel %vm7868, %v7860, %v7865
    %v7870 = vmul.f32 %v7822, %v7839
    %v7871 = vmul.f32 %v7823, %v7849
    %v7872 = vmul.f32 %v7824, %v7859
    %v7873 = vmul.f32 %v7825, %v7869
    %v7875 = vperm.slane %v7779, 0
    %v7877 = vmul.f32 %v7870, %v7875
    %v7878 = vmul.f32 %v7871, %v7875
    %v7879 = vmul.f32 %v7872, %v7875
    %v7880 = vmul.f32 %v7873, %v7875
    %v7882 = vperm.slane %v7781, 0
    %v7884 = vadd.f32 %v7877, %v7882
    %v7885 = vadd.f32 %v7878, %v7882
    %v7886 = vadd.f32 %v7879, %v7882
    %v7887 = vadd.f32 %v7880, %v7882
    %v7888 = vpack.c.bf16 %v7885, %v7884
    %v7889 = vpack.c.bf16 %v7887, %v7886
    %s7890 = scalar_lea.vmem %s12, 256
    %v7891 = vld [vmem:[%s7890] sm:$0xff]
    %v7892 = vld [vmem:[%s7890 + $0x8] sm:$0xff]
    %v7893 = vld [vmem:[%s7890 + $0x10] sm:$0xff]
    %v7894 = vld [vmem:[%s7890 + $0x18] sm:$0xff]
    %v7895 = vld [vmem:[%s7890 + $0x20] sm:$0xff]
    %v7896 = vld [vmem:[%s7890 + $0x28] sm:$0xff]
    %v7897 = vld [vmem:[%s7890 + $0x30] sm:$0xff]
    %v7898 = vld [vmem:[%s7890 + $0x38] sm:$0xff]
    %v7899 = vld [vmem:[%s7890 + $0x40] sm:$0xff]
    %v7900 = vld [vmem:[%s7890 + $0x48] sm:$0xff]
    %v7901 = vld [vmem:[%s7890 + $0x50] sm:$0xff]
    %v7902 = vld [vmem:[%s7890 + $0x58] sm:$0xff]
    %v7903 = vld [vmem:[%s7890 + $0x60] sm:$0xff]
    %v7904 = vld [vmem:[%s7890 + $0x68] sm:$0xff]
    %v7905 = vld [vmem:[%s7890 + $0x70] sm:$0xff]
    %v7906 = vld [vmem:[%s7890 + $0x78] sm:$0xff]
    %v7907 = vld [vmem:[%s7890 + $0x80] sm:$0xff]
    %v7908 = vld [vmem:[%s7890 + $0x88] sm:$0xff]
    %v7909 = vld [vmem:[%s7890 + $0x90] sm:$0xff]
    %v7910 = vld [vmem:[%s7890 + $0x98] sm:$0xff]
    %v7911 = vld [vmem:[%s7890 + $0xa0] sm:$0xff]
    %v7912 = vld [vmem:[%s7890 + $0xa8] sm:$0xff]
    %v7913 = vld [vmem:[%s7890 + $0xb0] sm:$0xff]
    %v7914 = vld [vmem:[%s7890 + $0xb8] sm:$0xff]
    %v7915 = vld [vmem:[%s7890 + $0xc0] sm:$0xff]
    %v7916 = vld [vmem:[%s7890 + $0xc8] sm:$0xff]
    %v7917 = vld [vmem:[%s7890 + $0xd0] sm:$0xff]
    %v7918 = vld [vmem:[%s7890 + $0xd8] sm:$0xff]
    %v7919 = vld [vmem:[%s7890 + $0xe0] sm:$0xff]
    %v7920 = vld [vmem:[%s7890 + $0xe8] sm:$0xff]
    %v7921 = vld [vmem:[%s7890 + $0xf0] sm:$0xff]
    %v7922 = vld [vmem:[%s7890 + $0xf8] sm:$0xff]
    %s7923 = scalar_lea.vmem %s13, 4
    %v7924 = vld [vmem:[%s7923] sm:$0xf]
    %v7926 = vperm.slane %v7924, 0
    %v7927 = vperm.slane %v7924, 1
    %v7928 = vperm.slane %v7924, 2
    %v7929 = vperm.slane %v7924, 3
    %v7966 = vunpack.c.l.b16 %v7891
    %v7967 = vunpack.c.h.b16 %v7891
    %v7968 = vunpack.c.l.b16 %v7892
    %v7969 = vunpack.c.h.b16 %v7892
    %v7970 = vunpack.c.l.b16 %v7893
    %v7971 = vunpack.c.h.b16 %v7893
    %v7972 = vunpack.c.l.b16 %v7894
    %v7973 = vunpack.c.h.b16 %v7894
    %v7974 = vunpack.c.l.b16 %v7895
    %v7975 = vunpack.c.h.b16 %v7895
    %v7976 = vunpack.c.l.b16 %v7896
    %v7977 = vunpack.c.h.b16 %v7896
    %v7978 = vunpack.c.l.b16 %v7897
    %v7979 = vunpack.c.h.b16 %v7897
    %v7980 = vunpack.c.l.b16 %v7898
    %v7981 = vunpack.c.h.b16 %v7898
    %v7982 = vunpack.c.l.b16 %v7899
    %v7983 = vunpack.c.h.b16 %v7899
    %v7984 = vunpack.c.l.b16 %v7900
    %v7985 = vunpack.c.h.b16 %v7900
    %v7986 = vunpack.c.l.b16 %v7901
    %v7987 = vunpack.c.h.b16 %v7901
    %v7988 = vunpack.c.l.b16 %v7902
    %v7989 = vunpack.c.h.b16 %v7902
    %v7990 = vunpack.c.l.b16 %v7903
    %v7991 = vunpack.c.h.b16 %v7903
    %v7992 = vunpack.c.l.b16 %v7904
    %v7993 = vunpack.c.h.b16 %v7904
    %v7994 = vunpack.c.l.b16 %v7905
    %v7995 = vunpack.c.h.b16 %v7905
    %v7996 = vunpack.c.l.b16 %v7906
    %v7997 = vunpack.c.h.b16 %v7906
    %v7998 = vunpack.c.l.b16 %v7907
    %v7999 = vunpack.c.h.b16 %v7907
    %v8000 = vunpack.c.l.b16 %v7908
    %v8001 = vunpack.c.h.b16 %v7908
    %v8002 = vunpack.c.l.b16 %v7909
    %v8003 = vunpack.c.h.b16 %v7909
    %v8004 = vunpack.c.l.b16 %v7910
    %v8005 = vunpack.c.h.b16 %v7910
    %v8006 = vunpack.c.l.b16 %v7911
    %v8007 = vunpack.c.h.b16 %v7911
    %v8008 = vunpack.c.l.b16 %v7912
    %v8009 = vunpack.c.h.b16 %v7912
    %v8010 = vunpack.c.l.b16 %v7913
    %v8011 = vunpack.c.h.b16 %v7913
    %v8012 = vunpack.c.l.b16 %v7914
    %v8013 = vunpack.c.h.b16 %v7914
    %v8014 = vunpack.c.l.b16 %v7915
    %v8015 = vunpack.c.h.b16 %v7915
    %v8016 = vunpack.c.l.b16 %v7916
    %v8017 = vunpack.c.h.b16 %v7916
    %v8018 = vunpack.c.l.b16 %v7917
    %v8019 = vunpack.c.h.b16 %v7917
    %v8020 = vunpack.c.l.b16 %v7918
    %v8021 = vunpack.c.h.b16 %v7918
    %v8022 = vunpack.c.l.b16 %v7919
    %v8023 = vunpack.c.h.b16 %v7919
    %v8024 = vunpack.c.l.b16 %v7920
    %v8025 = vunpack.c.h.b16 %v7920
    %v8026 = vunpack.c.l.b16 %v7921
    %v8027 = vunpack.c.h.b16 %v7921
    %v8028 = vunpack.c.l.b16 %v7922
    %v8029 = vunpack.c.h.b16 %v7922
    %v8030 = vpack.c.b16 %v7970, %v7966
    %v8031 = vpack.c.b16 %v7971, %v7967
    %v8032 = vpack.c.b16 %v7972, %v7968
    %v8033 = vpack.c.b16 %v7973, %v7969
    %v8034 = vpack.c.b16 %v7978, %v7974
    %v8035 = vpack.c.b16 %v7979, %v7975
    %v8036 = vpack.c.b16 %v7980, %v7976
    %v8037 = vpack.c.b16 %v7981, %v7977
    %v8038 = vpack.c.b16 %v7986, %v7982
    %v8039 = vpack.c.b16 %v7987, %v7983
    %v8040 = vpack.c.b16 %v7988, %v7984
    %v8041 = vpack.c.b16 %v7989, %v7985
    %v8042 = vpack.c.b16 %v7994, %v7990
    %v8043 = vpack.c.b16 %v7995, %v7991
    %v8044 = vpack.c.b16 %v7996, %v7992
    %v8045 = vpack.c.b16 %v7997, %v7993
    %v8046 = vpack.c.b16 %v8002, %v7998
    %v8047 = vpack.c.b16 %v8003, %v7999
    %v8048 = vpack.c.b16 %v8004, %v8000
    %v8049 = vpack.c.b16 %v8005, %v8001
    %v8050 = vpack.c.b16 %v8010, %v8006
    %v8051 = vpack.c.b16 %v8011, %v8007
    %v8052 = vpack.c.b16 %v8012, %v8008
    %v8053 = vpack.c.b16 %v8013, %v8009
    %v8054 = vpack.c.b16 %v8018, %v8014
    %v8055 = vpack.c.b16 %v8019, %v8015
    %v8056 = vpack.c.b16 %v8020, %v8016
    %v8057 = vpack.c.b16 %v8021, %v8017
    %v8058 = vpack.c.b16 %v8026, %v8022
    %v8059 = vpack.c.b16 %v8027, %v8023
    %v8060 = vpack.c.b16 %v8028, %v8024
    %v8061 = vpack.c.b16 %v8029, %v8025
    %8094 = vmatpush.bf16.msra.mxu0 %v8058
    %8095 = vmatpush.bf16.msra.mxu0 %v8054
    %8096 = vmatpush.bf16.msra.mxu0 %v8050
    %8097 = vmatpush.bf16.msra.mxu0 %v8046
    %8098 = vmatpush.bf16.msra.mxu0 %v8042
    %8099 = vmatpush.bf16.msra.mxu0 %v8038
    %8100 = vmatpush.bf16.msra.mxu0 %v8034
    %8101 = vmatpush.bf16.msra.mxu0 %v8030
    %8102 = vmatmul.bf16.gmra.mxu0 %v7888
    %v8103 = vpop.f32.mrf.mxu0
    %v8104 = vadd.f32 %v7926, %v8103
    %v8105 = vpop.f32.mrf.mxu0
    %v8106 = vadd.f32 %v7926, %v8105
    %8107 = vmatmul.bf16.gmra.mxu0 %v7889
    %v8108 = vpop.f32.mrf.mxu0
    %v8109 = vadd.f32 %v7926, %v8108
    %v8110 = vpop.f32.mrf.mxu0
    %v8111 = vadd.f32 %v7926, %v8110
    %8112 = vdwg.mxu0
    %8113 = vmatpush.bf16.msra.mxu0 %v8059
    %8114 = vmatpush.bf16.msra.mxu0 %v8055
    %8115 = vmatpush.bf16.msra.mxu0 %v8051
    %8116 = vmatpush.bf16.msra.mxu0 %v8047
    %8117 = vmatpush.bf16.msra.mxu0 %v8043
    %8118 = vmatpush.bf16.msra.mxu0 %v8039
    %8119 = vmatpush.bf16.msra.mxu0 %v8035
    %8120 = vmatpush.bf16.msra.mxu0 %v8031
    %8121 = vmatmul.bf16.gmra.mxu0 %v7888
    %v8122 = vpop.f32.mrf.mxu0
    %v8123 = vadd.f32 %v7927, %v8122
    %v8124 = vpop.f32.mrf.mxu0
    %v8125 = vadd.f32 %v7927, %v8124
    %8126 = vmatmul.bf16.gmra.mxu0 %v7889
    %v8127 = vpop.f32.mrf.mxu0
    %v8128 = vadd.f32 %v7927, %v8127
    %v8129 = vpop.f32.mrf.mxu0
    %v8130 = vadd.f32 %v7927, %v8129
    %8131 = vdwg.mxu0
    %8132 = vmatpush.bf16.msra.mxu0 %v8060
    %8133 = vmatpush.bf16.msra.mxu0 %v8056
    %8134 = vmatpush.bf16.msra.mxu0 %v8052
    %8135 = vmatpush.bf16.msra.mxu0 %v8048
    %8136 = vmatpush.bf16.msra.mxu0 %v8044
    %8137 = vmatpush.bf16.msra.mxu0 %v8040
    %8138 = vmatpush.bf16.msra.mxu0 %v8036
    %8139 = vmatpush.bf16.msra.mxu0 %v8032
    %8140 = vmatmul.bf16.gmra.mxu0 %v7888
    %v8141 = vpop.f32.mrf.mxu0
    %v8142 = vadd.f32 %v7928, %v8141
    %v8143 = vpop.f32.mrf.mxu0
    %v8144 = vadd.f32 %v7928, %v8143
    %8145 = vmatmul.bf16.gmra.mxu0 %v7889
    %v8146 = vpop.f32.mrf.mxu0
    %v8147 = vadd.f32 %v7928, %v8146
    %v8148 = vpop.f32.mrf.mxu0
    %v8149 = vadd.f32 %v7928, %v8148
    %8150 = vdwg.mxu0
    %8151 = vmatpush.bf16.msra.mxu0 %v8061
    %8152 = vmatpush.bf16.msra.mxu0 %v8057
    %8153 = vmatpush.bf16.msra.mxu0 %v8053
    %8154 = vmatpush.bf16.msra.mxu0 %v8049
    %8155 = vmatpush.bf16.msra.mxu0 %v8045
    %8156 = vmatpush.bf16.msra.mxu0 %v8041
    %8157 = vmatpush.bf16.msra.mxu0 %v8037
    %8158 = vmatpush.bf16.msra.mxu0 %v8033
    %8159 = vmatmul.bf16.gmra.mxu0 %v7888
    %v8160 = vpop.f32.mrf.mxu0
    %v8161 = vadd.f32 %v7929, %v8160
    %v8162 = vpop.f32.mrf.mxu0
    %v8163 = vadd.f32 %v7929, %v8162
    %8164 = vmatmul.bf16.gmra.mxu0 %v7889
    %v8165 = vpop.f32.mrf.mxu0
    %v8166 = vadd.f32 %v7929, %v8165
    %v8167 = vpop.f32.mrf.mxu0
    %v8168 = vadd.f32 %v7929, %v8167
    %8169 = vdwg.mxu0
    %v8170 = vmul.f32 %v8104, 0.5
    %v8171 = vmul.f32 %v8123, 0.5
    %v8172 = vmul.f32 %v8142, 0.5
    %v8173 = vmul.f32 %v8161, 0.5
    %v8174 = vmul.f32 %v8106, 0.5
    %v8175 = vmul.f32 %v8125, 0.5
    %v8176 = vmul.f32 %v8144, 0.5
    %v8177 = vmul.f32 %v8163, 0.5
    %v8178 = vmul.f32 %v8109, 0.5
    %v8179 = vmul.f32 %v8128, 0.5
    %v8180 = vmul.f32 %v8147, 0.5
    %v8181 = vmul.f32 %v8166, 0.5
    %v8182 = vmul.f32 %v8111, 0.5
    %v8183 = vmul.f32 %v8130, 0.5
    %v8184 = vmul.f32 %v8149, 0.5
    %v8185 = vmul.f32 %v8168, 0.5
    %v8186 = vmul.f32 %v8104, 0.70710677
    %v8187 = vmul.f32 %v8123, 0.70710677
    %v8188 = vmul.f32 %v8142, 0.70710677
    %v8189 = vmul.f32 %v8161, 0.70710677
    %v8190 = vmul.f32 %v8106, 0.70710677
    %v8191 = vmul.f32 %v8125, 0.70710677
    %v8192 = vmul.f32 %v8144, 0.70710677
    %v8193 = vmul.f32 %v8163, 0.70710677
    %v8194 = vmul.f32 %v8109, 0.70710677
    %v8195 = vmul.f32 %v8128, 0.70710677
    %v8196 = vmul.f32 %v8147, 0.70710677
    %v8197 = vmul.f32 %v8166, 0.70710677
    %v8198 = vmul.f32 %v8111, 0.70710677
    %v8199 = vmul.f32 %v8130, 0.70710677
    %v8200 = vmul.f32 %v8149, 0.70710677
    %v8201 = vmul.f32 %v8168, 0.70710677
    %v8202 = vmul.f32 %v8186, %v8186
    %v8203 = vmin.f32 16.0, %v8202
    %v8204 = vmul.f32 %v8203, 2.1237322e-06
    %v8205 = vadd.f32 %v8204, 0.00028619796
    %v8206 = vmul.f32 %v8203, %v8205
    %v8207 = vadd.f32 %v8206, 0.0036580483
    %v8208 = vmul.f32 %v8203, %v8207
    %v8209 = vadd.f32 %v8208, 0.05243302
    %v8210 = vmul.f32 %v8203, %v8209
    %v8211 = vadd.f32 %v8210, 0.18741608
    %v8212 = vmul.f32 %v8203, %v8211
    %v8213 = vadd.f32 %v8212, 1.1283791
    %v8214 = vmul.f32 %v8186, %v8213
    %v8215 = vmul.f32 %v8203, 3.8918573e-05
    %v8216 = vadd.f32 %v8215, 0.001143296
    %v8217 = vmul.f32 %v8203, %v8216
    %v8218 = vadd.f32 %v8217, 0.014752088
    %v8219 = vmul.f32 %v8203, %v8218
    %v8220 = vadd.f32 %v8219, 0.112945676
    %v8221 = vmul.f32 %v8203, %v8220
    %v8222 = vadd.f32 %v8221, 0.4994258
    %v8223 = vmul.f32 %v8203, %v8222
    %v8224 = vadd.f32 %v8223, 1.0
    %v8225 = vrcp.pop %v8224
    %v8226 = vmul.f32 %v8224, %v8225
    %v8227 = vsub.f32 1.0, %v8226
    %v8228 = vmul.f32 %v8225, %v8227
    %v8229 = vadd.f32 %v8225, %v8228
    %vm8230 = vweird.f32 %v8224
    %vm8231 = vweird.f32 %v8225
    %vm8232 = vmor %vm8230, %vm8231
    %v8233 = vsel %vm8232, %v8225, %v8229
    %v8234 = vand.u32 2147483647, %v8224
    %vm8235 = vcmp.eq.f32.partialorder %v8234, 8.507059e+37
    %v8236 = vand.u32 %v8224, 2147483648
    %v8237 = vor.u32 1.1754944e-38, %v8236
    %v8238 = vsel %vm8235, %v8237, %v8233
    %v8239 = vmul.f32 %v8214, %v8238
    %v8240 = vmin.f32 %v8239, 1.0
    %v8241 = vmax.f32 %v8240, -1.0
    %v8242 = vmul.f32 %v8187, %v8187
    %v8243 = vmin.f32 16.0, %v8242
    %v8244 = vmul.f32 %v8243, 2.1237322e-06
    %v8245 = vadd.f32 %v8244, 0.00028619796
    %v8246 = vmul.f32 %v8243, %v8245
    %v8247 = vadd.f32 %v8246, 0.0036580483
    %v8248 = vmul.f32 %v8243, %v8247
    %v8249 = vadd.f32 %v8248, 0.05243302
    %v8250 = vmul.f32 %v8243, %v8249
    %v8251 = vadd.f32 %v8250, 0.18741608
    %v8252 = vmul.f32 %v8243, %v8251
    %v8253 = vadd.f32 %v8252, 1.1283791
    %v8254 = vmul.f32 %v8187, %v8253
    %v8255 = vmul.f32 %v8243, 3.8918573e-05
    %v8256 = vadd.f32 %v8255, 0.001143296
    %v8257 = vmul.f32 %v8243, %v8256
    %v8258 = vadd.f32 %v8257, 0.014752088
    %v8259 = vmul.f32 %v8243, %v8258
    %v8260 = vadd.f32 %v8259, 0.112945676
    %v8261 = vmul.f32 %v8243, %v8260
    %v8262 = vadd.f32 %v8261, 0.4994258
    %v8263 = vmul.f32 %v8243, %v8262
    %v8264 = vadd.f32 %v8263, 1.0
    %v8265 = vrcp.pop %v8264
    %v8266 = vmul.f32 %v8264, %v8265
    %v8267 = vsub.f32 1.0, %v8266
    %v8268 = vmul.f32 %v8265, %v8267
    %v8269 = vadd.f32 %v8265, %v8268
    %vm8270 = vweird.f32 %v8264
    %vm8271 = vweird.f32 %v8265
    %vm8272 = vmor %vm8270, %vm8271
    %v8273 = vsel %vm8272, %v8265, %v8269
    %v8274 = vand.u32 2147483647, %v8264
    %vm8275 = vcmp.eq.f32.partialorder %v8274, 8.507059e+37
    %v8276 = vand.u32 %v8264, 2147483648
    %v8277 = vor.u32 1.1754944e-38, %v8276
    %v8278 = vsel %vm8275, %v8277, %v8273
    %v8279 = vmul.f32 %v8254, %v8278
    %v8280 = vmin.f32 %v8279, 1.0
    %v8281 = vmax.f32 %v8280, -1.0
    %v8282 = vmul.f32 %v8188, %v8188
    %v8283 = vmin.f32 16.0, %v8282
    %v8284 = vmul.f32 %v8283, 2.1237322e-06
    %v8285 = vadd.f32 %v8284, 0.00028619796
    %v8286 = vmul.f32 %v8283, %v8285
    %v8287 = vadd.f32 %v8286, 0.0036580483
    %v8288 = vmul.f32 %v8283, %v8287
    %v8289 = vadd.f32 %v8288, 0.05243302
    %v8290 = vmul.f32 %v8283, %v8289
    %v8291 = vadd.f32 %v8290, 0.18741608
    %v8292 = vmul.f32 %v8283, %v8291
    %v8293 = vadd.f32 %v8292, 1.1283791
    %v8294 = vmul.f32 %v8188, %v8293
    %v8295 = vmul.f32 %v8283, 3.8918573e-05
    %v8296 = vadd.f32 %v8295, 0.001143296
    %v8297 = vmul.f32 %v8283, %v8296
    %v8298 = vadd.f32 %v8297, 0.014752088
    %v8299 = vmul.f32 %v8283, %v8298
    %v8300 = vadd.f32 %v8299, 0.112945676
    %v8301 = vmul.f32 %v8283, %v8300
    %v8302 = vadd.f32 %v8301, 0.4994258
    %v8303 = vmul.f32 %v8283, %v8302
    %v8304 = vadd.f32 %v8303, 1.0
    %v8305 = vrcp.pop %v8304
    %v8306 = vmul.f32 %v8304, %v8305
    %v8307 = vsub.f32 1.0, %v8306
    %v8308 = vmul.f32 %v8305, %v8307
    %v8309 = vadd.f32 %v8305, %v8308
    %vm8310 = vweird.f32 %v8304
    %vm8311 = vweird.f32 %v8305
    %vm8312 = vmor %vm8310, %vm8311
    %v8313 = vsel %vm8312, %v8305, %v8309
    %v8314 = vand.u32 2147483647, %v8304
    %vm8315 = vcmp.eq.f32.partialorder %v8314, 8.507059e+37
    %v8316 = vand.u32 %v8304, 2147483648
    %v8317 = vor.u32 1.1754944e-38, %v8316
    %v8318 = vsel %vm8315, %v8317, %v8313
    %v8319 = vmul.f32 %v8294, %v8318
    %v8320 = vmin.f32 %v8319, 1.0
    %v8321 = vmax.f32 %v8320, -1.0
    %v8322 = vmul.f32 %v8189, %v8189
    %v8323 = vmin.f32 16.0, %v8322
    %v8324 = vmul.f32 %v8323, 2.1237322e-06
    %v8325 = vadd.f32 %v8324, 0.00028619796
    %v8326 = vmul.f32 %v8323, %v8325
    %v8327 = vadd.f32 %v8326, 0.0036580483
    %v8328 = vmul.f32 %v8323, %v8327
    %v8329 = vadd.f32 %v8328, 0.05243302
    %v8330 = vmul.f32 %v8323, %v8329
    %v8331 = vadd.f32 %v8330, 0.18741608
    %v8332 = vmul.f32 %v8323, %v8331
    %v8333 = vadd.f32 %v8332, 1.1283791
    %v8334 = vmul.f32 %v8189, %v8333
    %v8335 = vmul.f32 %v8323, 3.8918573e-05
    %v8336 = vadd.f32 %v8335, 0.001143296
    %v8337 = vmul.f32 %v8323, %v8336
    %v8338 = vadd.f32 %v8337, 0.014752088
    %v8339 = vmul.f32 %v8323, %v8338
    %v8340 = vadd.f32 %v8339, 0.112945676
    %v8341 = vmul.f32 %v8323, %v8340
    %v8342 = vadd.f32 %v8341, 0.4994258
    %v8343 = vmul.f32 %v8323, %v8342
    %v8344 = vadd.f32 %v8343, 1.0
    %v8345 = vrcp.pop %v8344
    %v8346 = vmul.f32 %v8344, %v8345
    %v8347 = vsub.f32 1.0, %v8346
    %v8348 = vmul.f32 %v8345, %v8347
    %v8349 = vadd.f32 %v8345, %v8348
    %vm8350 = vweird.f32 %v8344
    %vm8351 = vweird.f32 %v8345
    %vm8352 = vmor %vm8350, %vm8351
    %v8353 = vsel %vm8352, %v8345, %v8349
    %v8354 = vand.u32 2147483647, %v8344
    %vm8355 = vcmp.eq.f32.partialorder %v8354, 8.507059e+37
    %v8356 = vand.u32 %v8344, 2147483648
    %v8357 = vor.u32 1.1754944e-38, %v8356
    %v8358 = vsel %vm8355, %v8357, %v8353
    %v8359 = vmul.f32 %v8334, %v8358
    %v8360 = vmin.f32 %v8359, 1.0
    %v8361 = vmax.f32 %v8360, -1.0
    %v8362 = vmul.f32 %v8190, %v8190
    %v8363 = vmin.f32 16.0, %v8362
    %v8364 = vmul.f32 %v8363, 2.1237322e-06
    %v8365 = vadd.f32 %v8364, 0.00028619796
    %v8366 = vmul.f32 %v8363, %v8365
    %v8367 = vadd.f32 %v8366, 0.0036580483
    %v8368 = vmul.f32 %v8363, %v8367
    %v8369 = vadd.f32 %v8368, 0.05243302
    %v8370 = vmul.f32 %v8363, %v8369
    %v8371 = vadd.f32 %v8370, 0.18741608
    %v8372 = vmul.f32 %v8363, %v8371
    %v8373 = vadd.f32 %v8372, 1.1283791
    %v8374 = vmul.f32 %v8190, %v8373
    %v8375 = vmul.f32 %v8363, 3.8918573e-05
    %v8376 = vadd.f32 %v8375, 0.001143296
    %v8377 = vmul.f32 %v8363, %v8376
    %v8378 = vadd.f32 %v8377, 0.014752088
    %v8379 = vmul.f32 %v8363, %v8378
    %v8380 = vadd.f32 %v8379, 0.112945676
    %v8381 = vmul.f32 %v8363, %v8380
    %v8382 = vadd.f32 %v8381, 0.4994258
    %v8383 = vmul.f32 %v8363, %v8382
    %v8384 = vadd.f32 %v8383, 1.0
    %v8385 = vrcp.pop %v8384
    %v8386 = vmul.f32 %v8384, %v8385
    %v8387 = vsub.f32 1.0, %v8386
    %v8388 = vmul.f32 %v8385, %v8387
    %v8389 = vadd.f32 %v8385, %v8388
    %vm8390 = vweird.f32 %v8384
    %vm8391 = vweird.f32 %v8385
    %vm8392 = vmor %vm8390, %vm8391
    %v8393 = vsel %vm8392, %v8385, %v8389
    %v8394 = vand.u32 2147483647, %v8384
    %vm8395 = vcmp.eq.f32.partialorder %v8394, 8.507059e+37
    %v8396 = vand.u32 %v8384, 2147483648
    %v8397 = vor.u32 1.1754944e-38, %v8396
    %v8398 = vsel %vm8395, %v8397, %v8393
    %v8399 = vmul.f32 %v8374, %v8398
    %v8400 = vmin.f32 %v8399, 1.0
    %v8401 = vmax.f32 %v8400, -1.0
    %v8402 = vmul.f32 %v8191, %v8191
    %v8403 = vmin.f32 16.0, %v8402
    %v8404 = vmul.f32 %v8403, 2.1237322e-06
    %v8405 = vadd.f32 %v8404, 0.00028619796
    %v8406 = vmul.f32 %v8403, %v8405
    %v8407 = vadd.f32 %v8406, 0.0036580483
    %v8408 = vmul.f32 %v8403, %v8407
    %v8409 = vadd.f32 %v8408, 0.05243302
    %v8410 = vmul.f32 %v8403, %v8409
    %v8411 = vadd.f32 %v8410, 0.18741608
    %v8412 = vmul.f32 %v8403, %v8411
    %v8413 = vadd.f32 %v8412, 1.1283791
    %v8414 = vmul.f32 %v8191, %v8413
    %v8415 = vmul.f32 %v8403, 3.8918573e-05
    %v8416 = vadd.f32 %v8415, 0.001143296
    %v8417 = vmul.f32 %v8403, %v8416
    %v8418 = vadd.f32 %v8417, 0.014752088
    %v8419 = vmul.f32 %v8403, %v8418
    %v8420 = vadd.f32 %v8419, 0.112945676
    %v8421 = vmul.f32 %v8403, %v8420
    %v8422 = vadd.f32 %v8421, 0.4994258
    %v8423 = vmul.f32 %v8403, %v8422
    %v8424 = vadd.f32 %v8423, 1.0
    %v8425 = vrcp.pop %v8424
    %v8426 = vmul.f32 %v8424, %v8425
    %v8427 = vsub.f32 1.0, %v8426
    %v8428 = vmul.f32 %v8425, %v8427
    %v8429 = vadd.f32 %v8425, %v8428
    %vm8430 = vweird.f32 %v8424
    %vm8431 = vweird.f32 %v8425
    %vm8432 = vmor %vm8430, %vm8431
    %v8433 = vsel %vm8432, %v8425, %v8429
    %v8434 = vand.u32 2147483647, %v8424
    %vm8435 = vcmp.eq.f32.partialorder %v8434, 8.507059e+37
    %v8436 = vand.u32 %v8424, 2147483648
    %v8437 = vor.u32 1.1754944e-38, %v8436
    %v8438 = vsel %vm8435, %v8437, %v8433
    %v8439 = vmul.f32 %v8414, %v8438
    %v8440 = vmin.f32 %v8439, 1.0
    %v8441 = vmax.f32 %v8440, -1.0
    %v8442 = vmul.f32 %v8192, %v8192
    %v8443 = vmin.f32 16.0, %v8442
    %v8444 = vmul.f32 %v8443, 2.1237322e-06
    %v8445 = vadd.f32 %v8444, 0.00028619796
    %v8446 = vmul.f32 %v8443, %v8445
    %v8447 = vadd.f32 %v8446, 0.0036580483
    %v8448 = vmul.f32 %v8443, %v8447
    %v8449 = vadd.f32 %v8448, 0.05243302
    %v8450 = vmul.f32 %v8443, %v8449
    %v8451 = vadd.f32 %v8450, 0.18741608
    %v8452 = vmul.f32 %v8443, %v8451
    %v8453 = vadd.f32 %v8452, 1.1283791
    %v8454 = vmul.f32 %v8192, %v8453
    %v8455 = vmul.f32 %v8443, 3.8918573e-05
    %v8456 = vadd.f32 %v8455, 0.001143296
    %v8457 = vmul.f32 %v8443, %v8456
    %v8458 = vadd.f32 %v8457, 0.014752088
    %v8459 = vmul.f32 %v8443, %v8458
    %v8460 = vadd.f32 %v8459, 0.112945676
    %v8461 = vmul.f32 %v8443, %v8460
    %v8462 = vadd.f32 %v8461, 0.4994258
    %v8463 = vmul.f32 %v8443, %v8462
    %v8464 = vadd.f32 %v8463, 1.0
    %v8465 = vrcp.pop %v8464
    %v8466 = vmul.f32 %v8464, %v8465
    %v8467 = vsub.f32 1.0, %v8466
    %v8468 = vmul.f32 %v8465, %v8467
    %v8469 = vadd.f32 %v8465, %v8468
    %vm8470 = vweird.f32 %v8464
    %vm8471 = vweird.f32 %v8465
    %vm8472 = vmor %vm8470, %vm8471
    %v8473 = vsel %vm8472, %v8465, %v8469
    %v8474 = vand.u32 2147483647, %v8464
    %vm8475 = vcmp.eq.f32.partialorder %v8474, 8.507059e+37
    %v8476 = vand.u32 %v8464, 2147483648
    %v8477 = vor.u32 1.1754944e-38, %v8476
    %v8478 = vsel %vm8475, %v8477, %v8473
    %v8479 = vmul.f32 %v8454, %v8478
    %v8480 = vmin.f32 %v8479, 1.0
    %v8481 = vmax.f32 %v8480, -1.0
    %v8482 = vmul.f32 %v8193, %v8193
    %v8483 = vmin.f32 16.0, %v8482
    %v8484 = vmul.f32 %v8483, 2.1237322e-06
    %v8485 = vadd.f32 %v8484, 0.00028619796
    %v8486 = vmul.f32 %v8483, %v8485
    %v8487 = vadd.f32 %v8486, 0.0036580483
    %v8488 = vmul.f32 %v8483, %v8487
    %v8489 = vadd.f32 %v8488, 0.05243302
    %v8490 = vmul.f32 %v8483, %v8489
    %v8491 = vadd.f32 %v8490, 0.18741608
    %v8492 = vmul.f32 %v8483, %v8491
    %v8493 = vadd.f32 %v8492, 1.1283791
    %v8494 = vmul.f32 %v8193, %v8493
    %v8495 = vmul.f32 %v8483, 3.8918573e-05
    %v8496 = vadd.f32 %v8495, 0.001143296
    %v8497 = vmul.f32 %v8483, %v8496
    %v8498 = vadd.f32 %v8497, 0.014752088
    %v8499 = vmul.f32 %v8483, %v8498
    %v8500 = vadd.f32 %v8499, 0.112945676
    %v8501 = vmul.f32 %v8483, %v8500
    %v8502 = vadd.f32 %v8501, 0.4994258
    %v8503 = vmul.f32 %v8483, %v8502
    %v8504 = vadd.f32 %v8503, 1.0
    %v8505 = vrcp.pop %v8504
    %v8506 = vmul.f32 %v8504, %v8505
    %v8507 = vsub.f32 1.0, %v8506
    %v8508 = vmul.f32 %v8505, %v8507
    %v8509 = vadd.f32 %v8505, %v8508
    %vm8510 = vweird.f32 %v8504
    %vm8511 = vweird.f32 %v8505
    %vm8512 = vmor %vm8510, %vm8511
    %v8513 = vsel %vm8512, %v8505, %v8509
    %v8514 = vand.u32 2147483647, %v8504
    %vm8515 = vcmp.eq.f32.partialorder %v8514, 8.507059e+37
    %v8516 = vand.u32 %v8504, 2147483648
    %v8517 = vor.u32 1.1754944e-38, %v8516
    %v8518 = vsel %vm8515, %v8517, %v8513
    %v8519 = vmul.f32 %v8494, %v8518
    %v8520 = vmin.f32 %v8519, 1.0
    %v8521 = vmax.f32 %v8520, -1.0
    %v8522 = vmul.f32 %v8194, %v8194
    %v8523 = vmin.f32 16.0, %v8522
    %v8524 = vmul.f32 %v8523, 2.1237322e-06
    %v8525 = vadd.f32 %v8524, 0.00028619796
    %v8526 = vmul.f32 %v8523, %v8525
    %v8527 = vadd.f32 %v8526, 0.0036580483
    %v8528 = vmul.f32 %v8523, %v8527
    %v8529 = vadd.f32 %v8528, 0.05243302
    %v8530 = vmul.f32 %v8523, %v8529
    %v8531 = vadd.f32 %v8530, 0.18741608
    %v8532 = vmul.f32 %v8523, %v8531
    %v8533 = vadd.f32 %v8532, 1.1283791
    %v8534 = vmul.f32 %v8194, %v8533
    %v8535 = vmul.f32 %v8523, 3.8918573e-05
    %v8536 = vadd.f32 %v8535, 0.001143296
    %v8537 = vmul.f32 %v8523, %v8536
    %v8538 = vadd.f32 %v8537, 0.014752088
    %v8539 = vmul.f32 %v8523, %v8538
    %v8540 = vadd.f32 %v8539, 0.112945676
    %v8541 = vmul.f32 %v8523, %v8540
    %v8542 = vadd.f32 %v8541, 0.4994258
    %v8543 = vmul.f32 %v8523, %v8542
    %v8544 = vadd.f32 %v8543, 1.0
    %v8545 = vrcp.pop %v8544
    %v8546 = vmul.f32 %v8544, %v8545
    %v8547 = vsub.f32 1.0, %v8546
    %v8548 = vmul.f32 %v8545, %v8547
    %v8549 = vadd.f32 %v8545, %v8548
    %vm8550 = vweird.f32 %v8544
    %vm8551 = vweird.f32 %v8545
    %vm8552 = vmor %vm8550, %vm8551
    %v8553 = vsel %vm8552, %v8545, %v8549
    %v8554 = vand.u32 2147483647, %v8544
    %vm8555 = vcmp.eq.f32.partialorder %v8554, 8.507059e+37
    %v8556 = vand.u32 %v8544, 2147483648
    %v8557 = vor.u32 1.1754944e-38, %v8556
    %v8558 = vsel %vm8555, %v8557, %v8553
    %v8559 = vmul.f32 %v8534, %v8558
    %v8560 = vmin.f32 %v8559, 1.0
    %v8561 = vmax.f32 %v8560, -1.0
    %v8562 = vmul.f32 %v8195, %v8195
    %v8563 = vmin.f32 16.0, %v8562
    %v8564 = vmul.f32 %v8563, 2.1237322e-06
    %v8565 = vadd.f32 %v8564, 0.00028619796
    %v8566 = vmul.f32 %v8563, %v8565
    %v8567 = vadd.f32 %v8566, 0.0036580483
    %v8568 = vmul.f32 %v8563, %v8567
    %v8569 = vadd.f32 %v8568, 0.05243302
    %v8570 = vmul.f32 %v8563, %v8569
    %v8571 = vadd.f32 %v8570, 0.18741608
    %v8572 = vmul.f32 %v8563, %v8571
    %v8573 = vadd.f32 %v8572, 1.1283791
    %v8574 = vmul.f32 %v8195, %v8573
    %v8575 = vmul.f32 %v8563, 3.8918573e-05
    %v8576 = vadd.f32 %v8575, 0.001143296
    %v8577 = vmul.f32 %v8563, %v8576
    %v8578 = vadd.f32 %v8577, 0.014752088
    %v8579 = vmul.f32 %v8563, %v8578
    %v8580 = vadd.f32 %v8579, 0.112945676
    %v8581 = vmul.f32 %v8563, %v8580
    %v8582 = vadd.f32 %v8581, 0.4994258
    %v8583 = vmul.f32 %v8563, %v8582
    %v8584 = vadd.f32 %v8583, 1.0
    %v8585 = vrcp.pop %v8584
    %v8586 = vmul.f32 %v8584, %v8585
    %v8587 = vsub.f32 1.0, %v8586
    %v8588 = vmul.f32 %v8585, %v8587
    %v8589 = vadd.f32 %v8585, %v8588
    %vm8590 = vweird.f32 %v8584
    %vm8591 = vweird.f32 %v8585
    %vm8592 = vmor %vm8590, %vm8591
    %v8593 = vsel %vm8592, %v8585, %v8589
    %v8594 = vand.u32 2147483647, %v8584
    %vm8595 = vcmp.eq.f32.partialorder %v8594, 8.507059e+37
    %v8596 = vand.u32 %v8584, 2147483648
    %v8597 = vor.u32 1.1754944e-38, %v8596
    %v8598 = vsel %vm8595, %v8597, %v8593
    %v8599 = vmul.f32 %v8574, %v8598
    %v8600 = vmin.f32 %v8599, 1.0
    %v8601 = vmax.f32 %v8600, -1.0
    %v8602 = vmul.f32 %v8196, %v8196
    %v8603 = vmin.f32 16.0, %v8602
    %v8604 = vmul.f32 %v8603, 2.1237322e-06
    %v8605 = vadd.f32 %v8604, 0.00028619796
    %v8606 = vmul.f32 %v8603, %v8605
    %v8607 = vadd.f32 %v8606, 0.0036580483
    %v8608 = vmul.f32 %v8603, %v8607
    %v8609 = vadd.f32 %v8608, 0.05243302
    %v8610 = vmul.f32 %v8603, %v8609
    %v8611 = vadd.f32 %v8610, 0.18741608
    %v8612 = vmul.f32 %v8603, %v8611
    %v8613 = vadd.f32 %v8612, 1.1283791
    %v8614 = vmul.f32 %v8196, %v8613
    %v8615 = vmul.f32 %v8603, 3.8918573e-05
    %v8616 = vadd.f32 %v8615, 0.001143296
    %v8617 = vmul.f32 %v8603, %v8616
    %v8618 = vadd.f32 %v8617, 0.014752088
    %v8619 = vmul.f32 %v8603, %v8618
    %v8620 = vadd.f32 %v8619, 0.112945676
    %v8621 = vmul.f32 %v8603, %v8620
    %v8622 = vadd.f32 %v8621, 0.4994258
    %v8623 = vmul.f32 %v8603, %v8622
    %v8624 = vadd.f32 %v8623, 1.0
    %v8625 = vrcp.pop %v8624
    %v8626 = vmul.f32 %v8624, %v8625
    %v8627 = vsub.f32 1.0, %v8626
    %v8628 = vmul.f32 %v8625, %v8627
    %v8629 = vadd.f32 %v8625, %v8628
    %vm8630 = vweird.f32 %v8624
    %vm8631 = vweird.f32 %v8625
    %vm8632 = vmor %vm8630, %vm8631
    %v8633 = vsel %vm8632, %v8625, %v8629
    %v8634 = vand.u32 2147483647, %v8624
    %vm8635 = vcmp.eq.f32.partialorder %v8634, 8.507059e+37
    %v8636 = vand.u32 %v8624, 2147483648
    %v8637 = vor.u32 1.1754944e-38, %v8636
    %v8638 = vsel %vm8635, %v8637, %v8633
    %v8639 = vmul.f32 %v8614, %v8638
    %v8640 = vmin.f32 %v8639, 1.0
    %v8641 = vmax.f32 %v8640, -1.0
    %v8642 = vmul.f32 %v8197, %v8197
    %v8643 = vmin.f32 16.0, %v8642
    %v8644 = vmul.f32 %v8643, 2.1237322e-06
    %v8645 = vadd.f32 %v8644, 0.00028619796
    %v8646 = vmul.f32 %v8643, %v8645
    %v8647 = vadd.f32 %v8646, 0.0036580483
    %v8648 = vmul.f32 %v8643, %v8647
    %v8649 = vadd.f32 %v8648, 0.05243302
    %v8650 = vmul.f32 %v8643, %v8649
    %v8651 = vadd.f32 %v8650, 0.18741608
    %v8652 = vmul.f32 %v8643, %v8651
    %v8653 = vadd.f32 %v8652, 1.1283791
    %v8654 = vmul.f32 %v8197, %v8653
    %v8655 = vmul.f32 %v8643, 3.8918573e-05
    %v8656 = vadd.f32 %v8655, 0.001143296
    %v8657 = vmul.f32 %v8643, %v8656
    %v8658 = vadd.f32 %v8657, 0.014752088
    %v8659 = vmul.f32 %v8643, %v8658
    %v8660 = vadd.f32 %v8659, 0.112945676
    %v8661 = vmul.f32 %v8643, %v8660
    %v8662 = vadd.f32 %v8661, 0.4994258
    %v8663 = vmul.f32 %v8643, %v8662
    %v8664 = vadd.f32 %v8663, 1.0
    %v8665 = vrcp.pop %v8664
    %v8666 = vmul.f32 %v8664, %v8665
    %v8667 = vsub.f32 1.0, %v8666
    %v8668 = vmul.f32 %v8665, %v8667
    %v8669 = vadd.f32 %v8665, %v8668
    %vm8670 = vweird.f32 %v8664
    %vm8671 = vweird.f32 %v8665
    %vm8672 = vmor %vm8670, %vm8671
    %v8673 = vsel %vm8672, %v8665, %v8669
    %v8674 = vand.u32 2147483647, %v8664
    %vm8675 = vcmp.eq.f32.partialorder %v8674, 8.507059e+37
    %v8676 = vand.u32 %v8664, 2147483648
    %v8677 = vor.u32 1.1754944e-38, %v8676
    %v8678 = vsel %vm8675, %v8677, %v8673
    %v8679 = vmul.f32 %v8654, %v8678
    %v8680 = vmin.f32 %v8679, 1.0
    %v8681 = vmax.f32 %v8680, -1.0
    %v8682 = vmul.f32 %v8198, %v8198
    %v8683 = vmin.f32 16.0, %v8682
    %v8684 = vmul.f32 %v8683, 2.1237322e-06
    %v8685 = vadd.f32 %v8684, 0.00028619796
    %v8686 = vmul.f32 %v8683, %v8685
    %v8687 = vadd.f32 %v8686, 0.0036580483
    %v8688 = vmul.f32 %v8683, %v8687
    %v8689 = vadd.f32 %v8688, 0.05243302
    %v8690 = vmul.f32 %v8683, %v8689
    %v8691 = vadd.f32 %v8690, 0.18741608
    %v8692 = vmul.f32 %v8683, %v8691
    %v8693 = vadd.f32 %v8692, 1.1283791
    %v8694 = vmul.f32 %v8198, %v8693
    %v8695 = vmul.f32 %v8683, 3.8918573e-05
    %v8696 = vadd.f32 %v8695, 0.001143296
    %v8697 = vmul.f32 %v8683, %v8696
    %v8698 = vadd.f32 %v8697, 0.014752088
    %v8699 = vmul.f32 %v8683, %v8698
    %v8700 = vadd.f32 %v8699, 0.112945676
    %v8701 = vmul.f32 %v8683, %v8700
    %v8702 = vadd.f32 %v8701, 0.4994258
    %v8703 = vmul.f32 %v8683, %v8702
    %v8704 = vadd.f32 %v8703, 1.0
    %v8705 = vrcp.pop %v8704
    %v8706 = vmul.f32 %v8704, %v8705
    %v8707 = vsub.f32 1.0, %v8706
    %v8708 = vmul.f32 %v8705, %v8707
    %v8709 = vadd.f32 %v8705, %v8708
    %vm8710 = vweird.f32 %v8704
    %vm8711 = vweird.f32 %v8705
    %vm8712 = vmor %vm8710, %vm8711
    %v8713 = vsel %vm8712, %v8705, %v8709
    %v8714 = vand.u32 2147483647, %v8704
    %vm8715 = vcmp.eq.f32.partialorder %v8714, 8.507059e+37
    %v8716 = vand.u32 %v8704, 2147483648
    %v8717 = vor.u32 1.1754944e-38, %v8716
    %v8718 = vsel %vm8715, %v8717, %v8713
    %v8719 = vmul.f32 %v8694, %v8718
    %v8720 = vmin.f32 %v8719, 1.0
    %v8721 = vmax.f32 %v8720, -1.0
    %v8722 = vmul.f32 %v8199, %v8199
    %v8723 = vmin.f32 16.0, %v8722
    %v8724 = vmul.f32 %v8723, 2.1237322e-06
    %v8725 = vadd.f32 %v8724, 0.00028619796
    %v8726 = vmul.f32 %v8723, %v8725
    %v8727 = vadd.f32 %v8726, 0.0036580483
    %v8728 = vmul.f32 %v8723, %v8727
    %v8729 = vadd.f32 %v8728, 0.05243302
    %v8730 = vmul.f32 %v8723, %v8729
    %v8731 = vadd.f32 %v8730, 0.18741608
    %v8732 = vmul.f32 %v8723, %v8731
    %v8733 = vadd.f32 %v8732, 1.1283791
    %v8734 = vmul.f32 %v8199, %v8733
    %v8735 = vmul.f32 %v8723, 3.8918573e-05
    %v8736 = vadd.f32 %v8735, 0.001143296
    %v8737 = vmul.f32 %v8723, %v8736
    %v8738 = vadd.f32 %v8737, 0.014752088
    %v8739 = vmul.f32 %v8723, %v8738
    %v8740 = vadd.f32 %v8739, 0.112945676
    %v8741 = vmul.f32 %v8723, %v8740
    %v8742 = vadd.f32 %v8741, 0.4994258
    %v8743 = vmul.f32 %v8723, %v8742
    %v8744 = vadd.f32 %v8743, 1.0
    %v8745 = vrcp.pop %v8744
    %v8746 = vmul.f32 %v8744, %v8745
    %v8747 = vsub.f32 1.0, %v8746
    %v8748 = vmul.f32 %v8745, %v8747
    %v8749 = vadd.f32 %v8745, %v8748
    %vm8750 = vweird.f32 %v8744
    %vm8751 = vweird.f32 %v8745
    %vm8752 = vmor %vm8750, %vm8751
    %v8753 = vsel %vm8752, %v8745, %v8749
    %v8754 = vand.u32 2147483647, %v8744
    %vm8755 = vcmp.eq.f32.partialorder %v8754, 8.507059e+37
    %v8756 = vand.u32 %v8744, 2147483648
    %v8757 = vor.u32 1.1754944e-38, %v8756
    %v8758 = vsel %vm8755, %v8757, %v8753
    %v8759 = vmul.f32 %v8734, %v8758
    %v8760 = vmin.f32 %v8759, 1.0
    %v8761 = vmax.f32 %v8760, -1.0
    %v8762 = vmul.f32 %v8200, %v8200
    %v8763 = vmin.f32 16.0, %v8762
    %v8764 = vmul.f32 %v8763, 2.1237322e-06
    %v8765 = vadd.f32 %v8764, 0.00028619796
    %v8766 = vmul.f32 %v8763, %v8765
    %v8767 = vadd.f32 %v8766, 0.0036580483
    %v8768 = vmul.f32 %v8763, %v8767
    %v8769 = vadd.f32 %v8768, 0.05243302
    %v8770 = vmul.f32 %v8763, %v8769
    %v8771 = vadd.f32 %v8770, 0.18741608
    %v8772 = vmul.f32 %v8763, %v8771
    %v8773 = vadd.f32 %v8772, 1.1283791
    %v8774 = vmul.f32 %v8200, %v8773
    %v8775 = vmul.f32 %v8763, 3.8918573e-05
    %v8776 = vadd.f32 %v8775, 0.001143296
    %v8777 = vmul.f32 %v8763, %v8776
    %v8778 = vadd.f32 %v8777, 0.014752088
    %v8779 = vmul.f32 %v8763, %v8778
    %v8780 = vadd.f32 %v8779, 0.112945676
    %v8781 = vmul.f32 %v8763, %v8780
    %v8782 = vadd.f32 %v8781, 0.4994258
    %v8783 = vmul.f32 %v8763, %v8782
    %v8784 = vadd.f32 %v8783, 1.0
    %v8785 = vrcp.pop %v8784
    %v8786 = vmul.f32 %v8784, %v8785
    %v8787 = vsub.f32 1.0, %v8786
    %v8788 = vmul.f32 %v8785, %v8787
    %v8789 = vadd.f32 %v8785, %v8788
    %vm8790 = vweird.f32 %v8784
    %vm8791 = vweird.f32 %v8785
    %vm8792 = vmor %vm8790, %vm8791
    %v8793 = vsel %vm8792, %v8785, %v8789
    %v8794 = vand.u32 2147483647, %v8784
    %vm8795 = vcmp.eq.f32.partialorder %v8794, 8.507059e+37
    %v8796 = vand.u32 %v8784, 2147483648
    %v8797 = vor.u32 1.1754944e-38, %v8796
    %v8798 = vsel %vm8795, %v8797, %v8793
    %v8799 = vmul.f32 %v8774, %v8798
    %v8800 = vmin.f32 %v8799, 1.0
    %v8801 = vmax.f32 %v8800, -1.0
    %v8802 = vmul.f32 %v8201, %v8201
    %v8803 = vmin.f32 16.0, %v8802
    %v8804 = vmul.f32 %v8803, 2.1237322e-06
    %v8805 = vadd.f32 %v8804, 0.00028619796
    %v8806 = vmul.f32 %v8803, %v8805
    %v8807 = vadd.f32 %v8806, 0.0036580483
    %v8808 = vmul.f32 %v8803, %v8807
    %v8809 = vadd.f32 %v8808, 0.05243302
    %v8810 = vmul.f32 %v8803, %v8809
    %v8811 = vadd.f32 %v8810, 0.18741608
    %v8812 = vmul.f32 %v8803, %v8811
    %v8813 = vadd.f32 %v8812, 1.1283791
    %v8814 = vmul.f32 %v8201, %v8813
    %v8815 = vmul.f32 %v8803, 3.8918573e-05
    %v8816 = vadd.f32 %v8815, 0.001143296
    %v8817 = vmul.f32 %v8803, %v8816
    %v8818 = vadd.f32 %v8817, 0.014752088
    %v8819 = vmul.f32 %v8803, %v8818
    %v8820 = vadd.f32 %v8819, 0.112945676
    %v8821 = vmul.f32 %v8803, %v8820
    %v8822 = vadd.f32 %v8821, 0.4994258
    %v8823 = vmul.f32 %v8803, %v8822
    %v8824 = vadd.f32 %v8823, 1.0
    %v8825 = vrcp.pop %v8824
    %v8826 = vmul.f32 %v8824, %v8825
    %v8827 = vsub.f32 1.0, %v8826
    %v8828 = vmul.f32 %v8825, %v8827
    %v8829 = vadd.f32 %v8825, %v8828
    %vm8830 = vweird.f32 %v8824
    %vm8831 = vweird.f32 %v8825
    %vm8832 = vmor %vm8830, %vm8831
    %v8833 = vsel %vm8832, %v8825, %v8829
    %v8834 = vand.u32 2147483647, %v8824
    %vm8835 = vcmp.eq.f32.partialorder %v8834, 8.507059e+37
    %v8836 = vand.u32 %v8824, 2147483648
    %v8837 = vor.u32 1.1754944e-38, %v8836
    %v8838 = vsel %vm8835, %v8837, %v8833
    %v8839 = vmul.f32 %v8814, %v8838
    %v8840 = vmin.f32 %v8839, 1.0
    %v8841 = vmax.f32 %v8840, -1.0
    %v8842 = vadd.f32 %v8241, 1.0
    %v8843 = vadd.f32 %v8281, 1.0
    %v8844 = vadd.f32 %v8321, 1.0
    %v8845 = vadd.f32 %v8361, 1.0
    %v8846 = vadd.f32 %v8401, 1.0
    %v8847 = vadd.f32 %v8441, 1.0
    %v8848 = vadd.f32 %v8481, 1.0
    %v8849 = vadd.f32 %v8521, 1.0
    %v8850 = vadd.f32 %v8561, 1.0
    %v8851 = vadd.f32 %v8601, 1.0
    %v8852 = vadd.f32 %v8641, 1.0
    %v8853 = vadd.f32 %v8681, 1.0
    %v8854 = vadd.f32 %v8721, 1.0
    %v8855 = vadd.f32 %v8761, 1.0
    %v8856 = vadd.f32 %v8801, 1.0
    %v8857 = vadd.f32 %v8841, 1.0
    %v8858 = vmul.f32 %v8170, %v8842
    %v8859 = vmul.f32 %v8171, %v8843
    %v8860 = vmul.f32 %v8172, %v8844
    %v8861 = vmul.f32 %v8173, %v8845
    %v8862 = vmul.f32 %v8174, %v8846
    %v8863 = vmul.f32 %v8175, %v8847
    %v8864 = vmul.f32 %v8176, %v8848
    %v8865 = vmul.f32 %v8177, %v8849
    %v8866 = vmul.f32 %v8178, %v8850
    %v8867 = vmul.f32 %v8179, %v8851
    %v8868 = vmul.f32 %v8180, %v8852
    %v8869 = vmul.f32 %v8181, %v8853
    %v8870 = vmul.f32 %v8182, %v8854
    %v8871 = vmul.f32 %v8183, %v8855
    %v8872 = vmul.f32 %v8184, %v8856
    %v8873 = vmul.f32 %v8185, %v8857
    %v8874 = vpack.c.bf16 %v8862, %v8858
    %v8875 = vpack.c.bf16 %v8863, %v8859
    %v8876 = vpack.c.bf16 %v8864, %v8860
    %v8877 = vpack.c.bf16 %v8865, %v8861
    %v8878 = vpack.c.bf16 %v8870, %v8866
    %v8879 = vpack.c.bf16 %v8871, %v8867
    %v8880 = vpack.c.bf16 %v8872, %v8868
    %v8881 = vpack.c.bf16 %v8873, %v8869
    %s8882 = scalar_lea.vmem [#allocation5], 256
    %v8883 = vld [vmem:[%s8882] sm:$0xf]
    %v8884 = vld [vmem:[%s8882 + $0x4] sm:$0xf]
    %v8885 = vld [vmem:[%s8882 + $0x8] sm:$0xf]
    %v8886 = vld [vmem:[%s8882 + $0xc] sm:$0xf]
    %v8887 = vld [vmem:[%s8882 + $0x10] sm:$0xf]
    %v8888 = vld [vmem:[%s8882 + $0x14] sm:$0xf]
    %v8889 = vld [vmem:[%s8882 + $0x18] sm:$0xf]
    %v8890 = vld [vmem:[%s8882 + $0x1c] sm:$0xf]
    %v8891 = vld [vmem:[%s8882 + $0x20] sm:$0xf]
    %v8892 = vld [vmem:[%s8882 + $0x24] sm:$0xf]
    %v8893 = vld [vmem:[%s8882 + $0x28] sm:$0xf]
    %v8894 = vld [vmem:[%s8882 + $0x2c] sm:$0xf]
    %v8895 = vld [vmem:[%s8882 + $0x30] sm:$0xf]
    %v8896 = vld [vmem:[%s8882 + $0x34] sm:$0xf]
    %v8897 = vld [vmem:[%s8882 + $0x38] sm:$0xf]
    %v8898 = vld [vmem:[%s8882 + $0x3c] sm:$0xf]
    %v8899 = vld [vmem:[%s8882 + $0x40] sm:$0xf]
    %v8900 = vld [vmem:[%s8882 + $0x44] sm:$0xf]
    %v8901 = vld [vmem:[%s8882 + $0x48] sm:$0xf]
    %v8902 = vld [vmem:[%s8882 + $0x4c] sm:$0xf]
    %v8903 = vld [vmem:[%s8882 + $0x50] sm:$0xf]
    %v8904 = vld [vmem:[%s8882 + $0x54] sm:$0xf]
    %v8905 = vld [vmem:[%s8882 + $0x58] sm:$0xf]
    %v8906 = vld [vmem:[%s8882 + $0x5c] sm:$0xf]
    %v8907 = vld [vmem:[%s8882 + $0x60] sm:$0xf]
    %v8908 = vld [vmem:[%s8882 + $0x64] sm:$0xf]
    %v8909 = vld [vmem:[%s8882 + $0x68] sm:$0xf]
    %v8910 = vld [vmem:[%s8882 + $0x6c] sm:$0xf]
    %v8911 = vld [vmem:[%s8882 + $0x70] sm:$0xf]
    %v8912 = vld [vmem:[%s8882 + $0x74] sm:$0xf]
    %v8913 = vld [vmem:[%s8882 + $0x78] sm:$0xf]
    %v8914 = vld [vmem:[%s8882 + $0x7c] sm:$0xf]
    %v8915 = vld [vmem:[%s8882 + $0x80] sm:$0xf]
    %v8916 = vld [vmem:[%s8882 + $0x84] sm:$0xf]
    %v8917 = vld [vmem:[%s8882 + $0x88] sm:$0xf]
    %v8918 = vld [vmem:[%s8882 + $0x8c] sm:$0xf]
    %v8919 = vld [vmem:[%s8882 + $0x90] sm:$0xf]
    %v8920 = vld [vmem:[%s8882 + $0x94] sm:$0xf]
    %v8921 = vld [vmem:[%s8882 + $0x98] sm:$0xf]
    %v8922 = vld [vmem:[%s8882 + $0x9c] sm:$0xf]
    %v8923 = vld [vmem:[%s8882 + $0xa0] sm:$0xf]
    %v8924 = vld [vmem:[%s8882 + $0xa4] sm:$0xf]
    %v8925 = vld [vmem:[%s8882 + $0xa8] sm:$0xf]
    %v8926 = vld [vmem:[%s8882 + $0xac] sm:$0xf]
    %v8927 = vld [vmem:[%s8882 + $0xb0] sm:$0xf]
    %v8928 = vld [vmem:[%s8882 + $0xb4] sm:$0xf]
    %v8929 = vld [vmem:[%s8882 + $0xb8] sm:$0xf]
    %v8930 = vld [vmem:[%s8882 + $0xbc] sm:$0xf]
    %v8931 = vld [vmem:[%s8882 + $0xc0] sm:$0xf]
    %v8932 = vld [vmem:[%s8882 + $0xc4] sm:$0xf]
    %v8933 = vld [vmem:[%s8882 + $0xc8] sm:$0xf]
    %v8934 = vld [vmem:[%s8882 + $0xcc] sm:$0xf]
    %v8935 = vld [vmem:[%s8882 + $0xd0] sm:$0xf]
    %v8936 = vld [vmem:[%s8882 + $0xd4] sm:$0xf]
    %v8937 = vld [vmem:[%s8882 + $0xd8] sm:$0xf]
    %v8938 = vld [vmem:[%s8882 + $0xdc] sm:$0xf]
    %v8939 = vld [vmem:[%s8882 + $0xe0] sm:$0xf]
    %v8940 = vld [vmem:[%s8882 + $0xe4] sm:$0xf]
    %v8941 = vld [vmem:[%s8882 + $0xe8] sm:$0xf]
    %v8942 = vld [vmem:[%s8882 + $0xec] sm:$0xf]
    %v8943 = vld [vmem:[%s8882 + $0xf0] sm:$0xf]
    %v8944 = vld [vmem:[%s8882 + $0xf4] sm:$0xf]
    %v8945 = vld [vmem:[%s8882 + $0xf8] sm:$0xf]
    %v8946 = vld [vmem:[%s8882 + $0xfc] sm:$0xf]
    %s8947 = scalar_lea.vmem %s15, 1
    %v8948 = vld [vmem:[%s8947] sm:$0x1]
    %v8950 = vperm.slane %v8948, 0
    %v9016 = vunpack.c.l.b16 %v8883
    %v9017 = vunpack.c.l.b16 %v8884
    %v9018 = vunpack.c.l.b16 %v8885
    %v9019 = vunpack.c.l.b16 %v8886
    %v9020 = vunpack.c.l.b16 %v8887
    %v9021 = vunpack.c.l.b16 %v8888
    %v9022 = vunpack.c.l.b16 %v8889
    %v9023 = vunpack.c.l.b16 %v8890
    %v9024 = vunpack.c.l.b16 %v8891
    %v9025 = vunpack.c.l.b16 %v8892
    %v9026 = vunpack.c.l.b16 %v8893
    %v9027 = vunpack.c.l.b16 %v8894
    %v9028 = vunpack.c.l.b16 %v8895
    %v9029 = vunpack.c.l.b16 %v8896
    %v9030 = vunpack.c.l.b16 %v8897
    %v9031 = vunpack.c.l.b16 %v8898
    %v9032 = vunpack.c.l.b16 %v8899
    %v9033 = vunpack.c.l.b16 %v8900
    %v9034 = vunpack.c.l.b16 %v8901
    %v9035 = vunpack.c.l.b16 %v8902
    %v9036 = vunpack.c.l.b16 %v8903
    %v9037 = vunpack.c.l.b16 %v8904
    %v9038 = vunpack.c.l.b16 %v8905
    %v9039 = vunpack.c.l.b16 %v8906
    %v9040 = vunpack.c.l.b16 %v8907
    %v9041 = vunpack.c.l.b16 %v8908
    %v9042 = vunpack.c.l.b16 %v8909
    %v9043 = vunpack.c.l.b16 %v8910
    %v9044 = vunpack.c.l.b16 %v8911
    %v9045 = vunpack.c.l.b16 %v8912
    %v9046 = vunpack.c.l.b16 %v8913
    %v9047 = vunpack.c.l.b16 %v8914
    %v9048 = vunpack.c.l.b16 %v8915
    %v9049 = vunpack.c.l.b16 %v8916
    %v9050 = vunpack.c.l.b16 %v8917
    %v9051 = vunpack.c.l.b16 %v8918
    %v9052 = vunpack.c.l.b16 %v8919
    %v9053 = vunpack.c.l.b16 %v8920
    %v9054 = vunpack.c.l.b16 %v8921
    %v9055 = vunpack.c.l.b16 %v8922
    %v9056 = vunpack.c.l.b16 %v8923
    %v9057 = vunpack.c.l.b16 %v8924
    %v9058 = vunpack.c.l.b16 %v8925
    %v9059 = vunpack.c.l.b16 %v8926
    %v9060 = vunpack.c.l.b16 %v8927
    %v9061 = vunpack.c.l.b16 %v8928
    %v9062 = vunpack.c.l.b16 %v8929
    %v9063 = vunpack.c.l.b16 %v8930
    %v9064 = vunpack.c.l.b16 %v8931
    %v9065 = vunpack.c.l.b16 %v8932
    %v9066 = vunpack.c.l.b16 %v8933
    %v9067 = vunpack.c.l.b16 %v8934
    %v9068 = vunpack.c.l.b16 %v8935
    %v9069 = vunpack.c.l.b16 %v8936
    %v9070 = vunpack.c.l.b16 %v8937
    %v9071 = vunpack.c.l.b16 %v8938
    %v9072 = vunpack.c.l.b16 %v8939
    %v9073 = vunpack.c.l.b16 %v8940
    %v9074 = vunpack.c.l.b16 %v8941
    %v9075 = vunpack.c.l.b16 %v8942
    %v9076 = vunpack.c.l.b16 %v8943
    %v9077 = vunpack.c.l.b16 %v8944
    %v9078 = vunpack.c.l.b16 %v8945
    %v9079 = vunpack.c.l.b16 %v8946
    %v9080 = vpack.c.b16 %v9017, %v9016
    %v9081 = vpack.c.b16 %v9019, %v9018
    %v9082 = vpack.c.b16 %v9021, %v9020
    %v9083 = vpack.c.b16 %v9023, %v9022
    %v9084 = vpack.c.b16 %v9025, %v9024
    %v9085 = vpack.c.b16 %v9027, %v9026
    %v9086 = vpack.c.b16 %v9029, %v9028
    %v9087 = vpack.c.b16 %v9031, %v9030
    %v9088 = vpack.c.b16 %v9033, %v9032
    %v9089 = vpack.c.b16 %v9035, %v9034
    %v9090 = vpack.c.b16 %v9037, %v9036
    %v9091 = vpack.c.b16 %v9039, %v9038
    %v9092 = vpack.c.b16 %v9041, %v9040
    %v9093 = vpack.c.b16 %v9043, %v9042
    %v9094 = vpack.c.b16 %v9045, %v9044
    %v9095 = vpack.c.b16 %v9047, %v9046
    %v9096 = vpack.c.b16 %v9049, %v9048
    %v9097 = vpack.c.b16 %v9051, %v9050
    %v9098 = vpack.c.b16 %v9053, %v9052
    %v9099 = vpack.c.b16 %v9055, %v9054
    %v9100 = vpack.c.b16 %v9057, %v9056
    %v9101 = vpack.c.b16 %v9059, %v9058
    %v9102 = vpack.c.b16 %v9061, %v9060
    %v9103 = vpack.c.b16 %v9063, %v9062
    %v9104 = vpack.c.b16 %v9065, %v9064
    %v9105 = vpack.c.b16 %v9067, %v9066
    %v9106 = vpack.c.b16 %v9069, %v9068
    %v9107 = vpack.c.b16 %v9071, %v9070
    %v9108 = vpack.c.b16 %v9073, %v9072
    %v9109 = vpack.c.b16 %v9075, %v9074
    %v9110 = vpack.c.b16 %v9077, %v9076
    %v9111 = vpack.c.b16 %v9079, %v9078
    %9144 = vmatpush.bf16.msra.mxu0 %v9087
    %9145 = vmatpush.bf16.msra.mxu0 %v9086
    %9146 = vmatpush.bf16.msra.mxu0 %v9085
    %9147 = vmatpush.bf16.msra.mxu0 %v9084
    %9148 = vmatpush.bf16.msra.mxu0 %v9083
    %9149 = vmatpush.bf16.msra.mxu0 %v9082
    %9150 = vmatpush.bf16.msra.mxu0 %v9081
    %9151 = vmatpush.bf16.msra.mxu0 %v9080
    %9152 = vmatmul.bf16.gmra.mxu0 %v8874
    %v9153 = vpop.f32.mrf.mxu0
    %v9154 = vadd.f32 %v8950, %v9153
    %v9155 = vpop.f32.mrf.mxu0
    %v9156 = vadd.f32 %v8950, %v9155
    %9157 = vmatmul.bf16.gmra.mxu0 %v8878
    %v9158 = vpop.f32.mrf.mxu0
    %v9159 = vadd.f32 %v8950, %v9158
    %v9160 = vpop.f32.mrf.mxu0
    %v9161 = vadd.f32 %v8950, %v9160
    %9162 = vdwg.mxu0
    %9163 = vmatpush.bf16.msra.mxu0 %v9095
    %9164 = vmatpush.bf16.msra.mxu0 %v9094
    %9165 = vmatpush.bf16.msra.mxu0 %v9093
    %9166 = vmatpush.bf16.msra.mxu0 %v9092
    %9167 = vmatpush.bf16.msra.mxu0 %v9091
    %9168 = vmatpush.bf16.msra.mxu0 %v9090
    %9169 = vmatpush.bf16.msra.mxu0 %v9089
    %9170 = vmatpush.bf16.msra.mxu0 %v9088
    %9171 = vmatmul.bf16.gmra.mxu0 %v8875
    %v9172 = vpop.f32.mrf.mxu0
    %v9173 = vadd.f32 %v9154, %v9172
    %v9174 = vpop.f32.mrf.mxu0
    %v9175 = vadd.f32 %v9156, %v9174
    %9176 = vmatmul.bf16.gmra.mxu0 %v8879
    %v9177 = vpop.f32.mrf.mxu0
    %v9178 = vadd.f32 %v9159, %v9177
    %v9179 = vpop.f32.mrf.mxu0
    %v9180 = vadd.f32 %v9161, %v9179
    %9181 = vdwg.mxu0
    %9182 = vmatpush.bf16.msra.mxu0 %v9103
    %9183 = vmatpush.bf16.msra.mxu0 %v9102
    %9184 = vmatpush.bf16.msra.mxu0 %v9101
    %9185 = vmatpush.bf16.msra.mxu0 %v9100
    %9186 = vmatpush.bf16.msra.mxu0 %v9099
    %9187 = vmatpush.bf16.msra.mxu0 %v9098
    %9188 = vmatpush.bf16.msra.mxu0 %v9097
    %9189 = vmatpush.bf16.msra.mxu0 %v9096
    %9190 = vmatmul.bf16.gmra.mxu0 %v8876
    %v9191 = vpop.f32.mrf.mxu0
    %v9192 = vadd.f32 %v9173, %v9191
    %v9193 = vpop.f32.mrf.mxu0
    %v9194 = vadd.f32 %v9175, %v9193
    %9195 = vmatmul.bf16.gmra.mxu0 %v8880
    %v9196 = vpop.f32.mrf.mxu0
    %v9197 = vadd.f32 %v9178, %v9196
    %v9198 = vpop.f32.mrf.mxu0
    %v9199 = vadd.f32 %v9180, %v9198
    %9200 = vdwg.mxu0
    %9201 = vmatpush.bf16.msra.mxu0 %v9111
    %9202 = vmatpush.bf16.msra.mxu0 %v9110
    %9203 = vmatpush.bf16.msra.mxu0 %v9109
    %9204 = vmatpush.bf16.msra.mxu0 %v9108
    %9205 = vmatpush.bf16.msra.mxu0 %v9107
    %9206 = vmatpush.bf16.msra.mxu0 %v9106
    %9207 = vmatpush.bf16.msra.mxu0 %v9105
    %9208 = vmatpush.bf16.msra.mxu0 %v9104
    %9209 = vmatmul.bf16.gmra.mxu0 %v8877
    %v9210 = vpop.f32.mrf.mxu0
    %v9211 = vadd.f32 %v9192, %v9210
    %v9212 = vpop.f32.mrf.mxu0
    %v9213 = vadd.f32 %v9194, %v9212
    %9214 = vmatmul.bf16.gmra.mxu0 %v8881
    %v9215 = vpop.f32.mrf.mxu0
    %v9216 = vadd.f32 %v9197, %v9215
    %v9217 = vpop.f32.mrf.mxu0
    %v9218 = vadd.f32 %v9199, %v9217
    %9219 = vdwg.mxu0
    %v9220 = vadd.f32 %v7774, %v9211
    %v9221 = vadd.f32 %v7775, %v9213
    %v9222 = vadd.f32 %v7776, %v9216
    %v9223 = vadd.f32 %v7777, %v9218
    %v9224 = vadd.f32 %v9220, %v9221
    %v9225 = vrot.slane %v9224, 4
    %v9226 = vadd.f32 %v9224, %v9225
    %v9227 = vrot.slane %v9226, 2
    %v9228 = vadd.f32 %v9226, %v9227
    %v9229 = vrot.slane %v9228, 1
    %v9230 = vadd.f32 %v9228, %v9229
    %v9231 = vadd.f32 %v9222, %v9223
    %v9232 = vrot.slane %v9231, 4
    %v9233 = vadd.f32 %v9231, %v9232
    %v9234 = vrot.slane %v9233, 2
    %v9235 = vadd.f32 %v9233, %v9234
    %v9236 = vrot.slane %v9235, 1
    %v9237 = vadd.f32 %v9235, %v9236
    %v9238 = vrcp.pop 16.0
    %v9239 = vmul.f32 16.0, %v9238
    %v9240 = vsub.f32 1.0, %v9239
    %v9241 = vmul.f32 %v9238, %v9240
    %v9242 = vadd.f32 %v9238, %v9241
    %vm9243 = vweird.f32 %v9238
    %v9244 = vsel %vm9243, %v9238, %v9242
    %v9245 = vmul.f32 %v9230, %v9244
    %v9246 = vmul.f32 %v9237, %v9244
    %v9247 = vpack.c.bf16 %v9245, %v9245
    %v9248 = vpack.c.bf16 %v9246, %v9246
    %v9249 = vld [vmem:[%s16] sm:$0xf]
    %v9250 = vld [vmem:[%s16 + $0x4] sm:$0xf]
    %v9251 = vld [vmem:[%s16 + $0x8] sm:$0xf]
    %v9252 = vld [vmem:[%s16 + $0xc] sm:$0xf]
    %v9253 = vld [vmem:[%s16 + $0x10] sm:$0xf]
    %v9254 = vld [vmem:[%s16 + $0x14] sm:$0xf]
    %v9255 = vld [vmem:[%s16 + $0x18] sm:$0xf]
    %v9256 = vld [vmem:[%s16 + $0x1c] sm:$0xf]
    %v9257 = vld [vmem:[%s16 + $0x20] sm:$0xf]
    %v9258 = vld [vmem:[%s16 + $0x24] sm:$0xf]
    %v9259 = vld [vmem:[%s16 + $0x28] sm:$0xf]
    %v9260 = vld [vmem:[%s16 + $0x2c] sm:$0xf]
    %v9261 = vld [vmem:[%s16 + $0x30] sm:$0xf]
    %v9262 = vld [vmem:[%s16 + $0x34] sm:$0xf]
    %v9263 = vld [vmem:[%s16 + $0x38] sm:$0xf]
    %v9264 = vld [vmem:[%s16 + $0x3c] sm:$0xf]
    %v9265 = vld [vmem:[%s17] sm:$0x1]
    %v9267 = vperm.slane %v9265, 0
    %v9271 = vunpack.c.l.b16 %v9247
    %v9272 = vunpack.c.l.b16 %v9248
    %vm9273 = vcmask 1041409
    %v9274 = vsel %vm9273, %v9272, %v9271
    %v9275 = vpack.c.b16 %v9274, %v9274
    %v9293 = vunpack.c.l.b16 %v9249
    %v9294 = vunpack.c.l.b16 %v9250
    %v9295 = vunpack.c.l.b16 %v9251
    %v9296 = vunpack.c.l.b16 %v9252
    %v9297 = vunpack.c.l.b16 %v9253
    %v9298 = vunpack.c.l.b16 %v9254
    %v9299 = vunpack.c.l.b16 %v9255
    %v9300 = vunpack.c.l.b16 %v9256
    %v9301 = vunpack.c.l.b16 %v9257
    %v9302 = vunpack.c.l.b16 %v9258
    %v9303 = vunpack.c.l.b16 %v9259
    %v9304 = vunpack.c.l.b16 %v9260
    %v9305 = vunpack.c.l.b16 %v9261
    %v9306 = vunpack.c.l.b16 %v9262
    %v9307 = vunpack.c.l.b16 %v9263
    %v9308 = vunpack.c.l.b16 %v9264
    %v9309 = vpack.c.b16 %v9294, %v9293
    %v9310 = vpack.c.b16 %v9296, %v9295
    %v9311 = vpack.c.b16 %v9298, %v9297
    %v9312 = vpack.c.b16 %v9300, %v9299
    %v9313 = vpack.c.b16 %v9302, %v9301
    %v9314 = vpack.c.b16 %v9304, %v9303
    %v9315 = vpack.c.b16 %v9306, %v9305
    %v9316 = vpack.c.b16 %v9308, %v9307
    %9325 = vmatpush.bf16.msra.mxu0 %v9316
    %9326 = vmatpush.bf16.msra.mxu0 %v9315
    %9327 = vmatpush.bf16.msra.mxu0 %v9314
    %9328 = vmatpush.bf16.msra.mxu0 %v9313
    %9329 = vmatpush.bf16.msra.mxu0 %v9312
    %9330 = vmatpush.bf16.msra.mxu0 %v9311
    %9331 = vmatpush.bf16.msra.mxu0 %v9310
    %9332 = vmatpush.bf16.msra.mxu0 %v9309
    %9333 = vmatmul.bf16.gmra.mxu0 %v9275
    %v9334 = vpop.f32.mrf.mxu0
    %v9335 = vadd.f32 %v9267, %v9334
    %v9336 = vpop.f32.mrf.mxu0
    %9337 = vdwg.mxu0
    %9338 = vst [vmem:[#allocation7] sm:$0x3] %v9335
    // Predicated region
    $region82: #{model_forward.1} parent=1 // pred_check
      _
    $region83: #{model_forward.1} parent=1 // pred_check_branch
      %9340 = sbr.rel (0) target = $region85
    $region84: #{model_forward.1} parent=1 // pred_region
      %9342 = vsyncadd [#allocation4], 0
      %s9344 = sshll.u32 [#allocation7], 4
      %s9345 = int_to_ptr.vmem [resolvable:$true] %s9344
      %s9346 = sshll.u32 %s18, 4
      %s9347 = int_to_ptr.hbm [resolvable:$true] %s9346
      %9349 = dma.vmem_to_hbm [thread:$0]  %s9345, 32, %s9347, [#allocation4]
    $region85: #{model_forward.1} parent=1 // pred_fallthru
      _
    // Predicated region
    $region86: #{model_forward.1} parent=1 // pred_check
      _
    $region87: #{model_forward.1} parent=1 // pred_check_branch
      %9351 = sbr.rel (0) target = $region89
    $region88: #{model_forward.1} parent=1 // pred_region
      %9353 = dma.done [#allocation4], 32
    $region89: #{model_forward.1} parent=1 // pred_fallthru
      _
    %9354 = vsyncpa [#allocation3], 1
    %9355 = vsyncpa [#allocation6], 1
    %9356 = vsyncpa [#allocation4], 1

</llo_original>
